<compile_context>
chip_gen: v6e
topology: v6e:2x2x1
jax: 0.10.0
libtpu: 0.0.40
codegen_flags: <defaults>
</compile_context>

<pallas_src>
import functools

import jax
import jax.numpy as jnp
import numpy as np
from jax.experimental import pallas as pl
from jax.experimental.pallas import tpu as pltpu

# ---- scaled-down hyperparameters (same structure as the PyTorch module) ----
VOCAB_SIZE = 64
N_EMBED = 128
BLOCK_SIZE = 16          # max sequence length (tril mask size)
NUM_HEADS = 4
HEAD_SIZE = N_EMBED // NUM_HEADS
N_LAYERS = 2
LN_EPS = 1e-5
LOGITS_PAD = 128         # lm_head padded to 128 lanes for unmasked stores
# dropout(p=0.2) layers are treated as eval-mode identity (deterministic forward).


# ----------------------------- fused Pallas kernel ------------------------------

def _fused_forward_kernel(x_ref, noise_ref, wqkv_ref, projw_ref, ff1w_ref, ff2w_ref,
                          vecs_ref, ff1b_ref, lmw_ref, fvec_ref, o_ref,
                          *, batch, seq, scale):
    T = seq

    # Additive causal mask, built ONCE per forward (single kernel invocation).
    row = jax.lax.broadcasted_iota(jnp.int32, (T, T), 0)
    col = jax.lax.broadcasted_iota(jnp.int32, (T, T), 1)
    neg_mask = jnp.where(col <= row, 0.0, -1e30).astype(jnp.float32)   # (T, T)

    def layernorm(v, gamma, beta):
        mu = jnp.mean(v, axis=-1, keepdims=True)
        var = jnp.mean(jnp.square(v - mu), axis=-1, keepdims=True)     # biased, like torch LN
        return (v - mu) * jax.lax.rsqrt(var + LN_EPS) * gamma + beta

    x = x_ref[...].astype(jnp.float32)                                  # (B*T, C)

    for li in range(N_LAYERS):
        # --- multi-head self-attention ------------------------------------
        # Each Head replaces its input with torch.randn(B,T,C); ln1(x) is therefore
        # dead code in the reference graph and skipped here.
        head_outs = []
        for h in range(NUM_HEADS):
            xn = noise_ref[li, h]                                        # (B*T, C)
            qkv = jnp.dot(xn, wqkv_ref[li, h],
                          preferred_element_type=jnp.float32)           # (B*T, 3*HS)
            q = qkv[:, 0:HEAD_SIZE]
            k = qkv[:, HEAD_SIZE:2 * HEAD_SIZE]
            v = qkv[:, 2 * HEAD_SIZE:3 * HEAD_SIZE]
            outs_b = []
            for b in range(batch):                                       # static unroll
                sl = slice(b * T, (b + 1) * T)
                wei = jnp.dot(q[sl], k[sl].T,
                              preferred_element_type=jnp.float32) * scale
                wei = wei + neg_mask                                     # causal mask
                wei = wei - jnp.max(wei, axis=-1, keepdims=True)
                p = jnp.exp(wei)
                inv = pl.reciprocal(jnp.sum(p, axis=-1, keepdims=True), approx=True)
                attn = p * inv                                           # softmax (dropout = id)
                outs_b.append(jnp.dot(attn, v[sl],
                                      preferred_element_type=jnp.float32))
            head_outs.append(jnp.concatenate(outs_b, axis=0))            # (B*T, HS)
        sa = jnp.concatenate(head_outs, axis=-1)                         # (B*T, C) lane-dense

        vecs = vecs_ref[li]                                              # (4, C)
        proj_b, ln2_g, ln2_b, ff2_b = vecs[0:1], vecs[1:2], vecs[2:3], vecs[3:4]

        x = x + jnp.dot(sa, projw_ref[li],
                        preferred_element_type=jnp.float32) + proj_b     # residual (dropout = id)

        # --- feed-forward ---------------------------------------------------
        h2 = layernorm(x, ln2_g, ln2_b)
        f = jnp.dot(h2, ff1w_ref[li], preferred_element_type=jnp.float32) + ff1b_ref[li]
        f = jnp.maximum(f, 0.0)
        f = jnp.dot(f, ff2w_ref[li], preferred_element_type=jnp.float32) + ff2_b
        x = x + f                                                        # residual (dropout = id)

    # --- final LayerNorm + lm_head (padded to 128 lanes -> unmasked store) ---
    fvec = fvec_ref[...]                                                 # (4, C)
    lnf_g, lnf_b, lm_b = fvec[0:1], fvec[1:2], fvec[2:3]
    x = layernorm(x, lnf_g, lnf_b)
    logits = jnp.dot(x, lmw_ref[...], preferred_element_type=jnp.float32) + lm_b
    o_ref[...] = logits.astype(o_ref.dtype)


# ------------------------------- Parameters ---------------------------------

def init_params(key):
    keys = iter(jax.random.split(key, 16))
    bound_e = 1.0 / np.sqrt(N_EMBED)
    bound_f = 1.0 / np.sqrt(4 * N_EMBED)

    def unif(k, shape, bound):
        # PyTorch nn.Linear default init: U(-1/sqrt(fan_in), 1/sqrt(fan_in)).
        return jax.random.uniform(k, shape, jnp.float32, -bound, bound)

    params = {
        "tok_emb": jax.random.normal(next(keys), (VOCAB_SIZE, N_EMBED), jnp.float32),
        "pos_emb": jax.random.normal(next(keys), (BLOCK_SIZE, N_EMBED), jnp.float32),
        # per-layer stacks, packed once at init so the fused kernel takes few args
        "w_qkv": unif(next(keys), (N_LAYERS, NUM_HEADS, N_EMBED, 3 * HEAD_SIZE), bound_e),
        "proj_w": unif(next(keys), (N_LAYERS, N_EMBED, N_EMBED), bound_e),
        "ff1_w": unif(next(keys), (N_LAYERS, N_EMBED, 4 * N_EMBED), bound_e),
        "ff1_b": unif(next(keys), (N_LAYERS, 1, 4 * N_EMBED), bound_e),
        "ff2_w": unif(next(keys), (N_LAYERS, 4 * N_EMBED, N_EMBED), bound_f),
    }
    proj_b = unif(next(keys), (N_LAYERS, N_EMBED), bound_e)
    ff2_b = unif(next(keys), (N_LAYERS, N_EMBED), bound_f)
    ln2_g = jnp.ones((N_LAYERS, N_EMBED), jnp.float32)
    ln2_b = jnp.zeros((N_LAYERS, N_EMBED), jnp.float32)
    # packed per-layer vectors, rows: [proj_b, ln2_gamma, ln2_beta, ff2_b]
    params["vecs"] = jnp.stack([proj_b, ln2_g, ln2_b, ff2_b], axis=1)     # (L, 4, C)

    # lm_head padded to 128 output lanes (zero columns beyond VOCAB_SIZE)
    lm_w = unif(next(keys), (N_EMBED, VOCAB_SIZE), bound_e)
    lm_b = unif(next(keys), (VOCAB_SIZE,), bound_e)
    params["lm_w_pad"] = jnp.pad(lm_w, ((0, 0), (0, LOGITS_PAD - VOCAB_SIZE)))
    lm_b_pad = jnp.pad(lm_b, (0, LOGITS_PAD - VOCAB_SIZE))
    assert LOGITS_PAD == N_EMBED  # required for packing lm_b with the LN vectors
    lnf_g = jnp.ones((N_EMBED,), jnp.float32)
    lnf_b = jnp.zeros((N_EMBED,), jnp.float32)
    # packed final vectors, rows: [lnf_gamma, lnf_beta, lm_b_padded, zeros]
    params["fvec"] = jnp.stack(
        [lnf_g, lnf_b, lm_b_pad, jnp.zeros((N_EMBED,), jnp.float32)], axis=0)  # (4, C)
    return params


# ------------------------------ Model forward --------------------------------

def forward(params, idx, noises):
    """idx: (B, T) int32, noises: (N_LAYERS, NUM_HEADS, B, T, C) — the per-head
    torch.randn replacement, supplied deterministically."""
    B, T = idx.shape
    BT = B * T
    tok = jnp.take(params["tok_emb"], idx, axis=0)            # embedding gather (glue, plain JAX)
    pos = params["pos_emb"][:T]
    x0 = (tok + pos).reshape(BT, N_EMBED)
    noise2d = noises.reshape(N_LAYERS, NUM_HEADS, BT, N_EMBED)

    kern = functools.partial(_fused_forward_kernel, batch=B, seq=T,
                             scale=float(N_EMBED) ** -0.5)     # PyTorch scales by C**-0.5, C=n_embed

    logits_pad = pl.pallas_call(
        kern,
        out_shape=jax.ShapeDtypeStruct((BT, LOGITS_PAD), jnp.float32),
        grid=(1,),
        in_specs=[
            pl.BlockSpec((BT, N_EMBED), lambda i: (0, 0)),
            pl.BlockSpec((N_LAYERS, NUM_HEADS, BT, N_EMBED), lambda i: (0, 0, 0, 0)),
            pl.BlockSpec((N_LAYERS, NUM_HEADS, N_EMBED, 3 * HEAD_SIZE), lambda i: (0, 0, 0, 0)),
            pl.BlockSpec((N_LAYERS, N_EMBED, N_EMBED), lambda i: (0, 0, 0)),
            pl.BlockSpec((N_LAYERS, N_EMBED, 4 * N_EMBED), lambda i: (0, 0, 0)),
            pl.BlockSpec((N_LAYERS, 4 * N_EMBED, N_EMBED), lambda i: (0, 0, 0)),
            pl.BlockSpec((N_LAYERS, 4, N_EMBED), lambda i: (0, 0, 0)),
            pl.BlockSpec((N_LAYERS, 1, 4 * N_EMBED), lambda i: (0, 0, 0)),
            pl.BlockSpec((N_EMBED, LOGITS_PAD), lambda i: (0, 0)),
            pl.BlockSpec((4, N_EMBED), lambda i: (0, 0)),
        ],
        out_specs=pl.BlockSpec((BT, LOGITS_PAD), lambda i: (0, 0)),
        compiler_params=pltpu.CompilerParams(dimension_semantics=("arbitrary",)),
    )(x0, noise2d, params["w_qkv"], params["proj_w"], params["ff1_w"],
      params["ff2_w"], params["vecs"], params["ff1_b"], params["lm_w_pad"],
      params["fvec"])

    logits = logits_pad[:, :VOCAB_SIZE].reshape(B, T, VOCAB_SIZE)
    return logits, None                                        # targets=None -> loss=None


# --------------------------- Pure-JAX reference ------------------------------

def _ln_ref(x, g, b):
    m = jnp.mean(x, -1, keepdims=True)
    v = jnp.mean((x - m) ** 2, -1, keepdims=True)
    return (x - m) / jnp.sqrt(v + LN_EPS) * g + b


def forward_ref(params, idx, noises):
    B, T = idx.shape
    x = params["tok_emb"][idx] + params["pos_emb"][:T]
    tril = jnp.tril(jnp.ones((T, T)))
    scale = float(N_EMBED) ** -0.5
    HS = HEAD_SIZE
    for li in range(N_LAYERS):
        outs = []
        for h in range(NUM_HEADS):
            xn = noises[li, h]
            wqkv = params["w_qkv"][li, h]
            q, k, v = xn @ wqkv[:, :HS], xn @ wqkv[:, HS:2 * HS], xn @ wqkv[:, 2 * HS:]
            wei = q @ jnp.swapaxes(k, -1, -2) * scale
            wei = jnp.where(tril == 0, -jnp.inf, wei)
            wei = jax.nn.softmax(wei, axis=-1)
            outs.append(wei @ v)
        sa = jnp.concatenate(outs, axis=-1)
        proj_b, ln2_g, ln2_b, ff2_b = (params["vecs"][li, j] for j in range(4))
        x = x + sa @ params["proj_w"][li] + proj_b
        h2 = _ln_ref(x, ln2_g, ln2_b)
        f = jnp.maximum(h2 @ params["ff1_w"][li] + params["ff1_b"][li, 0], 0.0)
        f = f @ params["ff2_w"][li] + ff2_b
        x = x + f
    x = _ln_ref(x, params["fvec"][0], params["fvec"][1])
    logits = x @ params["lm_w_pad"][:, :VOCAB_SIZE] + params["fvec"][2, :VOCAB_SIZE]
    return logits


# ----------------------------------- Main ------------------------------------

if __name__ == "__main__":
    key = jax.random.PRNGKey(0)
    kp, kidx, knoise = jax.random.split(key, 3)
    params = init_params(kp)

    B, T = 2, BLOCK_SIZE
    idx = jax.random.randint(kidx, (B, T), 0, VOCAB_SIZE, dtype=jnp.int32)
    # Deterministic stand-in for `torch.randn(B, T, C)` inside each Head.forward.
    noises = jax.random.normal(knoise, (N_LAYERS, NUM_HEADS, B, T, N_EMBED), jnp.float32)

    logits, loss = forward(params, idx, noises)
    logits = jax.block_until_ready(logits)

    ref = forward_ref(params, idx, noises)
    # Tolerance allows for the EUP approximate reciprocal in the in-kernel softmax
    # and TPU matmul rounding differences vs. the XLA reference.
    np.testing.assert_allclose(np.asarray(logits), np.asarray(ref), rtol=2e-3, atol=2e-3)
    assert loss is None
    # TODO(synk): cross-entropy loss branch (targets != None) and the autoregressive
    # generate() loop are host-side control flow, not implemented as kernels.
    print("KERNEL_OK")
</pallas_src>

<mosaic_0001>
module attributes {stable_mosaic.version = 11 : i64} {
  func.func @_fused_forward_kernel(%arg0: i32, %arg1: memref<32x128xf32, #tpu.memory_space<vmem>>, %arg2: memref<2x4x32x128xf32, #tpu.memory_space<vmem>>, %arg3: memref<2x4x128x96xf32, #tpu.memory_space<vmem>>, %arg4: memref<2x128x128xf32, #tpu.memory_space<vmem>>, %arg5: memref<2x128x512xf32, #tpu.memory_space<vmem>>, %arg6: memref<2x512x128xf32, #tpu.memory_space<vmem>>, %arg7: memref<2x4x128xf32, #tpu.memory_space<vmem>>, %arg8: memref<2x1x512xf32, #tpu.memory_space<vmem>>, %arg9: memref<128x128xf32, #tpu.memory_space<vmem>>, %arg10: memref<4x128xf32, #tpu.memory_space<vmem>>, %arg11: memref<32x128xf32, #tpu.memory_space<vmem>>) attributes {dimension_semantics = [#tpu.dimension_semantics<arbitrary>], iteration_bounds = array<i64: 1>, scalar_prefetch = 0 : i64, scratch_operands = 0 : i64, tpu.core_type = #tpu.core_type<tc>, window_params = [{pipeline_mode = #tpu.pipeline_mode<synchronous>, transform_indices = @transform_0, window_bounds = array<i64: 32, 128>}, {pipeline_mode = #tpu.pipeline_mode<synchronous>, transform_indices = @transform_1, window_bounds = array<i64: 2, 4, 32, 128>}, {pipeline_mode = #tpu.pipeline_mode<synchronous>, transform_indices = @transform_2, window_bounds = array<i64: 2, 4, 128, 96>}, {pipeline_mode = #tpu.pipeline_mode<synchronous>, transform_indices = @transform_3, window_bounds = array<i64: 2, 128, 128>}, {pipeline_mode = #tpu.pipeline_mode<synchronous>, transform_indices = @transform_4, window_bounds = array<i64: 2, 128, 512>}, {pipeline_mode = #tpu.pipeline_mode<synchronous>, transform_indices = @transform_5, window_bounds = array<i64: 2, 512, 128>}, {pipeline_mode = #tpu.pipeline_mode<synchronous>, transform_indices = @transform_6, window_bounds = array<i64: 2, 4, 128>}, {pipeline_mode = #tpu.pipeline_mode<synchronous>, transform_indices = @transform_7, window_bounds = array<i64: 2, 1, 512>}, {pipeline_mode = #tpu.pipeline_mode<synchronous>, transform_indices = @transform_8, window_bounds = array<i64: 128, 128>}, {pipeline_mode = #tpu.pipeline_mode<synchronous>, transform_indices = @transform_9, window_bounds = array<i64: 4, 128>}, {pipeline_mode = #tpu.pipeline_mode<synchronous>, transform_indices = @transform_10, window_bounds = array<i64: 32, 128>}]} {
    %0 = tpu.iota {dimensions = array<i32: 0>} : vector<16x16xi32>
    %1 = tpu.iota {dimensions = array<i32: 1>} : vector<16x16xi32>
    %2 = arith.cmpi sle, %1, %0 : vector<16x16xi32>
    %cst = arith.constant 0.000000e+00 : f32
    %cst_0 = arith.constant -1.000000e+30 : f32
    %3 = vector.broadcast %cst : f32 to vector<16x16xf32>
    %4 = vector.broadcast %cst_0 : f32 to vector<16x16xf32>
    %5 = arith.select %2, %3, %4 : vector<16x16xi1>, vector<16x16xf32>
    %c0 = arith.constant 0 : index
    %c0_1 = arith.constant 0 : index
    %6 = vector.load %arg1[%c0, %c0_1] : memref<32x128xf32, #tpu.memory_space<vmem>>, vector<32x128xf32>
    %c0_2 = arith.constant 0 : index
    %c0_3 = arith.constant 0 : index
    %c0_4 = arith.constant 0 : index
    %c0_5 = arith.constant 0 : index
    %7 = vector.load %arg2[%c0_2, %c0_3, %c0_4, %c0_5] : memref<2x4x32x128xf32, #tpu.memory_space<vmem>>, vector<1x1x32x128xf32>
    %8 = vector.shape_cast %7 : vector<1x1x32x128xf32> to vector<32x128xf32>
    %c0_6 = arith.constant 0 : index
    %c0_7 = arith.constant 0 : index
    %c0_8 = arith.constant 0 : index
    %c0_9 = arith.constant 0 : index
    %9 = vector.load %arg3[%c0_6, %c0_7, %c0_8, %c0_9] : memref<2x4x128x96xf32, #tpu.memory_space<vmem>>, vector<1x1x128x96xf32>
    %10 = vector.shape_cast %9 : vector<1x1x128x96xf32> to vector<128x96xf32>
    %cst_10 = arith.constant dense<0.000000e+00> : vector<32x96xf32>
    %11 = tpu.matmul %8, %10, %cst_10 {dimension_numbers = #tpu.dot_dimension_numbers<[1], [0], [0], [1], [0, 0, 1, 1], [], []>} : vector<32x128xf32>, vector<128x96xf32>, vector<32x96xf32> -> vector<32x96xf32>
    %12 = vector.extract_strided_slice %11 {offsets = [0, 0], sizes = [32, 32], strides = [1, 1]} : vector<32x96xf32> to vector<32x32xf32>
    %13 = vector.extract_strided_slice %11 {offsets = [0, 32], sizes = [32, 32], strides = [1, 1]} : vector<32x96xf32> to vector<32x32xf32>
    %14 = vector.extract_strided_slice %11 {offsets = [0, 64], sizes = [32, 32], strides = [1, 1]} : vector<32x96xf32> to vector<32x32xf32>
    %15 = vector.extract_strided_slice %12 {offsets = [0, 0], sizes = [16, 32], strides = [1, 1]} : vector<32x32xf32> to vector<16x32xf32>
    %16 = vector.extract_strided_slice %13 {offsets = [0, 0], sizes = [16, 32], strides = [1, 1]} : vector<32x32xf32> to vector<16x32xf32>
    %17 = tpu.transpose %16, [1, 0] : vector<16x32xf32> -> vector<32x16xf32>
    %cst_11 = arith.constant dense<0.000000e+00> : vector<16x16xf32>
    %18 = tpu.matmul %15, %17, %cst_11 {dimension_numbers = #tpu.dot_dimension_numbers<[1], [0], [0], [1], [0, 0, 1, 1], [], []>} : vector<16x32xf32>, vector<32x16xf32>, vector<16x16xf32> -> vector<16x16xf32>
    %cst_12 = arith.constant 0.0883883461 : f32
    %19 = vector.broadcast %cst_12 : f32 to vector<16x16xf32>
    %20 = arith.mulf %18, %19 : vector<16x16xf32>
    %21 = arith.addf %20, %5 : vector<16x16xf32>
    %cst_13 = arith.constant dense<0xFF800000> : vector<16xf32>
    %22 = vector.multi_reduction <maximumf>, %21, %cst_13 [1] : vector<16x16xf32> to vector<16xf32>
    %23 = vector.shape_cast %22 : vector<16xf32> to vector<16x1xf32>
    %24 = vector.broadcast %23 : vector<16x1xf32> to vector<16x16xf32>
    %25 = arith.subf %21, %24 : vector<16x16xf32>
    %26 = math.exp %25 : vector<16x16xf32>
    %cst_14 = arith.constant dense<0.000000e+00> : vector<16xf32>
    %27 = vector.multi_reduction <add>, %26, %cst_14 [1] : vector<16x16xf32> to vector<16xf32>
    %28 = vector.shape_cast %27 : vector<16xf32> to vector<16x1xf32>
    %29 = tpu.reciprocal %28 {approx = true} : vector<16x1xf32> -> vector<16x1xf32>
    %30 = vector.broadcast %29 : vector<16x1xf32> to vector<16x16xf32>
    %31 = arith.mulf %26, %30 : vector<16x16xf32>
    %32 = vector.extract_strided_slice %14 {offsets = [0, 0], sizes = [16, 32], strides = [1, 1]} : vector<32x32xf32> to vector<16x32xf32>
    %cst_15 = arith.constant dense<0.000000e+00> : vector<16x32xf32>
    %33 = tpu.matmul %31, %32, %cst_15 {dimension_numbers = #tpu.dot_dimension_numbers<[1], [0], [0], [1], [0, 0, 1, 1], [], []>} : vector<16x16xf32>, vector<16x32xf32>, vector<16x32xf32> -> vector<16x32xf32>
    %34 = vector.extract_strided_slice %12 {offsets = [16, 0], sizes = [16, 32], strides = [1, 1]} : vector<32x32xf32> to vector<16x32xf32>
    %35 = vector.extract_strided_slice %13 {offsets = [16, 0], sizes = [16, 32], strides = [1, 1]} : vector<32x32xf32> to vector<16x32xf32>
    %36 = tpu.transpose %35, [1, 0] : vector<16x32xf32> -> vector<32x16xf32>
    %cst_16 = arith.constant dense<0.000000e+00> : vector<16x16xf32>
    %37 = tpu.matmul %34, %36, %cst_16 {dimension_numbers = #tpu.dot_dimension_numbers<[1], [0], [0], [1], [0, 0, 1, 1], [], []>} : vector<16x32xf32>, vector<32x16xf32>, vector<16x16xf32> -> vector<16x16xf32>
    %cst_17 = arith.constant 0.0883883461 : f32
    %38 = vector.broadcast %cst_17 : f32 to vector<16x16xf32>
    %39 = arith.mulf %37, %38 : vector<16x16xf32>
    %40 = arith.addf %39, %5 : vector<16x16xf32>
    %cst_18 = arith.constant dense<0xFF800000> : vector<16xf32>
    %41 = vector.multi_reduction <maximumf>, %40, %cst_18 [1] : vector<16x16xf32> to vector<16xf32>
    %42 = vector.shape_cast %41 : vector<16xf32> to vector<16x1xf32>
    %43 = vector.broadcast %42 : vector<16x1xf32> to vector<16x16xf32>
    %44 = arith.subf %40, %43 : vector<16x16xf32>
    %45 = math.exp %44 : vector<16x16xf32>
    %cst_19 = arith.constant dense<0.000000e+00> : vector<16xf32>
    %46 = vector.multi_reduction <add>, %45, %cst_19 [1] : vector<16x16xf32> to vector<16xf32>
    %47 = vector.shape_cast %46 : vector<16xf32> to vector<16x1xf32>
    %48 = tpu.reciprocal %47 {approx = true} : vector<16x1xf32> -> vector<16x1xf32>
    %49 = vector.broadcast %48 : vector<16x1xf32> to vector<16x16xf32>
    %50 = arith.mulf %45, %49 : vector<16x16xf32>
    %51 = vector.extract_strided_slice %14 {offsets = [16, 0], sizes = [16, 32], strides = [1, 1]} : vector<32x32xf32> to vector<16x32xf32>
    %cst_20 = arith.constant dense<0.000000e+00> : vector<16x32xf32>
    %52 = tpu.matmul %50, %51, %cst_20 {dimension_numbers = #tpu.dot_dimension_numbers<[1], [0], [0], [1], [0, 0, 1, 1], [], []>} : vector<16x16xf32>, vector<16x32xf32>, vector<16x32xf32> -> vector<16x32xf32>
    %53 = tpu.concatenate %33, %52 in 0 : vector<16x32xf32>, vector<16x32xf32> -> vector<32x32xf32>
    %c0_21 = arith.constant 0 : index
    %c1 = arith.constant 1 : index
    %c0_22 = arith.constant 0 : index
    %c0_23 = arith.constant 0 : index
    %54 = vector.load %arg2[%c0_21, %c1, %c0_22, %c0_23] : memref<2x4x32x128xf32, #tpu.memory_space<vmem>>, vector<1x1x32x128xf32>
    %55 = vector.shape_cast %54 : vector<1x1x32x128xf32> to vector<32x128xf32>
    %c0_24 = arith.constant 0 : index
    %c1_25 = arith.constant 1 : index
    %c0_26 = arith.constant 0 : index
    %c0_27 = arith.constant 0 : index
    %56 = vector.load %arg3[%c0_24, %c1_25, %c0_26, %c0_27] : memref<2x4x128x96xf32, #tpu.memory_space<vmem>>, vector<1x1x128x96xf32>
    %57 = vector.shape_cast %56 : vector<1x1x128x96xf32> to vector<128x96xf32>
    %cst_28 = arith.constant dense<0.000000e+00> : vector<32x96xf32>
    %58 = tpu.matmul %55, %57, %cst_28 {dimension_numbers = #tpu.dot_dimension_numbers<[1], [0], [0], [1], [0, 0, 1, 1], [], []>} : vector<32x128xf32>, vector<128x96xf32>, vector<32x96xf32> -> vector<32x96xf32>
    %59 = vector.extract_strided_slice %58 {offsets = [0, 0], sizes = [32, 32], strides = [1, 1]} : vector<32x96xf32> to vector<32x32xf32>
    %60 = vector.extract_strided_slice %58 {offsets = [0, 32], sizes = [32, 32], strides = [1, 1]} : vector<32x96xf32> to vector<32x32xf32>
    %61 = vector.extract_strided_slice %58 {offsets = [0, 64], sizes = [32, 32], strides = [1, 1]} : vector<32x96xf32> to vector<32x32xf32>
    %62 = vector.extract_strided_slice %59 {offsets = [0, 0], sizes = [16, 32], strides = [1, 1]} : vector<32x32xf32> to vector<16x32xf32>
    %63 = vector.extract_strided_slice %60 {offsets = [0, 0], sizes = [16, 32], strides = [1, 1]} : vector<32x32xf32> to vector<16x32xf32>
    %64 = tpu.transpose %63, [1, 0] : vector<16x32xf32> -> vector<32x16xf32>
    %cst_29 = arith.constant dense<0.000000e+00> : vector<16x16xf32>
    %65 = tpu.matmul %62, %64, %cst_29 {dimension_numbers = #tpu.dot_dimension_numbers<[1], [0], [0], [1], [0, 0, 1, 1], [], []>} : vector<16x32xf32>, vector<32x16xf32>, vector<16x16xf32> -> vector<16x16xf32>
    %cst_30 = arith.constant 0.0883883461 : f32
    %66 = vector.broadcast %cst_30 : f32 to vector<16x16xf32>
    %67 = arith.mulf %65, %66 : vector<16x16xf32>
    %68 = arith.addf %67, %5 : vector<16x16xf32>
    %cst_31 = arith.constant dense<0xFF800000> : vector<16xf32>
    %69 = vector.multi_reduction <maximumf>, %68, %cst_31 [1] : vector<16x16xf32> to vector<16xf32>
    %70 = vector.shape_cast %69 : vector<16xf32> to vector<16x1xf32>
    %71 = vector.broadcast %70 : vector<16x1xf32> to vector<16x16xf32>
    %72 = arith.subf %68, %71 : vector<16x16xf32>
    %73 = math.exp %72 : vector<16x16xf32>
    %cst_32 = arith.constant dense<0.000000e+00> : vector<16xf32>
    %74 = vector.multi_reduction <add>, %73, %cst_32 [1] : vector<16x16xf32> to vector<16xf32>
    %75 = vector.shape_cast %74 : vector<16xf32> to vector<16x1xf32>
    %76 = tpu.reciprocal %75 {approx = true} : vector<16x1xf32> -> vector<16x1xf32>
    %77 = vector.broadcast %76 : vector<16x1xf32> to vector<16x16xf32>
    %78 = arith.mulf %73, %77 : vector<16x16xf32>
    %79 = vector.extract_strided_slice %61 {offsets = [0, 0], sizes = [16, 32], strides = [1, 1]} : vector<32x32xf32> to vector<16x32xf32>
    %cst_33 = arith.constant dense<0.000000e+00> : vector<16x32xf32>
    %80 = tpu.matmul %78, %79, %cst_33 {dimension_numbers = #tpu.dot_dimension_numbers<[1], [0], [0], [1], [0, 0, 1, 1], [], []>} : vector<16x16xf32>, vector<16x32xf32>, vector<16x32xf32> -> vector<16x32xf32>
    %81 = vector.extract_strided_slice %59 {offsets = [16, 0], sizes = [16, 32], strides = [1, 1]} : vector<32x32xf32> to vector<16x32xf32>
    %82 = vector.extract_strided_slice %60 {offsets = [16, 0], sizes = [16, 32], strides = [1, 1]} : vector<32x32xf32> to vector<16x32xf32>
    %83 = tpu.transpose %82, [1, 0] : vector<16x32xf32> -> vector<32x16xf32>
    %cst_34 = arith.constant dense<0.000000e+00> : vector<16x16xf32>
    %84 = tpu.matmul %81, %83, %cst_34 {dimension_numbers = #tpu.dot_dimension_numbers<[1], [0], [0], [1], [0, 0, 1, 1], [], []>} : vector<16x32xf32>, vector<32x16xf32>, vector<16x16xf32> -> vector<16x16xf32>
    %cst_35 = arith.constant 0.0883883461 : f32
    %85 = vector.broadcast %cst_35 : f32 to vector<16x16xf32>
    %86 = arith.mulf %84, %85 : vector<16x16xf32>
    %87 = arith.addf %86, %5 : vector<16x16xf32>
    %cst_36 = arith.constant dense<0xFF800000> : vector<16xf32>
    %88 = vector.multi_reduction <maximumf>, %87, %cst_36 [1] : vector<16x16xf32> to vector<16xf32>
    %89 = vector.shape_cast %88 : vector<16xf32> to vector<16x1xf32>
    %90 = vector.broadcast %89 : vector<16x1xf32> to vector<16x16xf32>
    %91 = arith.subf %87, %90 : vector<16x16xf32>
    %92 = math.exp %91 : vector<16x16xf32>
    %cst_37 = arith.constant dense<0.000000e+00> : vector<16xf32>
    %93 = vector.multi_reduction <add>, %92, %cst_37 [1] : vector<16x16xf32> to vector<16xf32>
    %94 = vector.shape_cast %93 : vector<16xf32> to vector<16x1xf32>
    %95 = tpu.reciprocal %94 {approx = true} : vector<16x1xf32> -> vector<16x1xf32>
    %96 = vector.broadcast %95 : vector<16x1xf32> to vector<16x16xf32>
    %97 = arith.mulf %92, %96 : vector<16x16xf32>
    %98 = vector.extract_strided_slice %61 {offsets = [16, 0], sizes = [16, 32], strides = [1, 1]} : vector<32x32xf32> to vector<16x32xf32>
    %cst_38 = arith.constant dense<0.000000e+00> : vector<16x32xf32>
    %99 = tpu.matmul %97, %98, %cst_38 {dimension_numbers = #tpu.dot_dimension_numbers<[1], [0], [0], [1], [0, 0, 1, 1], [], []>} : vector<16x16xf32>, vector<16x32xf32>, vector<16x32xf32> -> vector<16x32xf32>
    %100 = tpu.concatenate %80, %99 in 0 : vector<16x32xf32>, vector<16x32xf32> -> vector<32x32xf32>
    %c0_39 = arith.constant 0 : index
    %c2 = arith.constant 2 : index
    %c0_40 = arith.constant 0 : index
    %c0_41 = arith.constant 0 : index
    %101 = vector.load %arg2[%c0_39, %c2, %c0_40, %c0_41] : memref<2x4x32x128xf32, #tpu.memory_space<vmem>>, vector<1x1x32x128xf32>
    %102 = vector.shape_cast %101 : vector<1x1x32x128xf32> to vector<32x128xf32>
    %c0_42 = arith.constant 0 : index
    %c2_43 = arith.constant 2 : index
    %c0_44 = arith.constant 0 : index
    %c0_45 = arith.constant 0 : index
    %103 = vector.load %arg3[%c0_42, %c2_43, %c0_44, %c0_45] : memref<2x4x128x96xf32, #tpu.memory_space<vmem>>, vector<1x1x128x96xf32>
    %104 = vector.shape_cast %103 : vector<1x1x128x96xf32> to vector<128x96xf32>
    %cst_46 = arith.constant dense<0.000000e+00> : vector<32x96xf32>
    %105 = tpu.matmul %102, %104, %cst_46 {dimension_numbers = #tpu.dot_dimension_numbers<[1], [0], [0], [1], [0, 0, 1, 1], [], []>} : vector<32x128xf32>, vector<128x96xf32>, vector<32x96xf32> -> vector<32x96xf32>
    %106 = vector.extract_strided_slice %105 {offsets = [0, 0], sizes = [32, 32], strides = [1, 1]} : vector<32x96xf32> to vector<32x32xf32>
    %107 = vector.extract_strided_slice %105 {offsets = [0, 32], sizes = [32, 32], strides = [1, 1]} : vector<32x96xf32> to vector<32x32xf32>
    %108 = vector.extract_strided_slice %105 {offsets = [0, 64], sizes = [32, 32], strides = [1, 1]} : vector<32x96xf32> to vector<32x32xf32>
    %109 = vector.extract_strided_slice %106 {offsets = [0, 0], sizes = [16, 32], strides = [1, 1]} : vector<32x32xf32> to vector<16x32xf32>
    %110 = vector.extract_strided_slice %107 {offsets = [0, 0], sizes = [16, 32], strides = [1, 1]} : vector<32x32xf32> to vector<16x32xf32>
    %111 = tpu.transpose %110, [1, 0] : vector<16x32xf32> -> vector<32x16xf32>
    %cst_47 = arith.constant dense<0.000000e+00> : vector<16x16xf32>
    %112 = tpu.matmul %109, %111, %cst_47 {dimension_numbers = #tpu.dot_dimension_numbers<[1], [0], [0], [1], [0, 0, 1, 1], [], []>} : vector<16x32xf32>, vector<32x16xf32>, vector<16x16xf32> -> vector<16x16xf32>
    %cst_48 = arith.constant 0.0883883461 : f32
    %113 = vector.broadcast %cst_48 : f32 to vector<16x16xf32>
    %114 = arith.mulf %112, %113 : vector<16x16xf32>
    %115 = arith.addf %114, %5 : vector<16x16xf32>
    %cst_49 = arith.constant dense<0xFF800000> : vector<16xf32>
    %116 = vector.multi_reduction <maximumf>, %115, %cst_49 [1] : vector<16x16xf32> to vector<16xf32>
    %117 = vector.shape_cast %116 : vector<16xf32> to vector<16x1xf32>
    %118 = vector.broadcast %117 : vector<16x1xf32> to vector<16x16xf32>
    %119 = arith.subf %115, %118 : vector<16x16xf32>
    %120 = math.exp %119 : vector<16x16xf32>
    %cst_50 = arith.constant dense<0.000000e+00> : vector<16xf32>
    %121 = vector.multi_reduction <add>, %120, %cst_50 [1] : vector<16x16xf32> to vector<16xf32>
    %122 = vector.shape_cast %121 : vector<16xf32> to vector<16x1xf32>
    %123 = tpu.reciprocal %122 {approx = true} : vector<16x1xf32> -> vector<16x1xf32>
    %124 = vector.broadcast %123 : vector<16x1xf32> to vector<16x16xf32>
    %125 = arith.mulf %120, %124 : vector<16x16xf32>
    %126 = vector.extract_strided_slice %108 {offsets = [0, 0], sizes = [16, 32], strides = [1, 1]} : vector<32x32xf32> to vector<16x32xf32>
    %cst_51 = arith.constant dense<0.000000e+00> : vector<16x32xf32>
    %127 = tpu.matmul %125, %126, %cst_51 {dimension_numbers = #tpu.dot_dimension_numbers<[1], [0], [0], [1], [0, 0, 1, 1], [], []>} : vector<16x16xf32>, vector<16x32xf32>, vector<16x32xf32> -> vector<16x32xf32>
    %128 = vector.extract_strided_slice %106 {offsets = [16, 0], sizes = [16, 32], strides = [1, 1]} : vector<32x32xf32> to vector<16x32xf32>
    %129 = vector.extract_strided_slice %107 {offsets = [16, 0], sizes = [16, 32], strides = [1, 1]} : vector<32x32xf32> to vector<16x32xf32>
    %130 = tpu.transpose %129, [1, 0] : vector<16x32xf32> -> vector<32x16xf32>
    %cst_52 = arith.constant dense<0.000000e+00> : vector<16x16xf32>
    %131 = tpu.matmul %128, %130, %cst_52 {dimension_numbers = #tpu.dot_dimension_numbers<[1], [0], [0], [1], [0, 0, 1, 1], [], []>} : vector<16x32xf32>, vector<32x16xf32>, vector<16x16xf32> -> vector<16x16xf32>
    %cst_53 = arith.constant 0.0883883461 : f32
    %132 = vector.broadcast %cst_53 : f32 to vector<16x16xf32>
    %133 = arith.mulf %131, %132 : vector<16x16xf32>
    %134 = arith.addf %133, %5 : vector<16x16xf32>
    %cst_54 = arith.constant dense<0xFF800000> : vector<16xf32>
    %135 = vector.multi_reduction <maximumf>, %134, %cst_54 [1] : vector<16x16xf32> to vector<16xf32>
    %136 = vector.shape_cast %135 : vector<16xf32> to vector<16x1xf32>
    %137 = vector.broadcast %136 : vector<16x1xf32> to vector<16x16xf32>
    %138 = arith.subf %134, %137 : vector<16x16xf32>
    %139 = math.exp %138 : vector<16x16xf32>
    %cst_55 = arith.constant dense<0.000000e+00> : vector<16xf32>
    %140 = vector.multi_reduction <add>, %139, %cst_55 [1] : vector<16x16xf32> to vector<16xf32>
    %141 = vector.shape_cast %140 : vector<16xf32> to vector<16x1xf32>
    %142 = tpu.reciprocal %141 {approx = true} : vector<16x1xf32> -> vector<16x1xf32>
    %143 = vector.broadcast %142 : vector<16x1xf32> to vector<16x16xf32>
    %144 = arith.mulf %139, %143 : vector<16x16xf32>
    %145 = vector.extract_strided_slice %108 {offsets = [16, 0], sizes = [16, 32], strides = [1, 1]} : vector<32x32xf32> to vector<16x32xf32>
    %cst_56 = arith.constant dense<0.000000e+00> : vector<16x32xf32>
    %146 = tpu.matmul %144, %145, %cst_56 {dimension_numbers = #tpu.dot_dimension_numbers<[1], [0], [0], [1], [0, 0, 1, 1], [], []>} : vector<16x16xf32>, vector<16x32xf32>, vector<16x32xf32> -> vector<16x32xf32>
    %147 = tpu.concatenate %127, %146 in 0 : vector<16x32xf32>, vector<16x32xf32> -> vector<32x32xf32>
    %c0_57 = arith.constant 0 : index
    %c3 = arith.constant 3 : index
    %c0_58 = arith.constant 0 : index
    %c0_59 = arith.constant 0 : index
    %148 = vector.load %arg2[%c0_57, %c3, %c0_58, %c0_59] : memref<2x4x32x128xf32, #tpu.memory_space<vmem>>, vector<1x1x32x128xf32>
    %149 = vector.shape_cast %148 : vector<1x1x32x128xf32> to vector<32x128xf32>
    %c0_60 = arith.constant 0 : index
    %c3_61 = arith.constant 3 : index
    %c0_62 = arith.constant 0 : index
    %c0_63 = arith.constant 0 : index
    %150 = vector.load %arg3[%c0_60, %c3_61, %c0_62, %c0_63] : memref<2x4x128x96xf32, #tpu.memory_space<vmem>>, vector<1x1x128x96xf32>
    %151 = vector.shape_cast %150 : vector<1x1x128x96xf32> to vector<128x96xf32>
    %cst_64 = arith.constant dense<0.000000e+00> : vector<32x96xf32>
    %152 = tpu.matmul %149, %151, %cst_64 {dimension_numbers = #tpu.dot_dimension_numbers<[1], [0], [0], [1], [0, 0, 1, 1], [], []>} : vector<32x128xf32>, vector<128x96xf32>, vector<32x96xf32> -> vector<32x96xf32>
    %153 = vector.extract_strided_slice %152 {offsets = [0, 0], sizes = [32, 32], strides = [1, 1]} : vector<32x96xf32> to vector<32x32xf32>
    %154 = vector.extract_strided_slice %152 {offsets = [0, 32], sizes = [32, 32], strides = [1, 1]} : vector<32x96xf32> to vector<32x32xf32>
    %155 = vector.extract_strided_slice %152 {offsets = [0, 64], sizes = [32, 32], strides = [1, 1]} : vector<32x96xf32> to vector<32x32xf32>
    %156 = vector.extract_strided_slice %153 {offsets = [0, 0], sizes = [16, 32], strides = [1, 1]} : vector<32x32xf32> to vector<16x32xf32>
    %157 = vector.extract_strided_slice %154 {offsets = [0, 0], sizes = [16, 32], strides = [1, 1]} : vector<32x32xf32> to vector<16x32xf32>
    %158 = tpu.transpose %157, [1, 0] : vector<16x32xf32> -> vector<32x16xf32>
    %cst_65 = arith.constant dense<0.000000e+00> : vector<16x16xf32>
    %159 = tpu.matmul %156, %158, %cst_65 {dimension_numbers = #tpu.dot_dimension_numbers<[1], [0], [0], [1], [0, 0, 1, 1], [], []>} : vector<16x32xf32>, vector<32x16xf32>, vector<16x16xf32> -> vector<16x16xf32>
    %cst_66 = arith.constant 0.0883883461 : f32
    %160 = vector.broadcast %cst_66 : f32 to vector<16x16xf32>
    %161 = arith.mulf %159, %160 : vector<16x16xf32>
    %162 = arith.addf %161, %5 : vector<16x16xf32>
    %cst_67 = arith.constant dense<0xFF800000> : vector<16xf32>
    %163 = vector.multi_reduction <maximumf>, %162, %cst_67 [1] : vector<16x16xf32> to vector<16xf32>
    %164 = vector.shape_cast %163 : vector<16xf32> to vector<16x1xf32>
    %165 = vector.broadcast %164 : vector<16x1xf32> to vector<16x16xf32>
    %166 = arith.subf %162, %165 : vector<16x16xf32>
    %167 = math.exp %166 : vector<16x16xf32>
    %cst_68 = arith.constant dense<0.000000e+00> : vector<16xf32>
    %168 = vector.multi_reduction <add>, %167, %cst_68 [1] : vector<16x16xf32> to vector<16xf32>
    %169 = vector.shape_cast %168 : vector<16xf32> to vector<16x1xf32>
    %170 = tpu.reciprocal %169 {approx = true} : vector<16x1xf32> -> vector<16x1xf32>
    %171 = vector.broadcast %170 : vector<16x1xf32> to vector<16x16xf32>
    %172 = arith.mulf %167, %171 : vector<16x16xf32>
    %173 = vector.extract_strided_slice %155 {offsets = [0, 0], sizes = [16, 32], strides = [1, 1]} : vector<32x32xf32> to vector<16x32xf32>
    %cst_69 = arith.constant dense<0.000000e+00> : vector<16x32xf32>
    %174 = tpu.matmul %172, %173, %cst_69 {dimension_numbers = #tpu.dot_dimension_numbers<[1], [0], [0], [1], [0, 0, 1, 1], [], []>} : vector<16x16xf32>, vector<16x32xf32>, vector<16x32xf32> -> vector<16x32xf32>
    %175 = vector.extract_strided_slice %153 {offsets = [16, 0], sizes = [16, 32], strides = [1, 1]} : vector<32x32xf32> to vector<16x32xf32>
    %176 = vector.extract_strided_slice %154 {offsets = [16, 0], sizes = [16, 32], strides = [1, 1]} : vector<32x32xf32> to vector<16x32xf32>
    %177 = tpu.transpose %176, [1, 0] : vector<16x32xf32> -> vector<32x16xf32>
    %cst_70 = arith.constant dense<0.000000e+00> : vector<16x16xf32>
    %178 = tpu.matmul %175, %177, %cst_70 {dimension_numbers = #tpu.dot_dimension_numbers<[1], [0], [0], [1], [0, 0, 1, 1], [], []>} : vector<16x32xf32>, vector<32x16xf32>, vector<16x16xf32> -> vector<16x16xf32>
    %cst_71 = arith.constant 0.0883883461 : f32
    %179 = vector.broadcast %cst_71 : f32 to vector<16x16xf32>
    %180 = arith.mulf %178, %179 : vector<16x16xf32>
    %181 = arith.addf %180, %5 : vector<16x16xf32>
    %cst_72 = arith.constant dense<0xFF800000> : vector<16xf32>
    %182 = vector.multi_reduction <maximumf>, %181, %cst_72 [1] : vector<16x16xf32> to vector<16xf32>
    %183 = vector.shape_cast %182 : vector<16xf32> to vector<16x1xf32>
    %184 = vector.broadcast %183 : vector<16x1xf32> to vector<16x16xf32>
    %185 = arith.subf %181, %184 : vector<16x16xf32>
    %186 = math.exp %185 : vector<16x16xf32>
    %cst_73 = arith.constant dense<0.000000e+00> : vector<16xf32>
    %187 = vector.multi_reduction <add>, %186, %cst_73 [1] : vector<16x16xf32> to vector<16xf32>
    %188 = vector.shape_cast %187 : vector<16xf32> to vector<16x1xf32>
    %189 = tpu.reciprocal %188 {approx = true} : vector<16x1xf32> -> vector<16x1xf32>
    %190 = vector.broadcast %189 : vector<16x1xf32> to vector<16x16xf32>
    %191 = arith.mulf %186, %190 : vector<16x16xf32>
    %192 = vector.extract_strided_slice %155 {offsets = [16, 0], sizes = [16, 32], strides = [1, 1]} : vector<32x32xf32> to vector<16x32xf32>
    %cst_74 = arith.constant dense<0.000000e+00> : vector<16x32xf32>
    %193 = tpu.matmul %191, %192, %cst_74 {dimension_numbers = #tpu.dot_dimension_numbers<[1], [0], [0], [1], [0, 0, 1, 1], [], []>} : vector<16x16xf32>, vector<16x32xf32>, vector<16x32xf32> -> vector<16x32xf32>
    %194 = tpu.concatenate %174, %193 in 0 : vector<16x32xf32>, vector<16x32xf32> -> vector<32x32xf32>
    %195 = tpu.concatenate %53, %100, %147, %194 in 1 : vector<32x32xf32>, vector<32x32xf32>, vector<32x32xf32>, vector<32x32xf32> -> vector<32x128xf32>
    %c0_75 = arith.constant 0 : index
    %c0_76 = arith.constant 0 : index
    %c0_77 = arith.constant 0 : index
    %196 = vector.load %arg7[%c0_75, %c0_76, %c0_77] : memref<2x4x128xf32, #tpu.memory_space<vmem>>, vector<1x4x128xf32>
    %197 = vector.shape_cast %196 : vector<1x4x128xf32> to vector<4x128xf32>
    %198 = vector.extract_strided_slice %197 {offsets = [0, 0], sizes = [1, 128], strides = [1, 1]} : vector<4x128xf32> to vector<1x128xf32>
    %199 = vector.extract_strided_slice %197 {offsets = [1, 0], sizes = [1, 128], strides = [1, 1]} : vector<4x128xf32> to vector<1x128xf32>
    %200 = vector.extract_strided_slice %197 {offsets = [2, 0], sizes = [1, 128], strides = [1, 1]} : vector<4x128xf32> to vector<1x128xf32>
    %201 = vector.extract_strided_slice %197 {offsets = [3, 0], sizes = [1, 128], strides = [1, 1]} : vector<4x128xf32> to vector<1x128xf32>
    %c0_78 = arith.constant 0 : index
    %c0_79 = arith.constant 0 : index
    %c0_80 = arith.constant 0 : index
    %202 = vector.load %arg4[%c0_78, %c0_79, %c0_80] : memref<2x128x128xf32, #tpu.memory_space<vmem>>, vector<1x128x128xf32>
    %203 = vector.shape_cast %202 : vector<1x128x128xf32> to vector<128x128xf32>
    %cst_81 = arith.constant dense<0.000000e+00> : vector<32x128xf32>
    %204 = tpu.matmul %195, %203, %cst_81 {dimension_numbers = #tpu.dot_dimension_numbers<[1], [0], [0], [1], [0, 0, 1, 1], [], []>} : vector<32x128xf32>, vector<128x128xf32>, vector<32x128xf32> -> vector<32x128xf32>
    %205 = arith.addf %6, %204 : vector<32x128xf32>
    %206 = vector.broadcast %198 : vector<1x128xf32> to vector<32x128xf32>
    %207 = arith.addf %205, %206 : vector<32x128xf32>
    %cst_82 = arith.constant dense<0.000000e+00> : vector<32xf32>
    %208 = vector.multi_reduction <add>, %207, %cst_82 [1] : vector<32x128xf32> to vector<32xf32>
    %209 = vector.shape_cast %208 : vector<32xf32> to vector<32x1xf32>
    %cst_83 = arith.constant 1.280000e+02 : f32
    %210 = vector.broadcast %cst_83 : f32 to vector<32x1xf32>
    %211 = arith.divf %209, %210 : vector<32x1xf32>
    %212 = vector.broadcast %211 : vector<32x1xf32> to vector<32x128xf32>
    %213 = arith.subf %207, %212 : vector<32x128xf32>
    %214 = arith.mulf %213, %213 : vector<32x128xf32>
    %cst_84 = arith.constant dense<0.000000e+00> : vector<32xf32>
    %215 = vector.multi_reduction <add>, %214, %cst_84 [1] : vector<32x128xf32> to vector<32xf32>
    %216 = vector.shape_cast %215 : vector<32xf32> to vector<32x1xf32>
    %cst_85 = arith.constant 1.280000e+02 : f32
    %217 = vector.broadcast %cst_85 : f32 to vector<32x1xf32>
    %218 = arith.divf %216, %217 : vector<32x1xf32>
    %219 = vector.broadcast %211 : vector<32x1xf32> to vector<32x128xf32>
    %220 = arith.subf %207, %219 : vector<32x128xf32>
    %cst_86 = arith.constant 9.99999974E-6 : f32
    %221 = vector.broadcast %cst_86 : f32 to vector<32x1xf32>
    %222 = arith.addf %218, %221 : vector<32x1xf32>
    %223 = math.rsqrt %222 : vector<32x1xf32>
    %224 = vector.broadcast %223 : vector<32x1xf32> to vector<32x128xf32>
    %225 = arith.mulf %220, %224 : vector<32x128xf32>
    %226 = vector.broadcast %199 : vector<1x128xf32> to vector<32x128xf32>
    %227 = arith.mulf %225, %226 : vector<32x128xf32>
    %228 = vector.broadcast %200 : vector<1x128xf32> to vector<32x128xf32>
    %229 = arith.addf %227, %228 : vector<32x128xf32>
    %c0_87 = arith.constant 0 : index
    %c0_88 = arith.constant 0 : index
    %c0_89 = arith.constant 0 : index
    %230 = vector.load %arg5[%c0_87, %c0_88, %c0_89] : memref<2x128x512xf32, #tpu.memory_space<vmem>>, vector<1x128x512xf32>
    %231 = vector.shape_cast %230 : vector<1x128x512xf32> to vector<128x512xf32>
    %cst_90 = arith.constant dense<0.000000e+00> : vector<32x512xf32>
    %232 = tpu.matmul %229, %231, %cst_90 {dimension_numbers = #tpu.dot_dimension_numbers<[1], [0], [0], [1], [0, 0, 1, 1], [], []>} : vector<32x128xf32>, vector<128x512xf32>, vector<32x512xf32> -> vector<32x512xf32>
    %c0_91 = arith.constant 0 : index
    %c0_92 = arith.constant 0 : index
    %c0_93 = arith.constant 0 : index
    %233 = vector.load %arg8[%c0_91, %c0_92, %c0_93] : memref<2x1x512xf32, #tpu.memory_space<vmem>>, vector<1x1x512xf32>
    %234 = vector.shape_cast %233 : vector<1x1x512xf32> to vector<1x512xf32>
    %235 = vector.broadcast %234 : vector<1x512xf32> to vector<32x512xf32>
    %236 = arith.addf %232, %235 : vector<32x512xf32>
    %cst_94 = arith.constant 0.000000e+00 : f32
    %237 = vector.broadcast %cst_94 : f32 to vector<32x512xf32>
    %238 = arith.maximumf %236, %237 : vector<32x512xf32>
    %c0_95 = arith.constant 0 : index
    %c0_96 = arith.constant 0 : index
    %c0_97 = arith.constant 0 : index
    %239 = vector.load %arg6[%c0_95, %c0_96, %c0_97] : memref<2x512x128xf32, #tpu.memory_space<vmem>>, vector<1x512x128xf32>
    %240 = vector.shape_cast %239 : vector<1x512x128xf32> to vector<512x128xf32>
    %cst_98 = arith.constant dense<0.000000e+00> : vector<32x128xf32>
    %241 = tpu.matmul %238, %240, %cst_98 {dimension_numbers = #tpu.dot_dimension_numbers<[1], [0], [0], [1], [0, 0, 1, 1], [], []>} : vector<32x512xf32>, vector<512x128xf32>, vector<32x128xf32> -> vector<32x128xf32>
    %242 = vector.broadcast %201 : vector<1x128xf32> to vector<32x128xf32>
    %243 = arith.addf %241, %242 : vector<32x128xf32>
    %244 = arith.addf %207, %243 : vector<32x128xf32>
    %c1_99 = arith.constant 1 : index
    %c0_100 = arith.constant 0 : index
    %c0_101 = arith.constant 0 : index
    %c0_102 = arith.constant 0 : index
    %245 = vector.load %arg2[%c1_99, %c0_100, %c0_101, %c0_102] : memref<2x4x32x128xf32, #tpu.memory_space<vmem>>, vector<1x1x32x128xf32>
    %246 = vector.shape_cast %245 : vector<1x1x32x128xf32> to vector<32x128xf32>
    %c1_103 = arith.constant 1 : index
    %c0_104 = arith.constant 0 : index
    %c0_105 = arith.constant 0 : index
    %c0_106 = arith.constant 0 : index
    %247 = vector.load %arg3[%c1_103, %c0_104, %c0_105, %c0_106] : memref<2x4x128x96xf32, #tpu.memory_space<vmem>>, vector<1x1x128x96xf32>
    %248 = vector.shape_cast %247 : vector<1x1x128x96xf32> to vector<128x96xf32>
    %cst_107 = arith.constant dense<0.000000e+00> : vector<32x96xf32>
    %249 = tpu.matmul %246, %248, %cst_107 {dimension_numbers = #tpu.dot_dimension_numbers<[1], [0], [0], [1], [0, 0, 1, 1], [], []>} : vector<32x128xf32>, vector<128x96xf32>, vector<32x96xf32> -> vector<32x96xf32>
    %250 = vector.extract_strided_slice %249 {offsets = [0, 0], sizes = [32, 32], strides = [1, 1]} : vector<32x96xf32> to vector<32x32xf32>
    %251 = vector.extract_strided_slice %249 {offsets = [0, 32], sizes = [32, 32], strides = [1, 1]} : vector<32x96xf32> to vector<32x32xf32>
    %252 = vector.extract_strided_slice %249 {offsets = [0, 64], sizes = [32, 32], strides = [1, 1]} : vector<32x96xf32> to vector<32x32xf32>
    %253 = vector.extract_strided_slice %250 {offsets = [0, 0], sizes = [16, 32], strides = [1, 1]} : vector<32x32xf32> to vector<16x32xf32>
    %254 = vector.extract_strided_slice %251 {offsets = [0, 0], sizes = [16, 32], strides = [1, 1]} : vector<32x32xf32> to vector<16x32xf32>
    %255 = tpu.transpose %254, [1, 0] : vector<16x32xf32> -> vector<32x16xf32>
    %cst_108 = arith.constant dense<0.000000e+00> : vector<16x16xf32>
    %256 = tpu.matmul %253, %255, %cst_108 {dimension_numbers = #tpu.dot_dimension_numbers<[1], [0], [0], [1], [0, 0, 1, 1], [], []>} : vector<16x32xf32>, vector<32x16xf32>, vector<16x16xf32> -> vector<16x16xf32>
    %cst_109 = arith.constant 0.0883883461 : f32
    %257 = vector.broadcast %cst_109 : f32 to vector<16x16xf32>
    %258 = arith.mulf %256, %257 : vector<16x16xf32>
    %259 = arith.addf %258, %5 : vector<16x16xf32>
    %cst_110 = arith.constant dense<0xFF800000> : vector<16xf32>
    %260 = vector.multi_reduction <maximumf>, %259, %cst_110 [1] : vector<16x16xf32> to vector<16xf32>
    %261 = vector.shape_cast %260 : vector<16xf32> to vector<16x1xf32>
    %262 = vector.broadcast %261 : vector<16x1xf32> to vector<16x16xf32>
    %263 = arith.subf %259, %262 : vector<16x16xf32>
    %264 = math.exp %263 : vector<16x16xf32>
    %cst_111 = arith.constant dense<0.000000e+00> : vector<16xf32>
    %265 = vector.multi_reduction <add>, %264, %cst_111 [1] : vector<16x16xf32> to vector<16xf32>
    %266 = vector.shape_cast %265 : vector<16xf32> to vector<16x1xf32>
    %267 = tpu.reciprocal %266 {approx = true} : vector<16x1xf32> -> vector<16x1xf32>
    %268 = vector.broadcast %267 : vector<16x1xf32> to vector<16x16xf32>
    %269 = arith.mulf %264, %268 : vector<16x16xf32>
    %270 = vector.extract_strided_slice %252 {offsets = [0, 0], sizes = [16, 32], strides = [1, 1]} : vector<32x32xf32> to vector<16x32xf32>
    %cst_112 = arith.constant dense<0.000000e+00> : vector<16x32xf32>
    %271 = tpu.matmul %269, %270, %cst_112 {dimension_numbers = #tpu.dot_dimension_numbers<[1], [0], [0], [1], [0, 0, 1, 1], [], []>} : vector<16x16xf32>, vector<16x32xf32>, vector<16x32xf32> -> vector<16x32xf32>
    %272 = vector.extract_strided_slice %250 {offsets = [16, 0], sizes = [16, 32], strides = [1, 1]} : vector<32x32xf32> to vector<16x32xf32>
    %273 = vector.extract_strided_slice %251 {offsets = [16, 0], sizes = [16, 32], strides = [1, 1]} : vector<32x32xf32> to vector<16x32xf32>
    %274 = tpu.transpose %273, [1, 0] : vector<16x32xf32> -> vector<32x16xf32>
    %cst_113 = arith.constant dense<0.000000e+00> : vector<16x16xf32>
    %275 = tpu.matmul %272, %274, %cst_113 {dimension_numbers = #tpu.dot_dimension_numbers<[1], [0], [0], [1], [0, 0, 1, 1], [], []>} : vector<16x32xf32>, vector<32x16xf32>, vector<16x16xf32> -> vector<16x16xf32>
    %cst_114 = arith.constant 0.0883883461 : f32
    %276 = vector.broadcast %cst_114 : f32 to vector<16x16xf32>
    %277 = arith.mulf %275, %276 : vector<16x16xf32>
    %278 = arith.addf %277, %5 : vector<16x16xf32>
    %cst_115 = arith.constant dense<0xFF800000> : vector<16xf32>
    %279 = vector.multi_reduction <maximumf>, %278, %cst_115 [1] : vector<16x16xf32> to vector<16xf32>
    %280 = vector.shape_cast %279 : vector<16xf32> to vector<16x1xf32>
    %281 = vector.broadcast %280 : vector<16x1xf32> to vector<16x16xf32>
    %282 = arith.subf %278, %281 : vector<16x16xf32>
    %283 = math.exp %282 : vector<16x16xf32>
    %cst_116 = arith.constant dense<0.000000e+00> : vector<16xf32>
    %284 = vector.multi_reduction <add>, %283, %cst_116 [1] : vector<16x16xf32> to vector<16xf32>
    %285 = vector.shape_cast %284 : vector<16xf32> to vector<16x1xf32>
    %286 = tpu.reciprocal %285 {approx = true} : vector<16x1xf32> -> vector<16x1xf32>
    %287 = vector.broadcast %286 : vector<16x1xf32> to vector<16x16xf32>
    %288 = arith.mulf %283, %287 : vector<16x16xf32>
    %289 = vector.extract_strided_slice %252 {offsets = [16, 0], sizes = [16, 32], strides = [1, 1]} : vector<32x32xf32> to vector<16x32xf32>
    %cst_117 = arith.constant dense<0.000000e+00> : vector<16x32xf32>
    %290 = tpu.matmul %288, %289, %cst_117 {dimension_numbers = #tpu.dot_dimension_numbers<[1], [0], [0], [1], [0, 0, 1, 1], [], []>} : vector<16x16xf32>, vector<16x32xf32>, vector<16x32xf32> -> vector<16x32xf32>
    %291 = tpu.concatenate %271, %290 in 0 : vector<16x32xf32>, vector<16x32xf32> -> vector<32x32xf32>
    %c1_118 = arith.constant 1 : index
    %c1_119 = arith.constant 1 : index
    %c0_120 = arith.constant 0 : index
    %c0_121 = arith.constant 0 : index
    %292 = vector.load %arg2[%c1_118, %c1_119, %c0_120, %c0_121] : memref<2x4x32x128xf32, #tpu.memory_space<vmem>>, vector<1x1x32x128xf32>
    %293 = vector.shape_cast %292 : vector<1x1x32x128xf32> to vector<32x128xf32>
    %c1_122 = arith.constant 1 : index
    %c1_123 = arith.constant 1 : index
    %c0_124 = arith.constant 0 : index
    %c0_125 = arith.constant 0 : index
    %294 = vector.load %arg3[%c1_122, %c1_123, %c0_124, %c0_125] : memref<2x4x128x96xf32, #tpu.memory_space<vmem>>, vector<1x1x128x96xf32>
    %295 = vector.shape_cast %294 : vector<1x1x128x96xf32> to vector<128x96xf32>
    %cst_126 = arith.constant dense<0.000000e+00> : vector<32x96xf32>
    %296 = tpu.matmul %293, %295, %cst_126 {dimension_numbers = #tpu.dot_dimension_numbers<[1], [0], [0], [1], [0, 0, 1, 1], [], []>} : vector<32x128xf32>, vector<128x96xf32>, vector<32x96xf32> -> vector<32x96xf32>
    %297 = vector.extract_strided_slice %296 {offsets = [0, 0], sizes = [32, 32], strides = [1, 1]} : vector<32x96xf32> to vector<32x32xf32>
    %298 = vector.extract_strided_slice %296 {offsets = [0, 32], sizes = [32, 32], strides = [1, 1]} : vector<32x96xf32> to vector<32x32xf32>
    %299 = vector.extract_strided_slice %296 {offsets = [0, 64], sizes = [32, 32], strides = [1, 1]} : vector<32x96xf32> to vector<32x32xf32>
    %300 = vector.extract_strided_slice %297 {offsets = [0, 0], sizes = [16, 32], strides = [1, 1]} : vector<32x32xf32> to vector<16x32xf32>
    %301 = vector.extract_strided_slice %298 {offsets = [0, 0], sizes = [16, 32], strides = [1, 1]} : vector<32x32xf32> to vector<16x32xf32>
    %302 = tpu.transpose %301, [1, 0] : vector<16x32xf32> -> vector<32x16xf32>
    %cst_127 = arith.constant dense<0.000000e+00> : vector<16x16xf32>
    %303 = tpu.matmul %300, %302, %cst_127 {dimension_numbers = #tpu.dot_dimension_numbers<[1], [0], [0], [1], [0, 0, 1, 1], [], []>} : vector<16x32xf32>, vector<32x16xf32>, vector<16x16xf32> -> vector<16x16xf32>
    %cst_128 = arith.constant 0.0883883461 : f32
    %304 = vector.broadcast %cst_128 : f32 to vector<16x16xf32>
    %305 = arith.mulf %303, %304 : vector<16x16xf32>
    %306 = arith.addf %305, %5 : vector<16x16xf32>
    %cst_129 = arith.constant dense<0xFF800000> : vector<16xf32>
    %307 = vector.multi_reduction <maximumf>, %306, %cst_129 [1] : vector<16x16xf32> to vector<16xf32>
    %308 = vector.shape_cast %307 : vector<16xf32> to vector<16x1xf32>
    %309 = vector.broadcast %308 : vector<16x1xf32> to vector<16x16xf32>
    %310 = arith.subf %306, %309 : vector<16x16xf32>
    %311 = math.exp %310 : vector<16x16xf32>
    %cst_130 = arith.constant dense<0.000000e+00> : vector<16xf32>
    %312 = vector.multi_reduction <add>, %311, %cst_130 [1] : vector<16x16xf32> to vector<16xf32>
    %313 = vector.shape_cast %312 : vector<16xf32> to vector<16x1xf32>
    %314 = tpu.reciprocal %313 {approx = true} : vector<16x1xf32> -> vector<16x1xf32>
    %315 = vector.broadcast %314 : vector<16x1xf32> to vector<16x16xf32>
    %316 = arith.mulf %311, %315 : vector<16x16xf32>
    %317 = vector.extract_strided_slice %299 {offsets = [0, 0], sizes = [16, 32], strides = [1, 1]} : vector<32x32xf32> to vector<16x32xf32>
    %cst_131 = arith.constant dense<0.000000e+00> : vector<16x32xf32>
    %318 = tpu.matmul %316, %317, %cst_131 {dimension_numbers = #tpu.dot_dimension_numbers<[1], [0], [0], [1], [0, 0, 1, 1], [], []>} : vector<16x16xf32>, vector<16x32xf32>, vector<16x32xf32> -> vector<16x32xf32>
    %319 = vector.extract_strided_slice %297 {offsets = [16, 0], sizes = [16, 32], strides = [1, 1]} : vector<32x32xf32> to vector<16x32xf32>
    %320 = vector.extract_strided_slice %298 {offsets = [16, 0], sizes = [16, 32], strides = [1, 1]} : vector<32x32xf32> to vector<16x32xf32>
    %321 = tpu.transpose %320, [1, 0] : vector<16x32xf32> -> vector<32x16xf32>
    %cst_132 = arith.constant dense<0.000000e+00> : vector<16x16xf32>
    %322 = tpu.matmul %319, %321, %cst_132 {dimension_numbers = #tpu.dot_dimension_numbers<[1], [0], [0], [1], [0, 0, 1, 1], [], []>} : vector<16x32xf32>, vector<32x16xf32>, vector<16x16xf32> -> vector<16x16xf32>
    %cst_133 = arith.constant 0.0883883461 : f32
    %323 = vector.broadcast %cst_133 : f32 to vector<16x16xf32>
    %324 = arith.mulf %322, %323 : vector<16x16xf32>
    %325 = arith.addf %324, %5 : vector<16x16xf32>
    %cst_134 = arith.constant dense<0xFF800000> : vector<16xf32>
    %326 = vector.multi_reduction <maximumf>, %325, %cst_134 [1] : vector<16x16xf32> to vector<16xf32>
    %327 = vector.shape_cast %326 : vector<16xf32> to vector<16x1xf32>
    %328 = vector.broadcast %327 : vector<16x1xf32> to vector<16x16xf32>
    %329 = arith.subf %325, %328 : vector<16x16xf32>
    %330 = math.exp %329 : vector<16x16xf32>
    %cst_135 = arith.constant dense<0.000000e+00> : vector<16xf32>
    %331 = vector.multi_reduction <add>, %330, %cst_135 [1] : vector<16x16xf32> to vector<16xf32>
    %332 = vector.shape_cast %331 : vector<16xf32> to vector<16x1xf32>
    %333 = tpu.reciprocal %332 {approx = true} : vector<16x1xf32> -> vector<16x1xf32>
    %334 = vector.broadcast %333 : vector<16x1xf32> to vector<16x16xf32>
    %335 = arith.mulf %330, %334 : vector<16x16xf32>
    %336 = vector.extract_strided_slice %299 {offsets = [16, 0], sizes = [16, 32], strides = [1, 1]} : vector<32x32xf32> to vector<16x32xf32>
    %cst_136 = arith.constant dense<0.000000e+00> : vector<16x32xf32>
    %337 = tpu.matmul %335, %336, %cst_136 {dimension_numbers = #tpu.dot_dimension_numbers<[1], [0], [0], [1], [0, 0, 1, 1], [], []>} : vector<16x16xf32>, vector<16x32xf32>, vector<16x32xf32> -> vector<16x32xf32>
    %338 = tpu.concatenate %318, %337 in 0 : vector<16x32xf32>, vector<16x32xf32> -> vector<32x32xf32>
    %c1_137 = arith.constant 1 : index
    %c2_138 = arith.constant 2 : index
    %c0_139 = arith.constant 0 : index
    %c0_140 = arith.constant 0 : index
    %339 = vector.load %arg2[%c1_137, %c2_138, %c0_139, %c0_140] : memref<2x4x32x128xf32, #tpu.memory_space<vmem>>, vector<1x1x32x128xf32>
    %340 = vector.shape_cast %339 : vector<1x1x32x128xf32> to vector<32x128xf32>
    %c1_141 = arith.constant 1 : index
    %c2_142 = arith.constant 2 : index
    %c0_143 = arith.constant 0 : index
    %c0_144 = arith.constant 0 : index
    %341 = vector.load %arg3[%c1_141, %c2_142, %c0_143, %c0_144] : memref<2x4x128x96xf32, #tpu.memory_space<vmem>>, vector<1x1x128x96xf32>
    %342 = vector.shape_cast %341 : vector<1x1x128x96xf32> to vector<128x96xf32>
    %cst_145 = arith.constant dense<0.000000e+00> : vector<32x96xf32>
    %343 = tpu.matmul %340, %342, %cst_145 {dimension_numbers = #tpu.dot_dimension_numbers<[1], [0], [0], [1], [0, 0, 1, 1], [], []>} : vector<32x128xf32>, vector<128x96xf32>, vector<32x96xf32> -> vector<32x96xf32>
    %344 = vector.extract_strided_slice %343 {offsets = [0, 0], sizes = [32, 32], strides = [1, 1]} : vector<32x96xf32> to vector<32x32xf32>
    %345 = vector.extract_strided_slice %343 {offsets = [0, 32], sizes = [32, 32], strides = [1, 1]} : vector<32x96xf32> to vector<32x32xf32>
    %346 = vector.extract_strided_slice %343 {offsets = [0, 64], sizes = [32, 32], strides = [1, 1]} : vector<32x96xf32> to vector<32x32xf32>
    %347 = vector.extract_strided_slice %344 {offsets = [0, 0], sizes = [16, 32], strides = [1, 1]} : vector<32x32xf32> to vector<16x32xf32>
    %348 = vector.extract_strided_slice %345 {offsets = [0, 0], sizes = [16, 32], strides = [1, 1]} : vector<32x32xf32> to vector<16x32xf32>
    %349 = tpu.transpose %348, [1, 0] : vector<16x32xf32> -> vector<32x16xf32>
    %cst_146 = arith.constant dense<0.000000e+00> : vector<16x16xf32>
    %350 = tpu.matmul %347, %349, %cst_146 {dimension_numbers = #tpu.dot_dimension_numbers<[1], [0], [0], [1], [0, 0, 1, 1], [], []>} : vector<16x32xf32>, vector<32x16xf32>, vector<16x16xf32> -> vector<16x16xf32>
    %cst_147 = arith.constant 0.0883883461 : f32
    %351 = vector.broadcast %cst_147 : f32 to vector<16x16xf32>
    %352 = arith.mulf %350, %351 : vector<16x16xf32>
    %353 = arith.addf %352, %5 : vector<16x16xf32>
    %cst_148 = arith.constant dense<0xFF800000> : vector<16xf32>
    %354 = vector.multi_reduction <maximumf>, %353, %cst_148 [1] : vector<16x16xf32> to vector<16xf32>
    %355 = vector.shape_cast %354 : vector<16xf32> to vector<16x1xf32>
    %356 = vector.broadcast %355 : vector<16x1xf32> to vector<16x16xf32>
    %357 = arith.subf %353, %356 : vector<16x16xf32>
    %358 = math.exp %357 : vector<16x16xf32>
    %cst_149 = arith.constant dense<0.000000e+00> : vector<16xf32>
    %359 = vector.multi_reduction <add>, %358, %cst_149 [1] : vector<16x16xf32> to vector<16xf32>
    %360 = vector.shape_cast %359 : vector<16xf32> to vector<16x1xf32>
    %361 = tpu.reciprocal %360 {approx = true} : vector<16x1xf32> -> vector<16x1xf32>
    %362 = vector.broadcast %361 : vector<16x1xf32> to vector<16x16xf32>
    %363 = arith.mulf %358, %362 : vector<16x16xf32>
    %364 = vector.extract_strided_slice %346 {offsets = [0, 0], sizes = [16, 32], strides = [1, 1]} : vector<32x32xf32> to vector<16x32xf32>
    %cst_150 = arith.constant dense<0.000000e+00> : vector<16x32xf32>
    %365 = tpu.matmul %363, %364, %cst_150 {dimension_numbers = #tpu.dot_dimension_numbers<[1], [0], [0], [1], [0, 0, 1, 1], [], []>} : vector<16x16xf32>, vector<16x32xf32>, vector<16x32xf32> -> vector<16x32xf32>
    %366 = vector.extract_strided_slice %344 {offsets = [16, 0], sizes = [16, 32], strides = [1, 1]} : vector<32x32xf32> to vector<16x32xf32>
    %367 = vector.extract_strided_slice %345 {offsets = [16, 0], sizes = [16, 32], strides = [1, 1]} : vector<32x32xf32> to vector<16x32xf32>
    %368 = tpu.transpose %367, [1, 0] : vector<16x32xf32> -> vector<32x16xf32>
    %cst_151 = arith.constant dense<0.000000e+00> : vector<16x16xf32>
    %369 = tpu.matmul %366, %368, %cst_151 {dimension_numbers = #tpu.dot_dimension_numbers<[1], [0], [0], [1], [0, 0, 1, 1], [], []>} : vector<16x32xf32>, vector<32x16xf32>, vector<16x16xf32> -> vector<16x16xf32>
    %cst_152 = arith.constant 0.0883883461 : f32
    %370 = vector.broadcast %cst_152 : f32 to vector<16x16xf32>
    %371 = arith.mulf %369, %370 : vector<16x16xf32>
    %372 = arith.addf %371, %5 : vector<16x16xf32>
    %cst_153 = arith.constant dense<0xFF800000> : vector<16xf32>
    %373 = vector.multi_reduction <maximumf>, %372, %cst_153 [1] : vector<16x16xf32> to vector<16xf32>
    %374 = vector.shape_cast %373 : vector<16xf32> to vector<16x1xf32>
    %375 = vector.broadcast %374 : vector<16x1xf32> to vector<16x16xf32>
    %376 = arith.subf %372, %375 : vector<16x16xf32>
    %377 = math.exp %376 : vector<16x16xf32>
    %cst_154 = arith.constant dense<0.000000e+00> : vector<16xf32>
    %378 = vector.multi_reduction <add>, %377, %cst_154 [1] : vector<16x16xf32> to vector<16xf32>
    %379 = vector.shape_cast %378 : vector<16xf32> to vector<16x1xf32>
    %380 = tpu.reciprocal %379 {approx = true} : vector<16x1xf32> -> vector<16x1xf32>
    %381 = vector.broadcast %380 : vector<16x1xf32> to vector<16x16xf32>
    %382 = arith.mulf %377, %381 : vector<16x16xf32>
    %383 = vector.extract_strided_slice %346 {offsets = [16, 0], sizes = [16, 32], strides = [1, 1]} : vector<32x32xf32> to vector<16x32xf32>
    %cst_155 = arith.constant dense<0.000000e+00> : vector<16x32xf32>
    %384 = tpu.matmul %382, %383, %cst_155 {dimension_numbers = #tpu.dot_dimension_numbers<[1], [0], [0], [1], [0, 0, 1, 1], [], []>} : vector<16x16xf32>, vector<16x32xf32>, vector<16x32xf32> -> vector<16x32xf32>
    %385 = tpu.concatenate %365, %384 in 0 : vector<16x32xf32>, vector<16x32xf32> -> vector<32x32xf32>
    %c1_156 = arith.constant 1 : index
    %c3_157 = arith.constant 3 : index
    %c0_158 = arith.constant 0 : index
    %c0_159 = arith.constant 0 : index
    %386 = vector.load %arg2[%c1_156, %c3_157, %c0_158, %c0_159] : memref<2x4x32x128xf32, #tpu.memory_space<vmem>>, vector<1x1x32x128xf32>
    %387 = vector.shape_cast %386 : vector<1x1x32x128xf32> to vector<32x128xf32>
    %c1_160 = arith.constant 1 : index
    %c3_161 = arith.constant 3 : index
    %c0_162 = arith.constant 0 : index
    %c0_163 = arith.constant 0 : index
    %388 = vector.load %arg3[%c1_160, %c3_161, %c0_162, %c0_163] : memref<2x4x128x96xf32, #tpu.memory_space<vmem>>, vector<1x1x128x96xf32>
    %389 = vector.shape_cast %388 : vector<1x1x128x96xf32> to vector<128x96xf32>
    %cst_164 = arith.constant dense<0.000000e+00> : vector<32x96xf32>
    %390 = tpu.matmul %387, %389, %cst_164 {dimension_numbers = #tpu.dot_dimension_numbers<[1], [0], [0], [1], [0, 0, 1, 1], [], []>} : vector<32x128xf32>, vector<128x96xf32>, vector<32x96xf32> -> vector<32x96xf32>
    %391 = vector.extract_strided_slice %390 {offsets = [0, 0], sizes = [32, 32], strides = [1, 1]} : vector<32x96xf32> to vector<32x32xf32>
    %392 = vector.extract_strided_slice %390 {offsets = [0, 32], sizes = [32, 32], strides = [1, 1]} : vector<32x96xf32> to vector<32x32xf32>
    %393 = vector.extract_strided_slice %390 {offsets = [0, 64], sizes = [32, 32], strides = [1, 1]} : vector<32x96xf32> to vector<32x32xf32>
    %394 = vector.extract_strided_slice %391 {offsets = [0, 0], sizes = [16, 32], strides = [1, 1]} : vector<32x32xf32> to vector<16x32xf32>
    %395 = vector.extract_strided_slice %392 {offsets = [0, 0], sizes = [16, 32], strides = [1, 1]} : vector<32x32xf32> to vector<16x32xf32>
    %396 = tpu.transpose %395, [1, 0] : vector<16x32xf32> -> vector<32x16xf32>
    %cst_165 = arith.constant dense<0.000000e+00> : vector<16x16xf32>
    %397 = tpu.matmul %394, %396, %cst_165 {dimension_numbers = #tpu.dot_dimension_numbers<[1], [0], [0], [1], [0, 0, 1, 1], [], []>} : vector<16x32xf32>, vector<32x16xf32>, vector<16x16xf32> -> vector<16x16xf32>
    %cst_166 = arith.constant 0.0883883461 : f32
    %398 = vector.broadcast %cst_166 : f32 to vector<16x16xf32>
    %399 = arith.mulf %397, %398 : vector<16x16xf32>
    %400 = arith.addf %399, %5 : vector<16x16xf32>
    %cst_167 = arith.constant dense<0xFF800000> : vector<16xf32>
    %401 = vector.multi_reduction <maximumf>, %400, %cst_167 [1] : vector<16x16xf32> to vector<16xf32>
    %402 = vector.shape_cast %401 : vector<16xf32> to vector<16x1xf32>
    %403 = vector.broadcast %402 : vector<16x1xf32> to vector<16x16xf32>
    %404 = arith.subf %400, %403 : vector<16x16xf32>
    %405 = math.exp %404 : vector<16x16xf32>
    %cst_168 = arith.constant dense<0.000000e+00> : vector<16xf32>
    %406 = vector.multi_reduction <add>, %405, %cst_168 [1] : vector<16x16xf32> to vector<16xf32>
    %407 = vector.shape_cast %406 : vector<16xf32> to vector<16x1xf32>
    %408 = tpu.reciprocal %407 {approx = true} : vector<16x1xf32> -> vector<16x1xf32>
    %409 = vector.broadcast %408 : vector<16x1xf32> to vector<16x16xf32>
    %410 = arith.mulf %405, %409 : vector<16x16xf32>
    %411 = vector.extract_strided_slice %393 {offsets = [0, 0], sizes = [16, 32], strides = [1, 1]} : vector<32x32xf32> to vector<16x32xf32>
    %cst_169 = arith.constant dense<0.000000e+00> : vector<16x32xf32>
    %412 = tpu.matmul %410, %411, %cst_169 {dimension_numbers = #tpu.dot_dimension_numbers<[1], [0], [0], [1], [0, 0, 1, 1], [], []>} : vector<16x16xf32>, vector<16x32xf32>, vector<16x32xf32> -> vector<16x32xf32>
    %413 = vector.extract_strided_slice %391 {offsets = [16, 0], sizes = [16, 32], strides = [1, 1]} : vector<32x32xf32> to vector<16x32xf32>
    %414 = vector.extract_strided_slice %392 {offsets = [16, 0], sizes = [16, 32], strides = [1, 1]} : vector<32x32xf32> to vector<16x32xf32>
    %415 = tpu.transpose %414, [1, 0] : vector<16x32xf32> -> vector<32x16xf32>
    %cst_170 = arith.constant dense<0.000000e+00> : vector<16x16xf32>
    %416 = tpu.matmul %413, %415, %cst_170 {dimension_numbers = #tpu.dot_dimension_numbers<[1], [0], [0], [1], [0, 0, 1, 1], [], []>} : vector<16x32xf32>, vector<32x16xf32>, vector<16x16xf32> -> vector<16x16xf32>
    %cst_171 = arith.constant 0.0883883461 : f32
    %417 = vector.broadcast %cst_171 : f32 to vector<16x16xf32>
    %418 = arith.mulf %416, %417 : vector<16x16xf32>
    %419 = arith.addf %418, %5 : vector<16x16xf32>
    %cst_172 = arith.constant dense<0xFF800000> : vector<16xf32>
    %420 = vector.multi_reduction <maximumf>, %419, %cst_172 [1] : vector<16x16xf32> to vector<16xf32>
    %421 = vector.shape_cast %420 : vector<16xf32> to vector<16x1xf32>
    %422 = vector.broadcast %421 : vector<16x1xf32> to vector<16x16xf32>
    %423 = arith.subf %419, %422 : vector<16x16xf32>
    %424 = math.exp %423 : vector<16x16xf32>
    %cst_173 = arith.constant dense<0.000000e+00> : vector<16xf32>
    %425 = vector.multi_reduction <add>, %424, %cst_173 [1] : vector<16x16xf32> to vector<16xf32>
    %426 = vector.shape_cast %425 : vector<16xf32> to vector<16x1xf32>
    %427 = tpu.reciprocal %426 {approx = true} : vector<16x1xf32> -> vector<16x1xf32>
    %428 = vector.broadcast %427 : vector<16x1xf32> to vector<16x16xf32>
    %429 = arith.mulf %424, %428 : vector<16x16xf32>
    %430 = vector.extract_strided_slice %393 {offsets = [16, 0], sizes = [16, 32], strides = [1, 1]} : vector<32x32xf32> to vector<16x32xf32>
    %cst_174 = arith.constant dense<0.000000e+00> : vector<16x32xf32>
    %431 = tpu.matmul %429, %430, %cst_174 {dimension_numbers = #tpu.dot_dimension_numbers<[1], [0], [0], [1], [0, 0, 1, 1], [], []>} : vector<16x16xf32>, vector<16x32xf32>, vector<16x32xf32> -> vector<16x32xf32>
    %432 = tpu.concatenate %412, %431 in 0 : vector<16x32xf32>, vector<16x32xf32> -> vector<32x32xf32>
    %433 = tpu.concatenate %291, %338, %385, %432 in 1 : vector<32x32xf32>, vector<32x32xf32>, vector<32x32xf32>, vector<32x32xf32> -> vector<32x128xf32>
    %c1_175 = arith.constant 1 : index
    %c0_176 = arith.constant 0 : index
    %c0_177 = arith.constant 0 : index
    %434 = vector.load %arg7[%c1_175, %c0_176, %c0_177] : memref<2x4x128xf32, #tpu.memory_space<vmem>>, vector<1x4x128xf32>
    %435 = vector.shape_cast %434 : vector<1x4x128xf32> to vector<4x128xf32>
    %436 = vector.extract_strided_slice %435 {offsets = [0, 0], sizes = [1, 128], strides = [1, 1]} : vector<4x128xf32> to vector<1x128xf32>
    %437 = vector.extract_strided_slice %435 {offsets = [1, 0], sizes = [1, 128], strides = [1, 1]} : vector<4x128xf32> to vector<1x128xf32>
    %438 = vector.extract_strided_slice %435 {offsets = [2, 0], sizes = [1, 128], strides = [1, 1]} : vector<4x128xf32> to vector<1x128xf32>
    %439 = vector.extract_strided_slice %435 {offsets = [3, 0], sizes = [1, 128], strides = [1, 1]} : vector<4x128xf32> to vector<1x128xf32>
    %c1_178 = arith.constant 1 : index
    %c0_179 = arith.constant 0 : index
    %c0_180 = arith.constant 0 : index
    %440 = vector.load %arg4[%c1_178, %c0_179, %c0_180] : memref<2x128x128xf32, #tpu.memory_space<vmem>>, vector<1x128x128xf32>
    %441 = vector.shape_cast %440 : vector<1x128x128xf32> to vector<128x128xf32>
    %cst_181 = arith.constant dense<0.000000e+00> : vector<32x128xf32>
    %442 = tpu.matmul %433, %441, %cst_181 {dimension_numbers = #tpu.dot_dimension_numbers<[1], [0], [0], [1], [0, 0, 1, 1], [], []>} : vector<32x128xf32>, vector<128x128xf32>, vector<32x128xf32> -> vector<32x128xf32>
    %443 = arith.addf %244, %442 : vector<32x128xf32>
    %444 = vector.broadcast %436 : vector<1x128xf32> to vector<32x128xf32>
    %445 = arith.addf %443, %444 : vector<32x128xf32>
    %cst_182 = arith.constant dense<0.000000e+00> : vector<32xf32>
    %446 = vector.multi_reduction <add>, %445, %cst_182 [1] : vector<32x128xf32> to vector<32xf32>
    %447 = vector.shape_cast %446 : vector<32xf32> to vector<32x1xf32>
    %cst_183 = arith.constant 1.280000e+02 : f32
    %448 = vector.broadcast %cst_183 : f32 to vector<32x1xf32>
    %449 = arith.divf %447, %448 : vector<32x1xf32>
    %450 = vector.broadcast %449 : vector<32x1xf32> to vector<32x128xf32>
    %451 = arith.subf %445, %450 : vector<32x128xf32>
    %452 = arith.mulf %451, %451 : vector<32x128xf32>
    %cst_184 = arith.constant dense<0.000000e+00> : vector<32xf32>
    %453 = vector.multi_reduction <add>, %452, %cst_184 [1] : vector<32x128xf32> to vector<32xf32>
    %454 = vector.shape_cast %453 : vector<32xf32> to vector<32x1xf32>
    %cst_185 = arith.constant 1.280000e+02 : f32
    %455 = vector.broadcast %cst_185 : f32 to vector<32x1xf32>
    %456 = arith.divf %454, %455 : vector<32x1xf32>
    %457 = vector.broadcast %449 : vector<32x1xf32> to vector<32x128xf32>
    %458 = arith.subf %445, %457 : vector<32x128xf32>
    %cst_186 = arith.constant 9.99999974E-6 : f32
    %459 = vector.broadcast %cst_186 : f32 to vector<32x1xf32>
    %460 = arith.addf %456, %459 : vector<32x1xf32>
    %461 = math.rsqrt %460 : vector<32x1xf32>
    %462 = vector.broadcast %461 : vector<32x1xf32> to vector<32x128xf32>
    %463 = arith.mulf %458, %462 : vector<32x128xf32>
    %464 = vector.broadcast %437 : vector<1x128xf32> to vector<32x128xf32>
    %465 = arith.mulf %463, %464 : vector<32x128xf32>
    %466 = vector.broadcast %438 : vector<1x128xf32> to vector<32x128xf32>
    %467 = arith.addf %465, %466 : vector<32x128xf32>
    %c1_187 = arith.constant 1 : index
    %c0_188 = arith.constant 0 : index
    %c0_189 = arith.constant 0 : index
    %468 = vector.load %arg5[%c1_187, %c0_188, %c0_189] : memref<2x128x512xf32, #tpu.memory_space<vmem>>, vector<1x128x512xf32>
    %469 = vector.shape_cast %468 : vector<1x128x512xf32> to vector<128x512xf32>
    %cst_190 = arith.constant dense<0.000000e+00> : vector<32x512xf32>
    %470 = tpu.matmul %467, %469, %cst_190 {dimension_numbers = #tpu.dot_dimension_numbers<[1], [0], [0], [1], [0, 0, 1, 1], [], []>} : vector<32x128xf32>, vector<128x512xf32>, vector<32x512xf32> -> vector<32x512xf32>
    %c1_191 = arith.constant 1 : index
    %c0_192 = arith.constant 0 : index
    %c0_193 = arith.constant 0 : index
    %471 = vector.load %arg8[%c1_191, %c0_192, %c0_193] : memref<2x1x512xf32, #tpu.memory_space<vmem>>, vector<1x1x512xf32>
    %472 = vector.shape_cast %471 : vector<1x1x512xf32> to vector<1x512xf32>
    %473 = vector.broadcast %472 : vector<1x512xf32> to vector<32x512xf32>
    %474 = arith.addf %470, %473 : vector<32x512xf32>
    %cst_194 = arith.constant 0.000000e+00 : f32
    %475 = vector.broadcast %cst_194 : f32 to vector<32x512xf32>
    %476 = arith.maximumf %474, %475 : vector<32x512xf32>
    %c1_195 = arith.constant 1 : index
    %c0_196 = arith.constant 0 : index
    %c0_197 = arith.constant 0 : index
    %477 = vector.load %arg6[%c1_195, %c0_196, %c0_197] : memref<2x512x128xf32, #tpu.memory_space<vmem>>, vector<1x512x128xf32>
    %478 = vector.shape_cast %477 : vector<1x512x128xf32> to vector<512x128xf32>
    %cst_198 = arith.constant dense<0.000000e+00> : vector<32x128xf32>
    %479 = tpu.matmul %476, %478, %cst_198 {dimension_numbers = #tpu.dot_dimension_numbers<[1], [0], [0], [1], [0, 0, 1, 1], [], []>} : vector<32x512xf32>, vector<512x128xf32>, vector<32x128xf32> -> vector<32x128xf32>
    %480 = vector.broadcast %439 : vector<1x128xf32> to vector<32x128xf32>
    %481 = arith.addf %479, %480 : vector<32x128xf32>
    %482 = arith.addf %445, %481 : vector<32x128xf32>
    %c0_199 = arith.constant 0 : index
    %c0_200 = arith.constant 0 : index
    %483 = vector.load %arg10[%c0_199, %c0_200] : memref<4x128xf32, #tpu.memory_space<vmem>>, vector<4x128xf32>
    %484 = vector.extract_strided_slice %483 {offsets = [0, 0], sizes = [1, 128], strides = [1, 1]} : vector<4x128xf32> to vector<1x128xf32>
    %485 = vector.extract_strided_slice %483 {offsets = [1, 0], sizes = [1, 128], strides = [1, 1]} : vector<4x128xf32> to vector<1x128xf32>
    %486 = vector.extract_strided_slice %483 {offsets = [2, 0], sizes = [1, 128], strides = [1, 1]} : vector<4x128xf32> to vector<1x128xf32>
    %cst_201 = arith.constant dense<0.000000e+00> : vector<32xf32>
    %487 = vector.multi_reduction <add>, %482, %cst_201 [1] : vector<32x128xf32> to vector<32xf32>
    %488 = vector.shape_cast %487 : vector<32xf32> to vector<32x1xf32>
    %cst_202 = arith.constant 1.280000e+02 : f32
    %489 = vector.broadcast %cst_202 : f32 to vector<32x1xf32>
    %490 = arith.divf %488, %489 : vector<32x1xf32>
    %491 = vector.broadcast %490 : vector<32x1xf32> to vector<32x128xf32>
    %492 = arith.subf %482, %491 : vector<32x128xf32>
    %493 = arith.mulf %492, %492 : vector<32x128xf32>
    %cst_203 = arith.constant dense<0.000000e+00> : vector<32xf32>
    %494 = vector.multi_reduction <add>, %493, %cst_203 [1] : vector<32x128xf32> to vector<32xf32>
    %495 = vector.shape_cast %494 : vector<32xf32> to vector<32x1xf32>
    %cst_204 = arith.constant 1.280000e+02 : f32
    %496 = vector.broadcast %cst_204 : f32 to vector<32x1xf32>
    %497 = arith.divf %495, %496 : vector<32x1xf32>
    %498 = vector.broadcast %490 : vector<32x1xf32> to vector<32x128xf32>
    %499 = arith.subf %482, %498 : vector<32x128xf32>
    %cst_205 = arith.constant 9.99999974E-6 : f32
    %500 = vector.broadcast %cst_205 : f32 to vector<32x1xf32>
    %501 = arith.addf %497, %500 : vector<32x1xf32>
    %502 = math.rsqrt %501 : vector<32x1xf32>
    %503 = vector.broadcast %502 : vector<32x1xf32> to vector<32x128xf32>
    %504 = arith.mulf %499, %503 : vector<32x128xf32>
    %505 = vector.broadcast %484 : vector<1x128xf32> to vector<32x128xf32>
    %506 = arith.mulf %504, %505 : vector<32x128xf32>
    %507 = vector.broadcast %485 : vector<1x128xf32> to vector<32x128xf32>
    %508 = arith.addf %506, %507 : vector<32x128xf32>
    %c0_206 = arith.constant 0 : index
    %c0_207 = arith.constant 0 : index
    %509 = vector.load %arg9[%c0_206, %c0_207] : memref<128x128xf32, #tpu.memory_space<vmem>>, vector<128x128xf32>
    %cst_208 = arith.constant dense<0.000000e+00> : vector<32x128xf32>
    %510 = tpu.matmul %508, %509, %cst_208 {dimension_numbers = #tpu.dot_dimension_numbers<[1], [0], [0], [1], [0, 0, 1, 1], [], []>} : vector<32x128xf32>, vector<128x128xf32>, vector<32x128xf32> -> vector<32x128xf32>
    %511 = vector.broadcast %486 : vector<1x128xf32> to vector<32x128xf32>
    %512 = arith.addf %510, %511 : vector<32x128xf32>
    %c0_209 = arith.constant 0 : index
    %c0_210 = arith.constant 0 : index
    %513 = vector.load %arg11[%c0_209, %c0_210] : memref<32x128xf32, #tpu.memory_space<vmem>>, vector<32x128xf32>
    tpu.vector_store %arg11[%c0_209, %c0_210], %512 {strides = array<i32>} : memref<32x128xf32, #tpu.memory_space<vmem>>, vector<32x128xf32>,
    return
  }
  func.func @transform_0(%arg0: i32) -> (i32, i32) {
    %c0_i32 = arith.constant 0 : i32
    %c0_i32_0 = arith.constant 0 : i32
    %c0_i32_1 = arith.constant 0 : i32
    return %c0_i32, %c0_i32_0 : i32, i32
  }
  func.func @transform_1(%arg0: i32) -> (i32, i32, i32, i32) {
    %c0_i32 = arith.constant 0 : i32
    %c0_i32_0 = arith.constant 0 : i32
    %c0_i32_1 = arith.constant 0 : i32
    %c0_i32_2 = arith.constant 0 : i32
    %c0_i32_3 = arith.constant 0 : i32
    return %c0_i32, %c0_i32_0, %c0_i32_1, %c0_i32_2 : i32, i32, i32, i32
  }
  func.func @transform_2(%arg0: i32) -> (i32, i32, i32, i32) {
    %c0_i32 = arith.constant 0 : i32
    %c0_i32_0 = arith.constant 0 : i32
    %c0_i32_1 = arith.constant 0 : i32
    %c0_i32_2 = arith.constant 0 : i32
    %c0_i32_3 = arith.constant 0 : i32
    return %c0_i32, %c0_i32_0, %c0_i32_1, %c0_i32_2 : i32, i32, i32, i32
  }
  func.func @transform_3(%arg0: i32) -> (i32, i32, i32) {
    %c0_i32 = arith.constant 0 : i32
    %c0_i32_0 = arith.constant 0 : i32
    %c0_i32_1 = arith.constant 0 : i32
    %c0_i32_2 = arith.constant 0 : i32
    return %c0_i32, %c0_i32_0, %c0_i32_1 : i32, i32, i32
  }
  func.func @transform_4(%arg0: i32) -> (i32, i32, i32) {
    %c0_i32 = arith.constant 0 : i32
    %c0_i32_0 = arith.constant 0 : i32
    %c0_i32_1 = arith.constant 0 : i32
    %c0_i32_2 = arith.constant 0 : i32
    return %c0_i32, %c0_i32_0, %c0_i32_1 : i32, i32, i32
  }
  func.func @transform_5(%arg0: i32) -> (i32, i32, i32) {
    %c0_i32 = arith.constant 0 : i32
    %c0_i32_0 = arith.constant 0 : i32
    %c0_i32_1 = arith.constant 0 : i32
    %c0_i32_2 = arith.constant 0 : i32
    return %c0_i32, %c0_i32_0, %c0_i32_1 : i32, i32, i32
  }
  func.func @transform_6(%arg0: i32) -> (i32, i32, i32) {
    %c0_i32 = arith.constant 0 : i32
    %c0_i32_0 = arith.constant 0 : i32
    %c0_i32_1 = arith.constant 0 : i32
    %c0_i32_2 = arith.constant 0 : i32
    return %c0_i32, %c0_i32_0, %c0_i32_1 : i32, i32, i32
  }
  func.func @transform_7(%arg0: i32) -> (i32, i32, i32) {
    %c0_i32 = arith.constant 0 : i32
    %c0_i32_0 = arith.constant 0 : i32
    %c0_i32_1 = arith.constant 0 : i32
    %c0_i32_2 = arith.constant 0 : i32
    return %c0_i32, %c0_i32_0, %c0_i32_1 : i32, i32, i32
  }
  func.func @transform_8(%arg0: i32) -> (i32, i32) {
    %c0_i32 = arith.constant 0 : i32
    %c0_i32_0 = arith.constant 0 : i32
    %c0_i32_1 = arith.constant 0 : i32
    return %c0_i32, %c0_i32_0 : i32, i32
  }
  func.func @transform_9(%arg0: i32) -> (i32, i32) {
    %c0_i32 = arith.constant 0 : i32
    %c0_i32_0 = arith.constant 0 : i32
    %c0_i32_1 = arith.constant 0 : i32
    return %c0_i32, %c0_i32_0 : i32, i32
  }
  func.func @transform_10(%arg0: i32) -> (i32, i32) {
    %c0_i32 = arith.constant 0 : i32
    %c0_i32_0 = arith.constant 0 : i32
    %c0_i32_1 = arith.constant 0 : i32
    return %c0_i32, %c0_i32_0 : i32, i32
  }
}

</mosaic_0001>

<llo_original>
// kernel: tpu_custom_call.1
$region0: #{tpu_custom_call.1}
  #allocation0 [shape = 'u32[]', space=smem, size = 0x4, offset = 0x4, fixed_abs, tag = 'smem constant byte address 0x4 - core index']
  #allocation1 [shape = 'u32[144,128]{1,0:T(1,128)}', space=vmem, size = 0x12000, scoped, tag = 'internal scratch']
  %s0 = inlined_call_operand.vmem [shape: f32[32,128], index: 0, kind: input, shape index: {}]
  %s1 = inlined_call_operand.vmem [shape: f32[2,4,32,128], index: 1, kind: input, shape index: {}]
  %s2 = inlined_call_operand.vmem [shape: f32[2,4,128,96], index: 2, kind: input, shape index: {}]
  %s3 = inlined_call_operand.vmem [shape: f32[2,128,128], index: 3, kind: input, shape index: {}]
  %s4 = inlined_call_operand.vmem [shape: f32[2,128,512], index: 4, kind: input, shape index: {}]
  %s5 = inlined_call_operand.hbm [shape: f32[2,512,128], index: 5, kind: input, shape index: {}]
  %s6 = inlined_call_operand.vmem [shape: f32[2,4,128], index: 6, kind: input, shape index: {}]
  %s7 = inlined_call_operand.vmem [shape: f32[2,1,512], index: 7, kind: input, shape index: {}]
  %s8 = inlined_call_operand.vmem [shape: f32[128,128], index: 8, kind: input, shape index: {}]
  %s9 = inlined_call_operand.vmem [shape: f32[4,128], index: 9, kind: input, shape index: {}]
  %s10 = inlined_call_operand.hbm [shape: f32[32,128], index: 10, kind: output, shape index: {}]
  %s11 = sld [smem:[#allocation0]]
  $region54: #{tpu_custom_call.1} parent=0
    _
  %s13 = ssub.s32 1, %s11
  %s14 = scalar_select 0, %s13, %s11
  $region1: #{tpu_custom_call.1} parent=0
    #allocation2 [shape = 'u8[524288]{0}', space=vmem, size = 0x80000, scoped, tag = 'input window, operand 5, single buffered']
    #allocation3 [shape = 's32[1]{0}', space=sflag, size = 0x4, scoped, tag = 'scoped memory for tpu_custom_call.1']
    #allocation4 [shape = 's32[1]{0}', space=sflag, size = 0x4, scoped, tag = 'scoped memory for tpu_custom_call.1']
    #allocation5 [shape = 'u8[16384]{0}', space=vmem, size = 0x4000, scoped, tag = 'output window, operand 0, single buffered']
    %15 = vsyncpa [#allocation3], 0
    %16 = vsyncpa [#allocation4], 0
    // Predicated region
    $region2: #{tpu_custom_call.1} parent=1 // pred_check
      _
    $region3: #{tpu_custom_call.1} parent=1 // pred_check_branch
      %18 = sbr.rel (0) target = $region5
    $region4: #{tpu_custom_call.1} parent=1 // pred_region
      _
    $region5: #{tpu_custom_call.1} parent=1 // pred_fallthru
      _
    // Predicated region
    $region6: #{tpu_custom_call.1} parent=1 // pred_check
      _
    $region7: #{tpu_custom_call.1} parent=1 // pred_check_branch
      %20 = sbr.rel (0) target = $region9
    $region8: #{tpu_custom_call.1} parent=1 // pred_region
      _
    $region9: #{tpu_custom_call.1} parent=1 // pred_fallthru
      _
    // Predicated region
    $region10: #{tpu_custom_call.1} parent=1 // pred_check
      _
    $region11: #{tpu_custom_call.1} parent=1 // pred_check_branch
      %22 = sbr.rel (0) target = $region13
    $region12: #{tpu_custom_call.1} parent=1 // pred_region
      _
    $region13: #{tpu_custom_call.1} parent=1 // pred_fallthru
      _
    // Predicated region
    $region14: #{tpu_custom_call.1} parent=1 // pred_check
      _
    $region15: #{tpu_custom_call.1} parent=1 // pred_check_branch
      %24 = sbr.rel (0) target = $region17
    $region16: #{tpu_custom_call.1} parent=1 // pred_region
      _
    $region17: #{tpu_custom_call.1} parent=1 // pred_fallthru
      _
    // Predicated region
    $region18: #{tpu_custom_call.1} parent=1 // pred_check
      _
    $region19: #{tpu_custom_call.1} parent=1 // pred_check_branch
      %26 = sbr.rel (0) target = $region21
    $region20: #{tpu_custom_call.1} parent=1 // pred_region
      _
    $region21: #{tpu_custom_call.1} parent=1 // pred_fallthru
      _
    // Predicated region
    $region22: #{tpu_custom_call.1} parent=1 // pred_check
      _
    $region23: #{tpu_custom_call.1} parent=1 // pred_check_branch
      %28 = sbr.rel (0) target = $region25
    $region24: #{tpu_custom_call.1} parent=1 // pred_region
      %s30 = ssub.s32 16384, 16384
      %31 = vsyncadd [#allocation3], %s30
      %s32 = sshll.u32 [#allocation2], 4
      %s33 = int_to_ptr.vmem [resolvable:$true] %s32
      %38 = dma.hbm_to_vmem [thread:$0]  %s5, 16384, %s33, [#allocation3], 128, 128, 8
    $region25: #{tpu_custom_call.1} parent=1 // pred_fallthru
      _
    // Predicated region
    $region26: #{tpu_custom_call.1} parent=1 // pred_check
      _
    $region27: #{tpu_custom_call.1} parent=1 // pred_check_branch
      %40 = sbr.rel (0) target = $region29
    $region28: #{tpu_custom_call.1} parent=1 // pred_region
      _
    $region29: #{tpu_custom_call.1} parent=1 // pred_fallthru
      _
    // Predicated region
    $region30: #{tpu_custom_call.1} parent=1 // pred_check
      _
    $region31: #{tpu_custom_call.1} parent=1 // pred_check_branch
      %42 = sbr.rel (0) target = $region33
    $region32: #{tpu_custom_call.1} parent=1 // pred_region
      _
    $region33: #{tpu_custom_call.1} parent=1 // pred_fallthru
      _
    // Predicated region
    $region34: #{tpu_custom_call.1} parent=1 // pred_check
      _
    $region35: #{tpu_custom_call.1} parent=1 // pred_check_branch
      %44 = sbr.rel (0) target = $region37
    $region36: #{tpu_custom_call.1} parent=1 // pred_region
      _
    $region37: #{tpu_custom_call.1} parent=1 // pred_fallthru
      _
    // Predicated region
    $region38: #{tpu_custom_call.1} parent=1 // pred_check
      _
    $region39: #{tpu_custom_call.1} parent=1 // pred_check_branch
      %46 = sbr.rel (0) target = $region41
    $region40: #{tpu_custom_call.1} parent=1 // pred_region
      _
    $region41: #{tpu_custom_call.1} parent=1 // pred_fallthru
      _
    // Predicated region
    $region42: #{tpu_custom_call.1} parent=1 // pred_check
      _
    $region43: #{tpu_custom_call.1} parent=1 // pred_check_branch
      %48 = sbr.rel (0) target = $region45
    $region44: #{tpu_custom_call.1} parent=1 // pred_region
      %49 = dma.done [#allocation3], 16384
    $region45: #{tpu_custom_call.1} parent=1 // pred_fallthru
      _
    %v50 = vlaneseq
    %v51 = vshrl.u32 %v50, 7
    %v52 = vadd.s32 %v51, 8
    %v53 = vlaneseq
    %v54 = vand.u32 %v53, 127
    %vm55 = vcmp.le.s32.totalorder %v54, %v51
    %vm56 = vcmp.le.s32.totalorder %v54, %v52
    %v57 = vsel %vm55, 0.0, -1e+30
    %v58 = vsel %vm56, 0.0, -1e+30
    %v59 = vld [vmem:[%s0] sm:$0xff]
    %v60 = vld [vmem:[%s0 + $0x8] sm:$0xff]
    %v61 = vld [vmem:[%s0 + $0x10] sm:$0xff]
    %v62 = vld [vmem:[%s0 + $0x18] sm:$0xff]
    %v63 = vld [vmem:[%s1] sm:$0xff]
    %v64 = vld [vmem:[%s1 + $0x8] sm:$0xff]
    %v65 = vld [vmem:[%s1 + $0x10] sm:$0xff]
    %v66 = vld [vmem:[%s1 + $0x18] sm:$0xff]
    %v67 = vld [vmem:[%s2] sm:$0xff]
    %v68 = vld [vmem:[%s2 + $0x8] sm:$0xff]
    %v69 = vld [vmem:[%s2 + $0x10] sm:$0xff]
    %v70 = vld [vmem:[%s2 + $0x18] sm:$0xff]
    %v71 = vld [vmem:[%s2 + $0x20] sm:$0xff]
    %v72 = vld [vmem:[%s2 + $0x28] sm:$0xff]
    %v73 = vld [vmem:[%s2 + $0x30] sm:$0xff]
    %v74 = vld [vmem:[%s2 + $0x38] sm:$0xff]
    %v75 = vld [vmem:[%s2 + $0x40] sm:$0xff]
    %v76 = vld [vmem:[%s2 + $0x48] sm:$0xff]
    %v77 = vld [vmem:[%s2 + $0x50] sm:$0xff]
    %v78 = vld [vmem:[%s2 + $0x58] sm:$0xff]
    %v79 = vld [vmem:[%s2 + $0x60] sm:$0xff]
    %v80 = vld [vmem:[%s2 + $0x68] sm:$0xff]
    %v81 = vld [vmem:[%s2 + $0x70] sm:$0xff]
    %v82 = vld [vmem:[%s2 + $0x78] sm:$0xff]
    %83 = vmatprep.subr.mxu0 0.0
    %84 = vmatpush1.msra.mxu0 %v82
    %85 = vmatprep.subr.mxu0 0.0
    %86 = vmatpush1.msra.mxu0 %v81
    %87 = vmatprep.subr.mxu0 0.0
    %88 = vmatpush1.msra.mxu0 %v80
    %89 = vmatprep.subr.mxu0 0.0
    %90 = vmatpush1.msra.mxu0 %v79
    %91 = vmatprep.subr.mxu0 0.0
    %92 = vmatpush1.msra.mxu0 %v78
    %93 = vmatprep.subr.mxu0 0.0
    %94 = vmatpush1.msra.mxu0 %v77
    %95 = vmatprep.subr.mxu0 0.0
    %96 = vmatpush1.msra.mxu0 %v76
    %97 = vmatprep.subr.mxu0 0.0
    %98 = vmatpush1.msra.mxu0 %v75
    %99 = vmatprep.subr.mxu0 0.0
    %100 = vmatpush1.msra.mxu0 %v74
    %101 = vmatprep.subr.mxu0 0.0
    %102 = vmatpush1.msra.mxu0 %v73
    %103 = vmatprep.subr.mxu0 0.0
    %104 = vmatpush1.msra.mxu0 %v72
    %105 = vmatprep.subr.mxu0 0.0
    %106 = vmatpush1.msra.mxu0 %v71
    %107 = vmatprep.subr.mxu0 0.0
    %108 = vmatpush1.msra.mxu0 %v70
    %109 = vmatprep.subr.mxu0 0.0
    %110 = vmatpush1.msra.mxu0 %v69
    %111 = vmatprep.subr.mxu0 0.0
    %112 = vmatpush1.msra.mxu0 %v68
    %113 = vmatprep.subr.mxu0 0.0
    %114 = vmatpush1.msra.mxu0 %v67
    %115 = vmatprep.subr.mxu0 0.0
    %116 = vmatpush2.msra.mxu0 0.0
    %117 = vmatprep.subr.mxu0 0.0
    %118 = vmatpush2.msra.mxu0 0.0
    %119 = vmatprep.subr.mxu0 0.0
    %120 = vmatpush2.msra.mxu0 0.0
    %121 = vmatprep.subr.mxu0 0.0
    %122 = vmatpush2.msra.mxu0 0.0
    %123 = vmatprep.subr.mxu0 0.0
    %124 = vmatpush2.msra.mxu0 0.0
    %125 = vmatprep.subr.mxu0 0.0
    %126 = vmatpush2.msra.mxu0 0.0
    %127 = vmatprep.subr.mxu0 0.0
    %128 = vmatpush2.msra.mxu0 0.0
    %129 = vmatprep.subr.mxu0 0.0
    %130 = vmatpush2.msra.mxu0 0.0
    %131 = vmatprep.subr.mxu0 0.0
    %132 = vmatpush2.msra.mxu0 0.0
    %133 = vmatprep.subr.mxu0 0.0
    %134 = vmatpush2.msra.mxu0 0.0
    %135 = vmatprep.subr.mxu0 0.0
    %136 = vmatpush2.msra.mxu0 0.0
    %137 = vmatprep.subr.mxu0 0.0
    %138 = vmatpush2.msra.mxu0 0.0
    %139 = vmatprep.subr.mxu0 0.0
    %140 = vmatpush2.msra.mxu0 0.0
    %141 = vmatprep.subr.mxu0 0.0
    %142 = vmatpush2.msra.mxu0 0.0
    %143 = vmatprep.subr.mxu0 0.0
    %144 = vmatpush2.msra.mxu0 0.0
    %145 = vmatprep.subr.mxu0 0.0
    %146 = vmatpush2.msra.mxu0 0.0
    %147 = vmatprep.mubr.f32.mxu0 0.0
    %148 = vmatmul.mubr.f32.gmra.mxu0 %v63
    %v149 = vpop.f32.mrf.mxu0
    %v150 = vadd.f32 0.0, %v149
    %v151 = vpop.f32.mrf.mxu0
    %152 = vmatprep.mubr.f32.mxu0 0.0
    %153 = vmatmul.mubr.f32.gmra.mxu0 %v64
    %v154 = vpop.f32.mrf.mxu0
    %v155 = vadd.f32 0.0, %v154
    %v156 = vpop.f32.mrf.mxu0
    %157 = vmatprep.mubr.f32.mxu0 0.0
    %158 = vmatmul.mubr.f32.gmra.mxu0 %v65
    %v159 = vpop.f32.mrf.mxu0
    %v160 = vadd.f32 0.0, %v159
    %v161 = vpop.f32.mrf.mxu0
    %162 = vmatprep.mubr.f32.mxu0 0.0
    %163 = vmatmul.mubr.f32.gmra.mxu0 %v66
    %v164 = vpop.f32.mrf.mxu0
    %v165 = vadd.f32 0.0, %v164
    %v166 = vpop.f32.mrf.mxu0
    %167 = vdwg.mxu0
    %170 = vrot.lane.b32.xlu0 %v150, 96
    %v171 = vpop.permute.xlu0 %170
    %172 = vrot.lane.b32.xlu0 %v155, 96
    %v173 = vpop.permute.xlu0 %172
    %vm174 = vcmask 261120
    %v175 = vsel %vm174, %v150, 0
    %v177 = vsel %vm174, %v155, 0
    %v179 = vsel %vm174, %v171, 0
    %v181 = vsel %vm174, %v173, 0
    %183 = vmatprep.subr.mxu0 0.0
    %184 = vmatpush1.xpose.msra.mxu0 0.0
    %185 = vmatprep.subr.mxu0 0.0
    %186 = vmatpush1.xpose.msra.mxu0 0.0
    %187 = vmatprep.subr.mxu0 0.0
    %188 = vmatpush1.xpose.msra.mxu0 0.0
    %189 = vmatprep.subr.mxu0 0.0
    %190 = vmatpush1.xpose.msra.mxu0 0.0
    %191 = vmatprep.subr.mxu0 0.0
    %192 = vmatpush1.xpose.msra.mxu0 0.0
    %193 = vmatprep.subr.mxu0 0.0
    %194 = vmatpush1.xpose.msra.mxu0 0.0
    %195 = vmatprep.subr.mxu0 0.0
    %196 = vmatpush1.xpose.msra.mxu0 0.0
    %197 = vmatprep.subr.mxu0 0.0
    %198 = vmatpush1.xpose.msra.mxu0 0.0
    %199 = vmatprep.subr.mxu0 0.0
    %200 = vmatpush1.xpose.msra.mxu0 0.0
    %201 = vmatprep.subr.mxu0 0.0
    %202 = vmatpush1.xpose.msra.mxu0 0.0
    %203 = vmatprep.subr.mxu0 0.0
    %204 = vmatpush1.xpose.msra.mxu0 0.0
    %205 = vmatprep.subr.mxu0 0.0
    %206 = vmatpush1.xpose.msra.mxu0 0.0
    %207 = vmatprep.subr.mxu0 0.0
    %208 = vmatpush1.xpose.msra.mxu0 0.0
    %209 = vmatprep.subr.mxu0 0.0
    %210 = vmatpush1.xpose.msra.mxu0 0.0
    %211 = vmatprep.subr.mxu0 0.0
    %212 = vmatpush1.xpose.msra.mxu0 %v181
    %213 = vmatprep.subr.mxu0 0.0
    %214 = vmatpush1.xpose.msra.mxu0 %v179
    %215 = vmatprep.subr.mxu0 0.0
    %216 = vmatpush2.xpose.msra.mxu0 0.0
    %217 = vmatprep.subr.mxu0 0.0
    %218 = vmatpush2.xpose.msra.mxu0 0.0
    %219 = vmatprep.subr.mxu0 0.0
    %220 = vmatpush2.xpose.msra.mxu0 0.0
    %221 = vmatprep.subr.mxu0 0.0
    %222 = vmatpush2.xpose.msra.mxu0 0.0
    %223 = vmatprep.subr.mxu0 0.0
    %224 = vmatpush2.xpose.msra.mxu0 0.0
    %225 = vmatprep.subr.mxu0 0.0
    %226 = vmatpush2.xpose.msra.mxu0 0.0
    %227 = vmatprep.subr.mxu0 0.0
    %228 = vmatpush2.xpose.msra.mxu0 0.0
    %229 = vmatprep.subr.mxu0 0.0
    %230 = vmatpush2.xpose.msra.mxu0 0.0
    %231 = vmatprep.subr.mxu0 0.0
    %232 = vmatpush2.xpose.msra.mxu0 0.0
    %233 = vmatprep.subr.mxu0 0.0
    %234 = vmatpush2.xpose.msra.mxu0 0.0
    %235 = vmatprep.subr.mxu0 0.0
    %236 = vmatpush2.xpose.msra.mxu0 0.0
    %237 = vmatprep.subr.mxu0 0.0
    %238 = vmatpush2.xpose.msra.mxu0 0.0
    %239 = vmatprep.subr.mxu0 0.0
    %240 = vmatpush2.xpose.msra.mxu0 0.0
    %241 = vmatprep.subr.mxu0 0.0
    %242 = vmatpush2.xpose.msra.mxu0 0.0
    %243 = vmatprep.subr.mxu0 0.0
    %244 = vmatpush2.xpose.msra.mxu0 0.0
    %245 = vmatprep.subr.mxu0 0.0
    %246 = vmatpush2.xpose.msra.mxu0 0.0
    %247 = vmatprep.mubr.f32.mxu0 0.0
    %248 = vmatmul.mubr.f32.gmra.mxu0 %v175
    %v249 = vpop.f32.mrf.mxu0
    %v250 = vadd.f32 0.0, %v249
    %v251 = vpop.f32.mrf.mxu0
    %252 = vmatprep.mubr.f32.mxu0 0.0
    %253 = vmatmul.mubr.f32.gmra.mxu0 %v177
    %v254 = vpop.f32.mrf.mxu0
    %v255 = vadd.f32 0.0, %v254
    %v256 = vpop.f32.mrf.mxu0
    %257 = vdwg.mxu0
    %v258 = vmul.f32 %v250, 0.088388346
    %v259 = vmul.f32 %v255, 0.088388346
    %v260 = vadd.f32 %v258, %v57
    %v261 = vadd.f32 %v259, %v58
    %vm262 = vcmask 130048
    %v263 = vsel %vm262, %v260, -inf
    %264 = vmax.xlane.f32.xlu0 %v263
    %v265 = vpop.xlane.xlu0 %264
    %v266 = vsel %vm262, %v261, -inf
    %267 = vmax.xlane.f32.xlu0 %v266
    %v268 = vpop.xlane.xlu0 %267
    %v269 = vsub.f32 %v260, %v265
    %v270 = vsub.f32 %v261, %v268
    %v271 = vmul.f32 %v269, 1.442695
    %v272 = vpow.pop %v271
    %v273 = vmul.f32 %v270, 1.442695
    %v274 = vpow.pop %v273
    %v275 = vsel %vm262, %v272, 0.0
    %276 = vadd.xlane.f32.xlu0 %v275
    %v277 = vpop.xlane.xlu0 %276
    %v278 = vsel %vm262, %v274, 0.0
    %279 = vadd.xlane.f32.xlu0 %v278
    %v280 = vpop.xlane.xlu0 %279
    %v281 = vrcp.pop %v277
    %v282 = vrcp.pop %v280
    %v283 = vmul.f32 %v272, %v281
    %v284 = vmul.f32 %v274, %v282
    %285 = vrot.lane.b32.xlu0 %v150, 64
    %v286 = vpop.permute.xlu0 %285
    %287 = vrot.lane.b32.xlu0 %v155, 64
    %v288 = vpop.permute.xlu0 %287
    %v292 = vsel %vm262, %v283, 0
    %v295 = vsel %vm262, %v284, 0
    %297 = vmatprep.subr.mxu0 0.0
    %298 = vmatpush1.msra.mxu0 0.0
    %299 = vmatprep.subr.mxu0 0.0
    %300 = vmatpush1.msra.mxu0 0.0
    %301 = vmatprep.subr.mxu0 0.0
    %302 = vmatpush1.msra.mxu0 0.0
    %303 = vmatprep.subr.mxu0 0.0
    %304 = vmatpush1.msra.mxu0 0.0
    %305 = vmatprep.subr.mxu0 0.0
    %306 = vmatpush1.msra.mxu0 0.0
    %307 = vmatprep.subr.mxu0 0.0
    %308 = vmatpush1.msra.mxu0 0.0
    %309 = vmatprep.subr.mxu0 0.0
    %310 = vmatpush1.msra.mxu0 0.0
    %311 = vmatprep.subr.mxu0 0.0
    %312 = vmatpush1.msra.mxu0 0.0
    %313 = vmatprep.subr.mxu0 0.0
    %314 = vmatpush1.msra.mxu0 0.0
    %315 = vmatprep.subr.mxu0 0.0
    %316 = vmatpush1.msra.mxu0 0.0
    %317 = vmatprep.subr.mxu0 0.0
    %318 = vmatpush1.msra.mxu0 0.0
    %319 = vmatprep.subr.mxu0 0.0
    %320 = vmatpush1.msra.mxu0 0.0
    %321 = vmatprep.subr.mxu0 0.0
    %322 = vmatpush1.msra.mxu0 0.0
    %323 = vmatprep.subr.mxu0 0.0
    %324 = vmatpush1.msra.mxu0 0.0
    %325 = vmatprep.subr.mxu0 0.0
    %326 = vmatpush1.msra.mxu0 %v288
    %327 = vmatprep.subr.mxu0 0.0
    %328 = vmatpush1.msra.mxu0 %v286
    %329 = vmatprep.subr.mxu0 0.0
    %330 = vmatpush2.msra.mxu0 0.0
    %331 = vmatprep.subr.mxu0 0.0
    %332 = vmatpush2.msra.mxu0 0.0
    %333 = vmatprep.subr.mxu0 0.0
    %334 = vmatpush2.msra.mxu0 0.0
    %335 = vmatprep.subr.mxu0 0.0
    %336 = vmatpush2.msra.mxu0 0.0
    %337 = vmatprep.subr.mxu0 0.0
    %338 = vmatpush2.msra.mxu0 0.0
    %339 = vmatprep.subr.mxu0 0.0
    %340 = vmatpush2.msra.mxu0 0.0
    %341 = vmatprep.subr.mxu0 0.0
    %342 = vmatpush2.msra.mxu0 0.0
    %343 = vmatprep.subr.mxu0 0.0
    %344 = vmatpush2.msra.mxu0 0.0
    %345 = vmatprep.subr.mxu0 0.0
    %346 = vmatpush2.msra.mxu0 0.0
    %347 = vmatprep.subr.mxu0 0.0
    %348 = vmatpush2.msra.mxu0 0.0
    %349 = vmatprep.subr.mxu0 0.0
    %350 = vmatpush2.msra.mxu0 0.0
    %351 = vmatprep.subr.mxu0 0.0
    %352 = vmatpush2.msra.mxu0 0.0
    %353 = vmatprep.subr.mxu0 0.0
    %354 = vmatpush2.msra.mxu0 0.0
    %355 = vmatprep.subr.mxu0 0.0
    %356 = vmatpush2.msra.mxu0 0.0
    %357 = vmatprep.subr.mxu0 0.0
    %358 = vmatpush2.msra.mxu0 0.0
    %359 = vmatprep.subr.mxu0 0.0
    %360 = vmatpush2.msra.mxu0 0.0
    %361 = vmatprep.mubr.f32.mxu0 0.0
    %362 = vmatmul.mubr.f32.gmra.mxu0 %v292
    %v363 = vpop.f32.mrf.mxu0
    %v364 = vadd.f32 0.0, %v363
    %v365 = vpop.f32.mrf.mxu0
    %366 = vmatprep.mubr.f32.mxu0 0.0
    %367 = vmatmul.mubr.f32.gmra.mxu0 %v295
    %v368 = vpop.f32.mrf.mxu0
    %v369 = vadd.f32 0.0, %v368
    %v370 = vpop.f32.mrf.mxu0
    %371 = vdwg.mxu0
    %374 = vrot.lane.b32.xlu0 %v160, 96
    %v375 = vpop.permute.xlu0 %374
    %376 = vrot.lane.b32.xlu0 %v165, 96
    %v377 = vpop.permute.xlu0 %376
    %v378 = vsel %vm174, %v160, 0
    %v380 = vsel %vm174, %v165, 0
    %v382 = vsel %vm174, %v375, 0
    %v384 = vsel %vm174, %v377, 0
    %386 = vmatprep.subr.mxu0 0.0
    %387 = vmatpush1.xpose.msra.mxu0 0.0
    %388 = vmatprep.subr.mxu0 0.0
    %389 = vmatpush1.xpose.msra.mxu0 0.0
    %390 = vmatprep.subr.mxu0 0.0
    %391 = vmatpush1.xpose.msra.mxu0 0.0
    %392 = vmatprep.subr.mxu0 0.0
    %393 = vmatpush1.xpose.msra.mxu0 0.0
    %394 = vmatprep.subr.mxu0 0.0
    %395 = vmatpush1.xpose.msra.mxu0 0.0
    %396 = vmatprep.subr.mxu0 0.0
    %397 = vmatpush1.xpose.msra.mxu0 0.0
    %398 = vmatprep.subr.mxu0 0.0
    %399 = vmatpush1.xpose.msra.mxu0 0.0
    %400 = vmatprep.subr.mxu0 0.0
    %401 = vmatpush1.xpose.msra.mxu0 0.0
    %402 = vmatprep.subr.mxu0 0.0
    %403 = vmatpush1.xpose.msra.mxu0 0.0
    %404 = vmatprep.subr.mxu0 0.0
    %405 = vmatpush1.xpose.msra.mxu0 0.0
    %406 = vmatprep.subr.mxu0 0.0
    %407 = vmatpush1.xpose.msra.mxu0 0.0
    %408 = vmatprep.subr.mxu0 0.0
    %409 = vmatpush1.xpose.msra.mxu0 0.0
    %410 = vmatprep.subr.mxu0 0.0
    %411 = vmatpush1.xpose.msra.mxu0 0.0
    %412 = vmatprep.subr.mxu0 0.0
    %413 = vmatpush1.xpose.msra.mxu0 0.0
    %414 = vmatprep.subr.mxu0 0.0
    %415 = vmatpush1.xpose.msra.mxu0 %v384
    %416 = vmatprep.subr.mxu0 0.0
    %417 = vmatpush1.xpose.msra.mxu0 %v382
    %418 = vmatprep.subr.mxu0 0.0
    %419 = vmatpush2.xpose.msra.mxu0 0.0
    %420 = vmatprep.subr.mxu0 0.0
    %421 = vmatpush2.xpose.msra.mxu0 0.0
    %422 = vmatprep.subr.mxu0 0.0
    %423 = vmatpush2.xpose.msra.mxu0 0.0
    %424 = vmatprep.subr.mxu0 0.0
    %425 = vmatpush2.xpose.msra.mxu0 0.0
    %426 = vmatprep.subr.mxu0 0.0
    %427 = vmatpush2.xpose.msra.mxu0 0.0
    %428 = vmatprep.subr.mxu0 0.0
    %429 = vmatpush2.xpose.msra.mxu0 0.0
    %430 = vmatprep.subr.mxu0 0.0
    %431 = vmatpush2.xpose.msra.mxu0 0.0
    %432 = vmatprep.subr.mxu0 0.0
    %433 = vmatpush2.xpose.msra.mxu0 0.0
    %434 = vmatprep.subr.mxu0 0.0
    %435 = vmatpush2.xpose.msra.mxu0 0.0
    %436 = vmatprep.subr.mxu0 0.0
    %437 = vmatpush2.xpose.msra.mxu0 0.0
    %438 = vmatprep.subr.mxu0 0.0
    %439 = vmatpush2.xpose.msra.mxu0 0.0
    %440 = vmatprep.subr.mxu0 0.0
    %441 = vmatpush2.xpose.msra.mxu0 0.0
    %442 = vmatprep.subr.mxu0 0.0
    %443 = vmatpush2.xpose.msra.mxu0 0.0
    %444 = vmatprep.subr.mxu0 0.0
    %445 = vmatpush2.xpose.msra.mxu0 0.0
    %446 = vmatprep.subr.mxu0 0.0
    %447 = vmatpush2.xpose.msra.mxu0 0.0
    %448 = vmatprep.subr.mxu0 0.0
    %449 = vmatpush2.xpose.msra.mxu0 0.0
    %450 = vmatprep.mubr.f32.mxu0 0.0
    %451 = vmatmul.mubr.f32.gmra.mxu0 %v378
    %v452 = vpop.f32.mrf.mxu0
    %v453 = vadd.f32 0.0, %v452
    %v454 = vpop.f32.mrf.mxu0
    %455 = vmatprep.mubr.f32.mxu0 0.0
    %456 = vmatmul.mubr.f32.gmra.mxu0 %v380
    %v457 = vpop.f32.mrf.mxu0
    %v458 = vadd.f32 0.0, %v457
    %v459 = vpop.f32.mrf.mxu0
    %460 = vdwg.mxu0
    %v461 = vmul.f32 %v453, 0.088388346
    %v462 = vmul.f32 %v458, 0.088388346
    %v463 = vadd.f32 %v461, %v57
    %v464 = vadd.f32 %v462, %v58
    %v465 = vsel %vm262, %v463, -inf
    %466 = vmax.xlane.f32.xlu0 %v465
    %v467 = vpop.xlane.xlu0 %466
    %v468 = vsel %vm262, %v464, -inf
    %469 = vmax.xlane.f32.xlu0 %v468
    %v470 = vpop.xlane.xlu0 %469
    %v471 = vsub.f32 %v463, %v467
    %v472 = vsub.f32 %v464, %v470
    %v473 = vmul.f32 %v471, 1.442695
    %v474 = vpow.pop %v473
    %v475 = vmul.f32 %v472, 1.442695
    %v476 = vpow.pop %v475
    %v477 = vsel %vm262, %v474, 0.0
    %478 = vadd.xlane.f32.xlu0 %v477
    %v479 = vpop.xlane.xlu0 %478
    %v480 = vsel %vm262, %v476, 0.0
    %481 = vadd.xlane.f32.xlu0 %v480
    %v482 = vpop.xlane.xlu0 %481
    %v483 = vrcp.pop %v479
    %v484 = vrcp.pop %v482
    %v485 = vmul.f32 %v474, %v483
    %v486 = vmul.f32 %v476, %v484
    %487 = vrot.lane.b32.xlu0 %v160, 64
    %v488 = vpop.permute.xlu0 %487
    %489 = vrot.lane.b32.xlu0 %v165, 64
    %v490 = vpop.permute.xlu0 %489
    %v494 = vsel %vm262, %v485, 0
    %v497 = vsel %vm262, %v486, 0
    %499 = vmatprep.subr.mxu0 0.0
    %500 = vmatpush1.msra.mxu0 0.0
    %501 = vmatprep.subr.mxu0 0.0
    %502 = vmatpush1.msra.mxu0 0.0
    %503 = vmatprep.subr.mxu0 0.0
    %504 = vmatpush1.msra.mxu0 0.0
    %505 = vmatprep.subr.mxu0 0.0
    %506 = vmatpush1.msra.mxu0 0.0
    %507 = vmatprep.subr.mxu0 0.0
    %508 = vmatpush1.msra.mxu0 0.0
    %509 = vmatprep.subr.mxu0 0.0
    %510 = vmatpush1.msra.mxu0 0.0
    %511 = vmatprep.subr.mxu0 0.0
    %512 = vmatpush1.msra.mxu0 0.0
    %513 = vmatprep.subr.mxu0 0.0
    %514 = vmatpush1.msra.mxu0 0.0
    %515 = vmatprep.subr.mxu0 0.0
    %516 = vmatpush1.msra.mxu0 0.0
    %517 = vmatprep.subr.mxu0 0.0
    %518 = vmatpush1.msra.mxu0 0.0
    %519 = vmatprep.subr.mxu0 0.0
    %520 = vmatpush1.msra.mxu0 0.0
    %521 = vmatprep.subr.mxu0 0.0
    %522 = vmatpush1.msra.mxu0 0.0
    %523 = vmatprep.subr.mxu0 0.0
    %524 = vmatpush1.msra.mxu0 0.0
    %525 = vmatprep.subr.mxu0 0.0
    %526 = vmatpush1.msra.mxu0 0.0
    %527 = vmatprep.subr.mxu0 0.0
    %528 = vmatpush1.msra.mxu0 %v490
    %529 = vmatprep.subr.mxu0 0.0
    %530 = vmatpush1.msra.mxu0 %v488
    %531 = vmatprep.subr.mxu0 0.0
    %532 = vmatpush2.msra.mxu0 0.0
    %533 = vmatprep.subr.mxu0 0.0
    %534 = vmatpush2.msra.mxu0 0.0
    %535 = vmatprep.subr.mxu0 0.0
    %536 = vmatpush2.msra.mxu0 0.0
    %537 = vmatprep.subr.mxu0 0.0
    %538 = vmatpush2.msra.mxu0 0.0
    %539 = vmatprep.subr.mxu0 0.0
    %540 = vmatpush2.msra.mxu0 0.0
    %541 = vmatprep.subr.mxu0 0.0
    %542 = vmatpush2.msra.mxu0 0.0
    %543 = vmatprep.subr.mxu0 0.0
    %544 = vmatpush2.msra.mxu0 0.0
    %545 = vmatprep.subr.mxu0 0.0
    %546 = vmatpush2.msra.mxu0 0.0
    %547 = vmatprep.subr.mxu0 0.0
    %548 = vmatpush2.msra.mxu0 0.0
    %549 = vmatprep.subr.mxu0 0.0
    %550 = vmatpush2.msra.mxu0 0.0
    %551 = vmatprep.subr.mxu0 0.0
    %552 = vmatpush2.msra.mxu0 0.0
    %553 = vmatprep.subr.mxu0 0.0
    %554 = vmatpush2.msra.mxu0 0.0
    %555 = vmatprep.subr.mxu0 0.0
    %556 = vmatpush2.msra.mxu0 0.0
    %557 = vmatprep.subr.mxu0 0.0
    %558 = vmatpush2.msra.mxu0 0.0
    %559 = vmatprep.subr.mxu0 0.0
    %560 = vmatpush2.msra.mxu0 0.0
    %561 = vmatprep.subr.mxu0 0.0
    %562 = vmatpush2.msra.mxu0 0.0
    %563 = vmatprep.mubr.f32.mxu0 0.0
    %564 = vmatmul.mubr.f32.gmra.mxu0 %v494
    %v565 = vpop.f32.mrf.mxu0
    %v566 = vadd.f32 0.0, %v565
    %v567 = vpop.f32.mrf.mxu0
    %568 = vmatprep.mubr.f32.mxu0 0.0
    %569 = vmatmul.mubr.f32.gmra.mxu0 %v497
    %v570 = vpop.f32.mrf.mxu0
    %v571 = vadd.f32 0.0, %v570
    %v572 = vpop.f32.mrf.mxu0
    %573 = vdwg.mxu0
    %s574 = scalar_lea.vmem %s1, 32
    %v575 = vld [vmem:[%s574] sm:$0xff]
    %v576 = vld [vmem:[%s574 + $0x8] sm:$0xff]
    %v577 = vld [vmem:[%s574 + $0x10] sm:$0xff]
    %v578 = vld [vmem:[%s574 + $0x18] sm:$0xff]
    %s579 = scalar_lea.vmem %s2, 128
    %v580 = vld [vmem:[%s579] sm:$0xff]
    %v581 = vld [vmem:[%s579 + $0x8] sm:$0xff]
    %v582 = vld [vmem:[%s579 + $0x10] sm:$0xff]
    %v583 = vld [vmem:[%s579 + $0x18] sm:$0xff]
    %v584 = vld [vmem:[%s579 + $0x20] sm:$0xff]
    %v585 = vld [vmem:[%s579 + $0x28] sm:$0xff]
    %v586 = vld [vmem:[%s579 + $0x30] sm:$0xff]
    %v587 = vld [vmem:[%s579 + $0x38] sm:$0xff]
    %v588 = vld [vmem:[%s579 + $0x40] sm:$0xff]
    %v589 = vld [vmem:[%s579 + $0x48] sm:$0xff]
    %v590 = vld [vmem:[%s579 + $0x50] sm:$0xff]
    %v591 = vld [vmem:[%s579 + $0x58] sm:$0xff]
    %v592 = vld [vmem:[%s579 + $0x60] sm:$0xff]
    %v593 = vld [vmem:[%s579 + $0x68] sm:$0xff]
    %v594 = vld [vmem:[%s579 + $0x70] sm:$0xff]
    %v595 = vld [vmem:[%s579 + $0x78] sm:$0xff]
    %596 = vmatprep.subr.mxu0 0.0
    %597 = vmatpush1.msra.mxu0 %v595
    %598 = vmatprep.subr.mxu0 0.0
    %599 = vmatpush1.msra.mxu0 %v594
    %600 = vmatprep.subr.mxu0 0.0
    %601 = vmatpush1.msra.mxu0 %v593
    %602 = vmatprep.subr.mxu0 0.0
    %603 = vmatpush1.msra.mxu0 %v592
    %604 = vmatprep.subr.mxu0 0.0
    %605 = vmatpush1.msra.mxu0 %v591
    %606 = vmatprep.subr.mxu0 0.0
    %607 = vmatpush1.msra.mxu0 %v590
    %608 = vmatprep.subr.mxu0 0.0
    %609 = vmatpush1.msra.mxu0 %v589
    %610 = vmatprep.subr.mxu0 0.0
    %611 = vmatpush1.msra.mxu0 %v588
    %612 = vmatprep.subr.mxu0 0.0
    %613 = vmatpush1.msra.mxu0 %v587
    %614 = vmatprep.subr.mxu0 0.0
    %615 = vmatpush1.msra.mxu0 %v586
    %616 = vmatprep.subr.mxu0 0.0
    %617 = vmatpush1.msra.mxu0 %v585
    %618 = vmatprep.subr.mxu0 0.0
    %619 = vmatpush1.msra.mxu0 %v584
    %620 = vmatprep.subr.mxu0 0.0
    %621 = vmatpush1.msra.mxu0 %v583
    %622 = vmatprep.subr.mxu0 0.0
    %623 = vmatpush1.msra.mxu0 %v582
    %624 = vmatprep.subr.mxu0 0.0
    %625 = vmatpush1.msra.mxu0 %v581
    %626 = vmatprep.subr.mxu0 0.0
    %627 = vmatpush1.msra.mxu0 %v580
    %628 = vmatprep.subr.mxu0 0.0
    %629 = vmatpush2.msra.mxu0 0.0
    %630 = vmatprep.subr.mxu0 0.0
    %631 = vmatpush2.msra.mxu0 0.0
    %632 = vmatprep.subr.mxu0 0.0
    %633 = vmatpush2.msra.mxu0 0.0
    %634 = vmatprep.subr.mxu0 0.0
    %635 = vmatpush2.msra.mxu0 0.0
    %636 = vmatprep.subr.mxu0 0.0
    %637 = vmatpush2.msra.mxu0 0.0
    %638 = vmatprep.subr.mxu0 0.0
    %639 = vmatpush2.msra.mxu0 0.0
    %640 = vmatprep.subr.mxu0 0.0
    %641 = vmatpush2.msra.mxu0 0.0
    %642 = vmatprep.subr.mxu0 0.0
    %643 = vmatpush2.msra.mxu0 0.0
    %644 = vmatprep.subr.mxu0 0.0
    %645 = vmatpush2.msra.mxu0 0.0
    %646 = vmatprep.subr.mxu0 0.0
    %647 = vmatpush2.msra.mxu0 0.0
    %648 = vmatprep.subr.mxu0 0.0
    %649 = vmatpush2.msra.mxu0 0.0
    %650 = vmatprep.subr.mxu0 0.0
    %651 = vmatpush2.msra.mxu0 0.0
    %652 = vmatprep.subr.mxu0 0.0
    %653 = vmatpush2.msra.mxu0 0.0
    %654 = vmatprep.subr.mxu0 0.0
    %655 = vmatpush2.msra.mxu0 0.0
    %656 = vmatprep.subr.mxu0 0.0
    %657 = vmatpush2.msra.mxu0 0.0
    %658 = vmatprep.subr.mxu0 0.0
    %659 = vmatpush2.msra.mxu0 0.0
    %660 = vmatprep.mubr.f32.mxu0 0.0
    %661 = vmatmul.mubr.f32.gmra.mxu0 %v575
    %v662 = vpop.f32.mrf.mxu0
    %v663 = vadd.f32 0.0, %v662
    %v664 = vpop.f32.mrf.mxu0
    %665 = vmatprep.mubr.f32.mxu0 0.0
    %666 = vmatmul.mubr.f32.gmra.mxu0 %v576
    %v667 = vpop.f32.mrf.mxu0
    %v668 = vadd.f32 0.0, %v667
    %v669 = vpop.f32.mrf.mxu0
    %670 = vmatprep.mubr.f32.mxu0 0.0
    %671 = vmatmul.mubr.f32.gmra.mxu0 %v577
    %v672 = vpop.f32.mrf.mxu0
    %v673 = vadd.f32 0.0, %v672
    %v674 = vpop.f32.mrf.mxu0
    %675 = vmatprep.mubr.f32.mxu0 0.0
    %676 = vmatmul.mubr.f32.gmra.mxu0 %v578
    %v677 = vpop.f32.mrf.mxu0
    %v678 = vadd.f32 0.0, %v677
    %v679 = vpop.f32.mrf.mxu0
    %680 = vdwg.mxu0
    %683 = vrot.lane.b32.xlu0 %v663, 96
    %v684 = vpop.permute.xlu0 %683
    %685 = vrot.lane.b32.xlu0 %v668, 96
    %v686 = vpop.permute.xlu0 %685
    %v687 = vsel %vm174, %v663, 0
    %v689 = vsel %vm174, %v668, 0
    %v691 = vsel %vm174, %v684, 0
    %v693 = vsel %vm174, %v686, 0
    %695 = vmatprep.subr.mxu0 0.0
    %696 = vmatpush1.xpose.msra.mxu0 0.0
    %697 = vmatprep.subr.mxu0 0.0
    %698 = vmatpush1.xpose.msra.mxu0 0.0
    %699 = vmatprep.subr.mxu0 0.0
    %700 = vmatpush1.xpose.msra.mxu0 0.0
    %701 = vmatprep.subr.mxu0 0.0
    %702 = vmatpush1.xpose.msra.mxu0 0.0
    %703 = vmatprep.subr.mxu0 0.0
    %704 = vmatpush1.xpose.msra.mxu0 0.0
    %705 = vmatprep.subr.mxu0 0.0
    %706 = vmatpush1.xpose.msra.mxu0 0.0
    %707 = vmatprep.subr.mxu0 0.0
    %708 = vmatpush1.xpose.msra.mxu0 0.0
    %709 = vmatprep.subr.mxu0 0.0
    %710 = vmatpush1.xpose.msra.mxu0 0.0
    %711 = vmatprep.subr.mxu0 0.0
    %712 = vmatpush1.xpose.msra.mxu0 0.0
    %713 = vmatprep.subr.mxu0 0.0
    %714 = vmatpush1.xpose.msra.mxu0 0.0
    %715 = vmatprep.subr.mxu0 0.0
    %716 = vmatpush1.xpose.msra.mxu0 0.0
    %717 = vmatprep.subr.mxu0 0.0
    %718 = vmatpush1.xpose.msra.mxu0 0.0
    %719 = vmatprep.subr.mxu0 0.0
    %720 = vmatpush1.xpose.msra.mxu0 0.0
    %721 = vmatprep.subr.mxu0 0.0
    %722 = vmatpush1.xpose.msra.mxu0 0.0
    %723 = vmatprep.subr.mxu0 0.0
    %724 = vmatpush1.xpose.msra.mxu0 %v693
    %725 = vmatprep.subr.mxu0 0.0
    %726 = vmatpush1.xpose.msra.mxu0 %v691
    %727 = vmatprep.subr.mxu0 0.0
    %728 = vmatpush2.xpose.msra.mxu0 0.0
    %729 = vmatprep.subr.mxu0 0.0
    %730 = vmatpush2.xpose.msra.mxu0 0.0
    %731 = vmatprep.subr.mxu0 0.0
    %732 = vmatpush2.xpose.msra.mxu0 0.0
    %733 = vmatprep.subr.mxu0 0.0
    %734 = vmatpush2.xpose.msra.mxu0 0.0
    %735 = vmatprep.subr.mxu0 0.0
    %736 = vmatpush2.xpose.msra.mxu0 0.0
    %737 = vmatprep.subr.mxu0 0.0
    %738 = vmatpush2.xpose.msra.mxu0 0.0
    %739 = vmatprep.subr.mxu0 0.0
    %740 = vmatpush2.xpose.msra.mxu0 0.0
    %741 = vmatprep.subr.mxu0 0.0
    %742 = vmatpush2.xpose.msra.mxu0 0.0
    %743 = vmatprep.subr.mxu0 0.0
    %744 = vmatpush2.xpose.msra.mxu0 0.0
    %745 = vmatprep.subr.mxu0 0.0
    %746 = vmatpush2.xpose.msra.mxu0 0.0
    %747 = vmatprep.subr.mxu0 0.0
    %748 = vmatpush2.xpose.msra.mxu0 0.0
    %749 = vmatprep.subr.mxu0 0.0
    %750 = vmatpush2.xpose.msra.mxu0 0.0
    %751 = vmatprep.subr.mxu0 0.0
    %752 = vmatpush2.xpose.msra.mxu0 0.0
    %753 = vmatprep.subr.mxu0 0.0
    %754 = vmatpush2.xpose.msra.mxu0 0.0
    %755 = vmatprep.subr.mxu0 0.0
    %756 = vmatpush2.xpose.msra.mxu0 0.0
    %757 = vmatprep.subr.mxu0 0.0
    %758 = vmatpush2.xpose.msra.mxu0 0.0
    %759 = vmatprep.mubr.f32.mxu0 0.0
    %760 = vmatmul.mubr.f32.gmra.mxu0 %v687
    %v761 = vpop.f32.mrf.mxu0
    %v762 = vadd.f32 0.0, %v761
    %v763 = vpop.f32.mrf.mxu0
    %764 = vmatprep.mubr.f32.mxu0 0.0
    %765 = vmatmul.mubr.f32.gmra.mxu0 %v689
    %v766 = vpop.f32.mrf.mxu0
    %v767 = vadd.f32 0.0, %v766
    %v768 = vpop.f32.mrf.mxu0
    %769 = vdwg.mxu0
    %v770 = vmul.f32 %v762, 0.088388346
    %v771 = vmul.f32 %v767, 0.088388346
    %v772 = vadd.f32 %v770, %v57
    %v773 = vadd.f32 %v771, %v58
    %v774 = vsel %vm262, %v772, -inf
    %775 = vmax.xlane.f32.xlu0 %v774
    %v776 = vpop.xlane.xlu0 %775
    %v777 = vsel %vm262, %v773, -inf
    %778 = vmax.xlane.f32.xlu0 %v777
    %v779 = vpop.xlane.xlu0 %778
    %v780 = vsub.f32 %v772, %v776
    %v781 = vsub.f32 %v773, %v779
    %v782 = vmul.f32 %v780, 1.442695
    %v783 = vpow.pop %v782
    %v784 = vmul.f32 %v781, 1.442695
    %v785 = vpow.pop %v784
    %v786 = vsel %vm262, %v783, 0.0
    %787 = vadd.xlane.f32.xlu0 %v786
    %v788 = vpop.xlane.xlu0 %787
    %v789 = vsel %vm262, %v785, 0.0
    %790 = vadd.xlane.f32.xlu0 %v789
    %v791 = vpop.xlane.xlu0 %790
    %v792 = vrcp.pop %v788
    %v793 = vrcp.pop %v791
    %v794 = vmul.f32 %v783, %v792
    %v795 = vmul.f32 %v785, %v793
    %796 = vrot.lane.b32.xlu0 %v663, 64
    %v797 = vpop.permute.xlu0 %796
    %798 = vrot.lane.b32.xlu0 %v668, 64
    %v799 = vpop.permute.xlu0 %798
    %v803 = vsel %vm262, %v794, 0
    %v806 = vsel %vm262, %v795, 0
    %808 = vmatprep.subr.mxu0 0.0
    %809 = vmatpush1.msra.mxu0 0.0
    %810 = vmatprep.subr.mxu0 0.0
    %811 = vmatpush1.msra.mxu0 0.0
    %812 = vmatprep.subr.mxu0 0.0
    %813 = vmatpush1.msra.mxu0 0.0
    %814 = vmatprep.subr.mxu0 0.0
    %815 = vmatpush1.msra.mxu0 0.0
    %816 = vmatprep.subr.mxu0 0.0
    %817 = vmatpush1.msra.mxu0 0.0
    %818 = vmatprep.subr.mxu0 0.0
    %819 = vmatpush1.msra.mxu0 0.0
    %820 = vmatprep.subr.mxu0 0.0
    %821 = vmatpush1.msra.mxu0 0.0
    %822 = vmatprep.subr.mxu0 0.0
    %823 = vmatpush1.msra.mxu0 0.0
    %824 = vmatprep.subr.mxu0 0.0
    %825 = vmatpush1.msra.mxu0 0.0
    %826 = vmatprep.subr.mxu0 0.0
    %827 = vmatpush1.msra.mxu0 0.0
    %828 = vmatprep.subr.mxu0 0.0
    %829 = vmatpush1.msra.mxu0 0.0
    %830 = vmatprep.subr.mxu0 0.0
    %831 = vmatpush1.msra.mxu0 0.0
    %832 = vmatprep.subr.mxu0 0.0
    %833 = vmatpush1.msra.mxu0 0.0
    %834 = vmatprep.subr.mxu0 0.0
    %835 = vmatpush1.msra.mxu0 0.0
    %836 = vmatprep.subr.mxu0 0.0
    %837 = vmatpush1.msra.mxu0 %v799
    %838 = vmatprep.subr.mxu0 0.0
    %839 = vmatpush1.msra.mxu0 %v797
    %840 = vmatprep.subr.mxu0 0.0
    %841 = vmatpush2.msra.mxu0 0.0
    %842 = vmatprep.subr.mxu0 0.0
    %843 = vmatpush2.msra.mxu0 0.0
    %844 = vmatprep.subr.mxu0 0.0
    %845 = vmatpush2.msra.mxu0 0.0
    %846 = vmatprep.subr.mxu0 0.0
    %847 = vmatpush2.msra.mxu0 0.0
    %848 = vmatprep.subr.mxu0 0.0
    %849 = vmatpush2.msra.mxu0 0.0
    %850 = vmatprep.subr.mxu0 0.0
    %851 = vmatpush2.msra.mxu0 0.0
    %852 = vmatprep.subr.mxu0 0.0
    %853 = vmatpush2.msra.mxu0 0.0
    %854 = vmatprep.subr.mxu0 0.0
    %855 = vmatpush2.msra.mxu0 0.0
    %856 = vmatprep.subr.mxu0 0.0
    %857 = vmatpush2.msra.mxu0 0.0
    %858 = vmatprep.subr.mxu0 0.0
    %859 = vmatpush2.msra.mxu0 0.0
    %860 = vmatprep.subr.mxu0 0.0
    %861 = vmatpush2.msra.mxu0 0.0
    %862 = vmatprep.subr.mxu0 0.0
    %863 = vmatpush2.msra.mxu0 0.0
    %864 = vmatprep.subr.mxu0 0.0
    %865 = vmatpush2.msra.mxu0 0.0
    %866 = vmatprep.subr.mxu0 0.0
    %867 = vmatpush2.msra.mxu0 0.0
    %868 = vmatprep.subr.mxu0 0.0
    %869 = vmatpush2.msra.mxu0 0.0
    %870 = vmatprep.subr.mxu0 0.0
    %871 = vmatpush2.msra.mxu0 0.0
    %872 = vmatprep.mubr.f32.mxu0 0.0
    %873 = vmatmul.mubr.f32.gmra.mxu0 %v803
    %v874 = vpop.f32.mrf.mxu0
    %v875 = vadd.f32 0.0, %v874
    %v876 = vpop.f32.mrf.mxu0
    %877 = vmatprep.mubr.f32.mxu0 0.0
    %878 = vmatmul.mubr.f32.gmra.mxu0 %v806
    %v879 = vpop.f32.mrf.mxu0
    %v880 = vadd.f32 0.0, %v879
    %v881 = vpop.f32.mrf.mxu0
    %882 = vdwg.mxu0
    %885 = vrot.lane.b32.xlu0 %v673, 96
    %v886 = vpop.permute.xlu0 %885
    %887 = vrot.lane.b32.xlu0 %v678, 96
    %v888 = vpop.permute.xlu0 %887
    %v889 = vsel %vm174, %v673, 0
    %v891 = vsel %vm174, %v678, 0
    %v893 = vsel %vm174, %v886, 0
    %v895 = vsel %vm174, %v888, 0
    %897 = vmatprep.subr.mxu0 0.0
    %898 = vmatpush1.xpose.msra.mxu0 0.0
    %899 = vmatprep.subr.mxu0 0.0
    %900 = vmatpush1.xpose.msra.mxu0 0.0
    %901 = vmatprep.subr.mxu0 0.0
    %902 = vmatpush1.xpose.msra.mxu0 0.0
    %903 = vmatprep.subr.mxu0 0.0
    %904 = vmatpush1.xpose.msra.mxu0 0.0
    %905 = vmatprep.subr.mxu0 0.0
    %906 = vmatpush1.xpose.msra.mxu0 0.0
    %907 = vmatprep.subr.mxu0 0.0
    %908 = vmatpush1.xpose.msra.mxu0 0.0
    %909 = vmatprep.subr.mxu0 0.0
    %910 = vmatpush1.xpose.msra.mxu0 0.0
    %911 = vmatprep.subr.mxu0 0.0
    %912 = vmatpush1.xpose.msra.mxu0 0.0
    %913 = vmatprep.subr.mxu0 0.0
    %914 = vmatpush1.xpose.msra.mxu0 0.0
    %915 = vmatprep.subr.mxu0 0.0
    %916 = vmatpush1.xpose.msra.mxu0 0.0
    %917 = vmatprep.subr.mxu0 0.0
    %918 = vmatpush1.xpose.msra.mxu0 0.0
    %919 = vmatprep.subr.mxu0 0.0
    %920 = vmatpush1.xpose.msra.mxu0 0.0
    %921 = vmatprep.subr.mxu0 0.0
    %922 = vmatpush1.xpose.msra.mxu0 0.0
    %923 = vmatprep.subr.mxu0 0.0
    %924 = vmatpush1.xpose.msra.mxu0 0.0
    %925 = vmatprep.subr.mxu0 0.0
    %926 = vmatpush1.xpose.msra.mxu0 %v895
    %927 = vmatprep.subr.mxu0 0.0
    %928 = vmatpush1.xpose.msra.mxu0 %v893
    %929 = vmatprep.subr.mxu0 0.0
    %930 = vmatpush2.xpose.msra.mxu0 0.0
    %931 = vmatprep.subr.mxu0 0.0
    %932 = vmatpush2.xpose.msra.mxu0 0.0
    %933 = vmatprep.subr.mxu0 0.0
    %934 = vmatpush2.xpose.msra.mxu0 0.0
    %935 = vmatprep.subr.mxu0 0.0
    %936 = vmatpush2.xpose.msra.mxu0 0.0
    %937 = vmatprep.subr.mxu0 0.0
    %938 = vmatpush2.xpose.msra.mxu0 0.0
    %939 = vmatprep.subr.mxu0 0.0
    %940 = vmatpush2.xpose.msra.mxu0 0.0
    %941 = vmatprep.subr.mxu0 0.0
    %942 = vmatpush2.xpose.msra.mxu0 0.0
    %943 = vmatprep.subr.mxu0 0.0
    %944 = vmatpush2.xpose.msra.mxu0 0.0
    %945 = vmatprep.subr.mxu0 0.0
    %946 = vmatpush2.xpose.msra.mxu0 0.0
    %947 = vmatprep.subr.mxu0 0.0
    %948 = vmatpush2.xpose.msra.mxu0 0.0
    %949 = vmatprep.subr.mxu0 0.0
    %950 = vmatpush2.xpose.msra.mxu0 0.0
    %951 = vmatprep.subr.mxu0 0.0
    %952 = vmatpush2.xpose.msra.mxu0 0.0
    %953 = vmatprep.subr.mxu0 0.0
    %954 = vmatpush2.xpose.msra.mxu0 0.0
    %955 = vmatprep.subr.mxu0 0.0
    %956 = vmatpush2.xpose.msra.mxu0 0.0
    %957 = vmatprep.subr.mxu0 0.0
    %958 = vmatpush2.xpose.msra.mxu0 0.0
    %959 = vmatprep.subr.mxu0 0.0
    %960 = vmatpush2.xpose.msra.mxu0 0.0
    %961 = vmatprep.mubr.f32.mxu0 0.0
    %962 = vmatmul.mubr.f32.gmra.mxu0 %v889
    %v963 = vpop.f32.mrf.mxu0
    %v964 = vadd.f32 0.0, %v963
    %v965 = vpop.f32.mrf.mxu0
    %966 = vmatprep.mubr.f32.mxu0 0.0
    %967 = vmatmul.mubr.f32.gmra.mxu0 %v891
    %v968 = vpop.f32.mrf.mxu0
    %v969 = vadd.f32 0.0, %v968
    %v970 = vpop.f32.mrf.mxu0
    %971 = vdwg.mxu0
    %v972 = vmul.f32 %v964, 0.088388346
    %v973 = vmul.f32 %v969, 0.088388346
    %v974 = vadd.f32 %v972, %v57
    %v975 = vadd.f32 %v973, %v58
    %v976 = vsel %vm262, %v974, -inf
    %977 = vmax.xlane.f32.xlu0 %v976
    %v978 = vpop.xlane.xlu0 %977
    %v979 = vsel %vm262, %v975, -inf
    %980 = vmax.xlane.f32.xlu0 %v979
    %v981 = vpop.xlane.xlu0 %980
    %v982 = vsub.f32 %v974, %v978
    %v983 = vsub.f32 %v975, %v981
    %v984 = vmul.f32 %v982, 1.442695
    %v985 = vpow.pop %v984
    %v986 = vmul.f32 %v983, 1.442695
    %v987 = vpow.pop %v986
    %v988 = vsel %vm262, %v985, 0.0
    %989 = vadd.xlane.f32.xlu0 %v988
    %v990 = vpop.xlane.xlu0 %989
    %v991 = vsel %vm262, %v987, 0.0
    %992 = vadd.xlane.f32.xlu0 %v991
    %v993 = vpop.xlane.xlu0 %992
    %v994 = vrcp.pop %v990
    %v995 = vrcp.pop %v993
    %v996 = vmul.f32 %v985, %v994
    %v997 = vmul.f32 %v987, %v995
    %998 = vrot.lane.b32.xlu0 %v673, 64
    %v999 = vpop.permute.xlu0 %998
    %1000 = vrot.lane.b32.xlu0 %v678, 64
    %v1001 = vpop.permute.xlu0 %1000
    %v1005 = vsel %vm262, %v996, 0
    %v1008 = vsel %vm262, %v997, 0
    %1010 = vmatprep.subr.mxu0 0.0
    %1011 = vmatpush1.msra.mxu0 0.0
    %1012 = vmatprep.subr.mxu0 0.0
    %1013 = vmatpush1.msra.mxu0 0.0
    %1014 = vmatprep.subr.mxu0 0.0
    %1015 = vmatpush1.msra.mxu0 0.0
    %1016 = vmatprep.subr.mxu0 0.0
    %1017 = vmatpush1.msra.mxu0 0.0
    %1018 = vmatprep.subr.mxu0 0.0
    %1019 = vmatpush1.msra.mxu0 0.0
    %1020 = vmatprep.subr.mxu0 0.0
    %1021 = vmatpush1.msra.mxu0 0.0
    %1022 = vmatprep.subr.mxu0 0.0
    %1023 = vmatpush1.msra.mxu0 0.0
    %1024 = vmatprep.subr.mxu0 0.0
    %1025 = vmatpush1.msra.mxu0 0.0
    %1026 = vmatprep.subr.mxu0 0.0
    %1027 = vmatpush1.msra.mxu0 0.0
    %1028 = vmatprep.subr.mxu0 0.0
    %1029 = vmatpush1.msra.mxu0 0.0
    %1030 = vmatprep.subr.mxu0 0.0
    %1031 = vmatpush1.msra.mxu0 0.0
    %1032 = vmatprep.subr.mxu0 0.0
    %1033 = vmatpush1.msra.mxu0 0.0
    %1034 = vmatprep.subr.mxu0 0.0
    %1035 = vmatpush1.msra.mxu0 0.0
    %1036 = vmatprep.subr.mxu0 0.0
    %1037 = vmatpush1.msra.mxu0 0.0
    %1038 = vmatprep.subr.mxu0 0.0
    %1039 = vmatpush1.msra.mxu0 %v1001
    %1040 = vmatprep.subr.mxu0 0.0
    %1041 = vmatpush1.msra.mxu0 %v999
    %1042 = vmatprep.subr.mxu0 0.0
    %1043 = vmatpush2.msra.mxu0 0.0
    %1044 = vmatprep.subr.mxu0 0.0
    %1045 = vmatpush2.msra.mxu0 0.0
    %1046 = vmatprep.subr.mxu0 0.0
    %1047 = vmatpush2.msra.mxu0 0.0
    %1048 = vmatprep.subr.mxu0 0.0
    %1049 = vmatpush2.msra.mxu0 0.0
    %1050 = vmatprep.subr.mxu0 0.0
    %1051 = vmatpush2.msra.mxu0 0.0
    %1052 = vmatprep.subr.mxu0 0.0
    %1053 = vmatpush2.msra.mxu0 0.0
    %1054 = vmatprep.subr.mxu0 0.0
    %1055 = vmatpush2.msra.mxu0 0.0
    %1056 = vmatprep.subr.mxu0 0.0
    %1057 = vmatpush2.msra.mxu0 0.0
    %1058 = vmatprep.subr.mxu0 0.0
    %1059 = vmatpush2.msra.mxu0 0.0
    %1060 = vmatprep.subr.mxu0 0.0
    %1061 = vmatpush2.msra.mxu0 0.0
    %1062 = vmatprep.subr.mxu0 0.0
    %1063 = vmatpush2.msra.mxu0 0.0
    %1064 = vmatprep.subr.mxu0 0.0
    %1065 = vmatpush2.msra.mxu0 0.0
    %1066 = vmatprep.subr.mxu0 0.0
    %1067 = vmatpush2.msra.mxu0 0.0
    %1068 = vmatprep.subr.mxu0 0.0
    %1069 = vmatpush2.msra.mxu0 0.0
    %1070 = vmatprep.subr.mxu0 0.0
    %1071 = vmatpush2.msra.mxu0 0.0
    %1072 = vmatprep.subr.mxu0 0.0
    %1073 = vmatpush2.msra.mxu0 0.0
    %1074 = vmatprep.mubr.f32.mxu0 0.0
    %1075 = vmatmul.mubr.f32.gmra.mxu0 %v1005
    %v1076 = vpop.f32.mrf.mxu0
    %v1077 = vadd.f32 0.0, %v1076
    %v1078 = vpop.f32.mrf.mxu0
    %1079 = vmatprep.mubr.f32.mxu0 0.0
    %1080 = vmatmul.mubr.f32.gmra.mxu0 %v1008
    %v1081 = vpop.f32.mrf.mxu0
    %v1082 = vadd.f32 0.0, %v1081
    %v1083 = vpop.f32.mrf.mxu0
    %1084 = vdwg.mxu0
    %s1085 = scalar_lea.vmem %s1, 64
    %v1086 = vld [vmem:[%s1085] sm:$0xff]
    %v1087 = vld [vmem:[%s1085 + $0x8] sm:$0xff]
    %v1088 = vld [vmem:[%s1085 + $0x10] sm:$0xff]
    %v1089 = vld [vmem:[%s1085 + $0x18] sm:$0xff]
    %s1090 = scalar_lea.vmem %s2, 256
    %v1091 = vld [vmem:[%s1090] sm:$0xff]
    %v1092 = vld [vmem:[%s1090 + $0x8] sm:$0xff]
    %v1093 = vld [vmem:[%s1090 + $0x10] sm:$0xff]
    %v1094 = vld [vmem:[%s1090 + $0x18] sm:$0xff]
    %v1095 = vld [vmem:[%s1090 + $0x20] sm:$0xff]
    %v1096 = vld [vmem:[%s1090 + $0x28] sm:$0xff]
    %v1097 = vld [vmem:[%s1090 + $0x30] sm:$0xff]
    %v1098 = vld [vmem:[%s1090 + $0x38] sm:$0xff]
    %v1099 = vld [vmem:[%s1090 + $0x40] sm:$0xff]
    %v1100 = vld [vmem:[%s1090 + $0x48] sm:$0xff]
    %v1101 = vld [vmem:[%s1090 + $0x50] sm:$0xff]
    %v1102 = vld [vmem:[%s1090 + $0x58] sm:$0xff]
    %v1103 = vld [vmem:[%s1090 + $0x60] sm:$0xff]
    %v1104 = vld [vmem:[%s1090 + $0x68] sm:$0xff]
    %v1105 = vld [vmem:[%s1090 + $0x70] sm:$0xff]
    %v1106 = vld [vmem:[%s1090 + $0x78] sm:$0xff]
    %1107 = vmatprep.subr.mxu0 0.0
    %1108 = vmatpush1.msra.mxu0 %v1106
    %1109 = vmatprep.subr.mxu0 0.0
    %1110 = vmatpush1.msra.mxu0 %v1105
    %1111 = vmatprep.subr.mxu0 0.0
    %1112 = vmatpush1.msra.mxu0 %v1104
    %1113 = vmatprep.subr.mxu0 0.0
    %1114 = vmatpush1.msra.mxu0 %v1103
    %1115 = vmatprep.subr.mxu0 0.0
    %1116 = vmatpush1.msra.mxu0 %v1102
    %1117 = vmatprep.subr.mxu0 0.0
    %1118 = vmatpush1.msra.mxu0 %v1101
    %1119 = vmatprep.subr.mxu0 0.0
    %1120 = vmatpush1.msra.mxu0 %v1100
    %1121 = vmatprep.subr.mxu0 0.0
    %1122 = vmatpush1.msra.mxu0 %v1099
    %1123 = vmatprep.subr.mxu0 0.0
    %1124 = vmatpush1.msra.mxu0 %v1098
    %1125 = vmatprep.subr.mxu0 0.0
    %1126 = vmatpush1.msra.mxu0 %v1097
    %1127 = vmatprep.subr.mxu0 0.0
    %1128 = vmatpush1.msra.mxu0 %v1096
    %1129 = vmatprep.subr.mxu0 0.0
    %1130 = vmatpush1.msra.mxu0 %v1095
    %1131 = vmatprep.subr.mxu0 0.0
    %1132 = vmatpush1.msra.mxu0 %v1094
    %1133 = vmatprep.subr.mxu0 0.0
    %1134 = vmatpush1.msra.mxu0 %v1093
    %1135 = vmatprep.subr.mxu0 0.0
    %1136 = vmatpush1.msra.mxu0 %v1092
    %1137 = vmatprep.subr.mxu0 0.0
    %1138 = vmatpush1.msra.mxu0 %v1091
    %1139 = vmatprep.subr.mxu0 0.0
    %1140 = vmatpush2.msra.mxu0 0.0
    %1141 = vmatprep.subr.mxu0 0.0
    %1142 = vmatpush2.msra.mxu0 0.0
    %1143 = vmatprep.subr.mxu0 0.0
    %1144 = vmatpush2.msra.mxu0 0.0
    %1145 = vmatprep.subr.mxu0 0.0
    %1146 = vmatpush2.msra.mxu0 0.0
    %1147 = vmatprep.subr.mxu0 0.0
    %1148 = vmatpush2.msra.mxu0 0.0
    %1149 = vmatprep.subr.mxu0 0.0
    %1150 = vmatpush2.msra.mxu0 0.0
    %1151 = vmatprep.subr.mxu0 0.0
    %1152 = vmatpush2.msra.mxu0 0.0
    %1153 = vmatprep.subr.mxu0 0.0
    %1154 = vmatpush2.msra.mxu0 0.0
    %1155 = vmatprep.subr.mxu0 0.0
    %1156 = vmatpush2.msra.mxu0 0.0
    %1157 = vmatprep.subr.mxu0 0.0
    %1158 = vmatpush2.msra.mxu0 0.0
    %1159 = vmatprep.subr.mxu0 0.0
    %1160 = vmatpush2.msra.mxu0 0.0
    %1161 = vmatprep.subr.mxu0 0.0
    %1162 = vmatpush2.msra.mxu0 0.0
    %1163 = vmatprep.subr.mxu0 0.0
    %1164 = vmatpush2.msra.mxu0 0.0
    %1165 = vmatprep.subr.mxu0 0.0
    %1166 = vmatpush2.msra.mxu0 0.0
    %1167 = vmatprep.subr.mxu0 0.0
    %1168 = vmatpush2.msra.mxu0 0.0
    %1169 = vmatprep.subr.mxu0 0.0
    %1170 = vmatpush2.msra.mxu0 0.0
    %1171 = vmatprep.mubr.f32.mxu0 0.0
    %1172 = vmatmul.mubr.f32.gmra.mxu0 %v1086
    %v1173 = vpop.f32.mrf.mxu0
    %v1174 = vadd.f32 0.0, %v1173
    %v1175 = vpop.f32.mrf.mxu0
    %1176 = vmatprep.mubr.f32.mxu0 0.0
    %1177 = vmatmul.mubr.f32.gmra.mxu0 %v1087
    %v1178 = vpop.f32.mrf.mxu0
    %v1179 = vadd.f32 0.0, %v1178
    %v1180 = vpop.f32.mrf.mxu0
    %1181 = vmatprep.mubr.f32.mxu0 0.0
    %1182 = vmatmul.mubr.f32.gmra.mxu0 %v1088
    %v1183 = vpop.f32.mrf.mxu0
    %v1184 = vadd.f32 0.0, %v1183
    %v1185 = vpop.f32.mrf.mxu0
    %1186 = vmatprep.mubr.f32.mxu0 0.0
    %1187 = vmatmul.mubr.f32.gmra.mxu0 %v1089
    %v1188 = vpop.f32.mrf.mxu0
    %v1189 = vadd.f32 0.0, %v1188
    %v1190 = vpop.f32.mrf.mxu0
    %1191 = vdwg.mxu0
    %1194 = vrot.lane.b32.xlu0 %v1174, 96
    %v1195 = vpop.permute.xlu0 %1194
    %1196 = vrot.lane.b32.xlu0 %v1179, 96
    %v1197 = vpop.permute.xlu0 %1196
    %v1198 = vsel %vm174, %v1174, 0
    %v1200 = vsel %vm174, %v1179, 0
    %v1202 = vsel %vm174, %v1195, 0
    %v1204 = vsel %vm174, %v1197, 0
    %1206 = vmatprep.subr.mxu0 0.0
    %1207 = vmatpush1.xpose.msra.mxu0 0.0
    %1208 = vmatprep.subr.mxu0 0.0
    %1209 = vmatpush1.xpose.msra.mxu0 0.0
    %1210 = vmatprep.subr.mxu0 0.0
    %1211 = vmatpush1.xpose.msra.mxu0 0.0
    %1212 = vmatprep.subr.mxu0 0.0
    %1213 = vmatpush1.xpose.msra.mxu0 0.0
    %1214 = vmatprep.subr.mxu0 0.0
    %1215 = vmatpush1.xpose.msra.mxu0 0.0
    %1216 = vmatprep.subr.mxu0 0.0
    %1217 = vmatpush1.xpose.msra.mxu0 0.0
    %1218 = vmatprep.subr.mxu0 0.0
    %1219 = vmatpush1.xpose.msra.mxu0 0.0
    %1220 = vmatprep.subr.mxu0 0.0
    %1221 = vmatpush1.xpose.msra.mxu0 0.0
    %1222 = vmatprep.subr.mxu0 0.0
    %1223 = vmatpush1.xpose.msra.mxu0 0.0
    %1224 = vmatprep.subr.mxu0 0.0
    %1225 = vmatpush1.xpose.msra.mxu0 0.0
    %1226 = vmatprep.subr.mxu0 0.0
    %1227 = vmatpush1.xpose.msra.mxu0 0.0
    %1228 = vmatprep.subr.mxu0 0.0
    %1229 = vmatpush1.xpose.msra.mxu0 0.0
    %1230 = vmatprep.subr.mxu0 0.0
    %1231 = vmatpush1.xpose.msra.mxu0 0.0
    %1232 = vmatprep.subr.mxu0 0.0
    %1233 = vmatpush1.xpose.msra.mxu0 0.0
    %1234 = vmatprep.subr.mxu0 0.0
    %1235 = vmatpush1.xpose.msra.mxu0 %v1204
    %1236 = vmatprep.subr.mxu0 0.0
    %1237 = vmatpush1.xpose.msra.mxu0 %v1202
    %1238 = vmatprep.subr.mxu0 0.0
    %1239 = vmatpush2.xpose.msra.mxu0 0.0
    %1240 = vmatprep.subr.mxu0 0.0
    %1241 = vmatpush2.xpose.msra.mxu0 0.0
    %1242 = vmatprep.subr.mxu0 0.0
    %1243 = vmatpush2.xpose.msra.mxu0 0.0
    %1244 = vmatprep.subr.mxu0 0.0
    %1245 = vmatpush2.xpose.msra.mxu0 0.0
    %1246 = vmatprep.subr.mxu0 0.0
    %1247 = vmatpush2.xpose.msra.mxu0 0.0
    %1248 = vmatprep.subr.mxu0 0.0
    %1249 = vmatpush2.xpose.msra.mxu0 0.0
    %1250 = vmatprep.subr.mxu0 0.0
    %1251 = vmatpush2.xpose.msra.mxu0 0.0
    %1252 = vmatprep.subr.mxu0 0.0
    %1253 = vmatpush2.xpose.msra.mxu0 0.0
    %1254 = vmatprep.subr.mxu0 0.0
    %1255 = vmatpush2.xpose.msra.mxu0 0.0
    %1256 = vmatprep.subr.mxu0 0.0
    %1257 = vmatpush2.xpose.msra.mxu0 0.0
    %1258 = vmatprep.subr.mxu0 0.0
    %1259 = vmatpush2.xpose.msra.mxu0 0.0
    %1260 = vmatprep.subr.mxu0 0.0
    %1261 = vmatpush2.xpose.msra.mxu0 0.0
    %1262 = vmatprep.subr.mxu0 0.0
    %1263 = vmatpush2.xpose.msra.mxu0 0.0
    %1264 = vmatprep.subr.mxu0 0.0
    %1265 = vmatpush2.xpose.msra.mxu0 0.0
    %1266 = vmatprep.subr.mxu0 0.0
    %1267 = vmatpush2.xpose.msra.mxu0 0.0
    %1268 = vmatprep.subr.mxu0 0.0
    %1269 = vmatpush2.xpose.msra.mxu0 0.0
    %1270 = vmatprep.mubr.f32.mxu0 0.0
    %1271 = vmatmul.mubr.f32.gmra.mxu0 %v1198
    %v1272 = vpop.f32.mrf.mxu0
    %v1273 = vadd.f32 0.0, %v1272
    %v1274 = vpop.f32.mrf.mxu0
    %1275 = vmatprep.mubr.f32.mxu0 0.0
    %1276 = vmatmul.mubr.f32.gmra.mxu0 %v1200
    %v1277 = vpop.f32.mrf.mxu0
    %v1278 = vadd.f32 0.0, %v1277
    %v1279 = vpop.f32.mrf.mxu0
    %1280 = vdwg.mxu0
    %v1281 = vmul.f32 %v1273, 0.088388346
    %v1282 = vmul.f32 %v1278, 0.088388346
    %v1283 = vadd.f32 %v1281, %v57
    %v1284 = vadd.f32 %v1282, %v58
    %v1285 = vsel %vm262, %v1283, -inf
    %1286 = vmax.xlane.f32.xlu0 %v1285
    %v1287 = vpop.xlane.xlu0 %1286
    %v1288 = vsel %vm262, %v1284, -inf
    %1289 = vmax.xlane.f32.xlu0 %v1288
    %v1290 = vpop.xlane.xlu0 %1289
    %v1291 = vsub.f32 %v1283, %v1287
    %v1292 = vsub.f32 %v1284, %v1290
    %v1293 = vmul.f32 %v1291, 1.442695
    %v1294 = vpow.pop %v1293
    %v1295 = vmul.f32 %v1292, 1.442695
    %v1296 = vpow.pop %v1295
    %v1297 = vsel %vm262, %v1294, 0.0
    %1298 = vadd.xlane.f32.xlu0 %v1297
    %v1299 = vpop.xlane.xlu0 %1298
    %v1300 = vsel %vm262, %v1296, 0.0
    %1301 = vadd.xlane.f32.xlu0 %v1300
    %v1302 = vpop.xlane.xlu0 %1301
    %v1303 = vrcp.pop %v1299
    %v1304 = vrcp.pop %v1302
    %v1305 = vmul.f32 %v1294, %v1303
    %v1306 = vmul.f32 %v1296, %v1304
    %1307 = vrot.lane.b32.xlu0 %v1174, 64
    %v1308 = vpop.permute.xlu0 %1307
    %1309 = vrot.lane.b32.xlu0 %v1179, 64
    %v1310 = vpop.permute.xlu0 %1309
    %v1314 = vsel %vm262, %v1305, 0
    %v1317 = vsel %vm262, %v1306, 0
    %1319 = vmatprep.subr.mxu0 0.0
    %1320 = vmatpush1.msra.mxu0 0.0
    %1321 = vmatprep.subr.mxu0 0.0
    %1322 = vmatpush1.msra.mxu0 0.0
    %1323 = vmatprep.subr.mxu0 0.0
    %1324 = vmatpush1.msra.mxu0 0.0
    %1325 = vmatprep.subr.mxu0 0.0
    %1326 = vmatpush1.msra.mxu0 0.0
    %1327 = vmatprep.subr.mxu0 0.0
    %1328 = vmatpush1.msra.mxu0 0.0
    %1329 = vmatprep.subr.mxu0 0.0
    %1330 = vmatpush1.msra.mxu0 0.0
    %1331 = vmatprep.subr.mxu0 0.0
    %1332 = vmatpush1.msra.mxu0 0.0
    %1333 = vmatprep.subr.mxu0 0.0
    %1334 = vmatpush1.msra.mxu0 0.0
    %1335 = vmatprep.subr.mxu0 0.0
    %1336 = vmatpush1.msra.mxu0 0.0
    %1337 = vmatprep.subr.mxu0 0.0
    %1338 = vmatpush1.msra.mxu0 0.0
    %1339 = vmatprep.subr.mxu0 0.0
    %1340 = vmatpush1.msra.mxu0 0.0
    %1341 = vmatprep.subr.mxu0 0.0
    %1342 = vmatpush1.msra.mxu0 0.0
    %1343 = vmatprep.subr.mxu0 0.0
    %1344 = vmatpush1.msra.mxu0 0.0
    %1345 = vmatprep.subr.mxu0 0.0
    %1346 = vmatpush1.msra.mxu0 0.0
    %1347 = vmatprep.subr.mxu0 0.0
    %1348 = vmatpush1.msra.mxu0 %v1310
    %1349 = vmatprep.subr.mxu0 0.0
    %1350 = vmatpush1.msra.mxu0 %v1308
    %1351 = vmatprep.subr.mxu0 0.0
    %1352 = vmatpush2.msra.mxu0 0.0
    %1353 = vmatprep.subr.mxu0 0.0
    %1354 = vmatpush2.msra.mxu0 0.0
    %1355 = vmatprep.subr.mxu0 0.0
    %1356 = vmatpush2.msra.mxu0 0.0
    %1357 = vmatprep.subr.mxu0 0.0
    %1358 = vmatpush2.msra.mxu0 0.0
    %1359 = vmatprep.subr.mxu0 0.0
    %1360 = vmatpush2.msra.mxu0 0.0
    %1361 = vmatprep.subr.mxu0 0.0
    %1362 = vmatpush2.msra.mxu0 0.0
    %1363 = vmatprep.subr.mxu0 0.0
    %1364 = vmatpush2.msra.mxu0 0.0
    %1365 = vmatprep.subr.mxu0 0.0
    %1366 = vmatpush2.msra.mxu0 0.0
    %1367 = vmatprep.subr.mxu0 0.0
    %1368 = vmatpush2.msra.mxu0 0.0
    %1369 = vmatprep.subr.mxu0 0.0
    %1370 = vmatpush2.msra.mxu0 0.0
    %1371 = vmatprep.subr.mxu0 0.0
    %1372 = vmatpush2.msra.mxu0 0.0
    %1373 = vmatprep.subr.mxu0 0.0
    %1374 = vmatpush2.msra.mxu0 0.0
    %1375 = vmatprep.subr.mxu0 0.0
    %1376 = vmatpush2.msra.mxu0 0.0
    %1377 = vmatprep.subr.mxu0 0.0
    %1378 = vmatpush2.msra.mxu0 0.0
    %1379 = vmatprep.subr.mxu0 0.0
    %1380 = vmatpush2.msra.mxu0 0.0
    %1381 = vmatprep.subr.mxu0 0.0
    %1382 = vmatpush2.msra.mxu0 0.0
    %1383 = vmatprep.mubr.f32.mxu0 0.0
    %1384 = vmatmul.mubr.f32.gmra.mxu0 %v1314
    %v1385 = vpop.f32.mrf.mxu0
    %v1386 = vadd.f32 0.0, %v1385
    %v1387 = vpop.f32.mrf.mxu0
    %1388 = vmatprep.mubr.f32.mxu0 0.0
    %1389 = vmatmul.mubr.f32.gmra.mxu0 %v1317
    %v1390 = vpop.f32.mrf.mxu0
    %v1391 = vadd.f32 0.0, %v1390
    %v1392 = vpop.f32.mrf.mxu0
    %1393 = vdwg.mxu0
    %1396 = vrot.lane.b32.xlu0 %v1184, 96
    %v1397 = vpop.permute.xlu0 %1396
    %1398 = vrot.lane.b32.xlu0 %v1189, 96
    %v1399 = vpop.permute.xlu0 %1398
    %v1400 = vsel %vm174, %v1184, 0
    %v1402 = vsel %vm174, %v1189, 0
    %v1404 = vsel %vm174, %v1397, 0
    %v1406 = vsel %vm174, %v1399, 0
    %1408 = vmatprep.subr.mxu0 0.0
    %1409 = vmatpush1.xpose.msra.mxu0 0.0
    %1410 = vmatprep.subr.mxu0 0.0
    %1411 = vmatpush1.xpose.msra.mxu0 0.0
    %1412 = vmatprep.subr.mxu0 0.0
    %1413 = vmatpush1.xpose.msra.mxu0 0.0
    %1414 = vmatprep.subr.mxu0 0.0
    %1415 = vmatpush1.xpose.msra.mxu0 0.0
    %1416 = vmatprep.subr.mxu0 0.0
    %1417 = vmatpush1.xpose.msra.mxu0 0.0
    %1418 = vmatprep.subr.mxu0 0.0
    %1419 = vmatpush1.xpose.msra.mxu0 0.0
    %1420 = vmatprep.subr.mxu0 0.0
    %1421 = vmatpush1.xpose.msra.mxu0 0.0
    %1422 = vmatprep.subr.mxu0 0.0
    %1423 = vmatpush1.xpose.msra.mxu0 0.0
    %1424 = vmatprep.subr.mxu0 0.0
    %1425 = vmatpush1.xpose.msra.mxu0 0.0
    %1426 = vmatprep.subr.mxu0 0.0
    %1427 = vmatpush1.xpose.msra.mxu0 0.0
    %1428 = vmatprep.subr.mxu0 0.0
    %1429 = vmatpush1.xpose.msra.mxu0 0.0
    %1430 = vmatprep.subr.mxu0 0.0
    %1431 = vmatpush1.xpose.msra.mxu0 0.0
    %1432 = vmatprep.subr.mxu0 0.0
    %1433 = vmatpush1.xpose.msra.mxu0 0.0
    %1434 = vmatprep.subr.mxu0 0.0
    %1435 = vmatpush1.xpose.msra.mxu0 0.0
    %1436 = vmatprep.subr.mxu0 0.0
    %1437 = vmatpush1.xpose.msra.mxu0 %v1406
    %1438 = vmatprep.subr.mxu0 0.0
    %1439 = vmatpush1.xpose.msra.mxu0 %v1404
    %1440 = vmatprep.subr.mxu0 0.0
    %1441 = vmatpush2.xpose.msra.mxu0 0.0
    %1442 = vmatprep.subr.mxu0 0.0
    %1443 = vmatpush2.xpose.msra.mxu0 0.0
    %1444 = vmatprep.subr.mxu0 0.0
    %1445 = vmatpush2.xpose.msra.mxu0 0.0
    %1446 = vmatprep.subr.mxu0 0.0
    %1447 = vmatpush2.xpose.msra.mxu0 0.0
    %1448 = vmatprep.subr.mxu0 0.0
    %1449 = vmatpush2.xpose.msra.mxu0 0.0
    %1450 = vmatprep.subr.mxu0 0.0
    %1451 = vmatpush2.xpose.msra.mxu0 0.0
    %1452 = vmatprep.subr.mxu0 0.0
    %1453 = vmatpush2.xpose.msra.mxu0 0.0
    %1454 = vmatprep.subr.mxu0 0.0
    %1455 = vmatpush2.xpose.msra.mxu0 0.0
    %1456 = vmatprep.subr.mxu0 0.0
    %1457 = vmatpush2.xpose.msra.mxu0 0.0
    %1458 = vmatprep.subr.mxu0 0.0
    %1459 = vmatpush2.xpose.msra.mxu0 0.0
    %1460 = vmatprep.subr.mxu0 0.0
    %1461 = vmatpush2.xpose.msra.mxu0 0.0
    %1462 = vmatprep.subr.mxu0 0.0
    %1463 = vmatpush2.xpose.msra.mxu0 0.0
    %1464 = vmatprep.subr.mxu0 0.0
    %1465 = vmatpush2.xpose.msra.mxu0 0.0
    %1466 = vmatprep.subr.mxu0 0.0
    %1467 = vmatpush2.xpose.msra.mxu0 0.0
    %1468 = vmatprep.subr.mxu0 0.0
    %1469 = vmatpush2.xpose.msra.mxu0 0.0
    %1470 = vmatprep.subr.mxu0 0.0
    %1471 = vmatpush2.xpose.msra.mxu0 0.0
    %1472 = vmatprep.mubr.f32.mxu0 0.0
    %1473 = vmatmul.mubr.f32.gmra.mxu0 %v1400
    %v1474 = vpop.f32.mrf.mxu0
    %v1475 = vadd.f32 0.0, %v1474
    %v1476 = vpop.f32.mrf.mxu0
    %1477 = vmatprep.mubr.f32.mxu0 0.0
    %1478 = vmatmul.mubr.f32.gmra.mxu0 %v1402
    %v1479 = vpop.f32.mrf.mxu0
    %v1480 = vadd.f32 0.0, %v1479
    %v1481 = vpop.f32.mrf.mxu0
    %1482 = vdwg.mxu0
    %v1483 = vmul.f32 %v1475, 0.088388346
    %v1484 = vmul.f32 %v1480, 0.088388346
    %v1485 = vadd.f32 %v1483, %v57
    %v1486 = vadd.f32 %v1484, %v58
    %v1487 = vsel %vm262, %v1485, -inf
    %1488 = vmax.xlane.f32.xlu0 %v1487
    %v1489 = vpop.xlane.xlu0 %1488
    %v1490 = vsel %vm262, %v1486, -inf
    %1491 = vmax.xlane.f32.xlu0 %v1490
    %v1492 = vpop.xlane.xlu0 %1491
    %v1493 = vsub.f32 %v1485, %v1489
    %v1494 = vsub.f32 %v1486, %v1492
    %v1495 = vmul.f32 %v1493, 1.442695
    %v1496 = vpow.pop %v1495
    %v1497 = vmul.f32 %v1494, 1.442695
    %v1498 = vpow.pop %v1497
    %v1499 = vsel %vm262, %v1496, 0.0
    %1500 = vadd.xlane.f32.xlu0 %v1499
    %v1501 = vpop.xlane.xlu0 %1500
    %v1502 = vsel %vm262, %v1498, 0.0
    %1503 = vadd.xlane.f32.xlu0 %v1502
    %v1504 = vpop.xlane.xlu0 %1503
    %v1505 = vrcp.pop %v1501
    %v1506 = vrcp.pop %v1504
    %v1507 = vmul.f32 %v1496, %v1505
    %v1508 = vmul.f32 %v1498, %v1506
    %1509 = vrot.lane.b32.xlu0 %v1184, 64
    %v1510 = vpop.permute.xlu0 %1509
    %1511 = vrot.lane.b32.xlu0 %v1189, 64
    %v1512 = vpop.permute.xlu0 %1511
    %v1516 = vsel %vm262, %v1507, 0
    %v1519 = vsel %vm262, %v1508, 0
    %1521 = vmatprep.subr.mxu0 0.0
    %1522 = vmatpush1.msra.mxu0 0.0
    %1523 = vmatprep.subr.mxu0 0.0
    %1524 = vmatpush1.msra.mxu0 0.0
    %1525 = vmatprep.subr.mxu0 0.0
    %1526 = vmatpush1.msra.mxu0 0.0
    %1527 = vmatprep.subr.mxu0 0.0
    %1528 = vmatpush1.msra.mxu0 0.0
    %1529 = vmatprep.subr.mxu0 0.0
    %1530 = vmatpush1.msra.mxu0 0.0
    %1531 = vmatprep.subr.mxu0 0.0
    %1532 = vmatpush1.msra.mxu0 0.0
    %1533 = vmatprep.subr.mxu0 0.0
    %1534 = vmatpush1.msra.mxu0 0.0
    %1535 = vmatprep.subr.mxu0 0.0
    %1536 = vmatpush1.msra.mxu0 0.0
    %1537 = vmatprep.subr.mxu0 0.0
    %1538 = vmatpush1.msra.mxu0 0.0
    %1539 = vmatprep.subr.mxu0 0.0
    %1540 = vmatpush1.msra.mxu0 0.0
    %1541 = vmatprep.subr.mxu0 0.0
    %1542 = vmatpush1.msra.mxu0 0.0
    %1543 = vmatprep.subr.mxu0 0.0
    %1544 = vmatpush1.msra.mxu0 0.0
    %1545 = vmatprep.subr.mxu0 0.0
    %1546 = vmatpush1.msra.mxu0 0.0
    %1547 = vmatprep.subr.mxu0 0.0
    %1548 = vmatpush1.msra.mxu0 0.0
    %1549 = vmatprep.subr.mxu0 0.0
    %1550 = vmatpush1.msra.mxu0 %v1512
    %1551 = vmatprep.subr.mxu0 0.0
    %1552 = vmatpush1.msra.mxu0 %v1510
    %1553 = vmatprep.subr.mxu0 0.0
    %1554 = vmatpush2.msra.mxu0 0.0
    %1555 = vmatprep.subr.mxu0 0.0
    %1556 = vmatpush2.msra.mxu0 0.0
    %1557 = vmatprep.subr.mxu0 0.0
    %1558 = vmatpush2.msra.mxu0 0.0
    %1559 = vmatprep.subr.mxu0 0.0
    %1560 = vmatpush2.msra.mxu0 0.0
    %1561 = vmatprep.subr.mxu0 0.0
    %1562 = vmatpush2.msra.mxu0 0.0
    %1563 = vmatprep.subr.mxu0 0.0
    %1564 = vmatpush2.msra.mxu0 0.0
    %1565 = vmatprep.subr.mxu0 0.0
    %1566 = vmatpush2.msra.mxu0 0.0
    %1567 = vmatprep.subr.mxu0 0.0
    %1568 = vmatpush2.msra.mxu0 0.0
    %1569 = vmatprep.subr.mxu0 0.0
    %1570 = vmatpush2.msra.mxu0 0.0
    %1571 = vmatprep.subr.mxu0 0.0
    %1572 = vmatpush2.msra.mxu0 0.0
    %1573 = vmatprep.subr.mxu0 0.0
    %1574 = vmatpush2.msra.mxu0 0.0
    %1575 = vmatprep.subr.mxu0 0.0
    %1576 = vmatpush2.msra.mxu0 0.0
    %1577 = vmatprep.subr.mxu0 0.0
    %1578 = vmatpush2.msra.mxu0 0.0
    %1579 = vmatprep.subr.mxu0 0.0
    %1580 = vmatpush2.msra.mxu0 0.0
    %1581 = vmatprep.subr.mxu0 0.0
    %1582 = vmatpush2.msra.mxu0 0.0
    %1583 = vmatprep.subr.mxu0 0.0
    %1584 = vmatpush2.msra.mxu0 0.0
    %1585 = vmatprep.mubr.f32.mxu0 0.0
    %1586 = vmatmul.mubr.f32.gmra.mxu0 %v1516
    %v1587 = vpop.f32.mrf.mxu0
    %v1588 = vadd.f32 0.0, %v1587
    %v1589 = vpop.f32.mrf.mxu0
    %1590 = vmatprep.mubr.f32.mxu0 0.0
    %1591 = vmatmul.mubr.f32.gmra.mxu0 %v1519
    %v1592 = vpop.f32.mrf.mxu0
    %v1593 = vadd.f32 0.0, %v1592
    %v1594 = vpop.f32.mrf.mxu0
    %1595 = vdwg.mxu0
    %s1596 = scalar_lea.vmem %s1, 96
    %v1597 = vld [vmem:[%s1596] sm:$0xff]
    %v1598 = vld [vmem:[%s1596 + $0x8] sm:$0xff]
    %v1599 = vld [vmem:[%s1596 + $0x10] sm:$0xff]
    %v1600 = vld [vmem:[%s1596 + $0x18] sm:$0xff]
    %s1601 = scalar_lea.vmem %s2, 384
    %v1602 = vld [vmem:[%s1601] sm:$0xff]
    %v1603 = vld [vmem:[%s1601 + $0x8] sm:$0xff]
    %v1604 = vld [vmem:[%s1601 + $0x10] sm:$0xff]
    %v1605 = vld [vmem:[%s1601 + $0x18] sm:$0xff]
    %v1606 = vld [vmem:[%s1601 + $0x20] sm:$0xff]
    %v1607 = vld [vmem:[%s1601 + $0x28] sm:$0xff]
    %v1608 = vld [vmem:[%s1601 + $0x30] sm:$0xff]
    %v1609 = vld [vmem:[%s1601 + $0x38] sm:$0xff]
    %v1610 = vld [vmem:[%s1601 + $0x40] sm:$0xff]
    %v1611 = vld [vmem:[%s1601 + $0x48] sm:$0xff]
    %v1612 = vld [vmem:[%s1601 + $0x50] sm:$0xff]
    %v1613 = vld [vmem:[%s1601 + $0x58] sm:$0xff]
    %v1614 = vld [vmem:[%s1601 + $0x60] sm:$0xff]
    %v1615 = vld [vmem:[%s1601 + $0x68] sm:$0xff]
    %v1616 = vld [vmem:[%s1601 + $0x70] sm:$0xff]
    %v1617 = vld [vmem:[%s1601 + $0x78] sm:$0xff]
    %1618 = vmatprep.subr.mxu0 0.0
    %1619 = vmatpush1.msra.mxu0 %v1617
    %1620 = vmatprep.subr.mxu0 0.0
    %1621 = vmatpush1.msra.mxu0 %v1616
    %1622 = vmatprep.subr.mxu0 0.0
    %1623 = vmatpush1.msra.mxu0 %v1615
    %1624 = vmatprep.subr.mxu0 0.0
    %1625 = vmatpush1.msra.mxu0 %v1614
    %1626 = vmatprep.subr.mxu0 0.0
    %1627 = vmatpush1.msra.mxu0 %v1613
    %1628 = vmatprep.subr.mxu0 0.0
    %1629 = vmatpush1.msra.mxu0 %v1612
    %1630 = vmatprep.subr.mxu0 0.0
    %1631 = vmatpush1.msra.mxu0 %v1611
    %1632 = vmatprep.subr.mxu0 0.0
    %1633 = vmatpush1.msra.mxu0 %v1610
    %1634 = vmatprep.subr.mxu0 0.0
    %1635 = vmatpush1.msra.mxu0 %v1609
    %1636 = vmatprep.subr.mxu0 0.0
    %1637 = vmatpush1.msra.mxu0 %v1608
    %1638 = vmatprep.subr.mxu0 0.0
    %1639 = vmatpush1.msra.mxu0 %v1607
    %1640 = vmatprep.subr.mxu0 0.0
    %1641 = vmatpush1.msra.mxu0 %v1606
    %1642 = vmatprep.subr.mxu0 0.0
    %1643 = vmatpush1.msra.mxu0 %v1605
    %1644 = vmatprep.subr.mxu0 0.0
    %1645 = vmatpush1.msra.mxu0 %v1604
    %1646 = vmatprep.subr.mxu0 0.0
    %1647 = vmatpush1.msra.mxu0 %v1603
    %1648 = vmatprep.subr.mxu0 0.0
    %1649 = vmatpush1.msra.mxu0 %v1602
    %1650 = vmatprep.subr.mxu0 0.0
    %1651 = vmatpush2.msra.mxu0 0.0
    %1652 = vmatprep.subr.mxu0 0.0
    %1653 = vmatpush2.msra.mxu0 0.0
    %1654 = vmatprep.subr.mxu0 0.0
    %1655 = vmatpush2.msra.mxu0 0.0
    %1656 = vmatprep.subr.mxu0 0.0
    %1657 = vmatpush2.msra.mxu0 0.0
    %1658 = vmatprep.subr.mxu0 0.0
    %1659 = vmatpush2.msra.mxu0 0.0
    %1660 = vmatprep.subr.mxu0 0.0
    %1661 = vmatpush2.msra.mxu0 0.0
    %1662 = vmatprep.subr.mxu0 0.0
    %1663 = vmatpush2.msra.mxu0 0.0
    %1664 = vmatprep.subr.mxu0 0.0
    %1665 = vmatpush2.msra.mxu0 0.0
    %1666 = vmatprep.subr.mxu0 0.0
    %1667 = vmatpush2.msra.mxu0 0.0
    %1668 = vmatprep.subr.mxu0 0.0
    %1669 = vmatpush2.msra.mxu0 0.0
    %1670 = vmatprep.subr.mxu0 0.0
    %1671 = vmatpush2.msra.mxu0 0.0
    %1672 = vmatprep.subr.mxu0 0.0
    %1673 = vmatpush2.msra.mxu0 0.0
    %1674 = vmatprep.subr.mxu0 0.0
    %1675 = vmatpush2.msra.mxu0 0.0
    %1676 = vmatprep.subr.mxu0 0.0
    %1677 = vmatpush2.msra.mxu0 0.0
    %1678 = vmatprep.subr.mxu0 0.0
    %1679 = vmatpush2.msra.mxu0 0.0
    %1680 = vmatprep.subr.mxu0 0.0
    %1681 = vmatpush2.msra.mxu0 0.0
    %1682 = vmatprep.mubr.f32.mxu0 0.0
    %1683 = vmatmul.mubr.f32.gmra.mxu0 %v1597
    %v1684 = vpop.f32.mrf.mxu0
    %v1685 = vadd.f32 0.0, %v1684
    %v1686 = vpop.f32.mrf.mxu0
    %1687 = vmatprep.mubr.f32.mxu0 0.0
    %1688 = vmatmul.mubr.f32.gmra.mxu0 %v1598
    %v1689 = vpop.f32.mrf.mxu0
    %v1690 = vadd.f32 0.0, %v1689
    %v1691 = vpop.f32.mrf.mxu0
    %1692 = vmatprep.mubr.f32.mxu0 0.0
    %1693 = vmatmul.mubr.f32.gmra.mxu0 %v1599
    %v1694 = vpop.f32.mrf.mxu0
    %v1695 = vadd.f32 0.0, %v1694
    %v1696 = vpop.f32.mrf.mxu0
    %1697 = vmatprep.mubr.f32.mxu0 0.0
    %1698 = vmatmul.mubr.f32.gmra.mxu0 %v1600
    %v1699 = vpop.f32.mrf.mxu0
    %v1700 = vadd.f32 0.0, %v1699
    %v1701 = vpop.f32.mrf.mxu0
    %1702 = vdwg.mxu0
    %1705 = vrot.lane.b32.xlu0 %v1685, 96
    %v1706 = vpop.permute.xlu0 %1705
    %1707 = vrot.lane.b32.xlu0 %v1690, 96
    %v1708 = vpop.permute.xlu0 %1707
    %v1709 = vsel %vm174, %v1685, 0
    %v1711 = vsel %vm174, %v1690, 0
    %v1713 = vsel %vm174, %v1706, 0
    %v1715 = vsel %vm174, %v1708, 0
    %1717 = vmatprep.subr.mxu0 0.0
    %1718 = vmatpush1.xpose.msra.mxu0 0.0
    %1719 = vmatprep.subr.mxu0 0.0
    %1720 = vmatpush1.xpose.msra.mxu0 0.0
    %1721 = vmatprep.subr.mxu0 0.0
    %1722 = vmatpush1.xpose.msra.mxu0 0.0
    %1723 = vmatprep.subr.mxu0 0.0
    %1724 = vmatpush1.xpose.msra.mxu0 0.0
    %1725 = vmatprep.subr.mxu0 0.0
    %1726 = vmatpush1.xpose.msra.mxu0 0.0
    %1727 = vmatprep.subr.mxu0 0.0
    %1728 = vmatpush1.xpose.msra.mxu0 0.0
    %1729 = vmatprep.subr.mxu0 0.0
    %1730 = vmatpush1.xpose.msra.mxu0 0.0
    %1731 = vmatprep.subr.mxu0 0.0
    %1732 = vmatpush1.xpose.msra.mxu0 0.0
    %1733 = vmatprep.subr.mxu0 0.0
    %1734 = vmatpush1.xpose.msra.mxu0 0.0
    %1735 = vmatprep.subr.mxu0 0.0
    %1736 = vmatpush1.xpose.msra.mxu0 0.0
    %1737 = vmatprep.subr.mxu0 0.0
    %1738 = vmatpush1.xpose.msra.mxu0 0.0
    %1739 = vmatprep.subr.mxu0 0.0
    %1740 = vmatpush1.xpose.msra.mxu0 0.0
    %1741 = vmatprep.subr.mxu0 0.0
    %1742 = vmatpush1.xpose.msra.mxu0 0.0
    %1743 = vmatprep.subr.mxu0 0.0
    %1744 = vmatpush1.xpose.msra.mxu0 0.0
    %1745 = vmatprep.subr.mxu0 0.0
    %1746 = vmatpush1.xpose.msra.mxu0 %v1715
    %1747 = vmatprep.subr.mxu0 0.0
    %1748 = vmatpush1.xpose.msra.mxu0 %v1713
    %1749 = vmatprep.subr.mxu0 0.0
    %1750 = vmatpush2.xpose.msra.mxu0 0.0
    %1751 = vmatprep.subr.mxu0 0.0
    %1752 = vmatpush2.xpose.msra.mxu0 0.0
    %1753 = vmatprep.subr.mxu0 0.0
    %1754 = vmatpush2.xpose.msra.mxu0 0.0
    %1755 = vmatprep.subr.mxu0 0.0
    %1756 = vmatpush2.xpose.msra.mxu0 0.0
    %1757 = vmatprep.subr.mxu0 0.0
    %1758 = vmatpush2.xpose.msra.mxu0 0.0
    %1759 = vmatprep.subr.mxu0 0.0
    %1760 = vmatpush2.xpose.msra.mxu0 0.0
    %1761 = vmatprep.subr.mxu0 0.0
    %1762 = vmatpush2.xpose.msra.mxu0 0.0
    %1763 = vmatprep.subr.mxu0 0.0
    %1764 = vmatpush2.xpose.msra.mxu0 0.0
    %1765 = vmatprep.subr.mxu0 0.0
    %1766 = vmatpush2.xpose.msra.mxu0 0.0
    %1767 = vmatprep.subr.mxu0 0.0
    %1768 = vmatpush2.xpose.msra.mxu0 0.0
    %1769 = vmatprep.subr.mxu0 0.0
    %1770 = vmatpush2.xpose.msra.mxu0 0.0
    %1771 = vmatprep.subr.mxu0 0.0
    %1772 = vmatpush2.xpose.msra.mxu0 0.0
    %1773 = vmatprep.subr.mxu0 0.0
    %1774 = vmatpush2.xpose.msra.mxu0 0.0
    %1775 = vmatprep.subr.mxu0 0.0
    %1776 = vmatpush2.xpose.msra.mxu0 0.0
    %1777 = vmatprep.subr.mxu0 0.0
    %1778 = vmatpush2.xpose.msra.mxu0 0.0
    %1779 = vmatprep.subr.mxu0 0.0
    %1780 = vmatpush2.xpose.msra.mxu0 0.0
    %1781 = vmatprep.mubr.f32.mxu0 0.0
    %1782 = vmatmul.mubr.f32.gmra.mxu0 %v1709
    %v1783 = vpop.f32.mrf.mxu0
    %v1784 = vadd.f32 0.0, %v1783
    %v1785 = vpop.f32.mrf.mxu0
    %1786 = vmatprep.mubr.f32.mxu0 0.0
    %1787 = vmatmul.mubr.f32.gmra.mxu0 %v1711
    %v1788 = vpop.f32.mrf.mxu0
    %v1789 = vadd.f32 0.0, %v1788
    %v1790 = vpop.f32.mrf.mxu0
    %1791 = vdwg.mxu0
    %v1792 = vmul.f32 %v1784, 0.088388346
    %v1793 = vmul.f32 %v1789, 0.088388346
    %v1794 = vadd.f32 %v1792, %v57
    %v1795 = vadd.f32 %v1793, %v58
    %v1796 = vsel %vm262, %v1794, -inf
    %1797 = vmax.xlane.f32.xlu0 %v1796
    %v1798 = vpop.xlane.xlu0 %1797
    %v1799 = vsel %vm262, %v1795, -inf
    %1800 = vmax.xlane.f32.xlu0 %v1799
    %v1801 = vpop.xlane.xlu0 %1800
    %v1802 = vsub.f32 %v1794, %v1798
    %v1803 = vsub.f32 %v1795, %v1801
    %v1804 = vmul.f32 %v1802, 1.442695
    %v1805 = vpow.pop %v1804
    %v1806 = vmul.f32 %v1803, 1.442695
    %v1807 = vpow.pop %v1806
    %v1808 = vsel %vm262, %v1805, 0.0
    %1809 = vadd.xlane.f32.xlu0 %v1808
    %v1810 = vpop.xlane.xlu0 %1809
    %v1811 = vsel %vm262, %v1807, 0.0
    %1812 = vadd.xlane.f32.xlu0 %v1811
    %v1813 = vpop.xlane.xlu0 %1812
    %v1814 = vrcp.pop %v1810
    %v1815 = vrcp.pop %v1813
    %v1816 = vmul.f32 %v1805, %v1814
    %v1817 = vmul.f32 %v1807, %v1815
    %1818 = vrot.lane.b32.xlu0 %v1685, 64
    %v1819 = vpop.permute.xlu0 %1818
    %1820 = vrot.lane.b32.xlu0 %v1690, 64
    %v1821 = vpop.permute.xlu0 %1820
    %v1825 = vsel %vm262, %v1816, 0
    %v1828 = vsel %vm262, %v1817, 0
    %1830 = vmatprep.subr.mxu0 0.0
    %1831 = vmatpush1.msra.mxu0 0.0
    %1832 = vmatprep.subr.mxu0 0.0
    %1833 = vmatpush1.msra.mxu0 0.0
    %1834 = vmatprep.subr.mxu0 0.0
    %1835 = vmatpush1.msra.mxu0 0.0
    %1836 = vmatprep.subr.mxu0 0.0
    %1837 = vmatpush1.msra.mxu0 0.0
    %1838 = vmatprep.subr.mxu0 0.0
    %1839 = vmatpush1.msra.mxu0 0.0
    %1840 = vmatprep.subr.mxu0 0.0
    %1841 = vmatpush1.msra.mxu0 0.0
    %1842 = vmatprep.subr.mxu0 0.0
    %1843 = vmatpush1.msra.mxu0 0.0
    %1844 = vmatprep.subr.mxu0 0.0
    %1845 = vmatpush1.msra.mxu0 0.0
    %1846 = vmatprep.subr.mxu0 0.0
    %1847 = vmatpush1.msra.mxu0 0.0
    %1848 = vmatprep.subr.mxu0 0.0
    %1849 = vmatpush1.msra.mxu0 0.0
    %1850 = vmatprep.subr.mxu0 0.0
    %1851 = vmatpush1.msra.mxu0 0.0
    %1852 = vmatprep.subr.mxu0 0.0
    %1853 = vmatpush1.msra.mxu0 0.0
    %1854 = vmatprep.subr.mxu0 0.0
    %1855 = vmatpush1.msra.mxu0 0.0
    %1856 = vmatprep.subr.mxu0 0.0
    %1857 = vmatpush1.msra.mxu0 0.0
    %1858 = vmatprep.subr.mxu0 0.0
    %1859 = vmatpush1.msra.mxu0 %v1821
    %1860 = vmatprep.subr.mxu0 0.0
    %1861 = vmatpush1.msra.mxu0 %v1819
    %1862 = vmatprep.subr.mxu0 0.0
    %1863 = vmatpush2.msra.mxu0 0.0
    %1864 = vmatprep.subr.mxu0 0.0
    %1865 = vmatpush2.msra.mxu0 0.0
    %1866 = vmatprep.subr.mxu0 0.0
    %1867 = vmatpush2.msra.mxu0 0.0
    %1868 = vmatprep.subr.mxu0 0.0
    %1869 = vmatpush2.msra.mxu0 0.0
    %1870 = vmatprep.subr.mxu0 0.0
    %1871 = vmatpush2.msra.mxu0 0.0
    %1872 = vmatprep.subr.mxu0 0.0
    %1873 = vmatpush2.msra.mxu0 0.0
    %1874 = vmatprep.subr.mxu0 0.0
    %1875 = vmatpush2.msra.mxu0 0.0
    %1876 = vmatprep.subr.mxu0 0.0
    %1877 = vmatpush2.msra.mxu0 0.0
    %1878 = vmatprep.subr.mxu0 0.0
    %1879 = vmatpush2.msra.mxu0 0.0
    %1880 = vmatprep.subr.mxu0 0.0
    %1881 = vmatpush2.msra.mxu0 0.0
    %1882 = vmatprep.subr.mxu0 0.0
    %1883 = vmatpush2.msra.mxu0 0.0
    %1884 = vmatprep.subr.mxu0 0.0
    %1885 = vmatpush2.msra.mxu0 0.0
    %1886 = vmatprep.subr.mxu0 0.0
    %1887 = vmatpush2.msra.mxu0 0.0
    %1888 = vmatprep.subr.mxu0 0.0
    %1889 = vmatpush2.msra.mxu0 0.0
    %1890 = vmatprep.subr.mxu0 0.0
    %1891 = vmatpush2.msra.mxu0 0.0
    %1892 = vmatprep.subr.mxu0 0.0
    %1893 = vmatpush2.msra.mxu0 0.0
    %1894 = vmatprep.mubr.f32.mxu0 0.0
    %1895 = vmatmul.mubr.f32.gmra.mxu0 %v1825
    %v1896 = vpop.f32.mrf.mxu0
    %v1897 = vadd.f32 0.0, %v1896
    %v1898 = vpop.f32.mrf.mxu0
    %1899 = vmatprep.mubr.f32.mxu0 0.0
    %1900 = vmatmul.mubr.f32.gmra.mxu0 %v1828
    %v1901 = vpop.f32.mrf.mxu0
    %v1902 = vadd.f32 0.0, %v1901
    %v1903 = vpop.f32.mrf.mxu0
    %1904 = vdwg.mxu0
    %1907 = vrot.lane.b32.xlu0 %v1695, 96
    %v1908 = vpop.permute.xlu0 %1907
    %1909 = vrot.lane.b32.xlu0 %v1700, 96
    %v1910 = vpop.permute.xlu0 %1909
    %v1911 = vsel %vm174, %v1695, 0
    %v1913 = vsel %vm174, %v1700, 0
    %v1915 = vsel %vm174, %v1908, 0
    %v1917 = vsel %vm174, %v1910, 0
    %1919 = vmatprep.subr.mxu0 0.0
    %1920 = vmatpush1.xpose.msra.mxu0 0.0
    %1921 = vmatprep.subr.mxu0 0.0
    %1922 = vmatpush1.xpose.msra.mxu0 0.0
    %1923 = vmatprep.subr.mxu0 0.0
    %1924 = vmatpush1.xpose.msra.mxu0 0.0
    %1925 = vmatprep.subr.mxu0 0.0
    %1926 = vmatpush1.xpose.msra.mxu0 0.0
    %1927 = vmatprep.subr.mxu0 0.0
    %1928 = vmatpush1.xpose.msra.mxu0 0.0
    %1929 = vmatprep.subr.mxu0 0.0
    %1930 = vmatpush1.xpose.msra.mxu0 0.0
    %1931 = vmatprep.subr.mxu0 0.0
    %1932 = vmatpush1.xpose.msra.mxu0 0.0
    %1933 = vmatprep.subr.mxu0 0.0
    %1934 = vmatpush1.xpose.msra.mxu0 0.0
    %1935 = vmatprep.subr.mxu0 0.0
    %1936 = vmatpush1.xpose.msra.mxu0 0.0
    %1937 = vmatprep.subr.mxu0 0.0
    %1938 = vmatpush1.xpose.msra.mxu0 0.0
    %1939 = vmatprep.subr.mxu0 0.0
    %1940 = vmatpush1.xpose.msra.mxu0 0.0
    %1941 = vmatprep.subr.mxu0 0.0
    %1942 = vmatpush1.xpose.msra.mxu0 0.0
    %1943 = vmatprep.subr.mxu0 0.0
    %1944 = vmatpush1.xpose.msra.mxu0 0.0
    %1945 = vmatprep.subr.mxu0 0.0
    %1946 = vmatpush1.xpose.msra.mxu0 0.0
    %1947 = vmatprep.subr.mxu0 0.0
    %1948 = vmatpush1.xpose.msra.mxu0 %v1917
    %1949 = vmatprep.subr.mxu0 0.0
    %1950 = vmatpush1.xpose.msra.mxu0 %v1915
    %1951 = vmatprep.subr.mxu0 0.0
    %1952 = vmatpush2.xpose.msra.mxu0 0.0
    %1953 = vmatprep.subr.mxu0 0.0
    %1954 = vmatpush2.xpose.msra.mxu0 0.0
    %1955 = vmatprep.subr.mxu0 0.0
    %1956 = vmatpush2.xpose.msra.mxu0 0.0
    %1957 = vmatprep.subr.mxu0 0.0
    %1958 = vmatpush2.xpose.msra.mxu0 0.0
    %1959 = vmatprep.subr.mxu0 0.0
    %1960 = vmatpush2.xpose.msra.mxu0 0.0
    %1961 = vmatprep.subr.mxu0 0.0
    %1962 = vmatpush2.xpose.msra.mxu0 0.0
    %1963 = vmatprep.subr.mxu0 0.0
    %1964 = vmatpush2.xpose.msra.mxu0 0.0
    %1965 = vmatprep.subr.mxu0 0.0
    %1966 = vmatpush2.xpose.msra.mxu0 0.0
    %1967 = vmatprep.subr.mxu0 0.0
    %1968 = vmatpush2.xpose.msra.mxu0 0.0
    %1969 = vmatprep.subr.mxu0 0.0
    %1970 = vmatpush2.xpose.msra.mxu0 0.0
    %1971 = vmatprep.subr.mxu0 0.0
    %1972 = vmatpush2.xpose.msra.mxu0 0.0
    %1973 = vmatprep.subr.mxu0 0.0
    %1974 = vmatpush2.xpose.msra.mxu0 0.0
    %1975 = vmatprep.subr.mxu0 0.0
    %1976 = vmatpush2.xpose.msra.mxu0 0.0
    %1977 = vmatprep.subr.mxu0 0.0
    %1978 = vmatpush2.xpose.msra.mxu0 0.0
    %1979 = vmatprep.subr.mxu0 0.0
    %1980 = vmatpush2.xpose.msra.mxu0 0.0
    %1981 = vmatprep.subr.mxu0 0.0
    %1982 = vmatpush2.xpose.msra.mxu0 0.0
    %1983 = vmatprep.mubr.f32.mxu0 0.0
    %1984 = vmatmul.mubr.f32.gmra.mxu0 %v1911
    %v1985 = vpop.f32.mrf.mxu0
    %v1986 = vadd.f32 0.0, %v1985
    %v1987 = vpop.f32.mrf.mxu0
    %1988 = vmatprep.mubr.f32.mxu0 0.0
    %1989 = vmatmul.mubr.f32.gmra.mxu0 %v1913
    %v1990 = vpop.f32.mrf.mxu0
    %v1991 = vadd.f32 0.0, %v1990
    %v1992 = vpop.f32.mrf.mxu0
    %1993 = vdwg.mxu0
    %v1994 = vmul.f32 %v1986, 0.088388346
    %v1995 = vmul.f32 %v1991, 0.088388346
    %v1996 = vadd.f32 %v1994, %v57
    %v1997 = vadd.f32 %v1995, %v58
    %v1998 = vsel %vm262, %v1996, -inf
    %1999 = vmax.xlane.f32.xlu0 %v1998
    %v2000 = vpop.xlane.xlu0 %1999
    %v2001 = vsel %vm262, %v1997, -inf
    %2002 = vmax.xlane.f32.xlu0 %v2001
    %v2003 = vpop.xlane.xlu0 %2002
    %v2004 = vsub.f32 %v1996, %v2000
    %v2005 = vsub.f32 %v1997, %v2003
    %v2006 = vmul.f32 %v2004, 1.442695
    %v2007 = vpow.pop %v2006
    %v2008 = vmul.f32 %v2005, 1.442695
    %v2009 = vpow.pop %v2008
    %v2010 = vsel %vm262, %v2007, 0.0
    %2011 = vadd.xlane.f32.xlu0 %v2010
    %v2012 = vpop.xlane.xlu0 %2011
    %v2013 = vsel %vm262, %v2009, 0.0
    %2014 = vadd.xlane.f32.xlu0 %v2013
    %v2015 = vpop.xlane.xlu0 %2014
    %v2016 = vrcp.pop %v2012
    %v2017 = vrcp.pop %v2015
    %v2018 = vmul.f32 %v2007, %v2016
    %v2019 = vmul.f32 %v2009, %v2017
    %2020 = vrot.lane.b32.xlu0 %v1695, 64
    %v2021 = vpop.permute.xlu0 %2020
    %2022 = vrot.lane.b32.xlu0 %v1700, 64
    %v2023 = vpop.permute.xlu0 %2022
    %v2027 = vsel %vm262, %v2018, 0
    %v2030 = vsel %vm262, %v2019, 0
    %2032 = vmatprep.subr.mxu0 0.0
    %2033 = vmatpush1.msra.mxu0 0.0
    %2034 = vmatprep.subr.mxu0 0.0
    %2035 = vmatpush1.msra.mxu0 0.0
    %2036 = vmatprep.subr.mxu0 0.0
    %2037 = vmatpush1.msra.mxu0 0.0
    %2038 = vmatprep.subr.mxu0 0.0
    %2039 = vmatpush1.msra.mxu0 0.0
    %2040 = vmatprep.subr.mxu0 0.0
    %2041 = vmatpush1.msra.mxu0 0.0
    %2042 = vmatprep.subr.mxu0 0.0
    %2043 = vmatpush1.msra.mxu0 0.0
    %2044 = vmatprep.subr.mxu0 0.0
    %2045 = vmatpush1.msra.mxu0 0.0
    %2046 = vmatprep.subr.mxu0 0.0
    %2047 = vmatpush1.msra.mxu0 0.0
    %2048 = vmatprep.subr.mxu0 0.0
    %2049 = vmatpush1.msra.mxu0 0.0
    %2050 = vmatprep.subr.mxu0 0.0
    %2051 = vmatpush1.msra.mxu0 0.0
    %2052 = vmatprep.subr.mxu0 0.0
    %2053 = vmatpush1.msra.mxu0 0.0
    %2054 = vmatprep.subr.mxu0 0.0
    %2055 = vmatpush1.msra.mxu0 0.0
    %2056 = vmatprep.subr.mxu0 0.0
    %2057 = vmatpush1.msra.mxu0 0.0
    %2058 = vmatprep.subr.mxu0 0.0
    %2059 = vmatpush1.msra.mxu0 0.0
    %2060 = vmatprep.subr.mxu0 0.0
    %2061 = vmatpush1.msra.mxu0 %v2023
    %2062 = vmatprep.subr.mxu0 0.0
    %2063 = vmatpush1.msra.mxu0 %v2021
    %2064 = vmatprep.subr.mxu0 0.0
    %2065 = vmatpush2.msra.mxu0 0.0
    %2066 = vmatprep.subr.mxu0 0.0
    %2067 = vmatpush2.msra.mxu0 0.0
    %2068 = vmatprep.subr.mxu0 0.0
    %2069 = vmatpush2.msra.mxu0 0.0
    %2070 = vmatprep.subr.mxu0 0.0
    %2071 = vmatpush2.msra.mxu0 0.0
    %2072 = vmatprep.subr.mxu0 0.0
    %2073 = vmatpush2.msra.mxu0 0.0
    %2074 = vmatprep.subr.mxu0 0.0
    %2075 = vmatpush2.msra.mxu0 0.0
    %2076 = vmatprep.subr.mxu0 0.0
    %2077 = vmatpush2.msra.mxu0 0.0
    %2078 = vmatprep.subr.mxu0 0.0
    %2079 = vmatpush2.msra.mxu0 0.0
    %2080 = vmatprep.subr.mxu0 0.0
    %2081 = vmatpush2.msra.mxu0 0.0
    %2082 = vmatprep.subr.mxu0 0.0
    %2083 = vmatpush2.msra.mxu0 0.0
    %2084 = vmatprep.subr.mxu0 0.0
    %2085 = vmatpush2.msra.mxu0 0.0
    %2086 = vmatprep.subr.mxu0 0.0
    %2087 = vmatpush2.msra.mxu0 0.0
    %2088 = vmatprep.subr.mxu0 0.0
    %2089 = vmatpush2.msra.mxu0 0.0
    %2090 = vmatprep.subr.mxu0 0.0
    %2091 = vmatpush2.msra.mxu0 0.0
    %2092 = vmatprep.subr.mxu0 0.0
    %2093 = vmatpush2.msra.mxu0 0.0
    %2094 = vmatprep.subr.mxu0 0.0
    %2095 = vmatpush2.msra.mxu0 0.0
    %2096 = vmatprep.mubr.f32.mxu0 0.0
    %2097 = vmatmul.mubr.f32.gmra.mxu0 %v2027
    %v2098 = vpop.f32.mrf.mxu0
    %v2099 = vadd.f32 0.0, %v2098
    %v2100 = vpop.f32.mrf.mxu0
    %2101 = vmatprep.mubr.f32.mxu0 0.0
    %2102 = vmatmul.mubr.f32.gmra.mxu0 %v2030
    %v2103 = vpop.f32.mrf.mxu0
    %v2104 = vadd.f32 0.0, %v2103
    %v2105 = vpop.f32.mrf.mxu0
    %2106 = vdwg.mxu0
    %2111 = vrot.lane.b32.xlu0 %v875, 32
    %v2112 = vpop.permute.xlu0 %2111
    %2113 = vrot.lane.b32.xlu0 %v880, 32
    %v2114 = vpop.permute.xlu0 %2113
    %2115 = vrot.lane.b32.xlu0 %v1077, 32
    %v2116 = vpop.permute.xlu0 %2115
    %2117 = vrot.lane.b32.xlu0 %v1082, 32
    %v2118 = vpop.permute.xlu0 %2117
    %2127 = vrot.lane.b32.xlu0 %v1386, 64
    %v2128 = vpop.permute.xlu0 %2127
    %2129 = vrot.lane.b32.xlu0 %v1391, 64
    %v2130 = vpop.permute.xlu0 %2129
    %2131 = vrot.lane.b32.xlu0 %v1588, 64
    %v2132 = vpop.permute.xlu0 %2131
    %2133 = vrot.lane.b32.xlu0 %v1593, 64
    %v2134 = vpop.permute.xlu0 %2133
    %2143 = vrot.lane.b32.xlu0 %v1897, 96
    %v2144 = vpop.permute.xlu0 %2143
    %2145 = vrot.lane.b32.xlu0 %v1902, 96
    %v2146 = vpop.permute.xlu0 %2145
    %2147 = vrot.lane.b32.xlu0 %v2099, 96
    %v2148 = vpop.permute.xlu0 %2147
    %2149 = vrot.lane.b32.xlu0 %v2104, 96
    %v2150 = vpop.permute.xlu0 %2149
    %v2155 = vsel %vm174, %v364, %v2112
    %v2156 = vsel %vm174, %v369, %v2114
    %v2157 = vsel %vm174, %v566, %v2116
    %v2158 = vsel %vm174, %v571, %v2118
    %vm2159 = vcmask 523264
    %v2160 = vsel %vm2159, %v2155, %v2128
    %v2161 = vsel %vm2159, %v2156, %v2130
    %v2162 = vsel %vm2159, %v2157, %v2132
    %v2163 = vsel %vm2159, %v2158, %v2134
    %vm2164 = vcmask 785408
    %v2165 = vsel %vm2164, %v2160, %v2144
    %v2166 = vsel %vm2164, %v2161, %v2146
    %v2167 = vsel %vm2164, %v2162, %v2148
    %v2168 = vsel %vm2164, %v2163, %v2150
    %v2169 = vld [vmem:[%s6] sm:$0xf]
    %v2170 = vld [vmem:[%s3] sm:$0xff]
    %v2171 = vld [vmem:[%s3 + $0x8] sm:$0xff]
    %v2172 = vld [vmem:[%s3 + $0x10] sm:$0xff]
    %v2173 = vld [vmem:[%s3 + $0x18] sm:$0xff]
    %v2174 = vld [vmem:[%s3 + $0x20] sm:$0xff]
    %v2175 = vld [vmem:[%s3 + $0x28] sm:$0xff]
    %v2176 = vld [vmem:[%s3 + $0x30] sm:$0xff]
    %v2177 = vld [vmem:[%s3 + $0x38] sm:$0xff]
    %v2178 = vld [vmem:[%s3 + $0x40] sm:$0xff]
    %v2179 = vld [vmem:[%s3 + $0x48] sm:$0xff]
    %v2180 = vld [vmem:[%s3 + $0x50] sm:$0xff]
    %v2181 = vld [vmem:[%s3 + $0x58] sm:$0xff]
    %v2182 = vld [vmem:[%s3 + $0x60] sm:$0xff]
    %v2183 = vld [vmem:[%s3 + $0x68] sm:$0xff]
    %v2184 = vld [vmem:[%s3 + $0x70] sm:$0xff]
    %v2185 = vld [vmem:[%s3 + $0x78] sm:$0xff]
    %2186 = vmatprep.subr.mxu0 0.0
    %2187 = vmatpush1.msra.mxu0 %v2185
    %2188 = vmatprep.subr.mxu0 0.0
    %2189 = vmatpush1.msra.mxu0 %v2184
    %2190 = vmatprep.subr.mxu0 0.0
    %2191 = vmatpush1.msra.mxu0 %v2183
    %2192 = vmatprep.subr.mxu0 0.0
    %2193 = vmatpush1.msra.mxu0 %v2182
    %2194 = vmatprep.subr.mxu0 0.0
    %2195 = vmatpush1.msra.mxu0 %v2181
    %2196 = vmatprep.subr.mxu0 0.0
    %2197 = vmatpush1.msra.mxu0 %v2180
    %2198 = vmatprep.subr.mxu0 0.0
    %2199 = vmatpush1.msra.mxu0 %v2179
    %2200 = vmatprep.subr.mxu0 0.0
    %2201 = vmatpush1.msra.mxu0 %v2178
    %2202 = vmatprep.subr.mxu0 0.0
    %2203 = vmatpush1.msra.mxu0 %v2177
    %2204 = vmatprep.subr.mxu0 0.0
    %2205 = vmatpush1.msra.mxu0 %v2176
    %2206 = vmatprep.subr.mxu0 0.0
    %2207 = vmatpush1.msra.mxu0 %v2175
    %2208 = vmatprep.subr.mxu0 0.0
    %2209 = vmatpush1.msra.mxu0 %v2174
    %2210 = vmatprep.subr.mxu0 0.0
    %2211 = vmatpush1.msra.mxu0 %v2173
    %2212 = vmatprep.subr.mxu0 0.0
    %2213 = vmatpush1.msra.mxu0 %v2172
    %2214 = vmatprep.subr.mxu0 0.0
    %2215 = vmatpush1.msra.mxu0 %v2171
    %2216 = vmatprep.subr.mxu0 0.0
    %2217 = vmatpush1.msra.mxu0 %v2170
    %2218 = vmatprep.subr.mxu0 0.0
    %2219 = vmatpush2.msra.mxu0 0.0
    %2220 = vmatprep.subr.mxu0 0.0
    %2221 = vmatpush2.msra.mxu0 0.0
    %2222 = vmatprep.subr.mxu0 0.0
    %2223 = vmatpush2.msra.mxu0 0.0
    %2224 = vmatprep.subr.mxu0 0.0
    %2225 = vmatpush2.msra.mxu0 0.0
    %2226 = vmatprep.subr.mxu0 0.0
    %2227 = vmatpush2.msra.mxu0 0.0
    %2228 = vmatprep.subr.mxu0 0.0
    %2229 = vmatpush2.msra.mxu0 0.0
    %2230 = vmatprep.subr.mxu0 0.0
    %2231 = vmatpush2.msra.mxu0 0.0
    %2232 = vmatprep.subr.mxu0 0.0
    %2233 = vmatpush2.msra.mxu0 0.0
    %2234 = vmatprep.subr.mxu0 0.0
    %2235 = vmatpush2.msra.mxu0 0.0
    %2236 = vmatprep.subr.mxu0 0.0
    %2237 = vmatpush2.msra.mxu0 0.0
    %2238 = vmatprep.subr.mxu0 0.0
    %2239 = vmatpush2.msra.mxu0 0.0
    %2240 = vmatprep.subr.mxu0 0.0
    %2241 = vmatpush2.msra.mxu0 0.0
    %2242 = vmatprep.subr.mxu0 0.0
    %2243 = vmatpush2.msra.mxu0 0.0
    %2244 = vmatprep.subr.mxu0 0.0
    %2245 = vmatpush2.msra.mxu0 0.0
    %2246 = vmatprep.subr.mxu0 0.0
    %2247 = vmatpush2.msra.mxu0 0.0
    %2248 = vmatprep.subr.mxu0 0.0
    %2249 = vmatpush2.msra.mxu0 0.0
    %2250 = vmatprep.mubr.f32.mxu0 0.0
    %2251 = vmatmul.mubr.f32.gmra.mxu0 %v2165
    %v2252 = vpop.f32.mrf.mxu0
    %v2253 = vadd.f32 0.0, %v2252
    %v2254 = vpop.f32.mrf.mxu0
    %2255 = vmatprep.mubr.f32.mxu0 0.0
    %2256 = vmatmul.mubr.f32.gmra.mxu0 %v2166
    %v2257 = vpop.f32.mrf.mxu0
    %v2258 = vadd.f32 0.0, %v2257
    %v2259 = vpop.f32.mrf.mxu0
    %2260 = vmatprep.mubr.f32.mxu0 0.0
    %2261 = vmatmul.mubr.f32.gmra.mxu0 %v2167
    %v2262 = vpop.f32.mrf.mxu0
    %v2263 = vadd.f32 0.0, %v2262
    %v2264 = vpop.f32.mrf.mxu0
    %2265 = vmatprep.mubr.f32.mxu0 0.0
    %2266 = vmatmul.mubr.f32.gmra.mxu0 %v2168
    %v2267 = vpop.f32.mrf.mxu0
    %v2268 = vadd.f32 0.0, %v2267
    %v2269 = vpop.f32.mrf.mxu0
    %2270 = vdwg.mxu0
    %v2271 = vadd.f32 %v59, %v2253
    %v2272 = vadd.f32 %v60, %v2258
    %v2273 = vadd.f32 %v61, %v2263
    %v2274 = vadd.f32 %v62, %v2268
    %v2275 = vlaneseq
    %v2276 = vshrl.u32 %v2275, 7
    %v2277 = vsub.s32 0, %v2276
    %v2278 = vrot.slane %v2169, %v2277
    %v2279 = vadd.f32 %v2271, %v2278
    %v2280 = vadd.f32 %v2272, %v2278
    %v2281 = vadd.f32 %v2273, %v2278
    %v2282 = vadd.f32 %v2274, %v2278
    %2283 = vadd.xlane.f32.xlu0 %v2279
    %v2284 = vpop.xlane.xlu0 %2283
    %2285 = vadd.xlane.f32.xlu0 %v2280
    %v2286 = vpop.xlane.xlu0 %2285
    %2287 = vadd.xlane.f32.xlu0 %v2281
    %v2288 = vpop.xlane.xlu0 %2287
    %2289 = vadd.xlane.f32.xlu0 %v2282
    %v2290 = vpop.xlane.xlu0 %2289
    %v2291 = vrcp.pop 128.0
    %v2292 = vmul.f32 %v2284, %v2291
    %v2293 = vmul.f32 %v2286, %v2291
    %v2294 = vmul.f32 %v2288, %v2291
    %v2295 = vmul.f32 %v2290, %v2291
    %v2296 = vsub.f32 %v2279, %v2292
    %v2297 = vsub.f32 %v2280, %v2293
    %v2298 = vsub.f32 %v2281, %v2294
    %v2299 = vsub.f32 %v2282, %v2295
    %v2300 = vmul.f32 %v2296, %v2296
    %v2301 = vmul.f32 %v2297, %v2297
    %v2302 = vmul.f32 %v2298, %v2298
    %v2303 = vmul.f32 %v2299, %v2299
    %2304 = vadd.xlane.f32.xlu0 %v2300
    %v2305 = vpop.xlane.xlu0 %2304
    %2306 = vadd.xlane.f32.xlu0 %v2301
    %v2307 = vpop.xlane.xlu0 %2306
    %2308 = vadd.xlane.f32.xlu0 %v2302
    %v2309 = vpop.xlane.xlu0 %2308
    %2310 = vadd.xlane.f32.xlu0 %v2303
    %v2311 = vpop.xlane.xlu0 %2310
    %v2312 = vmul.f32 %v2305, %v2291
    %v2313 = vmul.f32 %v2307, %v2291
    %v2314 = vmul.f32 %v2309, %v2291
    %v2315 = vmul.f32 %v2311, %v2291
    %v2316 = vadd.f32 %v2312, 1e-05
    %v2317 = vadd.f32 %v2313, 1e-05
    %v2318 = vadd.f32 %v2314, 1e-05
    %v2319 = vadd.f32 %v2315, 1e-05
    %v2320 = vrsqrt.pop %v2316
    %v2321 = vrsqrt.pop %v2317
    %v2322 = vrsqrt.pop %v2318
    %v2323 = vrsqrt.pop %v2319
    %v2324 = vmul.f32 %v2296, %v2320
    %v2325 = vmul.f32 %v2297, %v2321
    %v2326 = vmul.f32 %v2298, %v2322
    %v2327 = vmul.f32 %v2299, %v2323
    %v2328 = vlaneseq
    %v2329 = vshrl.u32 %v2328, 7
    %v2330 = vsub.s32 1, %v2329
    %v2331 = vrot.slane %v2169, %v2330
    %v2332 = vmul.f32 %v2324, %v2331
    %v2333 = vmul.f32 %v2325, %v2331
    %v2334 = vmul.f32 %v2326, %v2331
    %v2335 = vmul.f32 %v2327, %v2331
    %v2336 = vlaneseq
    %v2337 = vshrl.u32 %v2336, 7
    %v2338 = vsub.s32 2, %v2337
    %v2339 = vrot.slane %v2169, %v2338
    %v2340 = vadd.f32 %v2332, %v2339
    %v2341 = vadd.f32 %v2333, %v2339
    %v2342 = vadd.f32 %v2334, %v2339
    %v2343 = vadd.f32 %v2335, %v2339
    %v2344 = vld [vmem:[%s4] sm:$0xff]
    %v2345 = vld [vmem:[%s4 + $0x8] sm:$0xff]
    %v2346 = vld [vmem:[%s4 + $0x10] sm:$0xff]
    %v2347 = vld [vmem:[%s4 + $0x18] sm:$0xff]
    %v2348 = vld [vmem:[%s4 + $0x20] sm:$0xff]
    %v2349 = vld [vmem:[%s4 + $0x28] sm:$0xff]
    %v2350 = vld [vmem:[%s4 + $0x30] sm:$0xff]
    %v2351 = vld [vmem:[%s4 + $0x38] sm:$0xff]
    %v2352 = vld [vmem:[%s4 + $0x40] sm:$0xff]
    %v2353 = vld [vmem:[%s4 + $0x48] sm:$0xff]
    %v2354 = vld [vmem:[%s4 + $0x50] sm:$0xff]
    %v2355 = vld [vmem:[%s4 + $0x58] sm:$0xff]
    %v2356 = vld [vmem:[%s4 + $0x60] sm:$0xff]
    %v2357 = vld [vmem:[%s4 + $0x68] sm:$0xff]
    %v2358 = vld [vmem:[%s4 + $0x70] sm:$0xff]
    %v2359 = vld [vmem:[%s4 + $0x78] sm:$0xff]
    %v2360 = vld [vmem:[%s4 + $0x80] sm:$0xff]
    %v2361 = vld [vmem:[%s4 + $0x88] sm:$0xff]
    %v2362 = vld [vmem:[%s4 + $0x90] sm:$0xff]
    %v2363 = vld [vmem:[%s4 + $0x98] sm:$0xff]
    %v2364 = vld [vmem:[%s4 + $0xa0] sm:$0xff]
    %v2365 = vld [vmem:[%s4 + $0xa8] sm:$0xff]
    %v2366 = vld [vmem:[%s4 + $0xb0] sm:$0xff]
    %v2367 = vld [vmem:[%s4 + $0xb8] sm:$0xff]
    %v2368 = vld [vmem:[%s4 + $0xc0] sm:$0xff]
    %v2369 = vld [vmem:[%s4 + $0xc8] sm:$0xff]
    %v2370 = vld [vmem:[%s4 + $0xd0] sm:$0xff]
    %v2371 = vld [vmem:[%s4 + $0xd8] sm:$0xff]
    %v2372 = vld [vmem:[%s4 + $0xe0] sm:$0xff]
    %v2373 = vld [vmem:[%s4 + $0xe8] sm:$0xff]
    %v2374 = vld [vmem:[%s4 + $0xf0] sm:$0xff]
    %v2375 = vld [vmem:[%s4 + $0xf8] sm:$0xff]
    %v2376 = vld [vmem:[%s4 + $0x100] sm:$0xff]
    %v2377 = vld [vmem:[%s4 + $0x108] sm:$0xff]
    %v2378 = vld [vmem:[%s4 + $0x110] sm:$0xff]
    %v2379 = vld [vmem:[%s4 + $0x118] sm:$0xff]
    %v2380 = vld [vmem:[%s4 + $0x120] sm:$0xff]
    %v2381 = vld [vmem:[%s4 + $0x128] sm:$0xff]
    %v2382 = vld [vmem:[%s4 + $0x130] sm:$0xff]
    %v2383 = vld [vmem:[%s4 + $0x138] sm:$0xff]
    %v2384 = vld [vmem:[%s4 + $0x140] sm:$0xff]
    %v2385 = vld [vmem:[%s4 + $0x148] sm:$0xff]
    %v2386 = vld [vmem:[%s4 + $0x150] sm:$0xff]
    %v2387 = vld [vmem:[%s4 + $0x158] sm:$0xff]
    %v2388 = vld [vmem:[%s4 + $0x160] sm:$0xff]
    %v2389 = vld [vmem:[%s4 + $0x168] sm:$0xff]
    %v2390 = vld [vmem:[%s4 + $0x170] sm:$0xff]
    %v2391 = vld [vmem:[%s4 + $0x178] sm:$0xff]
    %v2392 = vld [vmem:[%s4 + $0x180] sm:$0xff]
    %v2393 = vld [vmem:[%s4 + $0x188] sm:$0xff]
    %v2394 = vld [vmem:[%s4 + $0x190] sm:$0xff]
    %v2395 = vld [vmem:[%s4 + $0x198] sm:$0xff]
    %v2396 = vld [vmem:[%s4 + $0x1a0] sm:$0xff]
    %v2397 = vld [vmem:[%s4 + $0x1a8] sm:$0xff]
    %v2398 = vld [vmem:[%s4 + $0x1b0] sm:$0xff]
    %v2399 = vld [vmem:[%s4 + $0x1b8] sm:$0xff]
    %v2400 = vld [vmem:[%s4 + $0x1c0] sm:$0xff]
    %v2401 = vld [vmem:[%s4 + $0x1c8] sm:$0xff]
    %v2402 = vld [vmem:[%s4 + $0x1d0] sm:$0xff]
    %v2403 = vld [vmem:[%s4 + $0x1d8] sm:$0xff]
    %v2404 = vld [vmem:[%s4 + $0x1e0] sm:$0xff]
    %v2405 = vld [vmem:[%s4 + $0x1e8] sm:$0xff]
    %v2406 = vld [vmem:[%s4 + $0x1f0] sm:$0xff]
    %v2407 = vld [vmem:[%s4 + $0x1f8] sm:$0xff]
    %v2408 = vld [vmem:[%s7] sm:$0xf]
    %v2410 = vlaneseq
    %v2411 = vshrl.u32 %v2410, 7
    %v2412 = vsub.s32 0, %v2411
    %v2413 = vrot.slane %v2408, %v2412
    %v2414 = vlaneseq
    %v2415 = vshrl.u32 %v2414, 7
    %v2416 = vsub.s32 1, %v2415
    %v2417 = vrot.slane %v2408, %v2416
    %v2418 = vlaneseq
    %v2419 = vshrl.u32 %v2418, 7
    %v2420 = vsub.s32 2, %v2419
    %v2421 = vrot.slane %v2408, %v2420
    %v2422 = vlaneseq
    %v2423 = vshrl.u32 %v2422, 7
    %v2424 = vsub.s32 3, %v2423
    %v2425 = vrot.slane %v2408, %v2424
    %2430 = vmatprep.subr.mxu0 %v2405
    %2431 = vmatpush1.msra.mxu0 %v2404
    %2432 = vmatprep.subr.mxu0 %v2401
    %2433 = vmatpush1.msra.mxu0 %v2400
    %2434 = vmatprep.subr.mxu0 %v2397
    %2435 = vmatpush1.msra.mxu0 %v2396
    %2436 = vmatprep.subr.mxu0 %v2393
    %2437 = vmatpush1.msra.mxu0 %v2392
    %2438 = vmatprep.subr.mxu0 %v2389
    %2439 = vmatpush1.msra.mxu0 %v2388
    %2440 = vmatprep.subr.mxu0 %v2385
    %2441 = vmatpush1.msra.mxu0 %v2384
    %2442 = vmatprep.subr.mxu0 %v2381
    %2443 = vmatpush1.msra.mxu0 %v2380
    %2444 = vmatprep.subr.mxu0 %v2377
    %2445 = vmatpush1.msra.mxu0 %v2376
    %2446 = vmatprep.subr.mxu0 %v2373
    %2447 = vmatpush1.msra.mxu0 %v2372
    %2448 = vmatprep.subr.mxu0 %v2369
    %2449 = vmatpush1.msra.mxu0 %v2368
    %2450 = vmatprep.subr.mxu0 %v2365
    %2451 = vmatpush1.msra.mxu0 %v2364
    %2452 = vmatprep.subr.mxu0 %v2361
    %2453 = vmatpush1.msra.mxu0 %v2360
    %2454 = vmatprep.subr.mxu0 %v2357
    %2455 = vmatpush1.msra.mxu0 %v2356
    %2456 = vmatprep.subr.mxu0 %v2353
    %2457 = vmatpush1.msra.mxu0 %v2352
    %2458 = vmatprep.subr.mxu0 %v2349
    %2459 = vmatpush1.msra.mxu0 %v2348
    %2460 = vmatprep.subr.mxu0 %v2345
    %2461 = vmatpush1.msra.mxu0 %v2344
    %2462 = vmatprep.subr.mxu0 0.0
    %2463 = vmatpush2.msra.mxu0 0.0
    %2464 = vmatprep.subr.mxu0 0.0
    %2465 = vmatpush2.msra.mxu0 0.0
    %2466 = vmatprep.subr.mxu0 0.0
    %2467 = vmatpush2.msra.mxu0 0.0
    %2468 = vmatprep.subr.mxu0 0.0
    %2469 = vmatpush2.msra.mxu0 0.0
    %2470 = vmatprep.subr.mxu0 0.0
    %2471 = vmatpush2.msra.mxu0 0.0
    %2472 = vmatprep.subr.mxu0 0.0
    %2473 = vmatpush2.msra.mxu0 0.0
    %2474 = vmatprep.subr.mxu0 0.0
    %2475 = vmatpush2.msra.mxu0 0.0
    %2476 = vmatprep.subr.mxu0 0.0
    %2477 = vmatpush2.msra.mxu0 0.0
    %2478 = vmatprep.subr.mxu0 0.0
    %2479 = vmatpush2.msra.mxu0 0.0
    %2480 = vmatprep.subr.mxu0 0.0
    %2481 = vmatpush2.msra.mxu0 0.0
    %2482 = vmatprep.subr.mxu0 0.0
    %2483 = vmatpush2.msra.mxu0 0.0
    %2484 = vmatprep.subr.mxu0 0.0
    %2485 = vmatpush2.msra.mxu0 0.0
    %2486 = vmatprep.subr.mxu0 0.0
    %2487 = vmatpush2.msra.mxu0 0.0
    %2488 = vmatprep.subr.mxu0 0.0
    %2489 = vmatpush2.msra.mxu0 0.0
    %2490 = vmatprep.subr.mxu0 0.0
    %2491 = vmatpush2.msra.mxu0 0.0
    %2492 = vmatprep.subr.mxu0 0.0
    %2493 = vmatpush2.msra.mxu0 0.0
    %2494 = vmatprep.mubr.f32.mxu0 0.0
    %2495 = vmatmul.mubr.f32.gmra.mxu0 %v2340
    %v2496 = vpop.f32.mrf.mxu0
    %v2497 = vadd.f32 %v2413, %v2496
    %v2498 = vpop.f32.mrf.mxu0
    %v2499 = vadd.f32 %v2417, %v2498
    %2500 = vmatprep.mubr.f32.mxu0 0.0
    %2501 = vmatmul.mubr.f32.gmra.mxu0 %v2341
    %v2502 = vpop.f32.mrf.mxu0
    %v2503 = vadd.f32 %v2413, %v2502
    %v2504 = vpop.f32.mrf.mxu0
    %v2505 = vadd.f32 %v2417, %v2504
    %2506 = vmatprep.mubr.f32.mxu0 0.0
    %2507 = vmatmul.mubr.f32.gmra.mxu0 %v2342
    %v2508 = vpop.f32.mrf.mxu0
    %v2509 = vadd.f32 %v2413, %v2508
    %v2510 = vpop.f32.mrf.mxu0
    %v2511 = vadd.f32 %v2417, %v2510
    %2512 = vmatprep.mubr.f32.mxu0 0.0
    %2513 = vmatmul.mubr.f32.gmra.mxu0 %v2343
    %v2514 = vpop.f32.mrf.mxu0
    %v2515 = vadd.f32 %v2413, %v2514
    %v2516 = vpop.f32.mrf.mxu0
    %v2517 = vadd.f32 %v2417, %v2516
    %2518 = vdwg.mxu0
    %2519 = vmatprep.subr.mxu0 %v2407
    %2520 = vmatpush1.msra.mxu0 %v2406
    %2521 = vmatprep.subr.mxu0 %v2403
    %2522 = vmatpush1.msra.mxu0 %v2402
    %2523 = vmatprep.subr.mxu0 %v2399
    %2524 = vmatpush1.msra.mxu0 %v2398
    %2525 = vmatprep.subr.mxu0 %v2395
    %2526 = vmatpush1.msra.mxu0 %v2394
    %2527 = vmatprep.subr.mxu0 %v2391
    %2528 = vmatpush1.msra.mxu0 %v2390
    %2529 = vmatprep.subr.mxu0 %v2387
    %2530 = vmatpush1.msra.mxu0 %v2386
    %2531 = vmatprep.subr.mxu0 %v2383
    %2532 = vmatpush1.msra.mxu0 %v2382
    %2533 = vmatprep.subr.mxu0 %v2379
    %2534 = vmatpush1.msra.mxu0 %v2378
    %2535 = vmatprep.subr.mxu0 %v2375
    %2536 = vmatpush1.msra.mxu0 %v2374
    %2537 = vmatprep.subr.mxu0 %v2371
    %2538 = vmatpush1.msra.mxu0 %v2370
    %2539 = vmatprep.subr.mxu0 %v2367
    %2540 = vmatpush1.msra.mxu0 %v2366
    %2541 = vmatprep.subr.mxu0 %v2363
    %2542 = vmatpush1.msra.mxu0 %v2362
    %2543 = vmatprep.subr.mxu0 %v2359
    %2544 = vmatpush1.msra.mxu0 %v2358
    %2545 = vmatprep.subr.mxu0 %v2355
    %2546 = vmatpush1.msra.mxu0 %v2354
    %2547 = vmatprep.subr.mxu0 %v2351
    %2548 = vmatpush1.msra.mxu0 %v2350
    %2549 = vmatprep.subr.mxu0 %v2347
    %2550 = vmatpush1.msra.mxu0 %v2346
    %2551 = vmatprep.subr.mxu0 0.0
    %2552 = vmatpush2.msra.mxu0 0.0
    %2553 = vmatprep.subr.mxu0 0.0
    %2554 = vmatpush2.msra.mxu0 0.0
    %2555 = vmatprep.subr.mxu0 0.0
    %2556 = vmatpush2.msra.mxu0 0.0
    %2557 = vmatprep.subr.mxu0 0.0
    %2558 = vmatpush2.msra.mxu0 0.0
    %2559 = vmatprep.subr.mxu0 0.0
    %2560 = vmatpush2.msra.mxu0 0.0
    %2561 = vmatprep.subr.mxu0 0.0
    %2562 = vmatpush2.msra.mxu0 0.0
    %2563 = vmatprep.subr.mxu0 0.0
    %2564 = vmatpush2.msra.mxu0 0.0
    %2565 = vmatprep.subr.mxu0 0.0
    %2566 = vmatpush2.msra.mxu0 0.0
    %2567 = vmatprep.subr.mxu0 0.0
    %2568 = vmatpush2.msra.mxu0 0.0
    %2569 = vmatprep.subr.mxu0 0.0
    %2570 = vmatpush2.msra.mxu0 0.0
    %2571 = vmatprep.subr.mxu0 0.0
    %2572 = vmatpush2.msra.mxu0 0.0
    %2573 = vmatprep.subr.mxu0 0.0
    %2574 = vmatpush2.msra.mxu0 0.0
    %2575 = vmatprep.subr.mxu0 0.0
    %2576 = vmatpush2.msra.mxu0 0.0
    %2577 = vmatprep.subr.mxu0 0.0
    %2578 = vmatpush2.msra.mxu0 0.0
    %2579 = vmatprep.subr.mxu0 0.0
    %2580 = vmatpush2.msra.mxu0 0.0
    %2581 = vmatprep.subr.mxu0 0.0
    %2582 = vmatpush2.msra.mxu0 0.0
    %2583 = vmatprep.mubr.f32.mxu0 0.0
    %2584 = vmatmul.mubr.f32.gmra.mxu0 %v2340
    %v2585 = vpop.f32.mrf.mxu0
    %v2586 = vadd.f32 %v2421, %v2585
    %v2587 = vpop.f32.mrf.mxu0
    %v2588 = vadd.f32 %v2425, %v2587
    %2589 = vmatprep.mubr.f32.mxu0 0.0
    %2590 = vmatmul.mubr.f32.gmra.mxu0 %v2341
    %v2591 = vpop.f32.mrf.mxu0
    %v2592 = vadd.f32 %v2421, %v2591
    %v2593 = vpop.f32.mrf.mxu0
    %v2594 = vadd.f32 %v2425, %v2593
    %2595 = vmatprep.mubr.f32.mxu0 0.0
    %2596 = vmatmul.mubr.f32.gmra.mxu0 %v2342
    %v2597 = vpop.f32.mrf.mxu0
    %v2598 = vadd.f32 %v2421, %v2597
    %v2599 = vpop.f32.mrf.mxu0
    %v2600 = vadd.f32 %v2425, %v2599
    %2601 = vmatprep.mubr.f32.mxu0 0.0
    %2602 = vmatmul.mubr.f32.gmra.mxu0 %v2343
    %v2603 = vpop.f32.mrf.mxu0
    %v2604 = vadd.f32 %v2421, %v2603
    %v2605 = vpop.f32.mrf.mxu0
    %v2606 = vadd.f32 %v2425, %v2605
    %2607 = vdwg.mxu0
    %v2608 = vmax.f32 %v2497, 0.0
    %v2609 = vmax.f32 %v2499, 0.0
    %v2610 = vmax.f32 %v2586, 0.0
    %v2611 = vmax.f32 %v2588, 0.0
    %v2612 = vmax.f32 %v2503, 0.0
    %v2613 = vmax.f32 %v2505, 0.0
    %v2614 = vmax.f32 %v2592, 0.0
    %v2615 = vmax.f32 %v2594, 0.0
    %v2616 = vmax.f32 %v2509, 0.0
    %v2617 = vmax.f32 %v2511, 0.0
    %v2618 = vmax.f32 %v2598, 0.0
    %v2619 = vmax.f32 %v2600, 0.0
    %v2620 = vmax.f32 %v2515, 0.0
    %v2621 = vmax.f32 %v2517, 0.0
    %v2622 = vmax.f32 %v2604, 0.0
    %v2623 = vmax.f32 %v2606, 0.0
    %v2624 = vld [vmem:[#allocation2] sm:$0xff]
    %v2625 = vld [vmem:[#allocation2 + $0x8] sm:$0xff]
    %v2626 = vld [vmem:[#allocation2 + $0x10] sm:$0xff]
    %v2627 = vld [vmem:[#allocation2 + $0x18] sm:$0xff]
    %v2628 = vld [vmem:[#allocation2 + $0x20] sm:$0xff]
    %v2629 = vld [vmem:[#allocation2 + $0x28] sm:$0xff]
    %v2630 = vld [vmem:[#allocation2 + $0x30] sm:$0xff]
    %v2631 = vld [vmem:[#allocation2 + $0x38] sm:$0xff]
    %v2632 = vld [vmem:[#allocation2 + $0x40] sm:$0xff]
    %v2633 = vld [vmem:[#allocation2 + $0x48] sm:$0xff]
    %v2634 = vld [vmem:[#allocation2 + $0x50] sm:$0xff]
    %v2635 = vld [vmem:[#allocation2 + $0x58] sm:$0xff]
    %v2636 = vld [vmem:[#allocation2 + $0x60] sm:$0xff]
    %v2637 = vld [vmem:[#allocation2 + $0x68] sm:$0xff]
    %v2638 = vld [vmem:[#allocation2 + $0x70] sm:$0xff]
    %v2639 = vld [vmem:[#allocation2 + $0x78] sm:$0xff]
    %v2640 = vld [vmem:[#allocation2 + $0x80] sm:$0xff]
    %v2641 = vld [vmem:[#allocation2 + $0x88] sm:$0xff]
    %v2642 = vld [vmem:[#allocation2 + $0x90] sm:$0xff]
    %v2643 = vld [vmem:[#allocation2 + $0x98] sm:$0xff]
    %v2644 = vld [vmem:[#allocation2 + $0xa0] sm:$0xff]
    %v2645 = vld [vmem:[#allocation2 + $0xa8] sm:$0xff]
    %v2646 = vld [vmem:[#allocation2 + $0xb0] sm:$0xff]
    %v2647 = vld [vmem:[#allocation2 + $0xb8] sm:$0xff]
    %v2648 = vld [vmem:[#allocation2 + $0xc0] sm:$0xff]
    %v2649 = vld [vmem:[#allocation2 + $0xc8] sm:$0xff]
    %v2650 = vld [vmem:[#allocation2 + $0xd0] sm:$0xff]
    %v2651 = vld [vmem:[#allocation2 + $0xd8] sm:$0xff]
    %v2652 = vld [vmem:[#allocation2 + $0xe0] sm:$0xff]
    %v2653 = vld [vmem:[#allocation2 + $0xe8] sm:$0xff]
    %v2654 = vld [vmem:[#allocation2 + $0xf0] sm:$0xff]
    %v2655 = vld [vmem:[#allocation2 + $0xf8] sm:$0xff]
    %v2656 = vld [vmem:[#allocation2 + $0x100] sm:$0xff]
    %v2657 = vld [vmem:[#allocation2 + $0x108] sm:$0xff]
    %v2658 = vld [vmem:[#allocation2 + $0x110] sm:$0xff]
    %v2659 = vld [vmem:[#allocation2 + $0x118] sm:$0xff]
    %v2660 = vld [vmem:[#allocation2 + $0x120] sm:$0xff]
    %v2661 = vld [vmem:[#allocation2 + $0x128] sm:$0xff]
    %v2662 = vld [vmem:[#allocation2 + $0x130] sm:$0xff]
    %v2663 = vld [vmem:[#allocation2 + $0x138] sm:$0xff]
    %v2664 = vld [vmem:[#allocation2 + $0x140] sm:$0xff]
    %v2665 = vld [vmem:[#allocation2 + $0x148] sm:$0xff]
    %v2666 = vld [vmem:[#allocation2 + $0x150] sm:$0xff]
    %v2667 = vld [vmem:[#allocation2 + $0x158] sm:$0xff]
    %v2668 = vld [vmem:[#allocation2 + $0x160] sm:$0xff]
    %v2669 = vld [vmem:[#allocation2 + $0x168] sm:$0xff]
    %v2670 = vld [vmem:[#allocation2 + $0x170] sm:$0xff]
    %v2671 = vld [vmem:[#allocation2 + $0x178] sm:$0xff]
    %v2672 = vld [vmem:[#allocation2 + $0x180] sm:$0xff]
    %v2673 = vld [vmem:[#allocation2 + $0x188] sm:$0xff]
    %v2674 = vld [vmem:[#allocation2 + $0x190] sm:$0xff]
    %v2675 = vld [vmem:[#allocation2 + $0x198] sm:$0xff]
    %v2676 = vld [vmem:[#allocation2 + $0x1a0] sm:$0xff]
    %v2677 = vld [vmem:[#allocation2 + $0x1a8] sm:$0xff]
    %v2678 = vld [vmem:[#allocation2 + $0x1b0] sm:$0xff]
    %v2679 = vld [vmem:[#allocation2 + $0x1b8] sm:$0xff]
    %v2680 = vld [vmem:[#allocation2 + $0x1c0] sm:$0xff]
    %v2681 = vld [vmem:[#allocation2 + $0x1c8] sm:$0xff]
    %v2682 = vld [vmem:[#allocation2 + $0x1d0] sm:$0xff]
    %v2683 = vld [vmem:[#allocation2 + $0x1d8] sm:$0xff]
    %v2684 = vld [vmem:[#allocation2 + $0x1e0] sm:$0xff]
    %v2685 = vld [vmem:[#allocation2 + $0x1e8] sm:$0xff]
    %v2686 = vld [vmem:[#allocation2 + $0x1f0] sm:$0xff]
    %v2687 = vld [vmem:[#allocation2 + $0x1f8] sm:$0xff]
    %v2688 = vlaneseq
    %v2689 = vshrl.u32 %v2688, 7
    %v2690 = vsub.s32 3, %v2689
    %v2691 = vrot.slane %v2169, %v2690
    %2692 = vmatprep.subr.mxu0 0.0
    %2693 = vmatpush1.msra.mxu0 %v2639
    %2694 = vmatprep.subr.mxu0 0.0
    %2695 = vmatpush1.msra.mxu0 %v2638
    %2696 = vmatprep.subr.mxu0 0.0
    %2697 = vmatpush1.msra.mxu0 %v2637
    %2698 = vmatprep.subr.mxu0 0.0
    %2699 = vmatpush1.msra.mxu0 %v2636
    %2700 = vmatprep.subr.mxu0 0.0
    %2701 = vmatpush1.msra.mxu0 %v2635
    %2702 = vmatprep.subr.mxu0 0.0
    %2703 = vmatpush1.msra.mxu0 %v2634
    %2704 = vmatprep.subr.mxu0 0.0
    %2705 = vmatpush1.msra.mxu0 %v2633
    %2706 = vmatprep.subr.mxu0 0.0
    %2707 = vmatpush1.msra.mxu0 %v2632
    %2708 = vmatprep.subr.mxu0 0.0
    %2709 = vmatpush1.msra.mxu0 %v2631
    %2710 = vmatprep.subr.mxu0 0.0
    %2711 = vmatpush1.msra.mxu0 %v2630
    %2712 = vmatprep.subr.mxu0 0.0
    %2713 = vmatpush1.msra.mxu0 %v2629
    %2714 = vmatprep.subr.mxu0 0.0
    %2715 = vmatpush1.msra.mxu0 %v2628
    %2716 = vmatprep.subr.mxu0 0.0
    %2717 = vmatpush1.msra.mxu0 %v2627
    %2718 = vmatprep.subr.mxu0 0.0
    %2719 = vmatpush1.msra.mxu0 %v2626
    %2720 = vmatprep.subr.mxu0 0.0
    %2721 = vmatpush1.msra.mxu0 %v2625
    %2722 = vmatprep.subr.mxu0 0.0
    %2723 = vmatpush1.msra.mxu0 %v2624
    %2724 = vmatprep.subr.mxu0 0.0
    %2725 = vmatpush2.msra.mxu0 %v2655
    %2726 = vmatprep.subr.mxu0 0.0
    %2727 = vmatpush2.msra.mxu0 %v2654
    %2728 = vmatprep.subr.mxu0 0.0
    %2729 = vmatpush2.msra.mxu0 %v2653
    %2730 = vmatprep.subr.mxu0 0.0
    %2731 = vmatpush2.msra.mxu0 %v2652
    %2732 = vmatprep.subr.mxu0 0.0
    %2733 = vmatpush2.msra.mxu0 %v2651
    %2734 = vmatprep.subr.mxu0 0.0
    %2735 = vmatpush2.msra.mxu0 %v2650
    %2736 = vmatprep.subr.mxu0 0.0
    %2737 = vmatpush2.msra.mxu0 %v2649
    %2738 = vmatprep.subr.mxu0 0.0
    %2739 = vmatpush2.msra.mxu0 %v2648
    %2740 = vmatprep.subr.mxu0 0.0
    %2741 = vmatpush2.msra.mxu0 %v2647
    %2742 = vmatprep.subr.mxu0 0.0
    %2743 = vmatpush2.msra.mxu0 %v2646
    %2744 = vmatprep.subr.mxu0 0.0
    %2745 = vmatpush2.msra.mxu0 %v2645
    %2746 = vmatprep.subr.mxu0 0.0
    %2747 = vmatpush2.msra.mxu0 %v2644
    %2748 = vmatprep.subr.mxu0 0.0
    %2749 = vmatpush2.msra.mxu0 %v2643
    %2750 = vmatprep.subr.mxu0 0.0
    %2751 = vmatpush2.msra.mxu0 %v2642
    %2752 = vmatprep.subr.mxu0 0.0
    %2753 = vmatpush2.msra.mxu0 %v2641
    %2754 = vmatprep.subr.mxu0 0.0
    %2755 = vmatpush2.msra.mxu0 %v2640
    %2756 = vmatprep.mubr.f32.mxu0 %v2609
    %2757 = vmatmul.mubr.f32.gmra.mxu0 %v2608
    %v2758 = vpop.f32.mrf.mxu0
    %v2759 = vadd.f32 %v2691, %v2758
    %v2760 = vpop.f32.mrf.mxu0
    %2761 = vmatprep.mubr.f32.mxu0 %v2613
    %2762 = vmatmul.mubr.f32.gmra.mxu0 %v2612
    %v2763 = vpop.f32.mrf.mxu0
    %v2764 = vadd.f32 %v2691, %v2763
    %v2765 = vpop.f32.mrf.mxu0
    %2766 = vmatprep.mubr.f32.mxu0 %v2617
    %2767 = vmatmul.mubr.f32.gmra.mxu0 %v2616
    %v2768 = vpop.f32.mrf.mxu0
    %v2769 = vadd.f32 %v2691, %v2768
    %v2770 = vpop.f32.mrf.mxu0
    %2771 = vmatprep.mubr.f32.mxu0 %v2621
    %2772 = vmatmul.mubr.f32.gmra.mxu0 %v2620
    %v2773 = vpop.f32.mrf.mxu0
    %v2774 = vadd.f32 %v2691, %v2773
    %v2775 = vpop.f32.mrf.mxu0
    %2776 = vdwg.mxu0
    %2777 = vmatprep.subr.mxu0 0.0
    %2778 = vmatpush1.msra.mxu0 %v2671
    %2779 = vmatprep.subr.mxu0 0.0
    %2780 = vmatpush1.msra.mxu0 %v2670
    %2781 = vmatprep.subr.mxu0 0.0
    %2782 = vmatpush1.msra.mxu0 %v2669
    %2783 = vmatprep.subr.mxu0 0.0
    %2784 = vmatpush1.msra.mxu0 %v2668
    %2785 = vmatprep.subr.mxu0 0.0
    %2786 = vmatpush1.msra.mxu0 %v2667
    %2787 = vmatprep.subr.mxu0 0.0
    %2788 = vmatpush1.msra.mxu0 %v2666
    %2789 = vmatprep.subr.mxu0 0.0
    %2790 = vmatpush1.msra.mxu0 %v2665
    %2791 = vmatprep.subr.mxu0 0.0
    %2792 = vmatpush1.msra.mxu0 %v2664
    %2793 = vmatprep.subr.mxu0 0.0
    %2794 = vmatpush1.msra.mxu0 %v2663
    %2795 = vmatprep.subr.mxu0 0.0
    %2796 = vmatpush1.msra.mxu0 %v2662
    %2797 = vmatprep.subr.mxu0 0.0
    %2798 = vmatpush1.msra.mxu0 %v2661
    %2799 = vmatprep.subr.mxu0 0.0
    %2800 = vmatpush1.msra.mxu0 %v2660
    %2801 = vmatprep.subr.mxu0 0.0
    %2802 = vmatpush1.msra.mxu0 %v2659
    %2803 = vmatprep.subr.mxu0 0.0
    %2804 = vmatpush1.msra.mxu0 %v2658
    %2805 = vmatprep.subr.mxu0 0.0
    %2806 = vmatpush1.msra.mxu0 %v2657
    %2807 = vmatprep.subr.mxu0 0.0
    %2808 = vmatpush1.msra.mxu0 %v2656
    %2809 = vmatprep.subr.mxu0 0.0
    %2810 = vmatpush2.msra.mxu0 %v2687
    %2811 = vmatprep.subr.mxu0 0.0
    %2812 = vmatpush2.msra.mxu0 %v2686
    %2813 = vmatprep.subr.mxu0 0.0
    %2814 = vmatpush2.msra.mxu0 %v2685
    %2815 = vmatprep.subr.mxu0 0.0
    %2816 = vmatpush2.msra.mxu0 %v2684
    %2817 = vmatprep.subr.mxu0 0.0
    %2818 = vmatpush2.msra.mxu0 %v2683
    %2819 = vmatprep.subr.mxu0 0.0
    %2820 = vmatpush2.msra.mxu0 %v2682
    %2821 = vmatprep.subr.mxu0 0.0
    %2822 = vmatpush2.msra.mxu0 %v2681
    %2823 = vmatprep.subr.mxu0 0.0
    %2824 = vmatpush2.msra.mxu0 %v2680
    %2825 = vmatprep.subr.mxu0 0.0
    %2826 = vmatpush2.msra.mxu0 %v2679
    %2827 = vmatprep.subr.mxu0 0.0
    %2828 = vmatpush2.msra.mxu0 %v2678
    %2829 = vmatprep.subr.mxu0 0.0
    %2830 = vmatpush2.msra.mxu0 %v2677
    %2831 = vmatprep.subr.mxu0 0.0
    %2832 = vmatpush2.msra.mxu0 %v2676
    %2833 = vmatprep.subr.mxu0 0.0
    %2834 = vmatpush2.msra.mxu0 %v2675
    %2835 = vmatprep.subr.mxu0 0.0
    %2836 = vmatpush2.msra.mxu0 %v2674
    %2837 = vmatprep.subr.mxu0 0.0
    %2838 = vmatpush2.msra.mxu0 %v2673
    %2839 = vmatprep.subr.mxu0 0.0
    %2840 = vmatpush2.msra.mxu0 %v2672
    %2841 = vmatprep.mubr.f32.mxu0 %v2611
    %2842 = vmatmul.mubr.f32.gmra.mxu0 %v2610
    %v2843 = vpop.f32.mrf.mxu0
    %v2844 = vadd.f32 %v2759, %v2843
    %v2845 = vpop.f32.mrf.mxu0
    %2846 = vmatprep.mubr.f32.mxu0 %v2615
    %2847 = vmatmul.mubr.f32.gmra.mxu0 %v2614
    %v2848 = vpop.f32.mrf.mxu0
    %v2849 = vadd.f32 %v2764, %v2848
    %v2850 = vpop.f32.mrf.mxu0
    %2851 = vmatprep.mubr.f32.mxu0 %v2619
    %2852 = vmatmul.mubr.f32.gmra.mxu0 %v2618
    %v2853 = vpop.f32.mrf.mxu0
    %v2854 = vadd.f32 %v2769, %v2853
    %v2855 = vpop.f32.mrf.mxu0
    %2856 = vmatprep.mubr.f32.mxu0 %v2623
    %2857 = vmatmul.mubr.f32.gmra.mxu0 %v2622
    %v2858 = vpop.f32.mrf.mxu0
    %v2859 = vadd.f32 %v2774, %v2858
    %v2860 = vpop.f32.mrf.mxu0
    %2861 = vdwg.mxu0
    %v2862 = vadd.f32 %v2279, %v2844
    %v2863 = vadd.f32 %v2280, %v2849
    %v2864 = vadd.f32 %v2281, %v2854
    %v2865 = vadd.f32 %v2282, %v2859
    %s2866 = scalar_lea.vmem %s1, 128
    %v2867 = vld [vmem:[%s2866] sm:$0xff]
    %v2868 = vld [vmem:[%s2866 + $0x8] sm:$0xff]
    %v2869 = vld [vmem:[%s2866 + $0x10] sm:$0xff]
    %v2870 = vld [vmem:[%s2866 + $0x18] sm:$0xff]
    %s2871 = scalar_lea.vmem %s2, 512
    %v2872 = vld [vmem:[%s2871] sm:$0xff]
    %v2873 = vld [vmem:[%s2871 + $0x8] sm:$0xff]
    %v2874 = vld [vmem:[%s2871 + $0x10] sm:$0xff]
    %v2875 = vld [vmem:[%s2871 + $0x18] sm:$0xff]
    %v2876 = vld [vmem:[%s2871 + $0x20] sm:$0xff]
    %v2877 = vld [vmem:[%s2871 + $0x28] sm:$0xff]
    %v2878 = vld [vmem:[%s2871 + $0x30] sm:$0xff]
    %v2879 = vld [vmem:[%s2871 + $0x38] sm:$0xff]
    %v2880 = vld [vmem:[%s2871 + $0x40] sm:$0xff]
    %v2881 = vld [vmem:[%s2871 + $0x48] sm:$0xff]
    %v2882 = vld [vmem:[%s2871 + $0x50] sm:$0xff]
    %v2883 = vld [vmem:[%s2871 + $0x58] sm:$0xff]
    %v2884 = vld [vmem:[%s2871 + $0x60] sm:$0xff]
    %v2885 = vld [vmem:[%s2871 + $0x68] sm:$0xff]
    %v2886 = vld [vmem:[%s2871 + $0x70] sm:$0xff]
    %v2887 = vld [vmem:[%s2871 + $0x78] sm:$0xff]
    %2888 = vmatprep.subr.mxu0 0.0
    %2889 = vmatpush1.msra.mxu0 %v2887
    %2890 = vmatprep.subr.mxu0 0.0
    %2891 = vmatpush1.msra.mxu0 %v2886
    %2892 = vmatprep.subr.mxu0 0.0
    %2893 = vmatpush1.msra.mxu0 %v2885
    %2894 = vmatprep.subr.mxu0 0.0
    %2895 = vmatpush1.msra.mxu0 %v2884
    %2896 = vmatprep.subr.mxu0 0.0
    %2897 = vmatpush1.msra.mxu0 %v2883
    %2898 = vmatprep.subr.mxu0 0.0
    %2899 = vmatpush1.msra.mxu0 %v2882
    %2900 = vmatprep.subr.mxu0 0.0
    %2901 = vmatpush1.msra.mxu0 %v2881
    %2902 = vmatprep.subr.mxu0 0.0
    %2903 = vmatpush1.msra.mxu0 %v2880
    %2904 = vmatprep.subr.mxu0 0.0
    %2905 = vmatpush1.msra.mxu0 %v2879
    %2906 = vmatprep.subr.mxu0 0.0
    %2907 = vmatpush1.msra.mxu0 %v2878
    %2908 = vmatprep.subr.mxu0 0.0
    %2909 = vmatpush1.msra.mxu0 %v2877
    %2910 = vmatprep.subr.mxu0 0.0
    %2911 = vmatpush1.msra.mxu0 %v2876
    %2912 = vmatprep.subr.mxu0 0.0
    %2913 = vmatpush1.msra.mxu0 %v2875
    %2914 = vmatprep.subr.mxu0 0.0
    %2915 = vmatpush1.msra.mxu0 %v2874
    %2916 = vmatprep.subr.mxu0 0.0
    %2917 = vmatpush1.msra.mxu0 %v2873
    %2918 = vmatprep.subr.mxu0 0.0
    %2919 = vmatpush1.msra.mxu0 %v2872
    %2920 = vmatprep.subr.mxu0 0.0
    %2921 = vmatpush2.msra.mxu0 0.0
    %2922 = vmatprep.subr.mxu0 0.0
    %2923 = vmatpush2.msra.mxu0 0.0
    %2924 = vmatprep.subr.mxu0 0.0
    %2925 = vmatpush2.msra.mxu0 0.0
    %2926 = vmatprep.subr.mxu0 0.0
    %2927 = vmatpush2.msra.mxu0 0.0
    %2928 = vmatprep.subr.mxu0 0.0
    %2929 = vmatpush2.msra.mxu0 0.0
    %2930 = vmatprep.subr.mxu0 0.0
    %2931 = vmatpush2.msra.mxu0 0.0
    %2932 = vmatprep.subr.mxu0 0.0
    %2933 = vmatpush2.msra.mxu0 0.0
    %2934 = vmatprep.subr.mxu0 0.0
    %2935 = vmatpush2.msra.mxu0 0.0
    %2936 = vmatprep.subr.mxu0 0.0
    %2937 = vmatpush2.msra.mxu0 0.0
    %2938 = vmatprep.subr.mxu0 0.0
    %2939 = vmatpush2.msra.mxu0 0.0
    %2940 = vmatprep.subr.mxu0 0.0
    %2941 = vmatpush2.msra.mxu0 0.0
    %2942 = vmatprep.subr.mxu0 0.0
    %2943 = vmatpush2.msra.mxu0 0.0
    %2944 = vmatprep.subr.mxu0 0.0
    %2945 = vmatpush2.msra.mxu0 0.0
    %2946 = vmatprep.subr.mxu0 0.0
    %2947 = vmatpush2.msra.mxu0 0.0
    %2948 = vmatprep.subr.mxu0 0.0
    %2949 = vmatpush2.msra.mxu0 0.0
    %2950 = vmatprep.subr.mxu0 0.0
    %2951 = vmatpush2.msra.mxu0 0.0
    %2952 = vmatprep.mubr.f32.mxu0 0.0
    %2953 = vmatmul.mubr.f32.gmra.mxu0 %v2867
    %v2954 = vpop.f32.mrf.mxu0
    %v2955 = vadd.f32 0.0, %v2954
    %v2956 = vpop.f32.mrf.mxu0
    %2957 = vmatprep.mubr.f32.mxu0 0.0
    %2958 = vmatmul.mubr.f32.gmra.mxu0 %v2868
    %v2959 = vpop.f32.mrf.mxu0
    %v2960 = vadd.f32 0.0, %v2959
    %v2961 = vpop.f32.mrf.mxu0
    %2962 = vmatprep.mubr.f32.mxu0 0.0
    %2963 = vmatmul.mubr.f32.gmra.mxu0 %v2869
    %v2964 = vpop.f32.mrf.mxu0
    %v2965 = vadd.f32 0.0, %v2964
    %v2966 = vpop.f32.mrf.mxu0
    %2967 = vmatprep.mubr.f32.mxu0 0.0
    %2968 = vmatmul.mubr.f32.gmra.mxu0 %v2870
    %v2969 = vpop.f32.mrf.mxu0
    %v2970 = vadd.f32 0.0, %v2969
    %v2971 = vpop.f32.mrf.mxu0
    %2972 = vdwg.mxu0
    %2975 = vrot.lane.b32.xlu0 %v2955, 96
    %v2976 = vpop.permute.xlu0 %2975
    %2977 = vrot.lane.b32.xlu0 %v2960, 96
    %v2978 = vpop.permute.xlu0 %2977
    %v2979 = vsel %vm174, %v2955, 0
    %v2981 = vsel %vm174, %v2960, 0
    %v2983 = vsel %vm174, %v2976, 0
    %v2985 = vsel %vm174, %v2978, 0
    %2987 = vmatprep.subr.mxu0 0.0
    %2988 = vmatpush1.xpose.msra.mxu0 0.0
    %2989 = vmatprep.subr.mxu0 0.0
    %2990 = vmatpush1.xpose.msra.mxu0 0.0
    %2991 = vmatprep.subr.mxu0 0.0
    %2992 = vmatpush1.xpose.msra.mxu0 0.0
    %2993 = vmatprep.subr.mxu0 0.0
    %2994 = vmatpush1.xpose.msra.mxu0 0.0
    %2995 = vmatprep.subr.mxu0 0.0
    %2996 = vmatpush1.xpose.msra.mxu0 0.0
    %2997 = vmatprep.subr.mxu0 0.0
    %2998 = vmatpush1.xpose.msra.mxu0 0.0
    %2999 = vmatprep.subr.mxu0 0.0
    %3000 = vmatpush1.xpose.msra.mxu0 0.0
    %3001 = vmatprep.subr.mxu0 0.0
    %3002 = vmatpush1.xpose.msra.mxu0 0.0
    %3003 = vmatprep.subr.mxu0 0.0
    %3004 = vmatpush1.xpose.msra.mxu0 0.0
    %3005 = vmatprep.subr.mxu0 0.0
    %3006 = vmatpush1.xpose.msra.mxu0 0.0
    %3007 = vmatprep.subr.mxu0 0.0
    %3008 = vmatpush1.xpose.msra.mxu0 0.0
    %3009 = vmatprep.subr.mxu0 0.0
    %3010 = vmatpush1.xpose.msra.mxu0 0.0
    %3011 = vmatprep.subr.mxu0 0.0
    %3012 = vmatpush1.xpose.msra.mxu0 0.0
    %3013 = vmatprep.subr.mxu0 0.0
    %3014 = vmatpush1.xpose.msra.mxu0 0.0
    %3015 = vmatprep.subr.mxu0 0.0
    %3016 = vmatpush1.xpose.msra.mxu0 %v2985
    %3017 = vmatprep.subr.mxu0 0.0
    %3018 = vmatpush1.xpose.msra.mxu0 %v2983
    %3019 = vmatprep.subr.mxu0 0.0
    %3020 = vmatpush2.xpose.msra.mxu0 0.0
    %3021 = vmatprep.subr.mxu0 0.0
    %3022 = vmatpush2.xpose.msra.mxu0 0.0
    %3023 = vmatprep.subr.mxu0 0.0
    %3024 = vmatpush2.xpose.msra.mxu0 0.0
    %3025 = vmatprep.subr.mxu0 0.0
    %3026 = vmatpush2.xpose.msra.mxu0 0.0
    %3027 = vmatprep.subr.mxu0 0.0
    %3028 = vmatpush2.xpose.msra.mxu0 0.0
    %3029 = vmatprep.subr.mxu0 0.0
    %3030 = vmatpush2.xpose.msra.mxu0 0.0
    %3031 = vmatprep.subr.mxu0 0.0
    %3032 = vmatpush2.xpose.msra.mxu0 0.0
    %3033 = vmatprep.subr.mxu0 0.0
    %3034 = vmatpush2.xpose.msra.mxu0 0.0
    %3035 = vmatprep.subr.mxu0 0.0
    %3036 = vmatpush2.xpose.msra.mxu0 0.0
    %3037 = vmatprep.subr.mxu0 0.0
    %3038 = vmatpush2.xpose.msra.mxu0 0.0
    %3039 = vmatprep.subr.mxu0 0.0
    %3040 = vmatpush2.xpose.msra.mxu0 0.0
    %3041 = vmatprep.subr.mxu0 0.0
    %3042 = vmatpush2.xpose.msra.mxu0 0.0
    %3043 = vmatprep.subr.mxu0 0.0
    %3044 = vmatpush2.xpose.msra.mxu0 0.0
    %3045 = vmatprep.subr.mxu0 0.0
    %3046 = vmatpush2.xpose.msra.mxu0 0.0
    %3047 = vmatprep.subr.mxu0 0.0
    %3048 = vmatpush2.xpose.msra.mxu0 0.0
    %3049 = vmatprep.subr.mxu0 0.0
    %3050 = vmatpush2.xpose.msra.mxu0 0.0
    %3051 = vmatprep.mubr.f32.mxu0 0.0
    %3052 = vmatmul.mubr.f32.gmra.mxu0 %v2979
    %v3053 = vpop.f32.mrf.mxu0
    %v3054 = vadd.f32 0.0, %v3053
    %v3055 = vpop.f32.mrf.mxu0
    %3056 = vmatprep.mubr.f32.mxu0 0.0
    %3057 = vmatmul.mubr.f32.gmra.mxu0 %v2981
    %v3058 = vpop.f32.mrf.mxu0
    %v3059 = vadd.f32 0.0, %v3058
    %v3060 = vpop.f32.mrf.mxu0
    %3061 = vdwg.mxu0
    %v3062 = vmul.f32 %v3054, 0.088388346
    %v3063 = vmul.f32 %v3059, 0.088388346
    %v3064 = vadd.f32 %v3062, %v57
    %v3065 = vadd.f32 %v3063, %v58
    %v3066 = vsel %vm262, %v3064, -inf
    %3067 = vmax.xlane.f32.xlu0 %v3066
    %v3068 = vpop.xlane.xlu0 %3067
    %v3069 = vsel %vm262, %v3065, -inf
    %3070 = vmax.xlane.f32.xlu0 %v3069
    %v3071 = vpop.xlane.xlu0 %3070
    %v3072 = vsub.f32 %v3064, %v3068
    %v3073 = vsub.f32 %v3065, %v3071
    %v3074 = vmul.f32 %v3072, 1.442695
    %v3075 = vpow.pop %v3074
    %v3076 = vmul.f32 %v3073, 1.442695
    %v3077 = vpow.pop %v3076
    %v3078 = vsel %vm262, %v3075, 0.0
    %3079 = vadd.xlane.f32.xlu0 %v3078
    %v3080 = vpop.xlane.xlu0 %3079
    %v3081 = vsel %vm262, %v3077, 0.0
    %3082 = vadd.xlane.f32.xlu0 %v3081
    %v3083 = vpop.xlane.xlu0 %3082
    %v3084 = vrcp.pop %v3080
    %v3085 = vrcp.pop %v3083
    %v3086 = vmul.f32 %v3075, %v3084
    %v3087 = vmul.f32 %v3077, %v3085
    %3088 = vrot.lane.b32.xlu0 %v2955, 64
    %v3089 = vpop.permute.xlu0 %3088
    %3090 = vrot.lane.b32.xlu0 %v2960, 64
    %v3091 = vpop.permute.xlu0 %3090
    %v3095 = vsel %vm262, %v3086, 0
    %v3098 = vsel %vm262, %v3087, 0
    %3100 = vmatprep.subr.mxu0 0.0
    %3101 = vmatpush1.msra.mxu0 0.0
    %3102 = vmatprep.subr.mxu0 0.0
    %3103 = vmatpush1.msra.mxu0 0.0
    %3104 = vmatprep.subr.mxu0 0.0
    %3105 = vmatpush1.msra.mxu0 0.0
    %3106 = vmatprep.subr.mxu0 0.0
    %3107 = vmatpush1.msra.mxu0 0.0
    %3108 = vmatprep.subr.mxu0 0.0
    %3109 = vmatpush1.msra.mxu0 0.0
    %3110 = vmatprep.subr.mxu0 0.0
    %3111 = vmatpush1.msra.mxu0 0.0
    %3112 = vmatprep.subr.mxu0 0.0
    %3113 = vmatpush1.msra.mxu0 0.0
    %3114 = vmatprep.subr.mxu0 0.0
    %3115 = vmatpush1.msra.mxu0 0.0
    %3116 = vmatprep.subr.mxu0 0.0
    %3117 = vmatpush1.msra.mxu0 0.0
    %3118 = vmatprep.subr.mxu0 0.0
    %3119 = vmatpush1.msra.mxu0 0.0
    %3120 = vmatprep.subr.mxu0 0.0
    %3121 = vmatpush1.msra.mxu0 0.0
    %3122 = vmatprep.subr.mxu0 0.0
    %3123 = vmatpush1.msra.mxu0 0.0
    %3124 = vmatprep.subr.mxu0 0.0
    %3125 = vmatpush1.msra.mxu0 0.0
    %3126 = vmatprep.subr.mxu0 0.0
    %3127 = vmatpush1.msra.mxu0 0.0
    %3128 = vmatprep.subr.mxu0 0.0
    %3129 = vmatpush1.msra.mxu0 %v3091
    %3130 = vmatprep.subr.mxu0 0.0
    %3131 = vmatpush1.msra.mxu0 %v3089
    %3132 = vmatprep.subr.mxu0 0.0
    %3133 = vmatpush2.msra.mxu0 0.0
    %3134 = vmatprep.subr.mxu0 0.0
    %3135 = vmatpush2.msra.mxu0 0.0
    %3136 = vmatprep.subr.mxu0 0.0
    %3137 = vmatpush2.msra.mxu0 0.0
    %3138 = vmatprep.subr.mxu0 0.0
    %3139 = vmatpush2.msra.mxu0 0.0
    %3140 = vmatprep.subr.mxu0 0.0
    %3141 = vmatpush2.msra.mxu0 0.0
    %3142 = vmatprep.subr.mxu0 0.0
    %3143 = vmatpush2.msra.mxu0 0.0
    %3144 = vmatprep.subr.mxu0 0.0
    %3145 = vmatpush2.msra.mxu0 0.0
    %3146 = vmatprep.subr.mxu0 0.0
    %3147 = vmatpush2.msra.mxu0 0.0
    %3148 = vmatprep.subr.mxu0 0.0
    %3149 = vmatpush2.msra.mxu0 0.0
    %3150 = vmatprep.subr.mxu0 0.0
    %3151 = vmatpush2.msra.mxu0 0.0
    %3152 = vmatprep.subr.mxu0 0.0
    %3153 = vmatpush2.msra.mxu0 0.0
    %3154 = vmatprep.subr.mxu0 0.0
    %3155 = vmatpush2.msra.mxu0 0.0
    %3156 = vmatprep.subr.mxu0 0.0
    %3157 = vmatpush2.msra.mxu0 0.0
    %3158 = vmatprep.subr.mxu0 0.0
    %3159 = vmatpush2.msra.mxu0 0.0
    %3160 = vmatprep.subr.mxu0 0.0
    %3161 = vmatpush2.msra.mxu0 0.0
    %3162 = vmatprep.subr.mxu0 0.0
    %3163 = vmatpush2.msra.mxu0 0.0
    %3164 = vmatprep.mubr.f32.mxu0 0.0
    %3165 = vmatmul.mubr.f32.gmra.mxu0 %v3095
    %v3166 = vpop.f32.mrf.mxu0
    %v3167 = vadd.f32 0.0, %v3166
    %v3168 = vpop.f32.mrf.mxu0
    %3169 = vmatprep.mubr.f32.mxu0 0.0
    %3170 = vmatmul.mubr.f32.gmra.mxu0 %v3098
    %v3171 = vpop.f32.mrf.mxu0
    %v3172 = vadd.f32 0.0, %v3171
    %v3173 = vpop.f32.mrf.mxu0
    %3174 = vdwg.mxu0
    %3177 = vrot.lane.b32.xlu0 %v2965, 96
    %v3178 = vpop.permute.xlu0 %3177
    %3179 = vrot.lane.b32.xlu0 %v2970, 96
    %v3180 = vpop.permute.xlu0 %3179
    %v3181 = vsel %vm174, %v2965, 0
    %v3183 = vsel %vm174, %v2970, 0
    %v3185 = vsel %vm174, %v3178, 0
    %v3187 = vsel %vm174, %v3180, 0
    %3189 = vmatprep.subr.mxu0 0.0
    %3190 = vmatpush1.xpose.msra.mxu0 0.0
    %3191 = vmatprep.subr.mxu0 0.0
    %3192 = vmatpush1.xpose.msra.mxu0 0.0
    %3193 = vmatprep.subr.mxu0 0.0
    %3194 = vmatpush1.xpose.msra.mxu0 0.0
    %3195 = vmatprep.subr.mxu0 0.0
    %3196 = vmatpush1.xpose.msra.mxu0 0.0
    %3197 = vmatprep.subr.mxu0 0.0
    %3198 = vmatpush1.xpose.msra.mxu0 0.0
    %3199 = vmatprep.subr.mxu0 0.0
    %3200 = vmatpush1.xpose.msra.mxu0 0.0
    %3201 = vmatprep.subr.mxu0 0.0
    %3202 = vmatpush1.xpose.msra.mxu0 0.0
    %3203 = vmatprep.subr.mxu0 0.0
    %3204 = vmatpush1.xpose.msra.mxu0 0.0
    %3205 = vmatprep.subr.mxu0 0.0
    %3206 = vmatpush1.xpose.msra.mxu0 0.0
    %3207 = vmatprep.subr.mxu0 0.0
    %3208 = vmatpush1.xpose.msra.mxu0 0.0
    %3209 = vmatprep.subr.mxu0 0.0
    %3210 = vmatpush1.xpose.msra.mxu0 0.0
    %3211 = vmatprep.subr.mxu0 0.0
    %3212 = vmatpush1.xpose.msra.mxu0 0.0
    %3213 = vmatprep.subr.mxu0 0.0
    %3214 = vmatpush1.xpose.msra.mxu0 0.0
    %3215 = vmatprep.subr.mxu0 0.0
    %3216 = vmatpush1.xpose.msra.mxu0 0.0
    %3217 = vmatprep.subr.mxu0 0.0
    %3218 = vmatpush1.xpose.msra.mxu0 %v3187
    %3219 = vmatprep.subr.mxu0 0.0
    %3220 = vmatpush1.xpose.msra.mxu0 %v3185
    %3221 = vmatprep.subr.mxu0 0.0
    %3222 = vmatpush2.xpose.msra.mxu0 0.0
    %3223 = vmatprep.subr.mxu0 0.0
    %3224 = vmatpush2.xpose.msra.mxu0 0.0
    %3225 = vmatprep.subr.mxu0 0.0
    %3226 = vmatpush2.xpose.msra.mxu0 0.0
    %3227 = vmatprep.subr.mxu0 0.0
    %3228 = vmatpush2.xpose.msra.mxu0 0.0
    %3229 = vmatprep.subr.mxu0 0.0
    %3230 = vmatpush2.xpose.msra.mxu0 0.0
    %3231 = vmatprep.subr.mxu0 0.0
    %3232 = vmatpush2.xpose.msra.mxu0 0.0
    %3233 = vmatprep.subr.mxu0 0.0
    %3234 = vmatpush2.xpose.msra.mxu0 0.0
    %3235 = vmatprep.subr.mxu0 0.0
    %3236 = vmatpush2.xpose.msra.mxu0 0.0
    %3237 = vmatprep.subr.mxu0 0.0
    %3238 = vmatpush2.xpose.msra.mxu0 0.0
    %3239 = vmatprep.subr.mxu0 0.0
    %3240 = vmatpush2.xpose.msra.mxu0 0.0
    %3241 = vmatprep.subr.mxu0 0.0
    %3242 = vmatpush2.xpose.msra.mxu0 0.0
    %3243 = vmatprep.subr.mxu0 0.0
    %3244 = vmatpush2.xpose.msra.mxu0 0.0
    %3245 = vmatprep.subr.mxu0 0.0
    %3246 = vmatpush2.xpose.msra.mxu0 0.0
    %3247 = vmatprep.subr.mxu0 0.0
    %3248 = vmatpush2.xpose.msra.mxu0 0.0
    %3249 = vmatprep.subr.mxu0 0.0
    %3250 = vmatpush2.xpose.msra.mxu0 0.0
    %3251 = vmatprep.subr.mxu0 0.0
    %3252 = vmatpush2.xpose.msra.mxu0 0.0
    %3253 = vmatprep.mubr.f32.mxu0 0.0
    %3254 = vmatmul.mubr.f32.gmra.mxu0 %v3181
    %v3255 = vpop.f32.mrf.mxu0
    %v3256 = vadd.f32 0.0, %v3255
    %v3257 = vpop.f32.mrf.mxu0
    %3258 = vmatprep.mubr.f32.mxu0 0.0
    %3259 = vmatmul.mubr.f32.gmra.mxu0 %v3183
    %v3260 = vpop.f32.mrf.mxu0
    %v3261 = vadd.f32 0.0, %v3260
    %v3262 = vpop.f32.mrf.mxu0
    %3263 = vdwg.mxu0
    %v3264 = vmul.f32 %v3256, 0.088388346
    %v3265 = vmul.f32 %v3261, 0.088388346
    %v3266 = vadd.f32 %v3264, %v57
    %v3267 = vadd.f32 %v3265, %v58
    %v3268 = vsel %vm262, %v3266, -inf
    %3269 = vmax.xlane.f32.xlu0 %v3268
    %v3270 = vpop.xlane.xlu0 %3269
    %v3271 = vsel %vm262, %v3267, -inf
    %3272 = vmax.xlane.f32.xlu0 %v3271
    %v3273 = vpop.xlane.xlu0 %3272
    %v3274 = vsub.f32 %v3266, %v3270
    %v3275 = vsub.f32 %v3267, %v3273
    %v3276 = vmul.f32 %v3274, 1.442695
    %v3277 = vpow.pop %v3276
    %v3278 = vmul.f32 %v3275, 1.442695
    %v3279 = vpow.pop %v3278
    %v3280 = vsel %vm262, %v3277, 0.0
    %3281 = vadd.xlane.f32.xlu0 %v3280
    %v3282 = vpop.xlane.xlu0 %3281
    %v3283 = vsel %vm262, %v3279, 0.0
    %3284 = vadd.xlane.f32.xlu0 %v3283
    %v3285 = vpop.xlane.xlu0 %3284
    %v3286 = vrcp.pop %v3282
    %v3287 = vrcp.pop %v3285
    %v3288 = vmul.f32 %v3277, %v3286
    %v3289 = vmul.f32 %v3279, %v3287
    %3290 = vrot.lane.b32.xlu0 %v2965, 64
    %v3291 = vpop.permute.xlu0 %3290
    %3292 = vrot.lane.b32.xlu0 %v2970, 64
    %v3293 = vpop.permute.xlu0 %3292
    %v3297 = vsel %vm262, %v3288, 0
    %v3300 = vsel %vm262, %v3289, 0
    %3302 = vmatprep.subr.mxu0 0.0
    %3303 = vmatpush1.msra.mxu0 0.0
    %3304 = vmatprep.subr.mxu0 0.0
    %3305 = vmatpush1.msra.mxu0 0.0
    %3306 = vmatprep.subr.mxu0 0.0
    %3307 = vmatpush1.msra.mxu0 0.0
    %3308 = vmatprep.subr.mxu0 0.0
    %3309 = vmatpush1.msra.mxu0 0.0
    %3310 = vmatprep.subr.mxu0 0.0
    %3311 = vmatpush1.msra.mxu0 0.0
    %3312 = vmatprep.subr.mxu0 0.0
    %3313 = vmatpush1.msra.mxu0 0.0
    %3314 = vmatprep.subr.mxu0 0.0
    %3315 = vmatpush1.msra.mxu0 0.0
    %3316 = vmatprep.subr.mxu0 0.0
    %3317 = vmatpush1.msra.mxu0 0.0
    %3318 = vmatprep.subr.mxu0 0.0
    %3319 = vmatpush1.msra.mxu0 0.0
    %3320 = vmatprep.subr.mxu0 0.0
    %3321 = vmatpush1.msra.mxu0 0.0
    %3322 = vmatprep.subr.mxu0 0.0
    %3323 = vmatpush1.msra.mxu0 0.0
    %3324 = vmatprep.subr.mxu0 0.0
    %3325 = vmatpush1.msra.mxu0 0.0
    %3326 = vmatprep.subr.mxu0 0.0
    %3327 = vmatpush1.msra.mxu0 0.0
    %3328 = vmatprep.subr.mxu0 0.0
    %3329 = vmatpush1.msra.mxu0 0.0
    %3330 = vmatprep.subr.mxu0 0.0
    %3331 = vmatpush1.msra.mxu0 %v3293
    %3332 = vmatprep.subr.mxu0 0.0
    %3333 = vmatpush1.msra.mxu0 %v3291
    %3334 = vmatprep.subr.mxu0 0.0
    %3335 = vmatpush2.msra.mxu0 0.0
    %3336 = vmatprep.subr.mxu0 0.0
    %3337 = vmatpush2.msra.mxu0 0.0
    %3338 = vmatprep.subr.mxu0 0.0
    %3339 = vmatpush2.msra.mxu0 0.0
    %3340 = vmatprep.subr.mxu0 0.0
    %3341 = vmatpush2.msra.mxu0 0.0
    %3342 = vmatprep.subr.mxu0 0.0
    %3343 = vmatpush2.msra.mxu0 0.0
    %3344 = vmatprep.subr.mxu0 0.0
    %3345 = vmatpush2.msra.mxu0 0.0
    %3346 = vmatprep.subr.mxu0 0.0
    %3347 = vmatpush2.msra.mxu0 0.0
    %3348 = vmatprep.subr.mxu0 0.0
    %3349 = vmatpush2.msra.mxu0 0.0
    %3350 = vmatprep.subr.mxu0 0.0
    %3351 = vmatpush2.msra.mxu0 0.0
    %3352 = vmatprep.subr.mxu0 0.0
    %3353 = vmatpush2.msra.mxu0 0.0
    %3354 = vmatprep.subr.mxu0 0.0
    %3355 = vmatpush2.msra.mxu0 0.0
    %3356 = vmatprep.subr.mxu0 0.0
    %3357 = vmatpush2.msra.mxu0 0.0
    %3358 = vmatprep.subr.mxu0 0.0
    %3359 = vmatpush2.msra.mxu0 0.0
    %3360 = vmatprep.subr.mxu0 0.0
    %3361 = vmatpush2.msra.mxu0 0.0
    %3362 = vmatprep.subr.mxu0 0.0
    %3363 = vmatpush2.msra.mxu0 0.0
    %3364 = vmatprep.subr.mxu0 0.0
    %3365 = vmatpush2.msra.mxu0 0.0
    %3366 = vmatprep.mubr.f32.mxu0 0.0
    %3367 = vmatmul.mubr.f32.gmra.mxu0 %v3297
    %v3368 = vpop.f32.mrf.mxu0
    %v3369 = vadd.f32 0.0, %v3368
    %v3370 = vpop.f32.mrf.mxu0
    %3371 = vmatprep.mubr.f32.mxu0 0.0
    %3372 = vmatmul.mubr.f32.gmra.mxu0 %v3300
    %v3373 = vpop.f32.mrf.mxu0
    %v3374 = vadd.f32 0.0, %v3373
    %v3375 = vpop.f32.mrf.mxu0
    %3376 = vdwg.mxu0
    %s3377 = scalar_lea.vmem %s1, 160
    %v3378 = vld [vmem:[%s3377] sm:$0xff]
    %v3379 = vld [vmem:[%s3377 + $0x8] sm:$0xff]
    %v3380 = vld [vmem:[%s3377 + $0x10] sm:$0xff]
    %v3381 = vld [vmem:[%s3377 + $0x18] sm:$0xff]
    %s3382 = scalar_lea.vmem %s2, 640
    %v3383 = vld [vmem:[%s3382] sm:$0xff]
    %v3384 = vld [vmem:[%s3382 + $0x8] sm:$0xff]
    %v3385 = vld [vmem:[%s3382 + $0x10] sm:$0xff]
    %v3386 = vld [vmem:[%s3382 + $0x18] sm:$0xff]
    %v3387 = vld [vmem:[%s3382 + $0x20] sm:$0xff]
    %v3388 = vld [vmem:[%s3382 + $0x28] sm:$0xff]
    %v3389 = vld [vmem:[%s3382 + $0x30] sm:$0xff]
    %v3390 = vld [vmem:[%s3382 + $0x38] sm:$0xff]
    %v3391 = vld [vmem:[%s3382 + $0x40] sm:$0xff]
    %v3392 = vld [vmem:[%s3382 + $0x48] sm:$0xff]
    %v3393 = vld [vmem:[%s3382 + $0x50] sm:$0xff]
    %v3394 = vld [vmem:[%s3382 + $0x58] sm:$0xff]
    %v3395 = vld [vmem:[%s3382 + $0x60] sm:$0xff]
    %v3396 = vld [vmem:[%s3382 + $0x68] sm:$0xff]
    %v3397 = vld [vmem:[%s3382 + $0x70] sm:$0xff]
    %v3398 = vld [vmem:[%s3382 + $0x78] sm:$0xff]
    %3399 = vmatprep.subr.mxu0 0.0
    %3400 = vmatpush1.msra.mxu0 %v3398
    %3401 = vmatprep.subr.mxu0 0.0
    %3402 = vmatpush1.msra.mxu0 %v3397
    %3403 = vmatprep.subr.mxu0 0.0
    %3404 = vmatpush1.msra.mxu0 %v3396
    %3405 = vmatprep.subr.mxu0 0.0
    %3406 = vmatpush1.msra.mxu0 %v3395
    %3407 = vmatprep.subr.mxu0 0.0
    %3408 = vmatpush1.msra.mxu0 %v3394
    %3409 = vmatprep.subr.mxu0 0.0
    %3410 = vmatpush1.msra.mxu0 %v3393
    %3411 = vmatprep.subr.mxu0 0.0
    %3412 = vmatpush1.msra.mxu0 %v3392
    %3413 = vmatprep.subr.mxu0 0.0
    %3414 = vmatpush1.msra.mxu0 %v3391
    %3415 = vmatprep.subr.mxu0 0.0
    %3416 = vmatpush1.msra.mxu0 %v3390
    %3417 = vmatprep.subr.mxu0 0.0
    %3418 = vmatpush1.msra.mxu0 %v3389
    %3419 = vmatprep.subr.mxu0 0.0
    %3420 = vmatpush1.msra.mxu0 %v3388
    %3421 = vmatprep.subr.mxu0 0.0
    %3422 = vmatpush1.msra.mxu0 %v3387
    %3423 = vmatprep.subr.mxu0 0.0
    %3424 = vmatpush1.msra.mxu0 %v3386
    %3425 = vmatprep.subr.mxu0 0.0
    %3426 = vmatpush1.msra.mxu0 %v3385
    %3427 = vmatprep.subr.mxu0 0.0
    %3428 = vmatpush1.msra.mxu0 %v3384
    %3429 = vmatprep.subr.mxu0 0.0
    %3430 = vmatpush1.msra.mxu0 %v3383
    %3431 = vmatprep.subr.mxu0 0.0
    %3432 = vmatpush2.msra.mxu0 0.0
    %3433 = vmatprep.subr.mxu0 0.0
    %3434 = vmatpush2.msra.mxu0 0.0
    %3435 = vmatprep.subr.mxu0 0.0
    %3436 = vmatpush2.msra.mxu0 0.0
    %3437 = vmatprep.subr.mxu0 0.0
    %3438 = vmatpush2.msra.mxu0 0.0
    %3439 = vmatprep.subr.mxu0 0.0
    %3440 = vmatpush2.msra.mxu0 0.0
    %3441 = vmatprep.subr.mxu0 0.0
    %3442 = vmatpush2.msra.mxu0 0.0
    %3443 = vmatprep.subr.mxu0 0.0
    %3444 = vmatpush2.msra.mxu0 0.0
    %3445 = vmatprep.subr.mxu0 0.0
    %3446 = vmatpush2.msra.mxu0 0.0
    %3447 = vmatprep.subr.mxu0 0.0
    %3448 = vmatpush2.msra.mxu0 0.0
    %3449 = vmatprep.subr.mxu0 0.0
    %3450 = vmatpush2.msra.mxu0 0.0
    %3451 = vmatprep.subr.mxu0 0.0
    %3452 = vmatpush2.msra.mxu0 0.0
    %3453 = vmatprep.subr.mxu0 0.0
    %3454 = vmatpush2.msra.mxu0 0.0
    %3455 = vmatprep.subr.mxu0 0.0
    %3456 = vmatpush2.msra.mxu0 0.0
    %3457 = vmatprep.subr.mxu0 0.0
    %3458 = vmatpush2.msra.mxu0 0.0
    %3459 = vmatprep.subr.mxu0 0.0
    %3460 = vmatpush2.msra.mxu0 0.0
    %3461 = vmatprep.subr.mxu0 0.0
    %3462 = vmatpush2.msra.mxu0 0.0
    %3463 = vmatprep.mubr.f32.mxu0 0.0
    %3464 = vmatmul.mubr.f32.gmra.mxu0 %v3378
    %v3465 = vpop.f32.mrf.mxu0
    %v3466 = vadd.f32 0.0, %v3465
    %v3467 = vpop.f32.mrf.mxu0
    %3468 = vmatprep.mubr.f32.mxu0 0.0
    %3469 = vmatmul.mubr.f32.gmra.mxu0 %v3379
    %v3470 = vpop.f32.mrf.mxu0
    %v3471 = vadd.f32 0.0, %v3470
    %v3472 = vpop.f32.mrf.mxu0
    %3473 = vmatprep.mubr.f32.mxu0 0.0
    %3474 = vmatmul.mubr.f32.gmra.mxu0 %v3380
    %v3475 = vpop.f32.mrf.mxu0
    %v3476 = vadd.f32 0.0, %v3475
    %v3477 = vpop.f32.mrf.mxu0
    %3478 = vmatprep.mubr.f32.mxu0 0.0
    %3479 = vmatmul.mubr.f32.gmra.mxu0 %v3381
    %v3480 = vpop.f32.mrf.mxu0
    %v3481 = vadd.f32 0.0, %v3480
    %v3482 = vpop.f32.mrf.mxu0
    %3483 = vdwg.mxu0
    %3486 = vrot.lane.b32.xlu0 %v3466, 96
    %v3487 = vpop.permute.xlu0 %3486
    %3488 = vrot.lane.b32.xlu0 %v3471, 96
    %v3489 = vpop.permute.xlu0 %3488
    %v3490 = vsel %vm174, %v3466, 0
    %v3492 = vsel %vm174, %v3471, 0
    %v3494 = vsel %vm174, %v3487, 0
    %v3496 = vsel %vm174, %v3489, 0
    %3498 = vmatprep.subr.mxu0 0.0
    %3499 = vmatpush1.xpose.msra.mxu0 0.0
    %3500 = vmatprep.subr.mxu0 0.0
    %3501 = vmatpush1.xpose.msra.mxu0 0.0
    %3502 = vmatprep.subr.mxu0 0.0
    %3503 = vmatpush1.xpose.msra.mxu0 0.0
    %3504 = vmatprep.subr.mxu0 0.0
    %3505 = vmatpush1.xpose.msra.mxu0 0.0
    %3506 = vmatprep.subr.mxu0 0.0
    %3507 = vmatpush1.xpose.msra.mxu0 0.0
    %3508 = vmatprep.subr.mxu0 0.0
    %3509 = vmatpush1.xpose.msra.mxu0 0.0
    %3510 = vmatprep.subr.mxu0 0.0
    %3511 = vmatpush1.xpose.msra.mxu0 0.0
    %3512 = vmatprep.subr.mxu0 0.0
    %3513 = vmatpush1.xpose.msra.mxu0 0.0
    %3514 = vmatprep.subr.mxu0 0.0
    %3515 = vmatpush1.xpose.msra.mxu0 0.0
    %3516 = vmatprep.subr.mxu0 0.0
    %3517 = vmatpush1.xpose.msra.mxu0 0.0
    %3518 = vmatprep.subr.mxu0 0.0
    %3519 = vmatpush1.xpose.msra.mxu0 0.0
    %3520 = vmatprep.subr.mxu0 0.0
    %3521 = vmatpush1.xpose.msra.mxu0 0.0
    %3522 = vmatprep.subr.mxu0 0.0
    %3523 = vmatpush1.xpose.msra.mxu0 0.0
    %3524 = vmatprep.subr.mxu0 0.0
    %3525 = vmatpush1.xpose.msra.mxu0 0.0
    %3526 = vmatprep.subr.mxu0 0.0
    %3527 = vmatpush1.xpose.msra.mxu0 %v3496
    %3528 = vmatprep.subr.mxu0 0.0
    %3529 = vmatpush1.xpose.msra.mxu0 %v3494
    %3530 = vmatprep.subr.mxu0 0.0
    %3531 = vmatpush2.xpose.msra.mxu0 0.0
    %3532 = vmatprep.subr.mxu0 0.0
    %3533 = vmatpush2.xpose.msra.mxu0 0.0
    %3534 = vmatprep.subr.mxu0 0.0
    %3535 = vmatpush2.xpose.msra.mxu0 0.0
    %3536 = vmatprep.subr.mxu0 0.0
    %3537 = vmatpush2.xpose.msra.mxu0 0.0
    %3538 = vmatprep.subr.mxu0 0.0
    %3539 = vmatpush2.xpose.msra.mxu0 0.0
    %3540 = vmatprep.subr.mxu0 0.0
    %3541 = vmatpush2.xpose.msra.mxu0 0.0
    %3542 = vmatprep.subr.mxu0 0.0
    %3543 = vmatpush2.xpose.msra.mxu0 0.0
    %3544 = vmatprep.subr.mxu0 0.0
    %3545 = vmatpush2.xpose.msra.mxu0 0.0
    %3546 = vmatprep.subr.mxu0 0.0
    %3547 = vmatpush2.xpose.msra.mxu0 0.0
    %3548 = vmatprep.subr.mxu0 0.0
    %3549 = vmatpush2.xpose.msra.mxu0 0.0
    %3550 = vmatprep.subr.mxu0 0.0
    %3551 = vmatpush2.xpose.msra.mxu0 0.0
    %3552 = vmatprep.subr.mxu0 0.0
    %3553 = vmatpush2.xpose.msra.mxu0 0.0
    %3554 = vmatprep.subr.mxu0 0.0
    %3555 = vmatpush2.xpose.msra.mxu0 0.0
    %3556 = vmatprep.subr.mxu0 0.0
    %3557 = vmatpush2.xpose.msra.mxu0 0.0
    %3558 = vmatprep.subr.mxu0 0.0
    %3559 = vmatpush2.xpose.msra.mxu0 0.0
    %3560 = vmatprep.subr.mxu0 0.0
    %3561 = vmatpush2.xpose.msra.mxu0 0.0
    %3562 = vmatprep.mubr.f32.mxu0 0.0
    %3563 = vmatmul.mubr.f32.gmra.mxu0 %v3490
    %v3564 = vpop.f32.mrf.mxu0
    %v3565 = vadd.f32 0.0, %v3564
    %v3566 = vpop.f32.mrf.mxu0
    %3567 = vmatprep.mubr.f32.mxu0 0.0
    %3568 = vmatmul.mubr.f32.gmra.mxu0 %v3492
    %v3569 = vpop.f32.mrf.mxu0
    %v3570 = vadd.f32 0.0, %v3569
    %v3571 = vpop.f32.mrf.mxu0
    %3572 = vdwg.mxu0
    %v3573 = vmul.f32 %v3565, 0.088388346
    %v3574 = vmul.f32 %v3570, 0.088388346
    %v3575 = vadd.f32 %v3573, %v57
    %v3576 = vadd.f32 %v3574, %v58
    %v3577 = vsel %vm262, %v3575, -inf
    %3578 = vmax.xlane.f32.xlu0 %v3577
    %v3579 = vpop.xlane.xlu0 %3578
    %v3580 = vsel %vm262, %v3576, -inf
    %3581 = vmax.xlane.f32.xlu0 %v3580
    %v3582 = vpop.xlane.xlu0 %3581
    %v3583 = vsub.f32 %v3575, %v3579
    %v3584 = vsub.f32 %v3576, %v3582
    %v3585 = vmul.f32 %v3583, 1.442695
    %v3586 = vpow.pop %v3585
    %v3587 = vmul.f32 %v3584, 1.442695
    %v3588 = vpow.pop %v3587
    %v3589 = vsel %vm262, %v3586, 0.0
    %3590 = vadd.xlane.f32.xlu0 %v3589
    %v3591 = vpop.xlane.xlu0 %3590
    %v3592 = vsel %vm262, %v3588, 0.0
    %3593 = vadd.xlane.f32.xlu0 %v3592
    %v3594 = vpop.xlane.xlu0 %3593
    %v3595 = vrcp.pop %v3591
    %v3596 = vrcp.pop %v3594
    %v3597 = vmul.f32 %v3586, %v3595
    %v3598 = vmul.f32 %v3588, %v3596
    %3599 = vrot.lane.b32.xlu0 %v3466, 64
    %v3600 = vpop.permute.xlu0 %3599
    %3601 = vrot.lane.b32.xlu0 %v3471, 64
    %v3602 = vpop.permute.xlu0 %3601
    %v3606 = vsel %vm262, %v3597, 0
    %v3609 = vsel %vm262, %v3598, 0
    %3611 = vmatprep.subr.mxu0 0.0
    %3612 = vmatpush1.msra.mxu0 0.0
    %3613 = vmatprep.subr.mxu0 0.0
    %3614 = vmatpush1.msra.mxu0 0.0
    %3615 = vmatprep.subr.mxu0 0.0
    %3616 = vmatpush1.msra.mxu0 0.0
    %3617 = vmatprep.subr.mxu0 0.0
    %3618 = vmatpush1.msra.mxu0 0.0
    %3619 = vmatprep.subr.mxu0 0.0
    %3620 = vmatpush1.msra.mxu0 0.0
    %3621 = vmatprep.subr.mxu0 0.0
    %3622 = vmatpush1.msra.mxu0 0.0
    %3623 = vmatprep.subr.mxu0 0.0
    %3624 = vmatpush1.msra.mxu0 0.0
    %3625 = vmatprep.subr.mxu0 0.0
    %3626 = vmatpush1.msra.mxu0 0.0
    %3627 = vmatprep.subr.mxu0 0.0
    %3628 = vmatpush1.msra.mxu0 0.0
    %3629 = vmatprep.subr.mxu0 0.0
    %3630 = vmatpush1.msra.mxu0 0.0
    %3631 = vmatprep.subr.mxu0 0.0
    %3632 = vmatpush1.msra.mxu0 0.0
    %3633 = vmatprep.subr.mxu0 0.0
    %3634 = vmatpush1.msra.mxu0 0.0
    %3635 = vmatprep.subr.mxu0 0.0
    %3636 = vmatpush1.msra.mxu0 0.0
    %3637 = vmatprep.subr.mxu0 0.0
    %3638 = vmatpush1.msra.mxu0 0.0
    %3639 = vmatprep.subr.mxu0 0.0
    %3640 = vmatpush1.msra.mxu0 %v3602
    %3641 = vmatprep.subr.mxu0 0.0
    %3642 = vmatpush1.msra.mxu0 %v3600
    %3643 = vmatprep.subr.mxu0 0.0
    %3644 = vmatpush2.msra.mxu0 0.0
    %3645 = vmatprep.subr.mxu0 0.0
    %3646 = vmatpush2.msra.mxu0 0.0
    %3647 = vmatprep.subr.mxu0 0.0
    %3648 = vmatpush2.msra.mxu0 0.0
    %3649 = vmatprep.subr.mxu0 0.0
    %3650 = vmatpush2.msra.mxu0 0.0
    %3651 = vmatprep.subr.mxu0 0.0
    %3652 = vmatpush2.msra.mxu0 0.0
    %3653 = vmatprep.subr.mxu0 0.0
    %3654 = vmatpush2.msra.mxu0 0.0
    %3655 = vmatprep.subr.mxu0 0.0
    %3656 = vmatpush2.msra.mxu0 0.0
    %3657 = vmatprep.subr.mxu0 0.0
    %3658 = vmatpush2.msra.mxu0 0.0
    %3659 = vmatprep.subr.mxu0 0.0
    %3660 = vmatpush2.msra.mxu0 0.0
    %3661 = vmatprep.subr.mxu0 0.0
    %3662 = vmatpush2.msra.mxu0 0.0
    %3663 = vmatprep.subr.mxu0 0.0
    %3664 = vmatpush2.msra.mxu0 0.0
    %3665 = vmatprep.subr.mxu0 0.0
    %3666 = vmatpush2.msra.mxu0 0.0
    %3667 = vmatprep.subr.mxu0 0.0
    %3668 = vmatpush2.msra.mxu0 0.0
    %3669 = vmatprep.subr.mxu0 0.0
    %3670 = vmatpush2.msra.mxu0 0.0
    %3671 = vmatprep.subr.mxu0 0.0
    %3672 = vmatpush2.msra.mxu0 0.0
    %3673 = vmatprep.subr.mxu0 0.0
    %3674 = vmatpush2.msra.mxu0 0.0
    %3675 = vmatprep.mubr.f32.mxu0 0.0
    %3676 = vmatmul.mubr.f32.gmra.mxu0 %v3606
    %v3677 = vpop.f32.mrf.mxu0
    %v3678 = vadd.f32 0.0, %v3677
    %v3679 = vpop.f32.mrf.mxu0
    %3680 = vmatprep.mubr.f32.mxu0 0.0
    %3681 = vmatmul.mubr.f32.gmra.mxu0 %v3609
    %v3682 = vpop.f32.mrf.mxu0
    %v3683 = vadd.f32 0.0, %v3682
    %v3684 = vpop.f32.mrf.mxu0
    %3685 = vdwg.mxu0
    %3688 = vrot.lane.b32.xlu0 %v3476, 96
    %v3689 = vpop.permute.xlu0 %3688
    %3690 = vrot.lane.b32.xlu0 %v3481, 96
    %v3691 = vpop.permute.xlu0 %3690
    %v3692 = vsel %vm174, %v3476, 0
    %v3694 = vsel %vm174, %v3481, 0
    %v3696 = vsel %vm174, %v3689, 0
    %v3698 = vsel %vm174, %v3691, 0
    %3700 = vmatprep.subr.mxu0 0.0
    %3701 = vmatpush1.xpose.msra.mxu0 0.0
    %3702 = vmatprep.subr.mxu0 0.0
    %3703 = vmatpush1.xpose.msra.mxu0 0.0
    %3704 = vmatprep.subr.mxu0 0.0
    %3705 = vmatpush1.xpose.msra.mxu0 0.0
    %3706 = vmatprep.subr.mxu0 0.0
    %3707 = vmatpush1.xpose.msra.mxu0 0.0
    %3708 = vmatprep.subr.mxu0 0.0
    %3709 = vmatpush1.xpose.msra.mxu0 0.0
    %3710 = vmatprep.subr.mxu0 0.0
    %3711 = vmatpush1.xpose.msra.mxu0 0.0
    %3712 = vmatprep.subr.mxu0 0.0
    %3713 = vmatpush1.xpose.msra.mxu0 0.0
    %3714 = vmatprep.subr.mxu0 0.0
    %3715 = vmatpush1.xpose.msra.mxu0 0.0
    %3716 = vmatprep.subr.mxu0 0.0
    %3717 = vmatpush1.xpose.msra.mxu0 0.0
    %3718 = vmatprep.subr.mxu0 0.0
    %3719 = vmatpush1.xpose.msra.mxu0 0.0
    %3720 = vmatprep.subr.mxu0 0.0
    %3721 = vmatpush1.xpose.msra.mxu0 0.0
    %3722 = vmatprep.subr.mxu0 0.0
    %3723 = vmatpush1.xpose.msra.mxu0 0.0
    %3724 = vmatprep.subr.mxu0 0.0
    %3725 = vmatpush1.xpose.msra.mxu0 0.0
    %3726 = vmatprep.subr.mxu0 0.0
    %3727 = vmatpush1.xpose.msra.mxu0 0.0
    %3728 = vmatprep.subr.mxu0 0.0
    %3729 = vmatpush1.xpose.msra.mxu0 %v3698
    %3730 = vmatprep.subr.mxu0 0.0
    %3731 = vmatpush1.xpose.msra.mxu0 %v3696
    %3732 = vmatprep.subr.mxu0 0.0
    %3733 = vmatpush2.xpose.msra.mxu0 0.0
    %3734 = vmatprep.subr.mxu0 0.0
    %3735 = vmatpush2.xpose.msra.mxu0 0.0
    %3736 = vmatprep.subr.mxu0 0.0
    %3737 = vmatpush2.xpose.msra.mxu0 0.0
    %3738 = vmatprep.subr.mxu0 0.0
    %3739 = vmatpush2.xpose.msra.mxu0 0.0
    %3740 = vmatprep.subr.mxu0 0.0
    %3741 = vmatpush2.xpose.msra.mxu0 0.0
    %3742 = vmatprep.subr.mxu0 0.0
    %3743 = vmatpush2.xpose.msra.mxu0 0.0
    %3744 = vmatprep.subr.mxu0 0.0
    %3745 = vmatpush2.xpose.msra.mxu0 0.0
    %3746 = vmatprep.subr.mxu0 0.0
    %3747 = vmatpush2.xpose.msra.mxu0 0.0
    %3748 = vmatprep.subr.mxu0 0.0
    %3749 = vmatpush2.xpose.msra.mxu0 0.0
    %3750 = vmatprep.subr.mxu0 0.0
    %3751 = vmatpush2.xpose.msra.mxu0 0.0
    %3752 = vmatprep.subr.mxu0 0.0
    %3753 = vmatpush2.xpose.msra.mxu0 0.0
    %3754 = vmatprep.subr.mxu0 0.0
    %3755 = vmatpush2.xpose.msra.mxu0 0.0
    %3756 = vmatprep.subr.mxu0 0.0
    %3757 = vmatpush2.xpose.msra.mxu0 0.0
    %3758 = vmatprep.subr.mxu0 0.0
    %3759 = vmatpush2.xpose.msra.mxu0 0.0
    %3760 = vmatprep.subr.mxu0 0.0
    %3761 = vmatpush2.xpose.msra.mxu0 0.0
    %3762 = vmatprep.subr.mxu0 0.0
    %3763 = vmatpush2.xpose.msra.mxu0 0.0
    %3764 = vmatprep.mubr.f32.mxu0 0.0
    %3765 = vmatmul.mubr.f32.gmra.mxu0 %v3692
    %v3766 = vpop.f32.mrf.mxu0
    %v3767 = vadd.f32 0.0, %v3766
    %v3768 = vpop.f32.mrf.mxu0
    %3769 = vmatprep.mubr.f32.mxu0 0.0
    %3770 = vmatmul.mubr.f32.gmra.mxu0 %v3694
    %v3771 = vpop.f32.mrf.mxu0
    %v3772 = vadd.f32 0.0, %v3771
    %v3773 = vpop.f32.mrf.mxu0
    %3774 = vdwg.mxu0
    %v3775 = vmul.f32 %v3767, 0.088388346
    %v3776 = vmul.f32 %v3772, 0.088388346
    %v3777 = vadd.f32 %v3775, %v57
    %v3778 = vadd.f32 %v3776, %v58
    %v3779 = vsel %vm262, %v3777, -inf
    %3780 = vmax.xlane.f32.xlu0 %v3779
    %v3781 = vpop.xlane.xlu0 %3780
    %v3782 = vsel %vm262, %v3778, -inf
    %3783 = vmax.xlane.f32.xlu0 %v3782
    %v3784 = vpop.xlane.xlu0 %3783
    %v3785 = vsub.f32 %v3777, %v3781
    %v3786 = vsub.f32 %v3778, %v3784
    %v3787 = vmul.f32 %v3785, 1.442695
    %v3788 = vpow.pop %v3787
    %v3789 = vmul.f32 %v3786, 1.442695
    %v3790 = vpow.pop %v3789
    %v3791 = vsel %vm262, %v3788, 0.0
    %3792 = vadd.xlane.f32.xlu0 %v3791
    %v3793 = vpop.xlane.xlu0 %3792
    %v3794 = vsel %vm262, %v3790, 0.0
    %3795 = vadd.xlane.f32.xlu0 %v3794
    %v3796 = vpop.xlane.xlu0 %3795
    %v3797 = vrcp.pop %v3793
    %v3798 = vrcp.pop %v3796
    %v3799 = vmul.f32 %v3788, %v3797
    %v3800 = vmul.f32 %v3790, %v3798
    %3801 = vrot.lane.b32.xlu0 %v3476, 64
    %v3802 = vpop.permute.xlu0 %3801
    %3803 = vrot.lane.b32.xlu0 %v3481, 64
    %v3804 = vpop.permute.xlu0 %3803
    %v3808 = vsel %vm262, %v3799, 0
    %v3811 = vsel %vm262, %v3800, 0
    %3813 = vmatprep.subr.mxu0 0.0
    %3814 = vmatpush1.msra.mxu0 0.0
    %3815 = vmatprep.subr.mxu0 0.0
    %3816 = vmatpush1.msra.mxu0 0.0
    %3817 = vmatprep.subr.mxu0 0.0
    %3818 = vmatpush1.msra.mxu0 0.0
    %3819 = vmatprep.subr.mxu0 0.0
    %3820 = vmatpush1.msra.mxu0 0.0
    %3821 = vmatprep.subr.mxu0 0.0
    %3822 = vmatpush1.msra.mxu0 0.0
    %3823 = vmatprep.subr.mxu0 0.0
    %3824 = vmatpush1.msra.mxu0 0.0
    %3825 = vmatprep.subr.mxu0 0.0
    %3826 = vmatpush1.msra.mxu0 0.0
    %3827 = vmatprep.subr.mxu0 0.0
    %3828 = vmatpush1.msra.mxu0 0.0
    %3829 = vmatprep.subr.mxu0 0.0
    %3830 = vmatpush1.msra.mxu0 0.0
    %3831 = vmatprep.subr.mxu0 0.0
    %3832 = vmatpush1.msra.mxu0 0.0
    %3833 = vmatprep.subr.mxu0 0.0
    %3834 = vmatpush1.msra.mxu0 0.0
    %3835 = vmatprep.subr.mxu0 0.0
    %3836 = vmatpush1.msra.mxu0 0.0
    %3837 = vmatprep.subr.mxu0 0.0
    %3838 = vmatpush1.msra.mxu0 0.0
    %3839 = vmatprep.subr.mxu0 0.0
    %3840 = vmatpush1.msra.mxu0 0.0
    %3841 = vmatprep.subr.mxu0 0.0
    %3842 = vmatpush1.msra.mxu0 %v3804
    %3843 = vmatprep.subr.mxu0 0.0
    %3844 = vmatpush1.msra.mxu0 %v3802
    %3845 = vmatprep.subr.mxu0 0.0
    %3846 = vmatpush2.msra.mxu0 0.0
    %3847 = vmatprep.subr.mxu0 0.0
    %3848 = vmatpush2.msra.mxu0 0.0
    %3849 = vmatprep.subr.mxu0 0.0
    %3850 = vmatpush2.msra.mxu0 0.0
    %3851 = vmatprep.subr.mxu0 0.0
    %3852 = vmatpush2.msra.mxu0 0.0
    %3853 = vmatprep.subr.mxu0 0.0
    %3854 = vmatpush2.msra.mxu0 0.0
    %3855 = vmatprep.subr.mxu0 0.0
    %3856 = vmatpush2.msra.mxu0 0.0
    %3857 = vmatprep.subr.mxu0 0.0
    %3858 = vmatpush2.msra.mxu0 0.0
    %3859 = vmatprep.subr.mxu0 0.0
    %3860 = vmatpush2.msra.mxu0 0.0
    %3861 = vmatprep.subr.mxu0 0.0
    %3862 = vmatpush2.msra.mxu0 0.0
    %3863 = vmatprep.subr.mxu0 0.0
    %3864 = vmatpush2.msra.mxu0 0.0
    %3865 = vmatprep.subr.mxu0 0.0
    %3866 = vmatpush2.msra.mxu0 0.0
    %3867 = vmatprep.subr.mxu0 0.0
    %3868 = vmatpush2.msra.mxu0 0.0
    %3869 = vmatprep.subr.mxu0 0.0
    %3870 = vmatpush2.msra.mxu0 0.0
    %3871 = vmatprep.subr.mxu0 0.0
    %3872 = vmatpush2.msra.mxu0 0.0
    %3873 = vmatprep.subr.mxu0 0.0
    %3874 = vmatpush2.msra.mxu0 0.0
    %3875 = vmatprep.subr.mxu0 0.0
    %3876 = vmatpush2.msra.mxu0 0.0
    %3877 = vmatprep.mubr.f32.mxu0 0.0
    %3878 = vmatmul.mubr.f32.gmra.mxu0 %v3808
    %v3879 = vpop.f32.mrf.mxu0
    %v3880 = vadd.f32 0.0, %v3879
    %v3881 = vpop.f32.mrf.mxu0
    %3882 = vmatprep.mubr.f32.mxu0 0.0
    %3883 = vmatmul.mubr.f32.gmra.mxu0 %v3811
    %v3884 = vpop.f32.mrf.mxu0
    %v3885 = vadd.f32 0.0, %v3884
    %v3886 = vpop.f32.mrf.mxu0
    %3887 = vdwg.mxu0
    %s3888 = scalar_lea.vmem %s1, 192
    %v3889 = vld [vmem:[%s3888] sm:$0xff]
    %v3890 = vld [vmem:[%s3888 + $0x8] sm:$0xff]
    %v3891 = vld [vmem:[%s3888 + $0x10] sm:$0xff]
    %v3892 = vld [vmem:[%s3888 + $0x18] sm:$0xff]
    %s3893 = scalar_lea.vmem %s2, 768
    %v3894 = vld [vmem:[%s3893] sm:$0xff]
    %v3895 = vld [vmem:[%s3893 + $0x8] sm:$0xff]
    %v3896 = vld [vmem:[%s3893 + $0x10] sm:$0xff]
    %v3897 = vld [vmem:[%s3893 + $0x18] sm:$0xff]
    %v3898 = vld [vmem:[%s3893 + $0x20] sm:$0xff]
    %v3899 = vld [vmem:[%s3893 + $0x28] sm:$0xff]
    %v3900 = vld [vmem:[%s3893 + $0x30] sm:$0xff]
    %v3901 = vld [vmem:[%s3893 + $0x38] sm:$0xff]
    %v3902 = vld [vmem:[%s3893 + $0x40] sm:$0xff]
    %v3903 = vld [vmem:[%s3893 + $0x48] sm:$0xff]
    %v3904 = vld [vmem:[%s3893 + $0x50] sm:$0xff]
    %v3905 = vld [vmem:[%s3893 + $0x58] sm:$0xff]
    %v3906 = vld [vmem:[%s3893 + $0x60] sm:$0xff]
    %v3907 = vld [vmem:[%s3893 + $0x68] sm:$0xff]
    %v3908 = vld [vmem:[%s3893 + $0x70] sm:$0xff]
    %v3909 = vld [vmem:[%s3893 + $0x78] sm:$0xff]
    %3910 = vmatprep.subr.mxu0 0.0
    %3911 = vmatpush1.msra.mxu0 %v3909
    %3912 = vmatprep.subr.mxu0 0.0
    %3913 = vmatpush1.msra.mxu0 %v3908
    %3914 = vmatprep.subr.mxu0 0.0
    %3915 = vmatpush1.msra.mxu0 %v3907
    %3916 = vmatprep.subr.mxu0 0.0
    %3917 = vmatpush1.msra.mxu0 %v3906
    %3918 = vmatprep.subr.mxu0 0.0
    %3919 = vmatpush1.msra.mxu0 %v3905
    %3920 = vmatprep.subr.mxu0 0.0
    %3921 = vmatpush1.msra.mxu0 %v3904
    %3922 = vmatprep.subr.mxu0 0.0
    %3923 = vmatpush1.msra.mxu0 %v3903
    %3924 = vmatprep.subr.mxu0 0.0
    %3925 = vmatpush1.msra.mxu0 %v3902
    %3926 = vmatprep.subr.mxu0 0.0
    %3927 = vmatpush1.msra.mxu0 %v3901
    %3928 = vmatprep.subr.mxu0 0.0
    %3929 = vmatpush1.msra.mxu0 %v3900
    %3930 = vmatprep.subr.mxu0 0.0
    %3931 = vmatpush1.msra.mxu0 %v3899
    %3932 = vmatprep.subr.mxu0 0.0
    %3933 = vmatpush1.msra.mxu0 %v3898
    %3934 = vmatprep.subr.mxu0 0.0
    %3935 = vmatpush1.msra.mxu0 %v3897
    %3936 = vmatprep.subr.mxu0 0.0
    %3937 = vmatpush1.msra.mxu0 %v3896
    %3938 = vmatprep.subr.mxu0 0.0
    %3939 = vmatpush1.msra.mxu0 %v3895
    %3940 = vmatprep.subr.mxu0 0.0
    %3941 = vmatpush1.msra.mxu0 %v3894
    %3942 = vmatprep.subr.mxu0 0.0
    %3943 = vmatpush2.msra.mxu0 0.0
    %3944 = vmatprep.subr.mxu0 0.0
    %3945 = vmatpush2.msra.mxu0 0.0
    %3946 = vmatprep.subr.mxu0 0.0
    %3947 = vmatpush2.msra.mxu0 0.0
    %3948 = vmatprep.subr.mxu0 0.0
    %3949 = vmatpush2.msra.mxu0 0.0
    %3950 = vmatprep.subr.mxu0 0.0
    %3951 = vmatpush2.msra.mxu0 0.0
    %3952 = vmatprep.subr.mxu0 0.0
    %3953 = vmatpush2.msra.mxu0 0.0
    %3954 = vmatprep.subr.mxu0 0.0
    %3955 = vmatpush2.msra.mxu0 0.0
    %3956 = vmatprep.subr.mxu0 0.0
    %3957 = vmatpush2.msra.mxu0 0.0
    %3958 = vmatprep.subr.mxu0 0.0
    %3959 = vmatpush2.msra.mxu0 0.0
    %3960 = vmatprep.subr.mxu0 0.0
    %3961 = vmatpush2.msra.mxu0 0.0
    %3962 = vmatprep.subr.mxu0 0.0
    %3963 = vmatpush2.msra.mxu0 0.0
    %3964 = vmatprep.subr.mxu0 0.0
    %3965 = vmatpush2.msra.mxu0 0.0
    %3966 = vmatprep.subr.mxu0 0.0
    %3967 = vmatpush2.msra.mxu0 0.0
    %3968 = vmatprep.subr.mxu0 0.0
    %3969 = vmatpush2.msra.mxu0 0.0
    %3970 = vmatprep.subr.mxu0 0.0
    %3971 = vmatpush2.msra.mxu0 0.0
    %3972 = vmatprep.subr.mxu0 0.0
    %3973 = vmatpush2.msra.mxu0 0.0
    %3974 = vmatprep.mubr.f32.mxu0 0.0
    %3975 = vmatmul.mubr.f32.gmra.mxu0 %v3889
    %v3976 = vpop.f32.mrf.mxu0
    %v3977 = vadd.f32 0.0, %v3976
    %v3978 = vpop.f32.mrf.mxu0
    %3979 = vmatprep.mubr.f32.mxu0 0.0
    %3980 = vmatmul.mubr.f32.gmra.mxu0 %v3890
    %v3981 = vpop.f32.mrf.mxu0
    %v3982 = vadd.f32 0.0, %v3981
    %v3983 = vpop.f32.mrf.mxu0
    %3984 = vmatprep.mubr.f32.mxu0 0.0
    %3985 = vmatmul.mubr.f32.gmra.mxu0 %v3891
    %v3986 = vpop.f32.mrf.mxu0
    %v3987 = vadd.f32 0.0, %v3986
    %v3988 = vpop.f32.mrf.mxu0
    %3989 = vmatprep.mubr.f32.mxu0 0.0
    %3990 = vmatmul.mubr.f32.gmra.mxu0 %v3892
    %v3991 = vpop.f32.mrf.mxu0
    %v3992 = vadd.f32 0.0, %v3991
    %v3993 = vpop.f32.mrf.mxu0
    %3994 = vdwg.mxu0
    %3997 = vrot.lane.b32.xlu0 %v3977, 96
    %v3998 = vpop.permute.xlu0 %3997
    %3999 = vrot.lane.b32.xlu0 %v3982, 96
    %v4000 = vpop.permute.xlu0 %3999
    %v4001 = vsel %vm174, %v3977, 0
    %v4003 = vsel %vm174, %v3982, 0
    %v4005 = vsel %vm174, %v3998, 0
    %v4007 = vsel %vm174, %v4000, 0
    %4009 = vmatprep.subr.mxu0 0.0
    %4010 = vmatpush1.xpose.msra.mxu0 0.0
    %4011 = vmatprep.subr.mxu0 0.0
    %4012 = vmatpush1.xpose.msra.mxu0 0.0
    %4013 = vmatprep.subr.mxu0 0.0
    %4014 = vmatpush1.xpose.msra.mxu0 0.0
    %4015 = vmatprep.subr.mxu0 0.0
    %4016 = vmatpush1.xpose.msra.mxu0 0.0
    %4017 = vmatprep.subr.mxu0 0.0
    %4018 = vmatpush1.xpose.msra.mxu0 0.0
    %4019 = vmatprep.subr.mxu0 0.0
    %4020 = vmatpush1.xpose.msra.mxu0 0.0
    %4021 = vmatprep.subr.mxu0 0.0
    %4022 = vmatpush1.xpose.msra.mxu0 0.0
    %4023 = vmatprep.subr.mxu0 0.0
    %4024 = vmatpush1.xpose.msra.mxu0 0.0
    %4025 = vmatprep.subr.mxu0 0.0
    %4026 = vmatpush1.xpose.msra.mxu0 0.0
    %4027 = vmatprep.subr.mxu0 0.0
    %4028 = vmatpush1.xpose.msra.mxu0 0.0
    %4029 = vmatprep.subr.mxu0 0.0
    %4030 = vmatpush1.xpose.msra.mxu0 0.0
    %4031 = vmatprep.subr.mxu0 0.0
    %4032 = vmatpush1.xpose.msra.mxu0 0.0
    %4033 = vmatprep.subr.mxu0 0.0
    %4034 = vmatpush1.xpose.msra.mxu0 0.0
    %4035 = vmatprep.subr.mxu0 0.0
    %4036 = vmatpush1.xpose.msra.mxu0 0.0
    %4037 = vmatprep.subr.mxu0 0.0
    %4038 = vmatpush1.xpose.msra.mxu0 %v4007
    %4039 = vmatprep.subr.mxu0 0.0
    %4040 = vmatpush1.xpose.msra.mxu0 %v4005
    %4041 = vmatprep.subr.mxu0 0.0
    %4042 = vmatpush2.xpose.msra.mxu0 0.0
    %4043 = vmatprep.subr.mxu0 0.0
    %4044 = vmatpush2.xpose.msra.mxu0 0.0
    %4045 = vmatprep.subr.mxu0 0.0
    %4046 = vmatpush2.xpose.msra.mxu0 0.0
    %4047 = vmatprep.subr.mxu0 0.0
    %4048 = vmatpush2.xpose.msra.mxu0 0.0
    %4049 = vmatprep.subr.mxu0 0.0
    %4050 = vmatpush2.xpose.msra.mxu0 0.0
    %4051 = vmatprep.subr.mxu0 0.0
    %4052 = vmatpush2.xpose.msra.mxu0 0.0
    %4053 = vmatprep.subr.mxu0 0.0
    %4054 = vmatpush2.xpose.msra.mxu0 0.0
    %4055 = vmatprep.subr.mxu0 0.0
    %4056 = vmatpush2.xpose.msra.mxu0 0.0
    %4057 = vmatprep.subr.mxu0 0.0
    %4058 = vmatpush2.xpose.msra.mxu0 0.0
    %4059 = vmatprep.subr.mxu0 0.0
    %4060 = vmatpush2.xpose.msra.mxu0 0.0
    %4061 = vmatprep.subr.mxu0 0.0
    %4062 = vmatpush2.xpose.msra.mxu0 0.0
    %4063 = vmatprep.subr.mxu0 0.0
    %4064 = vmatpush2.xpose.msra.mxu0 0.0
    %4065 = vmatprep.subr.mxu0 0.0
    %4066 = vmatpush2.xpose.msra.mxu0 0.0
    %4067 = vmatprep.subr.mxu0 0.0
    %4068 = vmatpush2.xpose.msra.mxu0 0.0
    %4069 = vmatprep.subr.mxu0 0.0
    %4070 = vmatpush2.xpose.msra.mxu0 0.0
    %4071 = vmatprep.subr.mxu0 0.0
    %4072 = vmatpush2.xpose.msra.mxu0 0.0
    %4073 = vmatprep.mubr.f32.mxu0 0.0
    %4074 = vmatmul.mubr.f32.gmra.mxu0 %v4001
    %v4075 = vpop.f32.mrf.mxu0
    %v4076 = vadd.f32 0.0, %v4075
    %v4077 = vpop.f32.mrf.mxu0
    %4078 = vmatprep.mubr.f32.mxu0 0.0
    %4079 = vmatmul.mubr.f32.gmra.mxu0 %v4003
    %v4080 = vpop.f32.mrf.mxu0
    %v4081 = vadd.f32 0.0, %v4080
    %v4082 = vpop.f32.mrf.mxu0
    %4083 = vdwg.mxu0
    %v4084 = vmul.f32 %v4076, 0.088388346
    %v4085 = vmul.f32 %v4081, 0.088388346
    %v4086 = vadd.f32 %v4084, %v57
    %v4087 = vadd.f32 %v4085, %v58
    %v4088 = vsel %vm262, %v4086, -inf
    %4089 = vmax.xlane.f32.xlu0 %v4088
    %v4090 = vpop.xlane.xlu0 %4089
    %v4091 = vsel %vm262, %v4087, -inf
    %4092 = vmax.xlane.f32.xlu0 %v4091
    %v4093 = vpop.xlane.xlu0 %4092
    %v4094 = vsub.f32 %v4086, %v4090
    %v4095 = vsub.f32 %v4087, %v4093
    %v4096 = vmul.f32 %v4094, 1.442695
    %v4097 = vpow.pop %v4096
    %v4098 = vmul.f32 %v4095, 1.442695
    %v4099 = vpow.pop %v4098
    %v4100 = vsel %vm262, %v4097, 0.0
    %4101 = vadd.xlane.f32.xlu0 %v4100
    %v4102 = vpop.xlane.xlu0 %4101
    %v4103 = vsel %vm262, %v4099, 0.0
    %4104 = vadd.xlane.f32.xlu0 %v4103
    %v4105 = vpop.xlane.xlu0 %4104
    %v4106 = vrcp.pop %v4102
    %v4107 = vrcp.pop %v4105
    %v4108 = vmul.f32 %v4097, %v4106
    %v4109 = vmul.f32 %v4099, %v4107
    %4110 = vrot.lane.b32.xlu0 %v3977, 64
    %v4111 = vpop.permute.xlu0 %4110
    %4112 = vrot.lane.b32.xlu0 %v3982, 64
    %v4113 = vpop.permute.xlu0 %4112
    %v4117 = vsel %vm262, %v4108, 0
    %v4120 = vsel %vm262, %v4109, 0
    %4122 = vmatprep.subr.mxu0 0.0
    %4123 = vmatpush1.msra.mxu0 0.0
    %4124 = vmatprep.subr.mxu0 0.0
    %4125 = vmatpush1.msra.mxu0 0.0
    %4126 = vmatprep.subr.mxu0 0.0
    %4127 = vmatpush1.msra.mxu0 0.0
    %4128 = vmatprep.subr.mxu0 0.0
    %4129 = vmatpush1.msra.mxu0 0.0
    %4130 = vmatprep.subr.mxu0 0.0
    %4131 = vmatpush1.msra.mxu0 0.0
    %4132 = vmatprep.subr.mxu0 0.0
    %4133 = vmatpush1.msra.mxu0 0.0
    %4134 = vmatprep.subr.mxu0 0.0
    %4135 = vmatpush1.msra.mxu0 0.0
    %4136 = vmatprep.subr.mxu0 0.0
    %4137 = vmatpush1.msra.mxu0 0.0
    %4138 = vmatprep.subr.mxu0 0.0
    %4139 = vmatpush1.msra.mxu0 0.0
    %4140 = vmatprep.subr.mxu0 0.0
    %4141 = vmatpush1.msra.mxu0 0.0
    %4142 = vmatprep.subr.mxu0 0.0
    %4143 = vmatpush1.msra.mxu0 0.0
    %4144 = vmatprep.subr.mxu0 0.0
    %4145 = vmatpush1.msra.mxu0 0.0
    %4146 = vmatprep.subr.mxu0 0.0
    %4147 = vmatpush1.msra.mxu0 0.0
    %4148 = vmatprep.subr.mxu0 0.0
    %4149 = vmatpush1.msra.mxu0 0.0
    %4150 = vmatprep.subr.mxu0 0.0
    %4151 = vmatpush1.msra.mxu0 %v4113
    %4152 = vmatprep.subr.mxu0 0.0
    %4153 = vmatpush1.msra.mxu0 %v4111
    %4154 = vmatprep.subr.mxu0 0.0
    %4155 = vmatpush2.msra.mxu0 0.0
    %4156 = vmatprep.subr.mxu0 0.0
    %4157 = vmatpush2.msra.mxu0 0.0
    %4158 = vmatprep.subr.mxu0 0.0
    %4159 = vmatpush2.msra.mxu0 0.0
    %4160 = vmatprep.subr.mxu0 0.0
    %4161 = vmatpush2.msra.mxu0 0.0
    %4162 = vmatprep.subr.mxu0 0.0
    %4163 = vmatpush2.msra.mxu0 0.0
    %4164 = vmatprep.subr.mxu0 0.0
    %4165 = vmatpush2.msra.mxu0 0.0
    %4166 = vmatprep.subr.mxu0 0.0
    %4167 = vmatpush2.msra.mxu0 0.0
    %4168 = vmatprep.subr.mxu0 0.0
    %4169 = vmatpush2.msra.mxu0 0.0
    %4170 = vmatprep.subr.mxu0 0.0
    %4171 = vmatpush2.msra.mxu0 0.0
    %4172 = vmatprep.subr.mxu0 0.0
    %4173 = vmatpush2.msra.mxu0 0.0
    %4174 = vmatprep.subr.mxu0 0.0
    %4175 = vmatpush2.msra.mxu0 0.0
    %4176 = vmatprep.subr.mxu0 0.0
    %4177 = vmatpush2.msra.mxu0 0.0
    %4178 = vmatprep.subr.mxu0 0.0
    %4179 = vmatpush2.msra.mxu0 0.0
    %4180 = vmatprep.subr.mxu0 0.0
    %4181 = vmatpush2.msra.mxu0 0.0
    %4182 = vmatprep.subr.mxu0 0.0
    %4183 = vmatpush2.msra.mxu0 0.0
    %4184 = vmatprep.subr.mxu0 0.0
    %4185 = vmatpush2.msra.mxu0 0.0
    %4186 = vmatprep.mubr.f32.mxu0 0.0
    %4187 = vmatmul.mubr.f32.gmra.mxu0 %v4117
    %v4188 = vpop.f32.mrf.mxu0
    %v4189 = vadd.f32 0.0, %v4188
    %v4190 = vpop.f32.mrf.mxu0
    %4191 = vmatprep.mubr.f32.mxu0 0.0
    %4192 = vmatmul.mubr.f32.gmra.mxu0 %v4120
    %v4193 = vpop.f32.mrf.mxu0
    %v4194 = vadd.f32 0.0, %v4193
    %v4195 = vpop.f32.mrf.mxu0
    %4196 = vdwg.mxu0
    %4199 = vrot.lane.b32.xlu0 %v3987, 96
    %v4200 = vpop.permute.xlu0 %4199
    %4201 = vrot.lane.b32.xlu0 %v3992, 96
    %v4202 = vpop.permute.xlu0 %4201
    %v4203 = vsel %vm174, %v3987, 0
    %v4205 = vsel %vm174, %v3992, 0
    %v4207 = vsel %vm174, %v4200, 0
    %v4209 = vsel %vm174, %v4202, 0
    %4211 = vmatprep.subr.mxu0 0.0
    %4212 = vmatpush1.xpose.msra.mxu0 0.0
    %4213 = vmatprep.subr.mxu0 0.0
    %4214 = vmatpush1.xpose.msra.mxu0 0.0
    %4215 = vmatprep.subr.mxu0 0.0
    %4216 = vmatpush1.xpose.msra.mxu0 0.0
    %4217 = vmatprep.subr.mxu0 0.0
    %4218 = vmatpush1.xpose.msra.mxu0 0.0
    %4219 = vmatprep.subr.mxu0 0.0
    %4220 = vmatpush1.xpose.msra.mxu0 0.0
    %4221 = vmatprep.subr.mxu0 0.0
    %4222 = vmatpush1.xpose.msra.mxu0 0.0
    %4223 = vmatprep.subr.mxu0 0.0
    %4224 = vmatpush1.xpose.msra.mxu0 0.0
    %4225 = vmatprep.subr.mxu0 0.0
    %4226 = vmatpush1.xpose.msra.mxu0 0.0
    %4227 = vmatprep.subr.mxu0 0.0
    %4228 = vmatpush1.xpose.msra.mxu0 0.0
    %4229 = vmatprep.subr.mxu0 0.0
    %4230 = vmatpush1.xpose.msra.mxu0 0.0
    %4231 = vmatprep.subr.mxu0 0.0
    %4232 = vmatpush1.xpose.msra.mxu0 0.0
    %4233 = vmatprep.subr.mxu0 0.0
    %4234 = vmatpush1.xpose.msra.mxu0 0.0
    %4235 = vmatprep.subr.mxu0 0.0
    %4236 = vmatpush1.xpose.msra.mxu0 0.0
    %4237 = vmatprep.subr.mxu0 0.0
    %4238 = vmatpush1.xpose.msra.mxu0 0.0
    %4239 = vmatprep.subr.mxu0 0.0
    %4240 = vmatpush1.xpose.msra.mxu0 %v4209
    %4241 = vmatprep.subr.mxu0 0.0
    %4242 = vmatpush1.xpose.msra.mxu0 %v4207
    %4243 = vmatprep.subr.mxu0 0.0
    %4244 = vmatpush2.xpose.msra.mxu0 0.0
    %4245 = vmatprep.subr.mxu0 0.0
    %4246 = vmatpush2.xpose.msra.mxu0 0.0
    %4247 = vmatprep.subr.mxu0 0.0
    %4248 = vmatpush2.xpose.msra.mxu0 0.0
    %4249 = vmatprep.subr.mxu0 0.0
    %4250 = vmatpush2.xpose.msra.mxu0 0.0
    %4251 = vmatprep.subr.mxu0 0.0
    %4252 = vmatpush2.xpose.msra.mxu0 0.0
    %4253 = vmatprep.subr.mxu0 0.0
    %4254 = vmatpush2.xpose.msra.mxu0 0.0
    %4255 = vmatprep.subr.mxu0 0.0
    %4256 = vmatpush2.xpose.msra.mxu0 0.0
    %4257 = vmatprep.subr.mxu0 0.0
    %4258 = vmatpush2.xpose.msra.mxu0 0.0
    %4259 = vmatprep.subr.mxu0 0.0
    %4260 = vmatpush2.xpose.msra.mxu0 0.0
    %4261 = vmatprep.subr.mxu0 0.0
    %4262 = vmatpush2.xpose.msra.mxu0 0.0
    %4263 = vmatprep.subr.mxu0 0.0
    %4264 = vmatpush2.xpose.msra.mxu0 0.0
    %4265 = vmatprep.subr.mxu0 0.0
    %4266 = vmatpush2.xpose.msra.mxu0 0.0
    %4267 = vmatprep.subr.mxu0 0.0
    %4268 = vmatpush2.xpose.msra.mxu0 0.0
    %4269 = vmatprep.subr.mxu0 0.0
    %4270 = vmatpush2.xpose.msra.mxu0 0.0
    %4271 = vmatprep.subr.mxu0 0.0
    %4272 = vmatpush2.xpose.msra.mxu0 0.0
    %4273 = vmatprep.subr.mxu0 0.0
    %4274 = vmatpush2.xpose.msra.mxu0 0.0
    %4275 = vmatprep.mubr.f32.mxu0 0.0
    %4276 = vmatmul.mubr.f32.gmra.mxu0 %v4203
    %v4277 = vpop.f32.mrf.mxu0
    %v4278 = vadd.f32 0.0, %v4277
    %v4279 = vpop.f32.mrf.mxu0
    %4280 = vmatprep.mubr.f32.mxu0 0.0
    %4281 = vmatmul.mubr.f32.gmra.mxu0 %v4205
    %v4282 = vpop.f32.mrf.mxu0
    %v4283 = vadd.f32 0.0, %v4282
    %v4284 = vpop.f32.mrf.mxu0
    %4285 = vdwg.mxu0
    %v4286 = vmul.f32 %v4278, 0.088388346
    %v4287 = vmul.f32 %v4283, 0.088388346
    %v4288 = vadd.f32 %v4286, %v57
    %v4289 = vadd.f32 %v4287, %v58
    %v4290 = vsel %vm262, %v4288, -inf
    %4291 = vmax.xlane.f32.xlu0 %v4290
    %v4292 = vpop.xlane.xlu0 %4291
    %v4293 = vsel %vm262, %v4289, -inf
    %4294 = vmax.xlane.f32.xlu0 %v4293
    %v4295 = vpop.xlane.xlu0 %4294
    %v4296 = vsub.f32 %v4288, %v4292
    %v4297 = vsub.f32 %v4289, %v4295
    %v4298 = vmul.f32 %v4296, 1.442695
    %v4299 = vpow.pop %v4298
    %v4300 = vmul.f32 %v4297, 1.442695
    %v4301 = vpow.pop %v4300
    %v4302 = vsel %vm262, %v4299, 0.0
    %4303 = vadd.xlane.f32.xlu0 %v4302
    %v4304 = vpop.xlane.xlu0 %4303
    %v4305 = vsel %vm262, %v4301, 0.0
    %4306 = vadd.xlane.f32.xlu0 %v4305
    %v4307 = vpop.xlane.xlu0 %4306
    %v4308 = vrcp.pop %v4304
    %v4309 = vrcp.pop %v4307
    %v4310 = vmul.f32 %v4299, %v4308
    %v4311 = vmul.f32 %v4301, %v4309
    %4312 = vrot.lane.b32.xlu0 %v3987, 64
    %v4313 = vpop.permute.xlu0 %4312
    %4314 = vrot.lane.b32.xlu0 %v3992, 64
    %v4315 = vpop.permute.xlu0 %4314
    %v4319 = vsel %vm262, %v4310, 0
    %v4322 = vsel %vm262, %v4311, 0
    %4324 = vmatprep.subr.mxu0 0.0
    %4325 = vmatpush1.msra.mxu0 0.0
    %4326 = vmatprep.subr.mxu0 0.0
    %4327 = vmatpush1.msra.mxu0 0.0
    %4328 = vmatprep.subr.mxu0 0.0
    %4329 = vmatpush1.msra.mxu0 0.0
    %4330 = vmatprep.subr.mxu0 0.0
    %4331 = vmatpush1.msra.mxu0 0.0
    %4332 = vmatprep.subr.mxu0 0.0
    %4333 = vmatpush1.msra.mxu0 0.0
    %4334 = vmatprep.subr.mxu0 0.0
    %4335 = vmatpush1.msra.mxu0 0.0
    %4336 = vmatprep.subr.mxu0 0.0
    %4337 = vmatpush1.msra.mxu0 0.0
    %4338 = vmatprep.subr.mxu0 0.0
    %4339 = vmatpush1.msra.mxu0 0.0
    %4340 = vmatprep.subr.mxu0 0.0
    %4341 = vmatpush1.msra.mxu0 0.0
    %4342 = vmatprep.subr.mxu0 0.0
    %4343 = vmatpush1.msra.mxu0 0.0
    %4344 = vmatprep.subr.mxu0 0.0
    %4345 = vmatpush1.msra.mxu0 0.0
    %4346 = vmatprep.subr.mxu0 0.0
    %4347 = vmatpush1.msra.mxu0 0.0
    %4348 = vmatprep.subr.mxu0 0.0
    %4349 = vmatpush1.msra.mxu0 0.0
    %4350 = vmatprep.subr.mxu0 0.0
    %4351 = vmatpush1.msra.mxu0 0.0
    %4352 = vmatprep.subr.mxu0 0.0
    %4353 = vmatpush1.msra.mxu0 %v4315
    %4354 = vmatprep.subr.mxu0 0.0
    %4355 = vmatpush1.msra.mxu0 %v4313
    %4356 = vmatprep.subr.mxu0 0.0
    %4357 = vmatpush2.msra.mxu0 0.0
    %4358 = vmatprep.subr.mxu0 0.0
    %4359 = vmatpush2.msra.mxu0 0.0
    %4360 = vmatprep.subr.mxu0 0.0
    %4361 = vmatpush2.msra.mxu0 0.0
    %4362 = vmatprep.subr.mxu0 0.0
    %4363 = vmatpush2.msra.mxu0 0.0
    %4364 = vmatprep.subr.mxu0 0.0
    %4365 = vmatpush2.msra.mxu0 0.0
    %4366 = vmatprep.subr.mxu0 0.0
    %4367 = vmatpush2.msra.mxu0 0.0
    %4368 = vmatprep.subr.mxu0 0.0
    %4369 = vmatpush2.msra.mxu0 0.0
    %4370 = vmatprep.subr.mxu0 0.0
    %4371 = vmatpush2.msra.mxu0 0.0
    %4372 = vmatprep.subr.mxu0 0.0
    %4373 = vmatpush2.msra.mxu0 0.0
    %4374 = vmatprep.subr.mxu0 0.0
    %4375 = vmatpush2.msra.mxu0 0.0
    %4376 = vmatprep.subr.mxu0 0.0
    %4377 = vmatpush2.msra.mxu0 0.0
    %4378 = vmatprep.subr.mxu0 0.0
    %4379 = vmatpush2.msra.mxu0 0.0
    %4380 = vmatprep.subr.mxu0 0.0
    %4381 = vmatpush2.msra.mxu0 0.0
    %4382 = vmatprep.subr.mxu0 0.0
    %4383 = vmatpush2.msra.mxu0 0.0
    %4384 = vmatprep.subr.mxu0 0.0
    %4385 = vmatpush2.msra.mxu0 0.0
    %4386 = vmatprep.subr.mxu0 0.0
    %4387 = vmatpush2.msra.mxu0 0.0
    %4388 = vmatprep.mubr.f32.mxu0 0.0
    %4389 = vmatmul.mubr.f32.gmra.mxu0 %v4319
    %v4390 = vpop.f32.mrf.mxu0
    %v4391 = vadd.f32 0.0, %v4390
    %v4392 = vpop.f32.mrf.mxu0
    %4393 = vmatprep.mubr.f32.mxu0 0.0
    %4394 = vmatmul.mubr.f32.gmra.mxu0 %v4322
    %v4395 = vpop.f32.mrf.mxu0
    %v4396 = vadd.f32 0.0, %v4395
    %v4397 = vpop.f32.mrf.mxu0
    %4398 = vdwg.mxu0
    %s4399 = scalar_lea.vmem %s1, 224
    %v4400 = vld [vmem:[%s4399] sm:$0xff]
    %v4401 = vld [vmem:[%s4399 + $0x8] sm:$0xff]
    %v4402 = vld [vmem:[%s4399 + $0x10] sm:$0xff]
    %v4403 = vld [vmem:[%s4399 + $0x18] sm:$0xff]
    %s4404 = scalar_lea.vmem %s2, 896
    %v4405 = vld [vmem:[%s4404] sm:$0xff]
    %v4406 = vld [vmem:[%s4404 + $0x8] sm:$0xff]
    %v4407 = vld [vmem:[%s4404 + $0x10] sm:$0xff]
    %v4408 = vld [vmem:[%s4404 + $0x18] sm:$0xff]
    %v4409 = vld [vmem:[%s4404 + $0x20] sm:$0xff]
    %v4410 = vld [vmem:[%s4404 + $0x28] sm:$0xff]
    %v4411 = vld [vmem:[%s4404 + $0x30] sm:$0xff]
    %v4412 = vld [vmem:[%s4404 + $0x38] sm:$0xff]
    %v4413 = vld [vmem:[%s4404 + $0x40] sm:$0xff]
    %v4414 = vld [vmem:[%s4404 + $0x48] sm:$0xff]
    %v4415 = vld [vmem:[%s4404 + $0x50] sm:$0xff]
    %v4416 = vld [vmem:[%s4404 + $0x58] sm:$0xff]
    %v4417 = vld [vmem:[%s4404 + $0x60] sm:$0xff]
    %v4418 = vld [vmem:[%s4404 + $0x68] sm:$0xff]
    %v4419 = vld [vmem:[%s4404 + $0x70] sm:$0xff]
    %v4420 = vld [vmem:[%s4404 + $0x78] sm:$0xff]
    %4421 = vmatprep.subr.mxu0 0.0
    %4422 = vmatpush1.msra.mxu0 %v4420
    %4423 = vmatprep.subr.mxu0 0.0
    %4424 = vmatpush1.msra.mxu0 %v4419
    %4425 = vmatprep.subr.mxu0 0.0
    %4426 = vmatpush1.msra.mxu0 %v4418
    %4427 = vmatprep.subr.mxu0 0.0
    %4428 = vmatpush1.msra.mxu0 %v4417
    %4429 = vmatprep.subr.mxu0 0.0
    %4430 = vmatpush1.msra.mxu0 %v4416
    %4431 = vmatprep.subr.mxu0 0.0
    %4432 = vmatpush1.msra.mxu0 %v4415
    %4433 = vmatprep.subr.mxu0 0.0
    %4434 = vmatpush1.msra.mxu0 %v4414
    %4435 = vmatprep.subr.mxu0 0.0
    %4436 = vmatpush1.msra.mxu0 %v4413
    %4437 = vmatprep.subr.mxu0 0.0
    %4438 = vmatpush1.msra.mxu0 %v4412
    %4439 = vmatprep.subr.mxu0 0.0
    %4440 = vmatpush1.msra.mxu0 %v4411
    %4441 = vmatprep.subr.mxu0 0.0
    %4442 = vmatpush1.msra.mxu0 %v4410
    %4443 = vmatprep.subr.mxu0 0.0
    %4444 = vmatpush1.msra.mxu0 %v4409
    %4445 = vmatprep.subr.mxu0 0.0
    %4446 = vmatpush1.msra.mxu0 %v4408
    %4447 = vmatprep.subr.mxu0 0.0
    %4448 = vmatpush1.msra.mxu0 %v4407
    %4449 = vmatprep.subr.mxu0 0.0
    %4450 = vmatpush1.msra.mxu0 %v4406
    %4451 = vmatprep.subr.mxu0 0.0
    %4452 = vmatpush1.msra.mxu0 %v4405
    %4453 = vmatprep.subr.mxu0 0.0
    %4454 = vmatpush2.msra.mxu0 0.0
    %4455 = vmatprep.subr.mxu0 0.0
    %4456 = vmatpush2.msra.mxu0 0.0
    %4457 = vmatprep.subr.mxu0 0.0
    %4458 = vmatpush2.msra.mxu0 0.0
    %4459 = vmatprep.subr.mxu0 0.0
    %4460 = vmatpush2.msra.mxu0 0.0
    %4461 = vmatprep.subr.mxu0 0.0
    %4462 = vmatpush2.msra.mxu0 0.0
    %4463 = vmatprep.subr.mxu0 0.0
    %4464 = vmatpush2.msra.mxu0 0.0
    %4465 = vmatprep.subr.mxu0 0.0
    %4466 = vmatpush2.msra.mxu0 0.0
    %4467 = vmatprep.subr.mxu0 0.0
    %4468 = vmatpush2.msra.mxu0 0.0
    %4469 = vmatprep.subr.mxu0 0.0
    %4470 = vmatpush2.msra.mxu0 0.0
    %4471 = vmatprep.subr.mxu0 0.0
    %4472 = vmatpush2.msra.mxu0 0.0
    %4473 = vmatprep.subr.mxu0 0.0
    %4474 = vmatpush2.msra.mxu0 0.0
    %4475 = vmatprep.subr.mxu0 0.0
    %4476 = vmatpush2.msra.mxu0 0.0
    %4477 = vmatprep.subr.mxu0 0.0
    %4478 = vmatpush2.msra.mxu0 0.0
    %4479 = vmatprep.subr.mxu0 0.0
    %4480 = vmatpush2.msra.mxu0 0.0
    %4481 = vmatprep.subr.mxu0 0.0
    %4482 = vmatpush2.msra.mxu0 0.0
    %4483 = vmatprep.subr.mxu0 0.0
    %4484 = vmatpush2.msra.mxu0 0.0
    %4485 = vmatprep.mubr.f32.mxu0 0.0
    %4486 = vmatmul.mubr.f32.gmra.mxu0 %v4400
    %v4487 = vpop.f32.mrf.mxu0
    %v4488 = vadd.f32 0.0, %v4487
    %v4489 = vpop.f32.mrf.mxu0
    %4490 = vmatprep.mubr.f32.mxu0 0.0
    %4491 = vmatmul.mubr.f32.gmra.mxu0 %v4401
    %v4492 = vpop.f32.mrf.mxu0
    %v4493 = vadd.f32 0.0, %v4492
    %v4494 = vpop.f32.mrf.mxu0
    %4495 = vmatprep.mubr.f32.mxu0 0.0
    %4496 = vmatmul.mubr.f32.gmra.mxu0 %v4402
    %v4497 = vpop.f32.mrf.mxu0
    %v4498 = vadd.f32 0.0, %v4497
    %v4499 = vpop.f32.mrf.mxu0
    %4500 = vmatprep.mubr.f32.mxu0 0.0
    %4501 = vmatmul.mubr.f32.gmra.mxu0 %v4403
    %v4502 = vpop.f32.mrf.mxu0
    %v4503 = vadd.f32 0.0, %v4502
    %v4504 = vpop.f32.mrf.mxu0
    %4505 = vdwg.mxu0
    %4508 = vrot.lane.b32.xlu0 %v4488, 96
    %v4509 = vpop.permute.xlu0 %4508
    %4510 = vrot.lane.b32.xlu0 %v4493, 96
    %v4511 = vpop.permute.xlu0 %4510
    %v4512 = vsel %vm174, %v4488, 0
    %v4514 = vsel %vm174, %v4493, 0
    %v4516 = vsel %vm174, %v4509, 0
    %v4518 = vsel %vm174, %v4511, 0
    %4520 = vmatprep.subr.mxu0 0.0
    %4521 = vmatpush1.xpose.msra.mxu0 0.0
    %4522 = vmatprep.subr.mxu0 0.0
    %4523 = vmatpush1.xpose.msra.mxu0 0.0
    %4524 = vmatprep.subr.mxu0 0.0
    %4525 = vmatpush1.xpose.msra.mxu0 0.0
    %4526 = vmatprep.subr.mxu0 0.0
    %4527 = vmatpush1.xpose.msra.mxu0 0.0
    %4528 = vmatprep.subr.mxu0 0.0
    %4529 = vmatpush1.xpose.msra.mxu0 0.0
    %4530 = vmatprep.subr.mxu0 0.0
    %4531 = vmatpush1.xpose.msra.mxu0 0.0
    %4532 = vmatprep.subr.mxu0 0.0
    %4533 = vmatpush1.xpose.msra.mxu0 0.0
    %4534 = vmatprep.subr.mxu0 0.0
    %4535 = vmatpush1.xpose.msra.mxu0 0.0
    %4536 = vmatprep.subr.mxu0 0.0
    %4537 = vmatpush1.xpose.msra.mxu0 0.0
    %4538 = vmatprep.subr.mxu0 0.0
    %4539 = vmatpush1.xpose.msra.mxu0 0.0
    %4540 = vmatprep.subr.mxu0 0.0
    %4541 = vmatpush1.xpose.msra.mxu0 0.0
    %4542 = vmatprep.subr.mxu0 0.0
    %4543 = vmatpush1.xpose.msra.mxu0 0.0
    %4544 = vmatprep.subr.mxu0 0.0
    %4545 = vmatpush1.xpose.msra.mxu0 0.0
    %4546 = vmatprep.subr.mxu0 0.0
    %4547 = vmatpush1.xpose.msra.mxu0 0.0
    %4548 = vmatprep.subr.mxu0 0.0
    %4549 = vmatpush1.xpose.msra.mxu0 %v4518
    %4550 = vmatprep.subr.mxu0 0.0
    %4551 = vmatpush1.xpose.msra.mxu0 %v4516
    %4552 = vmatprep.subr.mxu0 0.0
    %4553 = vmatpush2.xpose.msra.mxu0 0.0
    %4554 = vmatprep.subr.mxu0 0.0
    %4555 = vmatpush2.xpose.msra.mxu0 0.0
    %4556 = vmatprep.subr.mxu0 0.0
    %4557 = vmatpush2.xpose.msra.mxu0 0.0
    %4558 = vmatprep.subr.mxu0 0.0
    %4559 = vmatpush2.xpose.msra.mxu0 0.0
    %4560 = vmatprep.subr.mxu0 0.0
    %4561 = vmatpush2.xpose.msra.mxu0 0.0
    %4562 = vmatprep.subr.mxu0 0.0
    %4563 = vmatpush2.xpose.msra.mxu0 0.0
    %4564 = vmatprep.subr.mxu0 0.0
    %4565 = vmatpush2.xpose.msra.mxu0 0.0
    %4566 = vmatprep.subr.mxu0 0.0
    %4567 = vmatpush2.xpose.msra.mxu0 0.0
    %4568 = vmatprep.subr.mxu0 0.0
    %4569 = vmatpush2.xpose.msra.mxu0 0.0
    %4570 = vmatprep.subr.mxu0 0.0
    %4571 = vmatpush2.xpose.msra.mxu0 0.0
    %4572 = vmatprep.subr.mxu0 0.0
    %4573 = vmatpush2.xpose.msra.mxu0 0.0
    %4574 = vmatprep.subr.mxu0 0.0
    %4575 = vmatpush2.xpose.msra.mxu0 0.0
    %4576 = vmatprep.subr.mxu0 0.0
    %4577 = vmatpush2.xpose.msra.mxu0 0.0
    %4578 = vmatprep.subr.mxu0 0.0
    %4579 = vmatpush2.xpose.msra.mxu0 0.0
    %4580 = vmatprep.subr.mxu0 0.0
    %4581 = vmatpush2.xpose.msra.mxu0 0.0
    %4582 = vmatprep.subr.mxu0 0.0
    %4583 = vmatpush2.xpose.msra.mxu0 0.0
    %4584 = vmatprep.mubr.f32.mxu0 0.0
    %4585 = vmatmul.mubr.f32.gmra.mxu0 %v4512
    %v4586 = vpop.f32.mrf.mxu0
    %v4587 = vadd.f32 0.0, %v4586
    %v4588 = vpop.f32.mrf.mxu0
    %4589 = vmatprep.mubr.f32.mxu0 0.0
    %4590 = vmatmul.mubr.f32.gmra.mxu0 %v4514
    %v4591 = vpop.f32.mrf.mxu0
    %v4592 = vadd.f32 0.0, %v4591
    %v4593 = vpop.f32.mrf.mxu0
    %4594 = vdwg.mxu0
    %v4595 = vmul.f32 %v4587, 0.088388346
    %v4596 = vmul.f32 %v4592, 0.088388346
    %v4597 = vadd.f32 %v4595, %v57
    %v4598 = vadd.f32 %v4596, %v58
    %v4599 = vsel %vm262, %v4597, -inf
    %4600 = vmax.xlane.f32.xlu0 %v4599
    %v4601 = vpop.xlane.xlu0 %4600
    %v4602 = vsel %vm262, %v4598, -inf
    %4603 = vmax.xlane.f32.xlu0 %v4602
    %v4604 = vpop.xlane.xlu0 %4603
    %v4605 = vsub.f32 %v4597, %v4601
    %v4606 = vsub.f32 %v4598, %v4604
    %v4607 = vmul.f32 %v4605, 1.442695
    %v4608 = vpow.pop %v4607
    %v4609 = vmul.f32 %v4606, 1.442695
    %v4610 = vpow.pop %v4609
    %v4611 = vsel %vm262, %v4608, 0.0
    %4612 = vadd.xlane.f32.xlu0 %v4611
    %v4613 = vpop.xlane.xlu0 %4612
    %v4614 = vsel %vm262, %v4610, 0.0
    %4615 = vadd.xlane.f32.xlu0 %v4614
    %v4616 = vpop.xlane.xlu0 %4615
    %v4617 = vrcp.pop %v4613
    %v4618 = vrcp.pop %v4616
    %v4619 = vmul.f32 %v4608, %v4617
    %v4620 = vmul.f32 %v4610, %v4618
    %4621 = vrot.lane.b32.xlu0 %v4488, 64
    %v4622 = vpop.permute.xlu0 %4621
    %4623 = vrot.lane.b32.xlu0 %v4493, 64
    %v4624 = vpop.permute.xlu0 %4623
    %v4628 = vsel %vm262, %v4619, 0
    %v4631 = vsel %vm262, %v4620, 0
    %4633 = vmatprep.subr.mxu0 0.0
    %4634 = vmatpush1.msra.mxu0 0.0
    %4635 = vmatprep.subr.mxu0 0.0
    %4636 = vmatpush1.msra.mxu0 0.0
    %4637 = vmatprep.subr.mxu0 0.0
    %4638 = vmatpush1.msra.mxu0 0.0
    %4639 = vmatprep.subr.mxu0 0.0
    %4640 = vmatpush1.msra.mxu0 0.0
    %4641 = vmatprep.subr.mxu0 0.0
    %4642 = vmatpush1.msra.mxu0 0.0
    %4643 = vmatprep.subr.mxu0 0.0
    %4644 = vmatpush1.msra.mxu0 0.0
    %4645 = vmatprep.subr.mxu0 0.0
    %4646 = vmatpush1.msra.mxu0 0.0
    %4647 = vmatprep.subr.mxu0 0.0
    %4648 = vmatpush1.msra.mxu0 0.0
    %4649 = vmatprep.subr.mxu0 0.0
    %4650 = vmatpush1.msra.mxu0 0.0
    %4651 = vmatprep.subr.mxu0 0.0
    %4652 = vmatpush1.msra.mxu0 0.0
    %4653 = vmatprep.subr.mxu0 0.0
    %4654 = vmatpush1.msra.mxu0 0.0
    %4655 = vmatprep.subr.mxu0 0.0
    %4656 = vmatpush1.msra.mxu0 0.0
    %4657 = vmatprep.subr.mxu0 0.0
    %4658 = vmatpush1.msra.mxu0 0.0
    %4659 = vmatprep.subr.mxu0 0.0
    %4660 = vmatpush1.msra.mxu0 0.0
    %4661 = vmatprep.subr.mxu0 0.0
    %4662 = vmatpush1.msra.mxu0 %v4624
    %4663 = vmatprep.subr.mxu0 0.0
    %4664 = vmatpush1.msra.mxu0 %v4622
    %4665 = vmatprep.subr.mxu0 0.0
    %4666 = vmatpush2.msra.mxu0 0.0
    %4667 = vmatprep.subr.mxu0 0.0
    %4668 = vmatpush2.msra.mxu0 0.0
    %4669 = vmatprep.subr.mxu0 0.0
    %4670 = vmatpush2.msra.mxu0 0.0
    %4671 = vmatprep.subr.mxu0 0.0
    %4672 = vmatpush2.msra.mxu0 0.0
    %4673 = vmatprep.subr.mxu0 0.0
    %4674 = vmatpush2.msra.mxu0 0.0
    %4675 = vmatprep.subr.mxu0 0.0
    %4676 = vmatpush2.msra.mxu0 0.0
    %4677 = vmatprep.subr.mxu0 0.0
    %4678 = vmatpush2.msra.mxu0 0.0
    %4679 = vmatprep.subr.mxu0 0.0
    %4680 = vmatpush2.msra.mxu0 0.0
    %4681 = vmatprep.subr.mxu0 0.0
    %4682 = vmatpush2.msra.mxu0 0.0
    %4683 = vmatprep.subr.mxu0 0.0
    %4684 = vmatpush2.msra.mxu0 0.0
    %4685 = vmatprep.subr.mxu0 0.0
    %4686 = vmatpush2.msra.mxu0 0.0
    %4687 = vmatprep.subr.mxu0 0.0
    %4688 = vmatpush2.msra.mxu0 0.0
    %4689 = vmatprep.subr.mxu0 0.0
    %4690 = vmatpush2.msra.mxu0 0.0
    %4691 = vmatprep.subr.mxu0 0.0
    %4692 = vmatpush2.msra.mxu0 0.0
    %4693 = vmatprep.subr.mxu0 0.0
    %4694 = vmatpush2.msra.mxu0 0.0
    %4695 = vmatprep.subr.mxu0 0.0
    %4696 = vmatpush2.msra.mxu0 0.0
    %4697 = vmatprep.mubr.f32.mxu0 0.0
    %4698 = vmatmul.mubr.f32.gmra.mxu0 %v4628
    %v4699 = vpop.f32.mrf.mxu0
    %v4700 = vadd.f32 0.0, %v4699
    %v4701 = vpop.f32.mrf.mxu0
    %4702 = vmatprep.mubr.f32.mxu0 0.0
    %4703 = vmatmul.mubr.f32.gmra.mxu0 %v4631
    %v4704 = vpop.f32.mrf.mxu0
    %v4705 = vadd.f32 0.0, %v4704
    %v4706 = vpop.f32.mrf.mxu0
    %4707 = vdwg.mxu0
    %4710 = vrot.lane.b32.xlu0 %v4498, 96
    %v4711 = vpop.permute.xlu0 %4710
    %4712 = vrot.lane.b32.xlu0 %v4503, 96
    %v4713 = vpop.permute.xlu0 %4712
    %v4714 = vsel %vm174, %v4498, 0
    %v4716 = vsel %vm174, %v4503, 0
    %v4718 = vsel %vm174, %v4711, 0
    %v4720 = vsel %vm174, %v4713, 0
    %4722 = vmatprep.subr.mxu0 0.0
    %4723 = vmatpush1.xpose.msra.mxu0 0.0
    %4724 = vmatprep.subr.mxu0 0.0
    %4725 = vmatpush1.xpose.msra.mxu0 0.0
    %4726 = vmatprep.subr.mxu0 0.0
    %4727 = vmatpush1.xpose.msra.mxu0 0.0
    %4728 = vmatprep.subr.mxu0 0.0
    %4729 = vmatpush1.xpose.msra.mxu0 0.0
    %4730 = vmatprep.subr.mxu0 0.0
    %4731 = vmatpush1.xpose.msra.mxu0 0.0
    %4732 = vmatprep.subr.mxu0 0.0
    %4733 = vmatpush1.xpose.msra.mxu0 0.0
    %4734 = vmatprep.subr.mxu0 0.0
    %4735 = vmatpush1.xpose.msra.mxu0 0.0
    %4736 = vmatprep.subr.mxu0 0.0
    %4737 = vmatpush1.xpose.msra.mxu0 0.0
    %4738 = vmatprep.subr.mxu0 0.0
    %4739 = vmatpush1.xpose.msra.mxu0 0.0
    %4740 = vmatprep.subr.mxu0 0.0
    %4741 = vmatpush1.xpose.msra.mxu0 0.0
    %4742 = vmatprep.subr.mxu0 0.0
    %4743 = vmatpush1.xpose.msra.mxu0 0.0
    %4744 = vmatprep.subr.mxu0 0.0
    %4745 = vmatpush1.xpose.msra.mxu0 0.0
    %4746 = vmatprep.subr.mxu0 0.0
    %4747 = vmatpush1.xpose.msra.mxu0 0.0
    %4748 = vmatprep.subr.mxu0 0.0
    %4749 = vmatpush1.xpose.msra.mxu0 0.0
    %4750 = vmatprep.subr.mxu0 0.0
    %4751 = vmatpush1.xpose.msra.mxu0 %v4720
    %4752 = vmatprep.subr.mxu0 0.0
    %4753 = vmatpush1.xpose.msra.mxu0 %v4718
    %4754 = vmatprep.subr.mxu0 0.0
    %4755 = vmatpush2.xpose.msra.mxu0 0.0
    %4756 = vmatprep.subr.mxu0 0.0
    %4757 = vmatpush2.xpose.msra.mxu0 0.0
    %4758 = vmatprep.subr.mxu0 0.0
    %4759 = vmatpush2.xpose.msra.mxu0 0.0
    %4760 = vmatprep.subr.mxu0 0.0
    %4761 = vmatpush2.xpose.msra.mxu0 0.0
    %4762 = vmatprep.subr.mxu0 0.0
    %4763 = vmatpush2.xpose.msra.mxu0 0.0
    %4764 = vmatprep.subr.mxu0 0.0
    %4765 = vmatpush2.xpose.msra.mxu0 0.0
    %4766 = vmatprep.subr.mxu0 0.0
    %4767 = vmatpush2.xpose.msra.mxu0 0.0
    %4768 = vmatprep.subr.mxu0 0.0
    %4769 = vmatpush2.xpose.msra.mxu0 0.0
    %4770 = vmatprep.subr.mxu0 0.0
    %4771 = vmatpush2.xpose.msra.mxu0 0.0
    %4772 = vmatprep.subr.mxu0 0.0
    %4773 = vmatpush2.xpose.msra.mxu0 0.0
    %4774 = vmatprep.subr.mxu0 0.0
    %4775 = vmatpush2.xpose.msra.mxu0 0.0
    %4776 = vmatprep.subr.mxu0 0.0
    %4777 = vmatpush2.xpose.msra.mxu0 0.0
    %4778 = vmatprep.subr.mxu0 0.0
    %4779 = vmatpush2.xpose.msra.mxu0 0.0
    %4780 = vmatprep.subr.mxu0 0.0
    %4781 = vmatpush2.xpose.msra.mxu0 0.0
    %4782 = vmatprep.subr.mxu0 0.0
    %4783 = vmatpush2.xpose.msra.mxu0 0.0
    %4784 = vmatprep.subr.mxu0 0.0
    %4785 = vmatpush2.xpose.msra.mxu0 0.0
    %4786 = vmatprep.mubr.f32.mxu0 0.0
    %4787 = vmatmul.mubr.f32.gmra.mxu0 %v4714
    %v4788 = vpop.f32.mrf.mxu0
    %v4789 = vadd.f32 0.0, %v4788
    %v4790 = vpop.f32.mrf.mxu0
    %4791 = vmatprep.mubr.f32.mxu0 0.0
    %4792 = vmatmul.mubr.f32.gmra.mxu0 %v4716
    %v4793 = vpop.f32.mrf.mxu0
    %v4794 = vadd.f32 0.0, %v4793
    %v4795 = vpop.f32.mrf.mxu0
    %4796 = vdwg.mxu0
    %v4797 = vmul.f32 %v4789, 0.088388346
    %v4798 = vmul.f32 %v4794, 0.088388346
    %v4799 = vadd.f32 %v4797, %v57
    %v4800 = vadd.f32 %v4798, %v58
    %v4801 = vsel %vm262, %v4799, -inf
    %4802 = vmax.xlane.f32.xlu0 %v4801
    %v4803 = vpop.xlane.xlu0 %4802
    %v4804 = vsel %vm262, %v4800, -inf
    %4805 = vmax.xlane.f32.xlu0 %v4804
    %v4806 = vpop.xlane.xlu0 %4805
    %v4807 = vsub.f32 %v4799, %v4803
    %v4808 = vsub.f32 %v4800, %v4806
    %v4809 = vmul.f32 %v4807, 1.442695
    %v4810 = vpow.pop %v4809
    %v4811 = vmul.f32 %v4808, 1.442695
    %v4812 = vpow.pop %v4811
    %v4813 = vsel %vm262, %v4810, 0.0
    %4814 = vadd.xlane.f32.xlu0 %v4813
    %v4815 = vpop.xlane.xlu0 %4814
    %v4816 = vsel %vm262, %v4812, 0.0
    %4817 = vadd.xlane.f32.xlu0 %v4816
    %v4818 = vpop.xlane.xlu0 %4817
    %v4819 = vrcp.pop %v4815
    %v4820 = vrcp.pop %v4818
    %v4821 = vmul.f32 %v4810, %v4819
    %v4822 = vmul.f32 %v4812, %v4820
    %4823 = vrot.lane.b32.xlu0 %v4498, 64
    %v4824 = vpop.permute.xlu0 %4823
    %4825 = vrot.lane.b32.xlu0 %v4503, 64
    %v4826 = vpop.permute.xlu0 %4825
    %v4830 = vsel %vm262, %v4821, 0
    %v4833 = vsel %vm262, %v4822, 0
    %4835 = vmatprep.subr.mxu0 0.0
    %4836 = vmatpush1.msra.mxu0 0.0
    %4837 = vmatprep.subr.mxu0 0.0
    %4838 = vmatpush1.msra.mxu0 0.0
    %4839 = vmatprep.subr.mxu0 0.0
    %4840 = vmatpush1.msra.mxu0 0.0
    %4841 = vmatprep.subr.mxu0 0.0
    %4842 = vmatpush1.msra.mxu0 0.0
    %4843 = vmatprep.subr.mxu0 0.0
    %4844 = vmatpush1.msra.mxu0 0.0
    %4845 = vmatprep.subr.mxu0 0.0
    %4846 = vmatpush1.msra.mxu0 0.0
    %4847 = vmatprep.subr.mxu0 0.0
    %4848 = vmatpush1.msra.mxu0 0.0
    %4849 = vmatprep.subr.mxu0 0.0
    %4850 = vmatpush1.msra.mxu0 0.0
    %4851 = vmatprep.subr.mxu0 0.0
    %4852 = vmatpush1.msra.mxu0 0.0
    %4853 = vmatprep.subr.mxu0 0.0
    %4854 = vmatpush1.msra.mxu0 0.0
    %4855 = vmatprep.subr.mxu0 0.0
    %4856 = vmatpush1.msra.mxu0 0.0
    %4857 = vmatprep.subr.mxu0 0.0
    %4858 = vmatpush1.msra.mxu0 0.0
    %4859 = vmatprep.subr.mxu0 0.0
    %4860 = vmatpush1.msra.mxu0 0.0
    %4861 = vmatprep.subr.mxu0 0.0
    %4862 = vmatpush1.msra.mxu0 0.0
    %4863 = vmatprep.subr.mxu0 0.0
    %4864 = vmatpush1.msra.mxu0 %v4826
    %4865 = vmatprep.subr.mxu0 0.0
    %4866 = vmatpush1.msra.mxu0 %v4824
    %4867 = vmatprep.subr.mxu0 0.0
    %4868 = vmatpush2.msra.mxu0 0.0
    %4869 = vmatprep.subr.mxu0 0.0
    %4870 = vmatpush2.msra.mxu0 0.0
    %4871 = vmatprep.subr.mxu0 0.0
    %4872 = vmatpush2.msra.mxu0 0.0
    %4873 = vmatprep.subr.mxu0 0.0
    %4874 = vmatpush2.msra.mxu0 0.0
    %4875 = vmatprep.subr.mxu0 0.0
    %4876 = vmatpush2.msra.mxu0 0.0
    %4877 = vmatprep.subr.mxu0 0.0
    %4878 = vmatpush2.msra.mxu0 0.0
    %4879 = vmatprep.subr.mxu0 0.0
    %4880 = vmatpush2.msra.mxu0 0.0
    %4881 = vmatprep.subr.mxu0 0.0
    %4882 = vmatpush2.msra.mxu0 0.0
    %4883 = vmatprep.subr.mxu0 0.0
    %4884 = vmatpush2.msra.mxu0 0.0
    %4885 = vmatprep.subr.mxu0 0.0
    %4886 = vmatpush2.msra.mxu0 0.0
    %4887 = vmatprep.subr.mxu0 0.0
    %4888 = vmatpush2.msra.mxu0 0.0
    %4889 = vmatprep.subr.mxu0 0.0
    %4890 = vmatpush2.msra.mxu0 0.0
    %4891 = vmatprep.subr.mxu0 0.0
    %4892 = vmatpush2.msra.mxu0 0.0
    %4893 = vmatprep.subr.mxu0 0.0
    %4894 = vmatpush2.msra.mxu0 0.0
    %4895 = vmatprep.subr.mxu0 0.0
    %4896 = vmatpush2.msra.mxu0 0.0
    %4897 = vmatprep.subr.mxu0 0.0
    %4898 = vmatpush2.msra.mxu0 0.0
    %4899 = vmatprep.mubr.f32.mxu0 0.0
    %4900 = vmatmul.mubr.f32.gmra.mxu0 %v4830
    %v4901 = vpop.f32.mrf.mxu0
    %v4902 = vadd.f32 0.0, %v4901
    %v4903 = vpop.f32.mrf.mxu0
    %4904 = vmatprep.mubr.f32.mxu0 0.0
    %4905 = vmatmul.mubr.f32.gmra.mxu0 %v4833
    %v4906 = vpop.f32.mrf.mxu0
    %v4907 = vadd.f32 0.0, %v4906
    %v4908 = vpop.f32.mrf.mxu0
    %4909 = vdwg.mxu0
    %4914 = vrot.lane.b32.xlu0 %v3678, 32
    %v4915 = vpop.permute.xlu0 %4914
    %4916 = vrot.lane.b32.xlu0 %v3683, 32
    %v4917 = vpop.permute.xlu0 %4916
    %4918 = vrot.lane.b32.xlu0 %v3880, 32
    %v4919 = vpop.permute.xlu0 %4918
    %4920 = vrot.lane.b32.xlu0 %v3885, 32
    %v4921 = vpop.permute.xlu0 %4920
    %4930 = vrot.lane.b32.xlu0 %v4189, 64
    %v4931 = vpop.permute.xlu0 %4930
    %4932 = vrot.lane.b32.xlu0 %v4194, 64
    %v4933 = vpop.permute.xlu0 %4932
    %4934 = vrot.lane.b32.xlu0 %v4391, 64
    %v4935 = vpop.permute.xlu0 %4934
    %4936 = vrot.lane.b32.xlu0 %v4396, 64
    %v4937 = vpop.permute.xlu0 %4936
    %4946 = vrot.lane.b32.xlu0 %v4700, 96
    %v4947 = vpop.permute.xlu0 %4946
    %4948 = vrot.lane.b32.xlu0 %v4705, 96
    %v4949 = vpop.permute.xlu0 %4948
    %4950 = vrot.lane.b32.xlu0 %v4902, 96
    %v4951 = vpop.permute.xlu0 %4950
    %4952 = vrot.lane.b32.xlu0 %v4907, 96
    %v4953 = vpop.permute.xlu0 %4952
    %v4958 = vsel %vm174, %v3167, %v4915
    %v4959 = vsel %vm174, %v3172, %v4917
    %v4960 = vsel %vm174, %v3369, %v4919
    %v4961 = vsel %vm174, %v3374, %v4921
    %v4962 = vsel %vm2159, %v4958, %v4931
    %v4963 = vsel %vm2159, %v4959, %v4933
    %v4964 = vsel %vm2159, %v4960, %v4935
    %v4965 = vsel %vm2159, %v4961, %v4937
    %v4966 = vsel %vm2164, %v4962, %v4947
    %v4967 = vsel %vm2164, %v4963, %v4949
    %v4968 = vsel %vm2164, %v4964, %v4951
    %v4969 = vsel %vm2164, %v4965, %v4953
    %s4970 = scalar_lea.vmem %s6, 4
    %v4971 = vld [vmem:[%s4970] sm:$0xf]
    %s4972 = scalar_lea.vmem %s3, 128
    %v4973 = vld [vmem:[%s4972] sm:$0xff]
    %v4974 = vld [vmem:[%s4972 + $0x8] sm:$0xff]
    %v4975 = vld [vmem:[%s4972 + $0x10] sm:$0xff]
    %v4976 = vld [vmem:[%s4972 + $0x18] sm:$0xff]
    %v4977 = vld [vmem:[%s4972 + $0x20] sm:$0xff]
    %v4978 = vld [vmem:[%s4972 + $0x28] sm:$0xff]
    %v4979 = vld [vmem:[%s4972 + $0x30] sm:$0xff]
    %v4980 = vld [vmem:[%s4972 + $0x38] sm:$0xff]
    %v4981 = vld [vmem:[%s4972 + $0x40] sm:$0xff]
    %v4982 = vld [vmem:[%s4972 + $0x48] sm:$0xff]
    %v4983 = vld [vmem:[%s4972 + $0x50] sm:$0xff]
    %v4984 = vld [vmem:[%s4972 + $0x58] sm:$0xff]
    %v4985 = vld [vmem:[%s4972 + $0x60] sm:$0xff]
    %v4986 = vld [vmem:[%s4972 + $0x68] sm:$0xff]
    %v4987 = vld [vmem:[%s4972 + $0x70] sm:$0xff]
    %v4988 = vld [vmem:[%s4972 + $0x78] sm:$0xff]
    %4989 = vmatprep.subr.mxu0 0.0
    %4990 = vmatpush1.msra.mxu0 %v4988
    %4991 = vmatprep.subr.mxu0 0.0
    %4992 = vmatpush1.msra.mxu0 %v4987
    %4993 = vmatprep.subr.mxu0 0.0
    %4994 = vmatpush1.msra.mxu0 %v4986
    %4995 = vmatprep.subr.mxu0 0.0
    %4996 = vmatpush1.msra.mxu0 %v4985
    %4997 = vmatprep.subr.mxu0 0.0
    %4998 = vmatpush1.msra.mxu0 %v4984
    %4999 = vmatprep.subr.mxu0 0.0
    %5000 = vmatpush1.msra.mxu0 %v4983
    %5001 = vmatprep.subr.mxu0 0.0
    %5002 = vmatpush1.msra.mxu0 %v4982
    %5003 = vmatprep.subr.mxu0 0.0
    %5004 = vmatpush1.msra.mxu0 %v4981
    %5005 = vmatprep.subr.mxu0 0.0
    %5006 = vmatpush1.msra.mxu0 %v4980
    %5007 = vmatprep.subr.mxu0 0.0
    %5008 = vmatpush1.msra.mxu0 %v4979
    %5009 = vmatprep.subr.mxu0 0.0
    %5010 = vmatpush1.msra.mxu0 %v4978
    %5011 = vmatprep.subr.mxu0 0.0
    %5012 = vmatpush1.msra.mxu0 %v4977
    %5013 = vmatprep.subr.mxu0 0.0
    %5014 = vmatpush1.msra.mxu0 %v4976
    %5015 = vmatprep.subr.mxu0 0.0
    %5016 = vmatpush1.msra.mxu0 %v4975
    %5017 = vmatprep.subr.mxu0 0.0
    %5018 = vmatpush1.msra.mxu0 %v4974
    %5019 = vmatprep.subr.mxu0 0.0
    %5020 = vmatpush1.msra.mxu0 %v4973
    %5021 = vmatprep.subr.mxu0 0.0
    %5022 = vmatpush2.msra.mxu0 0.0
    %5023 = vmatprep.subr.mxu0 0.0
    %5024 = vmatpush2.msra.mxu0 0.0
    %5025 = vmatprep.subr.mxu0 0.0
    %5026 = vmatpush2.msra.mxu0 0.0
    %5027 = vmatprep.subr.mxu0 0.0
    %5028 = vmatpush2.msra.mxu0 0.0
    %5029 = vmatprep.subr.mxu0 0.0
    %5030 = vmatpush2.msra.mxu0 0.0
    %5031 = vmatprep.subr.mxu0 0.0
    %5032 = vmatpush2.msra.mxu0 0.0
    %5033 = vmatprep.subr.mxu0 0.0
    %5034 = vmatpush2.msra.mxu0 0.0
    %5035 = vmatprep.subr.mxu0 0.0
    %5036 = vmatpush2.msra.mxu0 0.0
    %5037 = vmatprep.subr.mxu0 0.0
    %5038 = vmatpush2.msra.mxu0 0.0
    %5039 = vmatprep.subr.mxu0 0.0
    %5040 = vmatpush2.msra.mxu0 0.0
    %5041 = vmatprep.subr.mxu0 0.0
    %5042 = vmatpush2.msra.mxu0 0.0
    %5043 = vmatprep.subr.mxu0 0.0
    %5044 = vmatpush2.msra.mxu0 0.0
    %5045 = vmatprep.subr.mxu0 0.0
    %5046 = vmatpush2.msra.mxu0 0.0
    %5047 = vmatprep.subr.mxu0 0.0
    %5048 = vmatpush2.msra.mxu0 0.0
    %5049 = vmatprep.subr.mxu0 0.0
    %5050 = vmatpush2.msra.mxu0 0.0
    %5051 = vmatprep.subr.mxu0 0.0
    %5052 = vmatpush2.msra.mxu0 0.0
    %5053 = vmatprep.mubr.f32.mxu0 0.0
    %5054 = vmatmul.mubr.f32.gmra.mxu0 %v4966
    %v5055 = vpop.f32.mrf.mxu0
    %v5056 = vadd.f32 0.0, %v5055
    %v5057 = vpop.f32.mrf.mxu0
    %5058 = vmatprep.mubr.f32.mxu0 0.0
    %5059 = vmatmul.mubr.f32.gmra.mxu0 %v4967
    %v5060 = vpop.f32.mrf.mxu0
    %v5061 = vadd.f32 0.0, %v5060
    %v5062 = vpop.f32.mrf.mxu0
    %5063 = vmatprep.mubr.f32.mxu0 0.0
    %5064 = vmatmul.mubr.f32.gmra.mxu0 %v4968
    %v5065 = vpop.f32.mrf.mxu0
    %v5066 = vadd.f32 0.0, %v5065
    %v5067 = vpop.f32.mrf.mxu0
    %5068 = vmatprep.mubr.f32.mxu0 0.0
    %5069 = vmatmul.mubr.f32.gmra.mxu0 %v4969
    %v5070 = vpop.f32.mrf.mxu0
    %v5071 = vadd.f32 0.0, %v5070
    %v5072 = vpop.f32.mrf.mxu0
    %5073 = vdwg.mxu0
    %v5074 = vadd.f32 %v2862, %v5056
    %v5075 = vadd.f32 %v2863, %v5061
    %v5076 = vadd.f32 %v2864, %v5066
    %v5077 = vadd.f32 %v2865, %v5071
    %v5078 = vlaneseq
    %v5079 = vshrl.u32 %v5078, 7
    %v5080 = vsub.s32 0, %v5079
    %v5081 = vrot.slane %v4971, %v5080
    %v5082 = vadd.f32 %v5074, %v5081
    %v5083 = vadd.f32 %v5075, %v5081
    %v5084 = vadd.f32 %v5076, %v5081
    %v5085 = vadd.f32 %v5077, %v5081
    %5086 = vadd.xlane.f32.xlu0 %v5082
    %v5087 = vpop.xlane.xlu0 %5086
    %5088 = vadd.xlane.f32.xlu0 %v5083
    %v5089 = vpop.xlane.xlu0 %5088
    %5090 = vadd.xlane.f32.xlu0 %v5084
    %v5091 = vpop.xlane.xlu0 %5090
    %5092 = vadd.xlane.f32.xlu0 %v5085
    %v5093 = vpop.xlane.xlu0 %5092
    %v5094 = vmul.f32 %v5087, %v2291
    %v5095 = vmul.f32 %v5089, %v2291
    %v5096 = vmul.f32 %v5091, %v2291
    %v5097 = vmul.f32 %v5093, %v2291
    %v5098 = vsub.f32 %v5082, %v5094
    %v5099 = vsub.f32 %v5083, %v5095
    %v5100 = vsub.f32 %v5084, %v5096
    %v5101 = vsub.f32 %v5085, %v5097
    %v5102 = vmul.f32 %v5098, %v5098
    %v5103 = vmul.f32 %v5099, %v5099
    %v5104 = vmul.f32 %v5100, %v5100
    %v5105 = vmul.f32 %v5101, %v5101
    %5106 = vadd.xlane.f32.xlu0 %v5102
    %v5107 = vpop.xlane.xlu0 %5106
    %5108 = vadd.xlane.f32.xlu0 %v5103
    %v5109 = vpop.xlane.xlu0 %5108
    %5110 = vadd.xlane.f32.xlu0 %v5104
    %v5111 = vpop.xlane.xlu0 %5110
    %5112 = vadd.xlane.f32.xlu0 %v5105
    %v5113 = vpop.xlane.xlu0 %5112
    %v5114 = vmul.f32 %v5107, %v2291
    %v5115 = vmul.f32 %v5109, %v2291
    %v5116 = vmul.f32 %v5111, %v2291
    %v5117 = vmul.f32 %v5113, %v2291
    %v5118 = vadd.f32 %v5114, 1e-05
    %v5119 = vadd.f32 %v5115, 1e-05
    %v5120 = vadd.f32 %v5116, 1e-05
    %v5121 = vadd.f32 %v5117, 1e-05
    %v5122 = vrsqrt.pop %v5118
    %v5123 = vrsqrt.pop %v5119
    %v5124 = vrsqrt.pop %v5120
    %v5125 = vrsqrt.pop %v5121
    %v5126 = vmul.f32 %v5098, %v5122
    %v5127 = vmul.f32 %v5099, %v5123
    %v5128 = vmul.f32 %v5100, %v5124
    %v5129 = vmul.f32 %v5101, %v5125
    %v5130 = vlaneseq
    %v5131 = vshrl.u32 %v5130, 7
    %v5132 = vsub.s32 1, %v5131
    %v5133 = vrot.slane %v4971, %v5132
    %v5134 = vmul.f32 %v5126, %v5133
    %v5135 = vmul.f32 %v5127, %v5133
    %v5136 = vmul.f32 %v5128, %v5133
    %v5137 = vmul.f32 %v5129, %v5133
    %v5138 = vlaneseq
    %v5139 = vshrl.u32 %v5138, 7
    %v5140 = vsub.s32 2, %v5139
    %v5141 = vrot.slane %v4971, %v5140
    %v5142 = vadd.f32 %v5134, %v5141
    %v5143 = vadd.f32 %v5135, %v5141
    %v5144 = vadd.f32 %v5136, %v5141
    %v5145 = vadd.f32 %v5137, %v5141
    %s5146 = scalar_lea.vmem %s4, 512
    %v5147 = vld [vmem:[%s5146] sm:$0xff]
    %v5148 = vld [vmem:[%s5146 + $0x8] sm:$0xff]
    %v5149 = vld [vmem:[%s5146 + $0x10] sm:$0xff]
    %v5150 = vld [vmem:[%s5146 + $0x18] sm:$0xff]
    %v5151 = vld [vmem:[%s5146 + $0x20] sm:$0xff]
    %v5152 = vld [vmem:[%s5146 + $0x28] sm:$0xff]
    %v5153 = vld [vmem:[%s5146 + $0x30] sm:$0xff]
    %v5154 = vld [vmem:[%s5146 + $0x38] sm:$0xff]
    %v5155 = vld [vmem:[%s5146 + $0x40] sm:$0xff]
    %v5156 = vld [vmem:[%s5146 + $0x48] sm:$0xff]
    %v5157 = vld [vmem:[%s5146 + $0x50] sm:$0xff]
    %v5158 = vld [vmem:[%s5146 + $0x58] sm:$0xff]
    %v5159 = vld [vmem:[%s5146 + $0x60] sm:$0xff]
    %v5160 = vld [vmem:[%s5146 + $0x68] sm:$0xff]
    %v5161 = vld [vmem:[%s5146 + $0x70] sm:$0xff]
    %v5162 = vld [vmem:[%s5146 + $0x78] sm:$0xff]
    %v5163 = vld [vmem:[%s5146 + $0x80] sm:$0xff]
    %v5164 = vld [vmem:[%s5146 + $0x88] sm:$0xff]
    %v5165 = vld [vmem:[%s5146 + $0x90] sm:$0xff]
    %v5166 = vld [vmem:[%s5146 + $0x98] sm:$0xff]
    %v5167 = vld [vmem:[%s5146 + $0xa0] sm:$0xff]
    %v5168 = vld [vmem:[%s5146 + $0xa8] sm:$0xff]
    %v5169 = vld [vmem:[%s5146 + $0xb0] sm:$0xff]
    %v5170 = vld [vmem:[%s5146 + $0xb8] sm:$0xff]
    %v5171 = vld [vmem:[%s5146 + $0xc0] sm:$0xff]
    %v5172 = vld [vmem:[%s5146 + $0xc8] sm:$0xff]
    %v5173 = vld [vmem:[%s5146 + $0xd0] sm:$0xff]
    %v5174 = vld [vmem:[%s5146 + $0xd8] sm:$0xff]
    %v5175 = vld [vmem:[%s5146 + $0xe0] sm:$0xff]
    %v5176 = vld [vmem:[%s5146 + $0xe8] sm:$0xff]
    %v5177 = vld [vmem:[%s5146 + $0xf0] sm:$0xff]
    %v5178 = vld [vmem:[%s5146 + $0xf8] sm:$0xff]
    %v5179 = vld [vmem:[%s5146 + $0x100] sm:$0xff]
    %v5180 = vld [vmem:[%s5146 + $0x108] sm:$0xff]
    %v5181 = vld [vmem:[%s5146 + $0x110] sm:$0xff]
    %v5182 = vld [vmem:[%s5146 + $0x118] sm:$0xff]
    %v5183 = vld [vmem:[%s5146 + $0x120] sm:$0xff]
    %v5184 = vld [vmem:[%s5146 + $0x128] sm:$0xff]
    %v5185 = vld [vmem:[%s5146 + $0x130] sm:$0xff]
    %v5186 = vld [vmem:[%s5146 + $0x138] sm:$0xff]
    %v5187 = vld [vmem:[%s5146 + $0x140] sm:$0xff]
    %v5188 = vld [vmem:[%s5146 + $0x148] sm:$0xff]
    %v5189 = vld [vmem:[%s5146 + $0x150] sm:$0xff]
    %v5190 = vld [vmem:[%s5146 + $0x158] sm:$0xff]
    %v5191 = vld [vmem:[%s5146 + $0x160] sm:$0xff]
    %v5192 = vld [vmem:[%s5146 + $0x168] sm:$0xff]
    %v5193 = vld [vmem:[%s5146 + $0x170] sm:$0xff]
    %v5194 = vld [vmem:[%s5146 + $0x178] sm:$0xff]
    %v5195 = vld [vmem:[%s5146 + $0x180] sm:$0xff]
    %v5196 = vld [vmem:[%s5146 + $0x188] sm:$0xff]
    %v5197 = vld [vmem:[%s5146 + $0x190] sm:$0xff]
    %v5198 = vld [vmem:[%s5146 + $0x198] sm:$0xff]
    %v5199 = vld [vmem:[%s5146 + $0x1a0] sm:$0xff]
    %v5200 = vld [vmem:[%s5146 + $0x1a8] sm:$0xff]
    %v5201 = vld [vmem:[%s5146 + $0x1b0] sm:$0xff]
    %v5202 = vld [vmem:[%s5146 + $0x1b8] sm:$0xff]
    %v5203 = vld [vmem:[%s5146 + $0x1c0] sm:$0xff]
    %v5204 = vld [vmem:[%s5146 + $0x1c8] sm:$0xff]
    %v5205 = vld [vmem:[%s5146 + $0x1d0] sm:$0xff]
    %v5206 = vld [vmem:[%s5146 + $0x1d8] sm:$0xff]
    %v5207 = vld [vmem:[%s5146 + $0x1e0] sm:$0xff]
    %v5208 = vld [vmem:[%s5146 + $0x1e8] sm:$0xff]
    %v5209 = vld [vmem:[%s5146 + $0x1f0] sm:$0xff]
    %v5210 = vld [vmem:[%s5146 + $0x1f8] sm:$0xff]
    %s5211 = scalar_lea.vmem %s7, 4
    %v5212 = vld [vmem:[%s5211] sm:$0xf]
    %v5214 = vlaneseq
    %v5215 = vshrl.u32 %v5214, 7
    %v5216 = vsub.s32 0, %v5215
    %v5217 = vrot.slane %v5212, %v5216
    %v5218 = vlaneseq
    %v5219 = vshrl.u32 %v5218, 7
    %v5220 = vsub.s32 1, %v5219
    %v5221 = vrot.slane %v5212, %v5220
    %v5222 = vlaneseq
    %v5223 = vshrl.u32 %v5222, 7
    %v5224 = vsub.s32 2, %v5223
    %v5225 = vrot.slane %v5212, %v5224
    %v5226 = vlaneseq
    %v5227 = vshrl.u32 %v5226, 7
    %v5228 = vsub.s32 3, %v5227
    %v5229 = vrot.slane %v5212, %v5228
    %5234 = vmatprep.subr.mxu0 %v5208
    %5235 = vmatpush1.msra.mxu0 %v5207
    %5236 = vmatprep.subr.mxu0 %v5204
    %5237 = vmatpush1.msra.mxu0 %v5203
    %5238 = vmatprep.subr.mxu0 %v5200
    %5239 = vmatpush1.msra.mxu0 %v5199
    %5240 = vmatprep.subr.mxu0 %v5196
    %5241 = vmatpush1.msra.mxu0 %v5195
    %5242 = vmatprep.subr.mxu0 %v5192
    %5243 = vmatpush1.msra.mxu0 %v5191
    %5244 = vmatprep.subr.mxu0 %v5188
    %5245 = vmatpush1.msra.mxu0 %v5187
    %5246 = vmatprep.subr.mxu0 %v5184
    %5247 = vmatpush1.msra.mxu0 %v5183
    %5248 = vmatprep.subr.mxu0 %v5180
    %5249 = vmatpush1.msra.mxu0 %v5179
    %5250 = vmatprep.subr.mxu0 %v5176
    %5251 = vmatpush1.msra.mxu0 %v5175
    %5252 = vmatprep.subr.mxu0 %v5172
    %5253 = vmatpush1.msra.mxu0 %v5171
    %5254 = vmatprep.subr.mxu0 %v5168
    %5255 = vmatpush1.msra.mxu0 %v5167
    %5256 = vmatprep.subr.mxu0 %v5164
    %5257 = vmatpush1.msra.mxu0 %v5163
    %5258 = vmatprep.subr.mxu0 %v5160
    %5259 = vmatpush1.msra.mxu0 %v5159
    %5260 = vmatprep.subr.mxu0 %v5156
    %5261 = vmatpush1.msra.mxu0 %v5155
    %5262 = vmatprep.subr.mxu0 %v5152
    %5263 = vmatpush1.msra.mxu0 %v5151
    %5264 = vmatprep.subr.mxu0 %v5148
    %5265 = vmatpush1.msra.mxu0 %v5147
    %5266 = vmatprep.subr.mxu0 0.0
    %5267 = vmatpush2.msra.mxu0 0.0
    %5268 = vmatprep.subr.mxu0 0.0
    %5269 = vmatpush2.msra.mxu0 0.0
    %5270 = vmatprep.subr.mxu0 0.0
    %5271 = vmatpush2.msra.mxu0 0.0
    %5272 = vmatprep.subr.mxu0 0.0
    %5273 = vmatpush2.msra.mxu0 0.0
    %5274 = vmatprep.subr.mxu0 0.0
    %5275 = vmatpush2.msra.mxu0 0.0
    %5276 = vmatprep.subr.mxu0 0.0
    %5277 = vmatpush2.msra.mxu0 0.0
    %5278 = vmatprep.subr.mxu0 0.0
    %5279 = vmatpush2.msra.mxu0 0.0
    %5280 = vmatprep.subr.mxu0 0.0
    %5281 = vmatpush2.msra.mxu0 0.0
    %5282 = vmatprep.subr.mxu0 0.0
    %5283 = vmatpush2.msra.mxu0 0.0
    %5284 = vmatprep.subr.mxu0 0.0
    %5285 = vmatpush2.msra.mxu0 0.0
    %5286 = vmatprep.subr.mxu0 0.0
    %5287 = vmatpush2.msra.mxu0 0.0
    %5288 = vmatprep.subr.mxu0 0.0
    %5289 = vmatpush2.msra.mxu0 0.0
    %5290 = vmatprep.subr.mxu0 0.0
    %5291 = vmatpush2.msra.mxu0 0.0
    %5292 = vmatprep.subr.mxu0 0.0
    %5293 = vmatpush2.msra.mxu0 0.0
    %5294 = vmatprep.subr.mxu0 0.0
    %5295 = vmatpush2.msra.mxu0 0.0
    %5296 = vmatprep.subr.mxu0 0.0
    %5297 = vmatpush2.msra.mxu0 0.0
    %5298 = vmatprep.mubr.f32.mxu0 0.0
    %5299 = vmatmul.mubr.f32.gmra.mxu0 %v5142
    %v5300 = vpop.f32.mrf.mxu0
    %v5301 = vadd.f32 %v5217, %v5300
    %v5302 = vpop.f32.mrf.mxu0
    %v5303 = vadd.f32 %v5221, %v5302
    %5304 = vmatprep.mubr.f32.mxu0 0.0
    %5305 = vmatmul.mubr.f32.gmra.mxu0 %v5143
    %v5306 = vpop.f32.mrf.mxu0
    %v5307 = vadd.f32 %v5217, %v5306
    %v5308 = vpop.f32.mrf.mxu0
    %v5309 = vadd.f32 %v5221, %v5308
    %5310 = vmatprep.mubr.f32.mxu0 0.0
    %5311 = vmatmul.mubr.f32.gmra.mxu0 %v5144
    %v5312 = vpop.f32.mrf.mxu0
    %v5313 = vadd.f32 %v5217, %v5312
    %v5314 = vpop.f32.mrf.mxu0
    %v5315 = vadd.f32 %v5221, %v5314
    %5316 = vmatprep.mubr.f32.mxu0 0.0
    %5317 = vmatmul.mubr.f32.gmra.mxu0 %v5145
    %v5318 = vpop.f32.mrf.mxu0
    %v5319 = vadd.f32 %v5217, %v5318
    %v5320 = vpop.f32.mrf.mxu0
    %v5321 = vadd.f32 %v5221, %v5320
    %5322 = vdwg.mxu0
    %5323 = vmatprep.subr.mxu0 %v5210
    %5324 = vmatpush1.msra.mxu0 %v5209
    %5325 = vmatprep.subr.mxu0 %v5206
    %5326 = vmatpush1.msra.mxu0 %v5205
    %5327 = vmatprep.subr.mxu0 %v5202
    %5328 = vmatpush1.msra.mxu0 %v5201
    %5329 = vmatprep.subr.mxu0 %v5198
    %5330 = vmatpush1.msra.mxu0 %v5197
    %5331 = vmatprep.subr.mxu0 %v5194
    %5332 = vmatpush1.msra.mxu0 %v5193
    %5333 = vmatprep.subr.mxu0 %v5190
    %5334 = vmatpush1.msra.mxu0 %v5189
    %5335 = vmatprep.subr.mxu0 %v5186
    %5336 = vmatpush1.msra.mxu0 %v5185
    %5337 = vmatprep.subr.mxu0 %v5182
    %5338 = vmatpush1.msra.mxu0 %v5181
    %5339 = vmatprep.subr.mxu0 %v5178
    %5340 = vmatpush1.msra.mxu0 %v5177
    %5341 = vmatprep.subr.mxu0 %v5174
    %5342 = vmatpush1.msra.mxu0 %v5173
    %5343 = vmatprep.subr.mxu0 %v5170
    %5344 = vmatpush1.msra.mxu0 %v5169
    %5345 = vmatprep.subr.mxu0 %v5166
    %5346 = vmatpush1.msra.mxu0 %v5165
    %5347 = vmatprep.subr.mxu0 %v5162
    %5348 = vmatpush1.msra.mxu0 %v5161
    %5349 = vmatprep.subr.mxu0 %v5158
    %5350 = vmatpush1.msra.mxu0 %v5157
    %5351 = vmatprep.subr.mxu0 %v5154
    %5352 = vmatpush1.msra.mxu0 %v5153
    %5353 = vmatprep.subr.mxu0 %v5150
    %5354 = vmatpush1.msra.mxu0 %v5149
    %5355 = vmatprep.subr.mxu0 0.0
    %5356 = vmatpush2.msra.mxu0 0.0
    %5357 = vmatprep.subr.mxu0 0.0
    %5358 = vmatpush2.msra.mxu0 0.0
    %5359 = vmatprep.subr.mxu0 0.0
    %5360 = vmatpush2.msra.mxu0 0.0
    %5361 = vmatprep.subr.mxu0 0.0
    %5362 = vmatpush2.msra.mxu0 0.0
    %5363 = vmatprep.subr.mxu0 0.0
    %5364 = vmatpush2.msra.mxu0 0.0
    %5365 = vmatprep.subr.mxu0 0.0
    %5366 = vmatpush2.msra.mxu0 0.0
    %5367 = vmatprep.subr.mxu0 0.0
    %5368 = vmatpush2.msra.mxu0 0.0
    %5369 = vmatprep.subr.mxu0 0.0
    %5370 = vmatpush2.msra.mxu0 0.0
    %5371 = vmatprep.subr.mxu0 0.0
    %5372 = vmatpush2.msra.mxu0 0.0
    %5373 = vmatprep.subr.mxu0 0.0
    %5374 = vmatpush2.msra.mxu0 0.0
    %5375 = vmatprep.subr.mxu0 0.0
    %5376 = vmatpush2.msra.mxu0 0.0
    %5377 = vmatprep.subr.mxu0 0.0
    %5378 = vmatpush2.msra.mxu0 0.0
    %5379 = vmatprep.subr.mxu0 0.0
    %5380 = vmatpush2.msra.mxu0 0.0
    %5381 = vmatprep.subr.mxu0 0.0
    %5382 = vmatpush2.msra.mxu0 0.0
    %5383 = vmatprep.subr.mxu0 0.0
    %5384 = vmatpush2.msra.mxu0 0.0
    %5385 = vmatprep.subr.mxu0 0.0
    %5386 = vmatpush2.msra.mxu0 0.0
    %5387 = vmatprep.mubr.f32.mxu0 0.0
    %5388 = vmatmul.mubr.f32.gmra.mxu0 %v5142
    %v5389 = vpop.f32.mrf.mxu0
    %v5390 = vadd.f32 %v5225, %v5389
    %v5391 = vpop.f32.mrf.mxu0
    %v5392 = vadd.f32 %v5229, %v5391
    %5393 = vmatprep.mubr.f32.mxu0 0.0
    %5394 = vmatmul.mubr.f32.gmra.mxu0 %v5143
    %v5395 = vpop.f32.mrf.mxu0
    %v5396 = vadd.f32 %v5225, %v5395
    %v5397 = vpop.f32.mrf.mxu0
    %v5398 = vadd.f32 %v5229, %v5397
    %5399 = vmatprep.mubr.f32.mxu0 0.0
    %5400 = vmatmul.mubr.f32.gmra.mxu0 %v5144
    %v5401 = vpop.f32.mrf.mxu0
    %v5402 = vadd.f32 %v5225, %v5401
    %v5403 = vpop.f32.mrf.mxu0
    %v5404 = vadd.f32 %v5229, %v5403
    %5405 = vmatprep.mubr.f32.mxu0 0.0
    %5406 = vmatmul.mubr.f32.gmra.mxu0 %v5145
    %v5407 = vpop.f32.mrf.mxu0
    %v5408 = vadd.f32 %v5225, %v5407
    %v5409 = vpop.f32.mrf.mxu0
    %v5410 = vadd.f32 %v5229, %v5409
    %5411 = vdwg.mxu0
    %v5412 = vmax.f32 %v5301, 0.0
    %v5413 = vmax.f32 %v5303, 0.0
    %v5414 = vmax.f32 %v5390, 0.0
    %v5415 = vmax.f32 %v5392, 0.0
    %v5416 = vmax.f32 %v5307, 0.0
    %v5417 = vmax.f32 %v5309, 0.0
    %v5418 = vmax.f32 %v5396, 0.0
    %v5419 = vmax.f32 %v5398, 0.0
    %v5420 = vmax.f32 %v5313, 0.0
    %v5421 = vmax.f32 %v5315, 0.0
    %v5422 = vmax.f32 %v5402, 0.0
    %v5423 = vmax.f32 %v5404, 0.0
    %v5424 = vmax.f32 %v5319, 0.0
    %v5425 = vmax.f32 %v5321, 0.0
    %v5426 = vmax.f32 %v5408, 0.0
    %v5427 = vmax.f32 %v5410, 0.0
    %s5428 = scalar_lea.vmem [#allocation2], 512
    %v5429 = vld [vmem:[%s5428] sm:$0xff]
    %v5430 = vld [vmem:[%s5428 + $0x8] sm:$0xff]
    %v5431 = vld [vmem:[%s5428 + $0x10] sm:$0xff]
    %v5432 = vld [vmem:[%s5428 + $0x18] sm:$0xff]
    %v5433 = vld [vmem:[%s5428 + $0x20] sm:$0xff]
    %v5434 = vld [vmem:[%s5428 + $0x28] sm:$0xff]
    %v5435 = vld [vmem:[%s5428 + $0x30] sm:$0xff]
    %v5436 = vld [vmem:[%s5428 + $0x38] sm:$0xff]
    %v5437 = vld [vmem:[%s5428 + $0x40] sm:$0xff]
    %v5438 = vld [vmem:[%s5428 + $0x48] sm:$0xff]
    %v5439 = vld [vmem:[%s5428 + $0x50] sm:$0xff]
    %v5440 = vld [vmem:[%s5428 + $0x58] sm:$0xff]
    %v5441 = vld [vmem:[%s5428 + $0x60] sm:$0xff]
    %v5442 = vld [vmem:[%s5428 + $0x68] sm:$0xff]
    %v5443 = vld [vmem:[%s5428 + $0x70] sm:$0xff]
    %v5444 = vld [vmem:[%s5428 + $0x78] sm:$0xff]
    %v5445 = vld [vmem:[%s5428 + $0x80] sm:$0xff]
    %v5446 = vld [vmem:[%s5428 + $0x88] sm:$0xff]
    %v5447 = vld [vmem:[%s5428 + $0x90] sm:$0xff]
    %v5448 = vld [vmem:[%s5428 + $0x98] sm:$0xff]
    %v5449 = vld [vmem:[%s5428 + $0xa0] sm:$0xff]
    %v5450 = vld [vmem:[%s5428 + $0xa8] sm:$0xff]
    %v5451 = vld [vmem:[%s5428 + $0xb0] sm:$0xff]
    %v5452 = vld [vmem:[%s5428 + $0xb8] sm:$0xff]
    %v5453 = vld [vmem:[%s5428 + $0xc0] sm:$0xff]
    %v5454 = vld [vmem:[%s5428 + $0xc8] sm:$0xff]
    %v5455 = vld [vmem:[%s5428 + $0xd0] sm:$0xff]
    %v5456 = vld [vmem:[%s5428 + $0xd8] sm:$0xff]
    %v5457 = vld [vmem:[%s5428 + $0xe0] sm:$0xff]
    %v5458 = vld [vmem:[%s5428 + $0xe8] sm:$0xff]
    %v5459 = vld [vmem:[%s5428 + $0xf0] sm:$0xff]
    %v5460 = vld [vmem:[%s5428 + $0xf8] sm:$0xff]
    %v5461 = vld [vmem:[%s5428 + $0x100] sm:$0xff]
    %v5462 = vld [vmem:[%s5428 + $0x108] sm:$0xff]
    %v5463 = vld [vmem:[%s5428 + $0x110] sm:$0xff]
    %v5464 = vld [vmem:[%s5428 + $0x118] sm:$0xff]
    %v5465 = vld [vmem:[%s5428 + $0x120] sm:$0xff]
    %v5466 = vld [vmem:[%s5428 + $0x128] sm:$0xff]
    %v5467 = vld [vmem:[%s5428 + $0x130] sm:$0xff]
    %v5468 = vld [vmem:[%s5428 + $0x138] sm:$0xff]
    %v5469 = vld [vmem:[%s5428 + $0x140] sm:$0xff]
    %v5470 = vld [vmem:[%s5428 + $0x148] sm:$0xff]
    %v5471 = vld [vmem:[%s5428 + $0x150] sm:$0xff]
    %v5472 = vld [vmem:[%s5428 + $0x158] sm:$0xff]
    %v5473 = vld [vmem:[%s5428 + $0x160] sm:$0xff]
    %v5474 = vld [vmem:[%s5428 + $0x168] sm:$0xff]
    %v5475 = vld [vmem:[%s5428 + $0x170] sm:$0xff]
    %v5476 = vld [vmem:[%s5428 + $0x178] sm:$0xff]
    %v5477 = vld [vmem:[%s5428 + $0x180] sm:$0xff]
    %v5478 = vld [vmem:[%s5428 + $0x188] sm:$0xff]
    %v5479 = vld [vmem:[%s5428 + $0x190] sm:$0xff]
    %v5480 = vld [vmem:[%s5428 + $0x198] sm:$0xff]
    %v5481 = vld [vmem:[%s5428 + $0x1a0] sm:$0xff]
    %v5482 = vld [vmem:[%s5428 + $0x1a8] sm:$0xff]
    %v5483 = vld [vmem:[%s5428 + $0x1b0] sm:$0xff]
    %v5484 = vld [vmem:[%s5428 + $0x1b8] sm:$0xff]
    %v5485 = vld [vmem:[%s5428 + $0x1c0] sm:$0xff]
    %v5486 = vld [vmem:[%s5428 + $0x1c8] sm:$0xff]
    %v5487 = vld [vmem:[%s5428 + $0x1d0] sm:$0xff]
    %v5488 = vld [vmem:[%s5428 + $0x1d8] sm:$0xff]
    %v5489 = vld [vmem:[%s5428 + $0x1e0] sm:$0xff]
    %v5490 = vld [vmem:[%s5428 + $0x1e8] sm:$0xff]
    %v5491 = vld [vmem:[%s5428 + $0x1f0] sm:$0xff]
    %v5492 = vld [vmem:[%s5428 + $0x1f8] sm:$0xff]
    %v5493 = vlaneseq
    %v5494 = vshrl.u32 %v5493, 7
    %v5495 = vsub.s32 3, %v5494
    %v5496 = vrot.slane %v4971, %v5495
    %5497 = vmatprep.subr.mxu0 0.0
    %5498 = vmatpush1.msra.mxu0 %v5444
    %5499 = vmatprep.subr.mxu0 0.0
    %5500 = vmatpush1.msra.mxu0 %v5443
    %5501 = vmatprep.subr.mxu0 0.0
    %5502 = vmatpush1.msra.mxu0 %v5442
    %5503 = vmatprep.subr.mxu0 0.0
    %5504 = vmatpush1.msra.mxu0 %v5441
    %5505 = vmatprep.subr.mxu0 0.0
    %5506 = vmatpush1.msra.mxu0 %v5440
    %5507 = vmatprep.subr.mxu0 0.0
    %5508 = vmatpush1.msra.mxu0 %v5439
    %5509 = vmatprep.subr.mxu0 0.0
    %5510 = vmatpush1.msra.mxu0 %v5438
    %5511 = vmatprep.subr.mxu0 0.0
    %5512 = vmatpush1.msra.mxu0 %v5437
    %5513 = vmatprep.subr.mxu0 0.0
    %5514 = vmatpush1.msra.mxu0 %v5436
    %5515 = vmatprep.subr.mxu0 0.0
    %5516 = vmatpush1.msra.mxu0 %v5435
    %5517 = vmatprep.subr.mxu0 0.0
    %5518 = vmatpush1.msra.mxu0 %v5434
    %5519 = vmatprep.subr.mxu0 0.0
    %5520 = vmatpush1.msra.mxu0 %v5433
    %5521 = vmatprep.subr.mxu0 0.0
    %5522 = vmatpush1.msra.mxu0 %v5432
    %5523 = vmatprep.subr.mxu0 0.0
    %5524 = vmatpush1.msra.mxu0 %v5431
    %5525 = vmatprep.subr.mxu0 0.0
    %5526 = vmatpush1.msra.mxu0 %v5430
    %5527 = vmatprep.subr.mxu0 0.0
    %5528 = vmatpush1.msra.mxu0 %v5429
    %5529 = vmatprep.subr.mxu0 0.0
    %5530 = vmatpush2.msra.mxu0 %v5460
    %5531 = vmatprep.subr.mxu0 0.0
    %5532 = vmatpush2.msra.mxu0 %v5459
    %5533 = vmatprep.subr.mxu0 0.0
    %5534 = vmatpush2.msra.mxu0 %v5458
    %5535 = vmatprep.subr.mxu0 0.0
    %5536 = vmatpush2.msra.mxu0 %v5457
    %5537 = vmatprep.subr.mxu0 0.0
    %5538 = vmatpush2.msra.mxu0 %v5456
    %5539 = vmatprep.subr.mxu0 0.0
    %5540 = vmatpush2.msra.mxu0 %v5455
    %5541 = vmatprep.subr.mxu0 0.0
    %5542 = vmatpush2.msra.mxu0 %v5454
    %5543 = vmatprep.subr.mxu0 0.0
    %5544 = vmatpush2.msra.mxu0 %v5453
    %5545 = vmatprep.subr.mxu0 0.0
    %5546 = vmatpush2.msra.mxu0 %v5452
    %5547 = vmatprep.subr.mxu0 0.0
    %5548 = vmatpush2.msra.mxu0 %v5451
    %5549 = vmatprep.subr.mxu0 0.0
    %5550 = vmatpush2.msra.mxu0 %v5450
    %5551 = vmatprep.subr.mxu0 0.0
    %5552 = vmatpush2.msra.mxu0 %v5449
    %5553 = vmatprep.subr.mxu0 0.0
    %5554 = vmatpush2.msra.mxu0 %v5448
    %5555 = vmatprep.subr.mxu0 0.0
    %5556 = vmatpush2.msra.mxu0 %v5447
    %5557 = vmatprep.subr.mxu0 0.0
    %5558 = vmatpush2.msra.mxu0 %v5446
    %5559 = vmatprep.subr.mxu0 0.0
    %5560 = vmatpush2.msra.mxu0 %v5445
    %5561 = vmatprep.mubr.f32.mxu0 %v5413
    %5562 = vmatmul.mubr.f32.gmra.mxu0 %v5412
    %v5563 = vpop.f32.mrf.mxu0
    %v5564 = vadd.f32 %v5496, %v5563
    %v5565 = vpop.f32.mrf.mxu0
    %5566 = vmatprep.mubr.f32.mxu0 %v5417
    %5567 = vmatmul.mubr.f32.gmra.mxu0 %v5416
    %v5568 = vpop.f32.mrf.mxu0
    %v5569 = vadd.f32 %v5496, %v5568
    %v5570 = vpop.f32.mrf.mxu0
    %5571 = vmatprep.mubr.f32.mxu0 %v5421
    %5572 = vmatmul.mubr.f32.gmra.mxu0 %v5420
    %v5573 = vpop.f32.mrf.mxu0
    %v5574 = vadd.f32 %v5496, %v5573
    %v5575 = vpop.f32.mrf.mxu0
    %5576 = vmatprep.mubr.f32.mxu0 %v5425
    %5577 = vmatmul.mubr.f32.gmra.mxu0 %v5424
    %v5578 = vpop.f32.mrf.mxu0
    %v5579 = vadd.f32 %v5496, %v5578
    %v5580 = vpop.f32.mrf.mxu0
    %5581 = vdwg.mxu0
    %5582 = vmatprep.subr.mxu0 0.0
    %5583 = vmatpush1.msra.mxu0 %v5476
    %5584 = vmatprep.subr.mxu0 0.0
    %5585 = vmatpush1.msra.mxu0 %v5475
    %5586 = vmatprep.subr.mxu0 0.0
    %5587 = vmatpush1.msra.mxu0 %v5474
    %5588 = vmatprep.subr.mxu0 0.0
    %5589 = vmatpush1.msra.mxu0 %v5473
    %5590 = vmatprep.subr.mxu0 0.0
    %5591 = vmatpush1.msra.mxu0 %v5472
    %5592 = vmatprep.subr.mxu0 0.0
    %5593 = vmatpush1.msra.mxu0 %v5471
    %5594 = vmatprep.subr.mxu0 0.0
    %5595 = vmatpush1.msra.mxu0 %v5470
    %5596 = vmatprep.subr.mxu0 0.0
    %5597 = vmatpush1.msra.mxu0 %v5469
    %5598 = vmatprep.subr.mxu0 0.0
    %5599 = vmatpush1.msra.mxu0 %v5468
    %5600 = vmatprep.subr.mxu0 0.0
    %5601 = vmatpush1.msra.mxu0 %v5467
    %5602 = vmatprep.subr.mxu0 0.0
    %5603 = vmatpush1.msra.mxu0 %v5466
    %5604 = vmatprep.subr.mxu0 0.0
    %5605 = vmatpush1.msra.mxu0 %v5465
    %5606 = vmatprep.subr.mxu0 0.0
    %5607 = vmatpush1.msra.mxu0 %v5464
    %5608 = vmatprep.subr.mxu0 0.0
    %5609 = vmatpush1.msra.mxu0 %v5463
    %5610 = vmatprep.subr.mxu0 0.0
    %5611 = vmatpush1.msra.mxu0 %v5462
    %5612 = vmatprep.subr.mxu0 0.0
    %5613 = vmatpush1.msra.mxu0 %v5461
    %5614 = vmatprep.subr.mxu0 0.0
    %5615 = vmatpush2.msra.mxu0 %v5492
    %5616 = vmatprep.subr.mxu0 0.0
    %5617 = vmatpush2.msra.mxu0 %v5491
    %5618 = vmatprep.subr.mxu0 0.0
    %5619 = vmatpush2.msra.mxu0 %v5490
    %5620 = vmatprep.subr.mxu0 0.0
    %5621 = vmatpush2.msra.mxu0 %v5489
    %5622 = vmatprep.subr.mxu0 0.0
    %5623 = vmatpush2.msra.mxu0 %v5488
    %5624 = vmatprep.subr.mxu0 0.0
    %5625 = vmatpush2.msra.mxu0 %v5487
    %5626 = vmatprep.subr.mxu0 0.0
    %5627 = vmatpush2.msra.mxu0 %v5486
    %5628 = vmatprep.subr.mxu0 0.0
    %5629 = vmatpush2.msra.mxu0 %v5485
    %5630 = vmatprep.subr.mxu0 0.0
    %5631 = vmatpush2.msra.mxu0 %v5484
    %5632 = vmatprep.subr.mxu0 0.0
    %5633 = vmatpush2.msra.mxu0 %v5483
    %5634 = vmatprep.subr.mxu0 0.0
    %5635 = vmatpush2.msra.mxu0 %v5482
    %5636 = vmatprep.subr.mxu0 0.0
    %5637 = vmatpush2.msra.mxu0 %v5481
    %5638 = vmatprep.subr.mxu0 0.0
    %5639 = vmatpush2.msra.mxu0 %v5480
    %5640 = vmatprep.subr.mxu0 0.0
    %5641 = vmatpush2.msra.mxu0 %v5479
    %5642 = vmatprep.subr.mxu0 0.0
    %5643 = vmatpush2.msra.mxu0 %v5478
    %5644 = vmatprep.subr.mxu0 0.0
    %5645 = vmatpush2.msra.mxu0 %v5477
    %5646 = vmatprep.mubr.f32.mxu0 %v5415
    %5647 = vmatmul.mubr.f32.gmra.mxu0 %v5414
    %v5648 = vpop.f32.mrf.mxu0
    %v5649 = vadd.f32 %v5564, %v5648
    %v5650 = vpop.f32.mrf.mxu0
    %5651 = vmatprep.mubr.f32.mxu0 %v5419
    %5652 = vmatmul.mubr.f32.gmra.mxu0 %v5418
    %v5653 = vpop.f32.mrf.mxu0
    %v5654 = vadd.f32 %v5569, %v5653
    %v5655 = vpop.f32.mrf.mxu0
    %5656 = vmatprep.mubr.f32.mxu0 %v5423
    %5657 = vmatmul.mubr.f32.gmra.mxu0 %v5422
    %v5658 = vpop.f32.mrf.mxu0
    %v5659 = vadd.f32 %v5574, %v5658
    %v5660 = vpop.f32.mrf.mxu0
    %5661 = vmatprep.mubr.f32.mxu0 %v5427
    %5662 = vmatmul.mubr.f32.gmra.mxu0 %v5426
    %v5663 = vpop.f32.mrf.mxu0
    %v5664 = vadd.f32 %v5579, %v5663
    %v5665 = vpop.f32.mrf.mxu0
    %5666 = vdwg.mxu0
    %v5667 = vadd.f32 %v5082, %v5649
    %v5668 = vadd.f32 %v5083, %v5654
    %v5669 = vadd.f32 %v5084, %v5659
    %v5670 = vadd.f32 %v5085, %v5664
    %v5671 = vld [vmem:[%s9] sm:$0xf]
    %5672 = vadd.xlane.f32.xlu0 %v5667
    %v5673 = vpop.xlane.xlu0 %5672
    %5674 = vadd.xlane.f32.xlu0 %v5668
    %v5675 = vpop.xlane.xlu0 %5674
    %5676 = vadd.xlane.f32.xlu0 %v5669
    %v5677 = vpop.xlane.xlu0 %5676
    %5678 = vadd.xlane.f32.xlu0 %v5670
    %v5679 = vpop.xlane.xlu0 %5678
    %v5680 = vmul.f32 %v5673, %v2291
    %v5681 = vmul.f32 %v5675, %v2291
    %v5682 = vmul.f32 %v5677, %v2291
    %v5683 = vmul.f32 %v5679, %v2291
    %v5684 = vsub.f32 %v5667, %v5680
    %v5685 = vsub.f32 %v5668, %v5681
    %v5686 = vsub.f32 %v5669, %v5682
    %v5687 = vsub.f32 %v5670, %v5683
    %v5688 = vmul.f32 %v5684, %v5684
    %v5689 = vmul.f32 %v5685, %v5685
    %v5690 = vmul.f32 %v5686, %v5686
    %v5691 = vmul.f32 %v5687, %v5687
    %5692 = vadd.xlane.f32.xlu0 %v5688
    %v5693 = vpop.xlane.xlu0 %5692
    %5694 = vadd.xlane.f32.xlu0 %v5689
    %v5695 = vpop.xlane.xlu0 %5694
    %5696 = vadd.xlane.f32.xlu0 %v5690
    %v5697 = vpop.xlane.xlu0 %5696
    %5698 = vadd.xlane.f32.xlu0 %v5691
    %v5699 = vpop.xlane.xlu0 %5698
    %v5700 = vmul.f32 %v5693, %v2291
    %v5701 = vmul.f32 %v5695, %v2291
    %v5702 = vmul.f32 %v5697, %v2291
    %v5703 = vmul.f32 %v5699, %v2291
    %v5704 = vadd.f32 %v5700, 1e-05
    %v5705 = vadd.f32 %v5701, 1e-05
    %v5706 = vadd.f32 %v5702, 1e-05
    %v5707 = vadd.f32 %v5703, 1e-05
    %v5708 = vrsqrt.pop %v5704
    %v5709 = vrsqrt.pop %v5705
    %v5710 = vrsqrt.pop %v5706
    %v5711 = vrsqrt.pop %v5707
    %v5712 = vmul.f32 %v5684, %v5708
    %v5713 = vmul.f32 %v5685, %v5709
    %v5714 = vmul.f32 %v5686, %v5710
    %v5715 = vmul.f32 %v5687, %v5711
    %v5716 = vlaneseq
    %v5717 = vshrl.u32 %v5716, 7
    %v5718 = vsub.s32 0, %v5717
    %v5719 = vrot.slane %v5671, %v5718
    %v5720 = vmul.f32 %v5712, %v5719
    %v5721 = vmul.f32 %v5713, %v5719
    %v5722 = vmul.f32 %v5714, %v5719
    %v5723 = vmul.f32 %v5715, %v5719
    %v5724 = vlaneseq
    %v5725 = vshrl.u32 %v5724, 7
    %v5726 = vsub.s32 1, %v5725
    %v5727 = vrot.slane %v5671, %v5726
    %v5728 = vadd.f32 %v5720, %v5727
    %v5729 = vadd.f32 %v5721, %v5727
    %v5730 = vadd.f32 %v5722, %v5727
    %v5731 = vadd.f32 %v5723, %v5727
    %v5732 = vld [vmem:[%s8] sm:$0xff]
    %v5733 = vld [vmem:[%s8 + $0x8] sm:$0xff]
    %v5734 = vld [vmem:[%s8 + $0x10] sm:$0xff]
    %v5735 = vld [vmem:[%s8 + $0x18] sm:$0xff]
    %v5736 = vld [vmem:[%s8 + $0x20] sm:$0xff]
    %v5737 = vld [vmem:[%s8 + $0x28] sm:$0xff]
    %v5738 = vld [vmem:[%s8 + $0x30] sm:$0xff]
    %v5739 = vld [vmem:[%s8 + $0x38] sm:$0xff]
    %v5740 = vld [vmem:[%s8 + $0x40] sm:$0xff]
    %v5741 = vld [vmem:[%s8 + $0x48] sm:$0xff]
    %v5742 = vld [vmem:[%s8 + $0x50] sm:$0xff]
    %v5743 = vld [vmem:[%s8 + $0x58] sm:$0xff]
    %v5744 = vld [vmem:[%s8 + $0x60] sm:$0xff]
    %v5745 = vld [vmem:[%s8 + $0x68] sm:$0xff]
    %v5746 = vld [vmem:[%s8 + $0x70] sm:$0xff]
    %v5747 = vld [vmem:[%s8 + $0x78] sm:$0xff]
    %v5748 = vlaneseq
    %v5749 = vshrl.u32 %v5748, 7
    %v5750 = vsub.s32 2, %v5749
    %v5751 = vrot.slane %v5671, %v5750
    %5752 = vmatprep.subr.mxu0 0.0
    %5753 = vmatpush1.msra.mxu0 %v5747
    %5754 = vmatprep.subr.mxu0 0.0
    %5755 = vmatpush1.msra.mxu0 %v5746
    %5756 = vmatprep.subr.mxu0 0.0
    %5757 = vmatpush1.msra.mxu0 %v5745
    %5758 = vmatprep.subr.mxu0 0.0
    %5759 = vmatpush1.msra.mxu0 %v5744
    %5760 = vmatprep.subr.mxu0 0.0
    %5761 = vmatpush1.msra.mxu0 %v5743
    %5762 = vmatprep.subr.mxu0 0.0
    %5763 = vmatpush1.msra.mxu0 %v5742
    %5764 = vmatprep.subr.mxu0 0.0
    %5765 = vmatpush1.msra.mxu0 %v5741
    %5766 = vmatprep.subr.mxu0 0.0
    %5767 = vmatpush1.msra.mxu0 %v5740
    %5768 = vmatprep.subr.mxu0 0.0
    %5769 = vmatpush1.msra.mxu0 %v5739
    %5770 = vmatprep.subr.mxu0 0.0
    %5771 = vmatpush1.msra.mxu0 %v5738
    %5772 = vmatprep.subr.mxu0 0.0
    %5773 = vmatpush1.msra.mxu0 %v5737
    %5774 = vmatprep.subr.mxu0 0.0
    %5775 = vmatpush1.msra.mxu0 %v5736
    %5776 = vmatprep.subr.mxu0 0.0
    %5777 = vmatpush1.msra.mxu0 %v5735
    %5778 = vmatprep.subr.mxu0 0.0
    %5779 = vmatpush1.msra.mxu0 %v5734
    %5780 = vmatprep.subr.mxu0 0.0
    %5781 = vmatpush1.msra.mxu0 %v5733
    %5782 = vmatprep.subr.mxu0 0.0
    %5783 = vmatpush1.msra.mxu0 %v5732
    %5784 = vmatprep.subr.mxu0 0.0
    %5785 = vmatpush2.msra.mxu0 0.0
    %5786 = vmatprep.subr.mxu0 0.0
    %5787 = vmatpush2.msra.mxu0 0.0
    %5788 = vmatprep.subr.mxu0 0.0
    %5789 = vmatpush2.msra.mxu0 0.0
    %5790 = vmatprep.subr.mxu0 0.0
    %5791 = vmatpush2.msra.mxu0 0.0
    %5792 = vmatprep.subr.mxu0 0.0
    %5793 = vmatpush2.msra.mxu0 0.0
    %5794 = vmatprep.subr.mxu0 0.0
    %5795 = vmatpush2.msra.mxu0 0.0
    %5796 = vmatprep.subr.mxu0 0.0
    %5797 = vmatpush2.msra.mxu0 0.0
    %5798 = vmatprep.subr.mxu0 0.0
    %5799 = vmatpush2.msra.mxu0 0.0
    %5800 = vmatprep.subr.mxu0 0.0
    %5801 = vmatpush2.msra.mxu0 0.0
    %5802 = vmatprep.subr.mxu0 0.0
    %5803 = vmatpush2.msra.mxu0 0.0
    %5804 = vmatprep.subr.mxu0 0.0
    %5805 = vmatpush2.msra.mxu0 0.0
    %5806 = vmatprep.subr.mxu0 0.0
    %5807 = vmatpush2.msra.mxu0 0.0
    %5808 = vmatprep.subr.mxu0 0.0
    %5809 = vmatpush2.msra.mxu0 0.0
    %5810 = vmatprep.subr.mxu0 0.0
    %5811 = vmatpush2.msra.mxu0 0.0
    %5812 = vmatprep.subr.mxu0 0.0
    %5813 = vmatpush2.msra.mxu0 0.0
    %5814 = vmatprep.subr.mxu0 0.0
    %5815 = vmatpush2.msra.mxu0 0.0
    %5816 = vmatprep.mubr.f32.mxu0 0.0
    %5817 = vmatmul.mubr.f32.gmra.mxu0 %v5728
    %v5818 = vpop.f32.mrf.mxu0
    %v5819 = vadd.f32 %v5751, %v5818
    %v5820 = vpop.f32.mrf.mxu0
    %5821 = vmatprep.mubr.f32.mxu0 0.0
    %5822 = vmatmul.mubr.f32.gmra.mxu0 %v5729
    %v5823 = vpop.f32.mrf.mxu0
    %v5824 = vadd.f32 %v5751, %v5823
    %v5825 = vpop.f32.mrf.mxu0
    %5826 = vmatprep.mubr.f32.mxu0 0.0
    %5827 = vmatmul.mubr.f32.gmra.mxu0 %v5730
    %v5828 = vpop.f32.mrf.mxu0
    %v5829 = vadd.f32 %v5751, %v5828
    %v5830 = vpop.f32.mrf.mxu0
    %5831 = vmatprep.mubr.f32.mxu0 0.0
    %5832 = vmatmul.mubr.f32.gmra.mxu0 %v5731
    %v5833 = vpop.f32.mrf.mxu0
    %v5834 = vadd.f32 %v5751, %v5833
    %v5835 = vpop.f32.mrf.mxu0
    %5836 = vdwg.mxu0
    %5837 = vst [vmem:[#allocation5] sm:$0xff] %v5819
    %5838 = vst [vmem:[#allocation5 + $0x8] sm:$0xff] %v5824
    %5839 = vst [vmem:[#allocation5 + $0x10] sm:$0xff] %v5829
    %5840 = vst [vmem:[#allocation5 + $0x18] sm:$0xff] %v5834
    // Predicated region
    $region46: #{tpu_custom_call.1} parent=1 // pred_check
      _
    $region47: #{tpu_custom_call.1} parent=1 // pred_check_branch
      %5842 = sbr.rel (0) target = $region49
    $region48: #{tpu_custom_call.1} parent=1 // pred_region
      %s5844 = ssub.s32 512, 512
      %5845 = vsyncadd [#allocation4], %s5844
      %s5846 = sshll.u32 [#allocation5], 4
      %s5847 = int_to_ptr.vmem [resolvable:$true] %s5846
      %5852 = dma.vmem_to_hbm [thread:$0]  %s5847, 512, %s10, [#allocation4], 128, 128, 8
    $region49: #{tpu_custom_call.1} parent=1 // pred_fallthru
      _
    // Predicated region
    $region50: #{tpu_custom_call.1} parent=1 // pred_check
      _
    $region51: #{tpu_custom_call.1} parent=1 // pred_check_branch
      %5854 = sbr.rel (0) target = $region53
    $region52: #{tpu_custom_call.1} parent=1 // pred_region
      %5855 = dma.done [#allocation4], 512
    $region53: #{tpu_custom_call.1} parent=1 // pred_fallthru
      _
    %5856 = vsyncpa [#allocation3], 1
    %5857 = vsyncpa [#allocation4], 1

</llo_original>
